<compile_context>
chip_gen: v7x
topology: tpu7x:2x2x1
jax: 0.10.0
libtpu: 0.0.40
codegen_flags: <defaults>
</compile_context>

<pallas_src>
import jax
import jax.numpy as jnp
from jax import lax
from jax.experimental import pallas as pl
from jax.experimental.pallas import tpu as pltpu

O_PAD = 128  # lane-dense output width; the real O columns are sliced out in the wrapper


def _sentence_encoder_kernel(
    x_ref, len_ref,
    w_ih_ref, b_ih_ref,
    whh_f_ref, bhh_f_ref,
    whh_b_ref, bhh_b_ref,
    wg_ref, bg_ref, us_ref,
    wo_ref, bo_ref,
    out_ref,
    gx_scr, h_scr,
):
    B, T, I = x_ref.shape
    H = whh_f_ref.shape[0]
    H2 = 2 * H
    H3 = 3 * H

    lengths = len_ref[...]                                            # [B, 1] int32

    # ---- one batched input projection for BOTH directions: [B*T, I] @ [I, 6H] ----
    # (hoisted out of the recurrence; only h @ W_hh remains on the serial path)
    gx_all = jnp.dot(x_ref[...].reshape(B * T, I), w_ih_ref[...],
                     preferred_element_type=jnp.float32) + b_ih_ref[...]
    gx_scr[...] = gx_all.reshape(B, T, 2 * H3)

    whh_f = whh_f_ref[...]
    bhh_f = bhh_f_ref[...]
    whh_b = whh_b_ref[...]
    bhh_b = bhh_b_ref[...]

    def gru_update(gx, h, whh, bhh):
        gh = jnp.dot(h, whh, preferred_element_type=jnp.float32) + bhh    # [B, 3H]
        r = jax.nn.sigmoid(gx[:, 0 * H:1 * H] + gh[:, 0 * H:1 * H])
        z = jax.nn.sigmoid(gx[:, 1 * H:2 * H] + gh[:, 1 * H:2 * H])
        n = jnp.tanh(gx[:, 2 * H:3 * H] + r * gh[:, 2 * H:3 * H])
        return (1.0 - z) * n + z * h

    # ---- fused forward / backward GRU recurrence (independent directions interleaved) ----
    def body(t, carry):
        h_f, h_b = carry
        tb = T - 1 - t

        # forward direction at step t
        gx_f = gx_scr[:, pl.ds(t, 1), :].reshape(B, 2 * H3)[:, :H3]
        h_f_new = gru_update(gx_f, h_f, whh_f, bhh_f)
        h_f = jnp.where(lengths > t, h_f_new, h_f)                    # pack_padded masking
        h_scr[:, pl.ds(t, 1), pl.ds(0, H)] = h_f.reshape(B, 1, H)

        # backward direction at step T-1-t
        gx_b = gx_scr[:, pl.ds(tb, 1), :].reshape(B, 2 * H3)[:, H3:]
        h_b_new = gru_update(gx_b, h_b, whh_b, bhh_b)
        h_b = jnp.where(lengths > tb, h_b_new, h_b)
        h_scr[:, pl.ds(tb, 1), pl.ds(H, H)] = h_b.reshape(B, 1, H)

        return (h_f, h_b)

    h0 = jnp.zeros((B, H), jnp.float32)
    lax.fori_loop(0, T, body, (h0, h0), unroll=True)

    # ---- attention pooling (g2r -> tanh -> score with u_s -> masked softmax) ----
    t_iota = lax.broadcasted_iota(jnp.int32, (B, T), 1)
    valid = t_iota < lengths                                          # [B, T] bool
    maskf = valid.astype(jnp.float32)

    hseq = h_scr[...]                                                 # [B, T, 2H]
    zrep = jnp.tanh(
        jnp.dot(hseq.reshape(B * T, H2), wg_ref[...],
                preferred_element_type=jnp.float32) + bg_ref[...])    # [B*T, R]
    scores = jnp.sum(zrep * us_ref[...], axis=-1).reshape(B, T)       # [B, T]
    scores = jnp.where(valid, scores, jnp.float32(-1e30))
    scores = scores - jnp.max(scores, axis=1, keepdims=True)
    e = jnp.exp(scores) * maskf
    denom = jnp.maximum(jnp.sum(e, axis=1, keepdims=True), jnp.float32(1e-30))
    attn = e * pl.reciprocal(denom, approx=True)                      # [B, T]
    pooled = jnp.sum(hseq * attn.reshape(B, T, 1), axis=1)            # [B, 2H]

    # ---- output projection (padded to 128 lanes in the wrapper) + sigmoid ----
    out_ref[...] = jax.nn.sigmoid(
        jnp.dot(pooled, wo_ref[...], preferred_element_type=jnp.float32) + bo_ref[...])


def sentence_encoder_forward(x, lengths, params, *, block_b=8):
    B, T, I = x.shape
    H = params["w_hh_f"].shape[0]
    O = params["w_r2o"].shape[1]

    # Pad the batch so it tiles into sublane-friendly blocks of `block_b` sentences.
    n_blocks = pl.cdiv(B, block_b)
    B_pad = n_blocks * block_b
    x_p = jnp.pad(x.astype(jnp.float32), ((0, B_pad - B), (0, 0), (0, 0)))
    len_p = jnp.pad(lengths.astype(jnp.int32), (0, B_pad - B)).reshape(B_pad, 1)

    # Fuse both directions' input projections into a single [I, 6H] operand and pad
    # the output projection to a lane-dense 128-wide slab (sliced back below).
    w_ih = jnp.concatenate([params["w_ih_f"], params["w_ih_b"]], axis=1)       # [I, 6H]
    b_ih = jnp.concatenate([params["b_ih_f"], params["b_ih_b"]], axis=1)       # [1, 6H]
    w_o = jnp.pad(params["w_r2o"], ((0, 0), (0, O_PAD - O)))                   # [2H, 128]
    b_o = jnp.pad(params["b_r2o"], ((0, 0), (0, O_PAD - O)))                   # [1, 128]

    weights = (
        w_ih, b_ih,
        params["w_hh_f"], params["b_hh_f"],
        params["w_hh_b"], params["b_hh_b"],
        params["w_g2r"], params["b_g2r"], params["u_s"],
        w_o, b_o,
    )

    def full_spec(a):
        nd = a.ndim
        return pl.BlockSpec(a.shape, lambda b, _nd=nd: (0,) * _nd)

    grid_spec = pltpu.PrefetchScalarGridSpec(
        num_scalar_prefetch=0,
        grid=(n_blocks,),
        in_specs=[
            pl.BlockSpec((block_b, T, I), lambda b: (b, 0, 0)),
            pl.BlockSpec((block_b, 1), lambda b: (b, 0)),
            *[full_spec(w) for w in weights],
        ],
        out_specs=pl.BlockSpec((block_b, O_PAD), lambda b: (b, 0)),
        scratch_shapes=[
            pltpu.VMEM((block_b, T, 6 * H), jnp.float32),   # cached input projections
            pltpu.VMEM((block_b, T, 2 * H), jnp.float32),   # [fwd | bwd] hidden states
        ],
    )

    out = pl.pallas_call(
        _sentence_encoder_kernel,
        out_shape=jax.ShapeDtypeStruct((B_pad, O_PAD), jnp.float32),
        grid_spec=grid_spec,
        compiler_params=pltpu.CompilerParams(
            dimension_semantics=("parallel",)),  # sentence blocks shard over TCs on v7x
    )(x_p, len_p, *weights)

    return out[:B, :O].reshape(1, B, O)


def reference_forward(x, lengths, p):
    """Pure-JAX reference with identical semantics (for sanity check)."""
    B, T, I = x.shape
    H = p["w_hh_f"].shape[0]
    mask = (jnp.arange(T)[None, :] < lengths[:, None]).astype(jnp.float32)

    def cell(x_t, h, wih, whh, bih, bhh):
        gx = x_t @ wih + bih
        gh = h @ whh + bhh
        r = jax.nn.sigmoid(gx[:, :H] + gh[:, :H])
        z = jax.nn.sigmoid(gx[:, H:2 * H] + gh[:, H:2 * H])
        n = jnp.tanh(gx[:, 2 * H:] + r * gh[:, 2 * H:])
        return (1.0 - z) * n + z * h

    h = jnp.zeros((B, H), jnp.float32)
    hf = []
    for t in range(T):
        h_new = cell(x[:, t], h, p["w_ih_f"], p["w_hh_f"], p["b_ih_f"], p["b_hh_f"])
        h = mask[:, t:t + 1] * h_new + (1.0 - mask[:, t:t + 1]) * h
        hf.append(h)
    hf = jnp.stack(hf, axis=1)

    h = jnp.zeros((B, H), jnp.float32)
    hb = [None] * T
    for t in range(T - 1, -1, -1):
        h_new = cell(x[:, t], h, p["w_ih_b"], p["w_hh_b"], p["b_ih_b"], p["b_hh_b"])
        h = mask[:, t:t + 1] * h_new + (1.0 - mask[:, t:t + 1]) * h
        hb[t] = h
    hb = jnp.stack(hb, axis=1)

    hseq = jnp.concatenate([hf, hb], axis=-1)
    z = jnp.tanh(hseq @ p["w_g2r"] + p["b_g2r"])
    scores = jnp.sum(z * p["u_s"], axis=-1)
    scores = jnp.where(mask > 0, scores, -1e30)
    scores = scores - jnp.max(scores, axis=1, keepdims=True)
    e = jnp.exp(scores) * mask
    attn = e / jnp.sum(e, axis=1, keepdims=True)
    pooled = jnp.sum(hseq * attn[:, :, None], axis=1)
    return jax.nn.sigmoid(pooled @ p["w_r2o"] + p["b_r2o"])[None]


if __name__ == "__main__":
    # Small shapes consistent with the module: B sentences, T words, I word-emb dim.
    B, T = 2, 8
    I, H, R, O = 16, 32, 16, 4          # input_size, hidden_size, repr_size, output_size

    key = jax.random.PRNGKey(0)
    keys = jax.random.split(key, 16)
    k_gru = 1.0 / jnp.sqrt(H)
    k_lin = 1.0 / jnp.sqrt(2 * H)

    def unif(kk, shape, lim):
        return jax.random.uniform(kk, shape, jnp.float32, -lim, lim)

    params = {
        "w_ih_f": unif(keys[0], (I, 3 * H), k_gru),
        "w_hh_f": unif(keys[1], (H, 3 * H), k_gru),
        "b_ih_f": unif(keys[2], (1, 3 * H), k_gru),
        "b_hh_f": unif(keys[3], (1, 3 * H), k_gru),
        "w_ih_b": unif(keys[4], (I, 3 * H), k_gru),
        "w_hh_b": unif(keys[5], (H, 3 * H), k_gru),
        "b_ih_b": unif(keys[6], (1, 3 * H), k_gru),
        "b_hh_b": unif(keys[7], (1, 3 * H), k_gru),
        "w_g2r": unif(keys[8], (2 * H, R), k_lin),
        "b_g2r": unif(keys[9], (1, R), k_lin),
        "u_s": jax.random.uniform(keys[10], (1, R), jnp.float32, 0.0, 1.0),
        "w_r2o": unif(keys[11], (2 * H, O), k_lin),
        "b_r2o": unif(keys[12], (1, O), k_lin),
    }

    x = jax.random.normal(keys[13], (B, T, I), jnp.float32)
    lengths = jnp.array([8, 5], dtype=jnp.int32)   # sorted descending, as pack_padded requires

    out = sentence_encoder_forward(x, lengths, params)
    out = jax.block_until_ready(out)

    ref = reference_forward(x, lengths, params)
    assert out.shape == (1, B, O), out.shape
    assert jnp.allclose(out, ref, atol=1e-2, rtol=1e-2), (
        f"max abs diff {jnp.max(jnp.abs(out - ref))}")

    print("KERNEL_OK")
</pallas_src>

<mosaic_0001>
module attributes {stable_mosaic.version = 11 : i64} {
  func.func @_sentence_encoder_kernel(%arg0: i32, %arg1: memref<8x8x16xf32, #tpu.memory_space<vmem>>, %arg2: memref<8x1xi32, #tpu.memory_space<vmem>>, %arg3: memref<16x192xf32, #tpu.memory_space<vmem>>, %arg4: memref<1x192xf32, #tpu.memory_space<vmem>>, %arg5: memref<32x96xf32, #tpu.memory_space<vmem>>, %arg6: memref<1x96xf32, #tpu.memory_space<vmem>>, %arg7: memref<32x96xf32, #tpu.memory_space<vmem>>, %arg8: memref<1x96xf32, #tpu.memory_space<vmem>>, %arg9: memref<64x16xf32, #tpu.memory_space<vmem>>, %arg10: memref<1x16xf32, #tpu.memory_space<vmem>>, %arg11: memref<1x16xf32, #tpu.memory_space<vmem>>, %arg12: memref<64x128xf32, #tpu.memory_space<vmem>>, %arg13: memref<1x128xf32, #tpu.memory_space<vmem>>, %arg14: memref<8x128xf32, #tpu.memory_space<vmem>>, %arg15: memref<8x8x192xf32, #tpu.memory_space<vmem>>, %arg16: memref<8x8x64xf32, #tpu.memory_space<vmem>>) attributes {dimension_semantics = [#tpu.dimension_semantics<parallel>], iteration_bounds = array<i64: 1>, scalar_prefetch = 0 : i64, scratch_operands = 2 : i64, tpu.core_type = #tpu.core_type<tc>, window_params = [{transform_indices = @transform_0, window_bounds = array<i64: 8, 8, 16>}, {transform_indices = @transform_1, window_bounds = array<i64: 8, 1>}, {pipeline_mode = #tpu.pipeline_mode<synchronous>, transform_indices = @transform_2, window_bounds = array<i64: 16, 192>}, {pipeline_mode = #tpu.pipeline_mode<synchronous>, transform_indices = @transform_3, window_bounds = array<i64: 1, 192>}, {pipeline_mode = #tpu.pipeline_mode<synchronous>, transform_indices = @transform_4, window_bounds = array<i64: 32, 96>}, {pipeline_mode = #tpu.pipeline_mode<synchronous>, transform_indices = @transform_5, window_bounds = array<i64: 1, 96>}, {pipeline_mode = #tpu.pipeline_mode<synchronous>, transform_indices = @transform_6, window_bounds = array<i64: 32, 96>}, {pipeline_mode = #tpu.pipeline_mode<synchronous>, transform_indices = @transform_7, window_bounds = array<i64: 1, 96>}, {pipeline_mode = #tpu.pipeline_mode<synchronous>, transform_indices = @transform_8, window_bounds = array<i64: 64, 16>}, {pipeline_mode = #tpu.pipeline_mode<synchronous>, transform_indices = @transform_9, window_bounds = array<i64: 1, 16>}, {pipeline_mode = #tpu.pipeline_mode<synchronous>, transform_indices = @transform_10, window_bounds = array<i64: 1, 16>}, {pipeline_mode = #tpu.pipeline_mode<synchronous>, transform_indices = @transform_11, window_bounds = array<i64: 64, 128>}, {pipeline_mode = #tpu.pipeline_mode<synchronous>, transform_indices = @transform_12, window_bounds = array<i64: 1, 128>}, {transform_indices = @transform_13, window_bounds = array<i64: 8, 128>}]} {
    %c0 = arith.constant 0 : index
    %c0_0 = arith.constant 0 : index
    %0 = vector.load %arg2[%c0, %c0_0] : memref<8x1xi32, #tpu.memory_space<vmem>>, vector<8x1xi32>
    %c0_1 = arith.constant 0 : index
    %c0_2 = arith.constant 0 : index
    %c0_3 = arith.constant 0 : index
    %1 = vector.load %arg1[%c0_1, %c0_2, %c0_3] : memref<8x8x16xf32, #tpu.memory_space<vmem>>, vector<8x8x16xf32>
    %2 = vector.shape_cast %1 : vector<8x8x16xf32> to vector<64x16xf32>
    %c0_4 = arith.constant 0 : index
    %c0_5 = arith.constant 0 : index
    %3 = vector.load %arg3[%c0_4, %c0_5] : memref<16x192xf32, #tpu.memory_space<vmem>>, vector<16x192xf32>
    %cst = arith.constant dense<0.000000e+00> : vector<64x192xf32>
    %4 = tpu.matmul %2, %3, %cst {dimension_numbers = #tpu.dot_dimension_numbers<[1], [0], [0], [1], [0, 0, 1, 1], [], []>} : vector<64x16xf32>, vector<16x192xf32>, vector<64x192xf32> -> vector<64x192xf32>
    %c0_6 = arith.constant 0 : index
    %c0_7 = arith.constant 0 : index
    %5 = vector.load %arg4[%c0_6, %c0_7] : memref<1x192xf32, #tpu.memory_space<vmem>>, vector<1x192xf32>
    %6 = vector.broadcast %5 : vector<1x192xf32> to vector<64x192xf32>
    %7 = arith.addf %4, %6 : vector<64x192xf32>
    %8 = vector.shape_cast %7 : vector<64x192xf32> to vector<8x8x192xf32>
    %c0_8 = arith.constant 0 : index
    %c0_9 = arith.constant 0 : index
    %c0_10 = arith.constant 0 : index
    %9 = vector.load %arg15[%c0_8, %c0_9, %c0_10] : memref<8x8x192xf32, #tpu.memory_space<vmem>>, vector<8x8x192xf32>
    tpu.vector_store %arg15[%c0_8, %c0_9, %c0_10], %8 {strides = array<i32>} : memref<8x8x192xf32, #tpu.memory_space<vmem>>, vector<8x8x192xf32>,
    %c0_11 = arith.constant 0 : index
    %c0_12 = arith.constant 0 : index
    %10 = vector.load %arg5[%c0_11, %c0_12] : memref<32x96xf32, #tpu.memory_space<vmem>>, vector<32x96xf32>
    %c0_13 = arith.constant 0 : index
    %c0_14 = arith.constant 0 : index
    %11 = vector.load %arg6[%c0_13, %c0_14] : memref<1x96xf32, #tpu.memory_space<vmem>>, vector<1x96xf32>
    %c0_15 = arith.constant 0 : index
    %c0_16 = arith.constant 0 : index
    %12 = vector.load %arg7[%c0_15, %c0_16] : memref<32x96xf32, #tpu.memory_space<vmem>>, vector<32x96xf32>
    %c0_17 = arith.constant 0 : index
    %c0_18 = arith.constant 0 : index
    %13 = vector.load %arg8[%c0_17, %c0_18] : memref<1x96xf32, #tpu.memory_space<vmem>>, vector<1x96xf32>
    %cst_19 = arith.constant 0.000000e+00 : f32
    %14 = vector.broadcast %cst_19 : f32 to vector<8x32xf32>
    %c0_i32 = arith.constant 0 : i32
    %c7_i32 = arith.constant 7 : i32
    %15 = arith.subi %c7_i32, %c0_i32 : i32
    %c0_20 = arith.constant 0 : index
    %16 = arith.index_cast %c0_i32 : i32 to index
    %c0_21 = arith.constant 0 : index
    %17 = vector.load %arg15[%c0_20, %16, %c0_21] : memref<8x8x192xf32, #tpu.memory_space<vmem>>, vector<8x1x192xf32>
    %18 = vector.shape_cast %17 : vector<8x1x192xf32> to vector<8x192xf32>
    %19 = vector.extract_strided_slice %18 {offsets = [0, 0], sizes = [8, 96], strides = [1, 1]} : vector<8x192xf32> to vector<8x96xf32>
    %cst_22 = arith.constant dense<0.000000e+00> : vector<8x96xf32>
    %20 = tpu.matmul %14, %10, %cst_22 {dimension_numbers = #tpu.dot_dimension_numbers<[1], [0], [0], [1], [0, 0, 1, 1], [], []>} : vector<8x32xf32>, vector<32x96xf32>, vector<8x96xf32> -> vector<8x96xf32>
    %21 = vector.broadcast %11 : vector<1x96xf32> to vector<8x96xf32>
    %22 = arith.addf %20, %21 : vector<8x96xf32>
    %23 = vector.extract_strided_slice %19 {offsets = [0, 0], sizes = [8, 32], strides = [1, 1]} : vector<8x96xf32> to vector<8x32xf32>
    %24 = vector.extract_strided_slice %22 {offsets = [0, 0], sizes = [8, 32], strides = [1, 1]} : vector<8x96xf32> to vector<8x32xf32>
    %25 = arith.addf %23, %24 : vector<8x32xf32>
    %26 = arith.negf %25 : vector<8x32xf32>
    %27 = math.exp %26 : vector<8x32xf32>
    %cst_23 = arith.constant 1.000000e+00 : f32
    %28 = vector.broadcast %cst_23 : f32 to vector<8x32xf32>
    %29 = arith.addf %28, %27 : vector<8x32xf32>
    %30 = arith.divf %28, %29 : vector<8x32xf32>
    %31 = vector.extract_strided_slice %19 {offsets = [0, 32], sizes = [8, 32], strides = [1, 1]} : vector<8x96xf32> to vector<8x32xf32>
    %32 = vector.extract_strided_slice %22 {offsets = [0, 32], sizes = [8, 32], strides = [1, 1]} : vector<8x96xf32> to vector<8x32xf32>
    %33 = arith.addf %31, %32 : vector<8x32xf32>
    %34 = arith.negf %33 : vector<8x32xf32>
    %35 = math.exp %34 : vector<8x32xf32>
    %cst_24 = arith.constant 1.000000e+00 : f32
    %36 = vector.broadcast %cst_24 : f32 to vector<8x32xf32>
    %37 = arith.addf %36, %35 : vector<8x32xf32>
    %38 = arith.divf %36, %37 : vector<8x32xf32>
    %39 = vector.extract_strided_slice %19 {offsets = [0, 64], sizes = [8, 32], strides = [1, 1]} : vector<8x96xf32> to vector<8x32xf32>
    %40 = vector.extract_strided_slice %22 {offsets = [0, 64], sizes = [8, 32], strides = [1, 1]} : vector<8x96xf32> to vector<8x32xf32>
    %41 = arith.mulf %30, %40 : vector<8x32xf32>
    %42 = arith.addf %39, %41 : vector<8x32xf32>
    %43 = math.tanh %42 : vector<8x32xf32>
    %cst_25 = arith.constant 1.000000e+00 : f32
    %44 = vector.broadcast %cst_25 : f32 to vector<8x32xf32>
    %45 = arith.subf %44, %38 : vector<8x32xf32>
    %46 = arith.mulf %45, %43 : vector<8x32xf32>
    %47 = arith.mulf %38, %14 : vector<8x32xf32>
    %48 = arith.addf %46, %47 : vector<8x32xf32>
    %49 = vector.broadcast %c0_i32 : i32 to vector<8x1xi32>
    %50 = arith.cmpi sgt, %0, %49 : vector<8x1xi32>
    %51 = vector.shape_cast %50 : vector<8x1xi1> to vector<8x1xi1>
    %52 = vector.broadcast %51 : vector<8x1xi1> to vector<8x32xi1>
    %53 = arith.select %52, %48, %14 : vector<8x32xi1>, vector<8x32xf32>
    %54 = vector.shape_cast %53 : vector<8x32xf32> to vector<8x1x32xf32>
    %c0_26 = arith.constant 0 : index
    %55 = arith.index_cast %c0_i32 : i32 to index
    %c0_27 = arith.constant 0 : index
    %56 = vector.load %arg16[%c0_26, %55, %c0_27] : memref<8x8x64xf32, #tpu.memory_space<vmem>>, vector<8x1x32xf32>
    tpu.vector_store %arg16[%c0_26, %55, %c0_27], %54 {strides = array<i32>} : memref<8x8x64xf32, #tpu.memory_space<vmem>>, vector<8x1x32xf32>,
    %c0_28 = arith.constant 0 : index
    %57 = arith.index_cast %15 : i32 to index
    %c0_29 = arith.constant 0 : index
    %58 = vector.load %arg15[%c0_28, %57, %c0_29] : memref<8x8x192xf32, #tpu.memory_space<vmem>>, vector<8x1x192xf32>
    %59 = vector.shape_cast %58 : vector<8x1x192xf32> to vector<8x192xf32>
    %60 = vector.extract_strided_slice %59 {offsets = [0, 96], sizes = [8, 96], strides = [1, 1]} : vector<8x192xf32> to vector<8x96xf32>
    %cst_30 = arith.constant dense<0.000000e+00> : vector<8x96xf32>
    %61 = tpu.matmul %14, %12, %cst_30 {dimension_numbers = #tpu.dot_dimension_numbers<[1], [0], [0], [1], [0, 0, 1, 1], [], []>} : vector<8x32xf32>, vector<32x96xf32>, vector<8x96xf32> -> vector<8x96xf32>
    %62 = vector.broadcast %13 : vector<1x96xf32> to vector<8x96xf32>
    %63 = arith.addf %61, %62 : vector<8x96xf32>
    %64 = vector.extract_strided_slice %60 {offsets = [0, 0], sizes = [8, 32], strides = [1, 1]} : vector<8x96xf32> to vector<8x32xf32>
    %65 = vector.extract_strided_slice %63 {offsets = [0, 0], sizes = [8, 32], strides = [1, 1]} : vector<8x96xf32> to vector<8x32xf32>
    %66 = arith.addf %64, %65 : vector<8x32xf32>
    %67 = arith.negf %66 : vector<8x32xf32>
    %68 = math.exp %67 : vector<8x32xf32>
    %cst_31 = arith.constant 1.000000e+00 : f32
    %69 = vector.broadcast %cst_31 : f32 to vector<8x32xf32>
    %70 = arith.addf %69, %68 : vector<8x32xf32>
    %71 = arith.divf %69, %70 : vector<8x32xf32>
    %72 = vector.extract_strided_slice %60 {offsets = [0, 32], sizes = [8, 32], strides = [1, 1]} : vector<8x96xf32> to vector<8x32xf32>
    %73 = vector.extract_strided_slice %63 {offsets = [0, 32], sizes = [8, 32], strides = [1, 1]} : vector<8x96xf32> to vector<8x32xf32>
    %74 = arith.addf %72, %73 : vector<8x32xf32>
    %75 = arith.negf %74 : vector<8x32xf32>
    %76 = math.exp %75 : vector<8x32xf32>
    %cst_32 = arith.constant 1.000000e+00 : f32
    %77 = vector.broadcast %cst_32 : f32 to vector<8x32xf32>
    %78 = arith.addf %77, %76 : vector<8x32xf32>
    %79 = arith.divf %77, %78 : vector<8x32xf32>
    %80 = vector.extract_strided_slice %60 {offsets = [0, 64], sizes = [8, 32], strides = [1, 1]} : vector<8x96xf32> to vector<8x32xf32>
    %81 = vector.extract_strided_slice %63 {offsets = [0, 64], sizes = [8, 32], strides = [1, 1]} : vector<8x96xf32> to vector<8x32xf32>
    %82 = arith.mulf %71, %81 : vector<8x32xf32>
    %83 = arith.addf %80, %82 : vector<8x32xf32>
    %84 = math.tanh %83 : vector<8x32xf32>
    %cst_33 = arith.constant 1.000000e+00 : f32
    %85 = vector.broadcast %cst_33 : f32 to vector<8x32xf32>
    %86 = arith.subf %85, %79 : vector<8x32xf32>
    %87 = arith.mulf %86, %84 : vector<8x32xf32>
    %88 = arith.mulf %79, %14 : vector<8x32xf32>
    %89 = arith.addf %87, %88 : vector<8x32xf32>
    %90 = vector.broadcast %15 : i32 to vector<8x1xi32>
    %91 = arith.cmpi sgt, %0, %90 : vector<8x1xi32>
    %92 = vector.shape_cast %91 : vector<8x1xi1> to vector<8x1xi1>
    %93 = vector.broadcast %92 : vector<8x1xi1> to vector<8x32xi1>
    %94 = arith.select %93, %89, %14 : vector<8x32xi1>, vector<8x32xf32>
    %95 = vector.shape_cast %94 : vector<8x32xf32> to vector<8x1x32xf32>
    %c0_34 = arith.constant 0 : index
    %96 = arith.index_cast %15 : i32 to index
    %c32 = arith.constant 32 : index
    %97 = vector.load %arg16[%c0_34, %96, %c32] : memref<8x8x64xf32, #tpu.memory_space<vmem>>, vector<8x1x32xf32>
    tpu.vector_store %arg16[%c0_34, %96, %c32], %95 {strides = array<i32>} : memref<8x8x64xf32, #tpu.memory_space<vmem>>, vector<8x1x32xf32>,
    %c1_i32 = arith.constant 1 : i32
    %c7_i32_35 = arith.constant 7 : i32
    %98 = arith.subi %c7_i32_35, %c1_i32 : i32
    %c0_36 = arith.constant 0 : index
    %99 = arith.index_cast %c1_i32 : i32 to index
    %c0_37 = arith.constant 0 : index
    %100 = vector.load %arg15[%c0_36, %99, %c0_37] : memref<8x8x192xf32, #tpu.memory_space<vmem>>, vector<8x1x192xf32>
    %101 = vector.shape_cast %100 : vector<8x1x192xf32> to vector<8x192xf32>
    %102 = vector.extract_strided_slice %101 {offsets = [0, 0], sizes = [8, 96], strides = [1, 1]} : vector<8x192xf32> to vector<8x96xf32>
    %cst_38 = arith.constant dense<0.000000e+00> : vector<8x96xf32>
    %103 = tpu.matmul %53, %10, %cst_38 {dimension_numbers = #tpu.dot_dimension_numbers<[1], [0], [0], [1], [0, 0, 1, 1], [], []>} : vector<8x32xf32>, vector<32x96xf32>, vector<8x96xf32> -> vector<8x96xf32>
    %104 = vector.broadcast %11 : vector<1x96xf32> to vector<8x96xf32>
    %105 = arith.addf %103, %104 : vector<8x96xf32>
    %106 = vector.extract_strided_slice %102 {offsets = [0, 0], sizes = [8, 32], strides = [1, 1]} : vector<8x96xf32> to vector<8x32xf32>
    %107 = vector.extract_strided_slice %105 {offsets = [0, 0], sizes = [8, 32], strides = [1, 1]} : vector<8x96xf32> to vector<8x32xf32>
    %108 = arith.addf %106, %107 : vector<8x32xf32>
    %109 = arith.negf %108 : vector<8x32xf32>
    %110 = math.exp %109 : vector<8x32xf32>
    %cst_39 = arith.constant 1.000000e+00 : f32
    %111 = vector.broadcast %cst_39 : f32 to vector<8x32xf32>
    %112 = arith.addf %111, %110 : vector<8x32xf32>
    %113 = arith.divf %111, %112 : vector<8x32xf32>
    %114 = vector.extract_strided_slice %102 {offsets = [0, 32], sizes = [8, 32], strides = [1, 1]} : vector<8x96xf32> to vector<8x32xf32>
    %115 = vector.extract_strided_slice %105 {offsets = [0, 32], sizes = [8, 32], strides = [1, 1]} : vector<8x96xf32> to vector<8x32xf32>
    %116 = arith.addf %114, %115 : vector<8x32xf32>
    %117 = arith.negf %116 : vector<8x32xf32>
    %118 = math.exp %117 : vector<8x32xf32>
    %cst_40 = arith.constant 1.000000e+00 : f32
    %119 = vector.broadcast %cst_40 : f32 to vector<8x32xf32>
    %120 = arith.addf %119, %118 : vector<8x32xf32>
    %121 = arith.divf %119, %120 : vector<8x32xf32>
    %122 = vector.extract_strided_slice %102 {offsets = [0, 64], sizes = [8, 32], strides = [1, 1]} : vector<8x96xf32> to vector<8x32xf32>
    %123 = vector.extract_strided_slice %105 {offsets = [0, 64], sizes = [8, 32], strides = [1, 1]} : vector<8x96xf32> to vector<8x32xf32>
    %124 = arith.mulf %113, %123 : vector<8x32xf32>
    %125 = arith.addf %122, %124 : vector<8x32xf32>
    %126 = math.tanh %125 : vector<8x32xf32>
    %cst_41 = arith.constant 1.000000e+00 : f32
    %127 = vector.broadcast %cst_41 : f32 to vector<8x32xf32>
    %128 = arith.subf %127, %121 : vector<8x32xf32>
    %129 = arith.mulf %128, %126 : vector<8x32xf32>
    %130 = arith.mulf %121, %53 : vector<8x32xf32>
    %131 = arith.addf %129, %130 : vector<8x32xf32>
    %132 = vector.broadcast %c1_i32 : i32 to vector<8x1xi32>
    %133 = arith.cmpi sgt, %0, %132 : vector<8x1xi32>
    %134 = vector.shape_cast %133 : vector<8x1xi1> to vector<8x1xi1>
    %135 = vector.broadcast %134 : vector<8x1xi1> to vector<8x32xi1>
    %136 = arith.select %135, %131, %53 : vector<8x32xi1>, vector<8x32xf32>
    %137 = vector.shape_cast %136 : vector<8x32xf32> to vector<8x1x32xf32>
    %c0_42 = arith.constant 0 : index
    %138 = arith.index_cast %c1_i32 : i32 to index
    %c0_43 = arith.constant 0 : index
    %139 = vector.load %arg16[%c0_42, %138, %c0_43] : memref<8x8x64xf32, #tpu.memory_space<vmem>>, vector<8x1x32xf32>
    tpu.vector_store %arg16[%c0_42, %138, %c0_43], %137 {strides = array<i32>} : memref<8x8x64xf32, #tpu.memory_space<vmem>>, vector<8x1x32xf32>,
    %c0_44 = arith.constant 0 : index
    %140 = arith.index_cast %98 : i32 to index
    %c0_45 = arith.constant 0 : index
    %141 = vector.load %arg15[%c0_44, %140, %c0_45] : memref<8x8x192xf32, #tpu.memory_space<vmem>>, vector<8x1x192xf32>
    %142 = vector.shape_cast %141 : vector<8x1x192xf32> to vector<8x192xf32>
    %143 = vector.extract_strided_slice %142 {offsets = [0, 96], sizes = [8, 96], strides = [1, 1]} : vector<8x192xf32> to vector<8x96xf32>
    %cst_46 = arith.constant dense<0.000000e+00> : vector<8x96xf32>
    %144 = tpu.matmul %94, %12, %cst_46 {dimension_numbers = #tpu.dot_dimension_numbers<[1], [0], [0], [1], [0, 0, 1, 1], [], []>} : vector<8x32xf32>, vector<32x96xf32>, vector<8x96xf32> -> vector<8x96xf32>
    %145 = vector.broadcast %13 : vector<1x96xf32> to vector<8x96xf32>
    %146 = arith.addf %144, %145 : vector<8x96xf32>
    %147 = vector.extract_strided_slice %143 {offsets = [0, 0], sizes = [8, 32], strides = [1, 1]} : vector<8x96xf32> to vector<8x32xf32>
    %148 = vector.extract_strided_slice %146 {offsets = [0, 0], sizes = [8, 32], strides = [1, 1]} : vector<8x96xf32> to vector<8x32xf32>
    %149 = arith.addf %147, %148 : vector<8x32xf32>
    %150 = arith.negf %149 : vector<8x32xf32>
    %151 = math.exp %150 : vector<8x32xf32>
    %cst_47 = arith.constant 1.000000e+00 : f32
    %152 = vector.broadcast %cst_47 : f32 to vector<8x32xf32>
    %153 = arith.addf %152, %151 : vector<8x32xf32>
    %154 = arith.divf %152, %153 : vector<8x32xf32>
    %155 = vector.extract_strided_slice %143 {offsets = [0, 32], sizes = [8, 32], strides = [1, 1]} : vector<8x96xf32> to vector<8x32xf32>
    %156 = vector.extract_strided_slice %146 {offsets = [0, 32], sizes = [8, 32], strides = [1, 1]} : vector<8x96xf32> to vector<8x32xf32>
    %157 = arith.addf %155, %156 : vector<8x32xf32>
    %158 = arith.negf %157 : vector<8x32xf32>
    %159 = math.exp %158 : vector<8x32xf32>
    %cst_48 = arith.constant 1.000000e+00 : f32
    %160 = vector.broadcast %cst_48 : f32 to vector<8x32xf32>
    %161 = arith.addf %160, %159 : vector<8x32xf32>
    %162 = arith.divf %160, %161 : vector<8x32xf32>
    %163 = vector.extract_strided_slice %143 {offsets = [0, 64], sizes = [8, 32], strides = [1, 1]} : vector<8x96xf32> to vector<8x32xf32>
    %164 = vector.extract_strided_slice %146 {offsets = [0, 64], sizes = [8, 32], strides = [1, 1]} : vector<8x96xf32> to vector<8x32xf32>
    %165 = arith.mulf %154, %164 : vector<8x32xf32>
    %166 = arith.addf %163, %165 : vector<8x32xf32>
    %167 = math.tanh %166 : vector<8x32xf32>
    %cst_49 = arith.constant 1.000000e+00 : f32
    %168 = vector.broadcast %cst_49 : f32 to vector<8x32xf32>
    %169 = arith.subf %168, %162 : vector<8x32xf32>
    %170 = arith.mulf %169, %167 : vector<8x32xf32>
    %171 = arith.mulf %162, %94 : vector<8x32xf32>
    %172 = arith.addf %170, %171 : vector<8x32xf32>
    %173 = vector.broadcast %98 : i32 to vector<8x1xi32>
    %174 = arith.cmpi sgt, %0, %173 : vector<8x1xi32>
    %175 = vector.shape_cast %174 : vector<8x1xi1> to vector<8x1xi1>
    %176 = vector.broadcast %175 : vector<8x1xi1> to vector<8x32xi1>
    %177 = arith.select %176, %172, %94 : vector<8x32xi1>, vector<8x32xf32>
    %178 = vector.shape_cast %177 : vector<8x32xf32> to vector<8x1x32xf32>
    %c0_50 = arith.constant 0 : index
    %179 = arith.index_cast %98 : i32 to index
    %c32_51 = arith.constant 32 : index
    %180 = vector.load %arg16[%c0_50, %179, %c32_51] : memref<8x8x64xf32, #tpu.memory_space<vmem>>, vector<8x1x32xf32>
    tpu.vector_store %arg16[%c0_50, %179, %c32_51], %178 {strides = array<i32>} : memref<8x8x64xf32, #tpu.memory_space<vmem>>, vector<8x1x32xf32>,
    %c2_i32 = arith.constant 2 : i32
    %c7_i32_52 = arith.constant 7 : i32
    %181 = arith.subi %c7_i32_52, %c2_i32 : i32
    %c0_53 = arith.constant 0 : index
    %182 = arith.index_cast %c2_i32 : i32 to index
    %c0_54 = arith.constant 0 : index
    %183 = vector.load %arg15[%c0_53, %182, %c0_54] : memref<8x8x192xf32, #tpu.memory_space<vmem>>, vector<8x1x192xf32>
    %184 = vector.shape_cast %183 : vector<8x1x192xf32> to vector<8x192xf32>
    %185 = vector.extract_strided_slice %184 {offsets = [0, 0], sizes = [8, 96], strides = [1, 1]} : vector<8x192xf32> to vector<8x96xf32>
    %cst_55 = arith.constant dense<0.000000e+00> : vector<8x96xf32>
    %186 = tpu.matmul %136, %10, %cst_55 {dimension_numbers = #tpu.dot_dimension_numbers<[1], [0], [0], [1], [0, 0, 1, 1], [], []>} : vector<8x32xf32>, vector<32x96xf32>, vector<8x96xf32> -> vector<8x96xf32>
    %187 = vector.broadcast %11 : vector<1x96xf32> to vector<8x96xf32>
    %188 = arith.addf %186, %187 : vector<8x96xf32>
    %189 = vector.extract_strided_slice %185 {offsets = [0, 0], sizes = [8, 32], strides = [1, 1]} : vector<8x96xf32> to vector<8x32xf32>
    %190 = vector.extract_strided_slice %188 {offsets = [0, 0], sizes = [8, 32], strides = [1, 1]} : vector<8x96xf32> to vector<8x32xf32>
    %191 = arith.addf %189, %190 : vector<8x32xf32>
    %192 = arith.negf %191 : vector<8x32xf32>
    %193 = math.exp %192 : vector<8x32xf32>
    %cst_56 = arith.constant 1.000000e+00 : f32
    %194 = vector.broadcast %cst_56 : f32 to vector<8x32xf32>
    %195 = arith.addf %194, %193 : vector<8x32xf32>
    %196 = arith.divf %194, %195 : vector<8x32xf32>
    %197 = vector.extract_strided_slice %185 {offsets = [0, 32], sizes = [8, 32], strides = [1, 1]} : vector<8x96xf32> to vector<8x32xf32>
    %198 = vector.extract_strided_slice %188 {offsets = [0, 32], sizes = [8, 32], strides = [1, 1]} : vector<8x96xf32> to vector<8x32xf32>
    %199 = arith.addf %197, %198 : vector<8x32xf32>
    %200 = arith.negf %199 : vector<8x32xf32>
    %201 = math.exp %200 : vector<8x32xf32>
    %cst_57 = arith.constant 1.000000e+00 : f32
    %202 = vector.broadcast %cst_57 : f32 to vector<8x32xf32>
    %203 = arith.addf %202, %201 : vector<8x32xf32>
    %204 = arith.divf %202, %203 : vector<8x32xf32>
    %205 = vector.extract_strided_slice %185 {offsets = [0, 64], sizes = [8, 32], strides = [1, 1]} : vector<8x96xf32> to vector<8x32xf32>
    %206 = vector.extract_strided_slice %188 {offsets = [0, 64], sizes = [8, 32], strides = [1, 1]} : vector<8x96xf32> to vector<8x32xf32>
    %207 = arith.mulf %196, %206 : vector<8x32xf32>
    %208 = arith.addf %205, %207 : vector<8x32xf32>
    %209 = math.tanh %208 : vector<8x32xf32>
    %cst_58 = arith.constant 1.000000e+00 : f32
    %210 = vector.broadcast %cst_58 : f32 to vector<8x32xf32>
    %211 = arith.subf %210, %204 : vector<8x32xf32>
    %212 = arith.mulf %211, %209 : vector<8x32xf32>
    %213 = arith.mulf %204, %136 : vector<8x32xf32>
    %214 = arith.addf %212, %213 : vector<8x32xf32>
    %215 = vector.broadcast %c2_i32 : i32 to vector<8x1xi32>
    %216 = arith.cmpi sgt, %0, %215 : vector<8x1xi32>
    %217 = vector.shape_cast %216 : vector<8x1xi1> to vector<8x1xi1>
    %218 = vector.broadcast %217 : vector<8x1xi1> to vector<8x32xi1>
    %219 = arith.select %218, %214, %136 : vector<8x32xi1>, vector<8x32xf32>
    %220 = vector.shape_cast %219 : vector<8x32xf32> to vector<8x1x32xf32>
    %c0_59 = arith.constant 0 : index
    %221 = arith.index_cast %c2_i32 : i32 to index
    %c0_60 = arith.constant 0 : index
    %222 = vector.load %arg16[%c0_59, %221, %c0_60] : memref<8x8x64xf32, #tpu.memory_space<vmem>>, vector<8x1x32xf32>
    tpu.vector_store %arg16[%c0_59, %221, %c0_60], %220 {strides = array<i32>} : memref<8x8x64xf32, #tpu.memory_space<vmem>>, vector<8x1x32xf32>,
    %c0_61 = arith.constant 0 : index
    %223 = arith.index_cast %181 : i32 to index
    %c0_62 = arith.constant 0 : index
    %224 = vector.load %arg15[%c0_61, %223, %c0_62] : memref<8x8x192xf32, #tpu.memory_space<vmem>>, vector<8x1x192xf32>
    %225 = vector.shape_cast %224 : vector<8x1x192xf32> to vector<8x192xf32>
    %226 = vector.extract_strided_slice %225 {offsets = [0, 96], sizes = [8, 96], strides = [1, 1]} : vector<8x192xf32> to vector<8x96xf32>
    %cst_63 = arith.constant dense<0.000000e+00> : vector<8x96xf32>
    %227 = tpu.matmul %177, %12, %cst_63 {dimension_numbers = #tpu.dot_dimension_numbers<[1], [0], [0], [1], [0, 0, 1, 1], [], []>} : vector<8x32xf32>, vector<32x96xf32>, vector<8x96xf32> -> vector<8x96xf32>
    %228 = vector.broadcast %13 : vector<1x96xf32> to vector<8x96xf32>
    %229 = arith.addf %227, %228 : vector<8x96xf32>
    %230 = vector.extract_strided_slice %226 {offsets = [0, 0], sizes = [8, 32], strides = [1, 1]} : vector<8x96xf32> to vector<8x32xf32>
    %231 = vector.extract_strided_slice %229 {offsets = [0, 0], sizes = [8, 32], strides = [1, 1]} : vector<8x96xf32> to vector<8x32xf32>
    %232 = arith.addf %230, %231 : vector<8x32xf32>
    %233 = arith.negf %232 : vector<8x32xf32>
    %234 = math.exp %233 : vector<8x32xf32>
    %cst_64 = arith.constant 1.000000e+00 : f32
    %235 = vector.broadcast %cst_64 : f32 to vector<8x32xf32>
    %236 = arith.addf %235, %234 : vector<8x32xf32>
    %237 = arith.divf %235, %236 : vector<8x32xf32>
    %238 = vector.extract_strided_slice %226 {offsets = [0, 32], sizes = [8, 32], strides = [1, 1]} : vector<8x96xf32> to vector<8x32xf32>
    %239 = vector.extract_strided_slice %229 {offsets = [0, 32], sizes = [8, 32], strides = [1, 1]} : vector<8x96xf32> to vector<8x32xf32>
    %240 = arith.addf %238, %239 : vector<8x32xf32>
    %241 = arith.negf %240 : vector<8x32xf32>
    %242 = math.exp %241 : vector<8x32xf32>
    %cst_65 = arith.constant 1.000000e+00 : f32
    %243 = vector.broadcast %cst_65 : f32 to vector<8x32xf32>
    %244 = arith.addf %243, %242 : vector<8x32xf32>
    %245 = arith.divf %243, %244 : vector<8x32xf32>
    %246 = vector.extract_strided_slice %226 {offsets = [0, 64], sizes = [8, 32], strides = [1, 1]} : vector<8x96xf32> to vector<8x32xf32>
    %247 = vector.extract_strided_slice %229 {offsets = [0, 64], sizes = [8, 32], strides = [1, 1]} : vector<8x96xf32> to vector<8x32xf32>
    %248 = arith.mulf %237, %247 : vector<8x32xf32>
    %249 = arith.addf %246, %248 : vector<8x32xf32>
    %250 = math.tanh %249 : vector<8x32xf32>
    %cst_66 = arith.constant 1.000000e+00 : f32
    %251 = vector.broadcast %cst_66 : f32 to vector<8x32xf32>
    %252 = arith.subf %251, %245 : vector<8x32xf32>
    %253 = arith.mulf %252, %250 : vector<8x32xf32>
    %254 = arith.mulf %245, %177 : vector<8x32xf32>
    %255 = arith.addf %253, %254 : vector<8x32xf32>
    %256 = vector.broadcast %181 : i32 to vector<8x1xi32>
    %257 = arith.cmpi sgt, %0, %256 : vector<8x1xi32>
    %258 = vector.shape_cast %257 : vector<8x1xi1> to vector<8x1xi1>
    %259 = vector.broadcast %258 : vector<8x1xi1> to vector<8x32xi1>
    %260 = arith.select %259, %255, %177 : vector<8x32xi1>, vector<8x32xf32>
    %261 = vector.shape_cast %260 : vector<8x32xf32> to vector<8x1x32xf32>
    %c0_67 = arith.constant 0 : index
    %262 = arith.index_cast %181 : i32 to index
    %c32_68 = arith.constant 32 : index
    %263 = vector.load %arg16[%c0_67, %262, %c32_68] : memref<8x8x64xf32, #tpu.memory_space<vmem>>, vector<8x1x32xf32>
    tpu.vector_store %arg16[%c0_67, %262, %c32_68], %261 {strides = array<i32>} : memref<8x8x64xf32, #tpu.memory_space<vmem>>, vector<8x1x32xf32>,
    %c3_i32 = arith.constant 3 : i32
    %c7_i32_69 = arith.constant 7 : i32
    %264 = arith.subi %c7_i32_69, %c3_i32 : i32
    %c0_70 = arith.constant 0 : index
    %265 = arith.index_cast %c3_i32 : i32 to index
    %c0_71 = arith.constant 0 : index
    %266 = vector.load %arg15[%c0_70, %265, %c0_71] : memref<8x8x192xf32, #tpu.memory_space<vmem>>, vector<8x1x192xf32>
    %267 = vector.shape_cast %266 : vector<8x1x192xf32> to vector<8x192xf32>
    %268 = vector.extract_strided_slice %267 {offsets = [0, 0], sizes = [8, 96], strides = [1, 1]} : vector<8x192xf32> to vector<8x96xf32>
    %cst_72 = arith.constant dense<0.000000e+00> : vector<8x96xf32>
    %269 = tpu.matmul %219, %10, %cst_72 {dimension_numbers = #tpu.dot_dimension_numbers<[1], [0], [0], [1], [0, 0, 1, 1], [], []>} : vector<8x32xf32>, vector<32x96xf32>, vector<8x96xf32> -> vector<8x96xf32>
    %270 = vector.broadcast %11 : vector<1x96xf32> to vector<8x96xf32>
    %271 = arith.addf %269, %270 : vector<8x96xf32>
    %272 = vector.extract_strided_slice %268 {offsets = [0, 0], sizes = [8, 32], strides = [1, 1]} : vector<8x96xf32> to vector<8x32xf32>
    %273 = vector.extract_strided_slice %271 {offsets = [0, 0], sizes = [8, 32], strides = [1, 1]} : vector<8x96xf32> to vector<8x32xf32>
    %274 = arith.addf %272, %273 : vector<8x32xf32>
    %275 = arith.negf %274 : vector<8x32xf32>
    %276 = math.exp %275 : vector<8x32xf32>
    %cst_73 = arith.constant 1.000000e+00 : f32
    %277 = vector.broadcast %cst_73 : f32 to vector<8x32xf32>
    %278 = arith.addf %277, %276 : vector<8x32xf32>
    %279 = arith.divf %277, %278 : vector<8x32xf32>
    %280 = vector.extract_strided_slice %268 {offsets = [0, 32], sizes = [8, 32], strides = [1, 1]} : vector<8x96xf32> to vector<8x32xf32>
    %281 = vector.extract_strided_slice %271 {offsets = [0, 32], sizes = [8, 32], strides = [1, 1]} : vector<8x96xf32> to vector<8x32xf32>
    %282 = arith.addf %280, %281 : vector<8x32xf32>
    %283 = arith.negf %282 : vector<8x32xf32>
    %284 = math.exp %283 : vector<8x32xf32>
    %cst_74 = arith.constant 1.000000e+00 : f32
    %285 = vector.broadcast %cst_74 : f32 to vector<8x32xf32>
    %286 = arith.addf %285, %284 : vector<8x32xf32>
    %287 = arith.divf %285, %286 : vector<8x32xf32>
    %288 = vector.extract_strided_slice %268 {offsets = [0, 64], sizes = [8, 32], strides = [1, 1]} : vector<8x96xf32> to vector<8x32xf32>
    %289 = vector.extract_strided_slice %271 {offsets = [0, 64], sizes = [8, 32], strides = [1, 1]} : vector<8x96xf32> to vector<8x32xf32>
    %290 = arith.mulf %279, %289 : vector<8x32xf32>
    %291 = arith.addf %288, %290 : vector<8x32xf32>
    %292 = math.tanh %291 : vector<8x32xf32>
    %cst_75 = arith.constant 1.000000e+00 : f32
    %293 = vector.broadcast %cst_75 : f32 to vector<8x32xf32>
    %294 = arith.subf %293, %287 : vector<8x32xf32>
    %295 = arith.mulf %294, %292 : vector<8x32xf32>
    %296 = arith.mulf %287, %219 : vector<8x32xf32>
    %297 = arith.addf %295, %296 : vector<8x32xf32>
    %298 = vector.broadcast %c3_i32 : i32 to vector<8x1xi32>
    %299 = arith.cmpi sgt, %0, %298 : vector<8x1xi32>
    %300 = vector.shape_cast %299 : vector<8x1xi1> to vector<8x1xi1>
    %301 = vector.broadcast %300 : vector<8x1xi1> to vector<8x32xi1>
    %302 = arith.select %301, %297, %219 : vector<8x32xi1>, vector<8x32xf32>
    %303 = vector.shape_cast %302 : vector<8x32xf32> to vector<8x1x32xf32>
    %c0_76 = arith.constant 0 : index
    %304 = arith.index_cast %c3_i32 : i32 to index
    %c0_77 = arith.constant 0 : index
    %305 = vector.load %arg16[%c0_76, %304, %c0_77] : memref<8x8x64xf32, #tpu.memory_space<vmem>>, vector<8x1x32xf32>
    tpu.vector_store %arg16[%c0_76, %304, %c0_77], %303 {strides = array<i32>} : memref<8x8x64xf32, #tpu.memory_space<vmem>>, vector<8x1x32xf32>,
    %c0_78 = arith.constant 0 : index
    %306 = arith.index_cast %264 : i32 to index
    %c0_79 = arith.constant 0 : index
    %307 = vector.load %arg15[%c0_78, %306, %c0_79] : memref<8x8x192xf32, #tpu.memory_space<vmem>>, vector<8x1x192xf32>
    %308 = vector.shape_cast %307 : vector<8x1x192xf32> to vector<8x192xf32>
    %309 = vector.extract_strided_slice %308 {offsets = [0, 96], sizes = [8, 96], strides = [1, 1]} : vector<8x192xf32> to vector<8x96xf32>
    %cst_80 = arith.constant dense<0.000000e+00> : vector<8x96xf32>
    %310 = tpu.matmul %260, %12, %cst_80 {dimension_numbers = #tpu.dot_dimension_numbers<[1], [0], [0], [1], [0, 0, 1, 1], [], []>} : vector<8x32xf32>, vector<32x96xf32>, vector<8x96xf32> -> vector<8x96xf32>
    %311 = vector.broadcast %13 : vector<1x96xf32> to vector<8x96xf32>
    %312 = arith.addf %310, %311 : vector<8x96xf32>
    %313 = vector.extract_strided_slice %309 {offsets = [0, 0], sizes = [8, 32], strides = [1, 1]} : vector<8x96xf32> to vector<8x32xf32>
    %314 = vector.extract_strided_slice %312 {offsets = [0, 0], sizes = [8, 32], strides = [1, 1]} : vector<8x96xf32> to vector<8x32xf32>
    %315 = arith.addf %313, %314 : vector<8x32xf32>
    %316 = arith.negf %315 : vector<8x32xf32>
    %317 = math.exp %316 : vector<8x32xf32>
    %cst_81 = arith.constant 1.000000e+00 : f32
    %318 = vector.broadcast %cst_81 : f32 to vector<8x32xf32>
    %319 = arith.addf %318, %317 : vector<8x32xf32>
    %320 = arith.divf %318, %319 : vector<8x32xf32>
    %321 = vector.extract_strided_slice %309 {offsets = [0, 32], sizes = [8, 32], strides = [1, 1]} : vector<8x96xf32> to vector<8x32xf32>
    %322 = vector.extract_strided_slice %312 {offsets = [0, 32], sizes = [8, 32], strides = [1, 1]} : vector<8x96xf32> to vector<8x32xf32>
    %323 = arith.addf %321, %322 : vector<8x32xf32>
    %324 = arith.negf %323 : vector<8x32xf32>
    %325 = math.exp %324 : vector<8x32xf32>
    %cst_82 = arith.constant 1.000000e+00 : f32
    %326 = vector.broadcast %cst_82 : f32 to vector<8x32xf32>
    %327 = arith.addf %326, %325 : vector<8x32xf32>
    %328 = arith.divf %326, %327 : vector<8x32xf32>
    %329 = vector.extract_strided_slice %309 {offsets = [0, 64], sizes = [8, 32], strides = [1, 1]} : vector<8x96xf32> to vector<8x32xf32>
    %330 = vector.extract_strided_slice %312 {offsets = [0, 64], sizes = [8, 32], strides = [1, 1]} : vector<8x96xf32> to vector<8x32xf32>
    %331 = arith.mulf %320, %330 : vector<8x32xf32>
    %332 = arith.addf %329, %331 : vector<8x32xf32>
    %333 = math.tanh %332 : vector<8x32xf32>
    %cst_83 = arith.constant 1.000000e+00 : f32
    %334 = vector.broadcast %cst_83 : f32 to vector<8x32xf32>
    %335 = arith.subf %334, %328 : vector<8x32xf32>
    %336 = arith.mulf %335, %333 : vector<8x32xf32>
    %337 = arith.mulf %328, %260 : vector<8x32xf32>
    %338 = arith.addf %336, %337 : vector<8x32xf32>
    %339 = vector.broadcast %264 : i32 to vector<8x1xi32>
    %340 = arith.cmpi sgt, %0, %339 : vector<8x1xi32>
    %341 = vector.shape_cast %340 : vector<8x1xi1> to vector<8x1xi1>
    %342 = vector.broadcast %341 : vector<8x1xi1> to vector<8x32xi1>
    %343 = arith.select %342, %338, %260 : vector<8x32xi1>, vector<8x32xf32>
    %344 = vector.shape_cast %343 : vector<8x32xf32> to vector<8x1x32xf32>
    %c0_84 = arith.constant 0 : index
    %345 = arith.index_cast %264 : i32 to index
    %c32_85 = arith.constant 32 : index
    %346 = vector.load %arg16[%c0_84, %345, %c32_85] : memref<8x8x64xf32, #tpu.memory_space<vmem>>, vector<8x1x32xf32>
    tpu.vector_store %arg16[%c0_84, %345, %c32_85], %344 {strides = array<i32>} : memref<8x8x64xf32, #tpu.memory_space<vmem>>, vector<8x1x32xf32>,
    %c4_i32 = arith.constant 4 : i32
    %c7_i32_86 = arith.constant 7 : i32
    %347 = arith.subi %c7_i32_86, %c4_i32 : i32
    %c0_87 = arith.constant 0 : index
    %348 = arith.index_cast %c4_i32 : i32 to index
    %c0_88 = arith.constant 0 : index
    %349 = vector.load %arg15[%c0_87, %348, %c0_88] : memref<8x8x192xf32, #tpu.memory_space<vmem>>, vector<8x1x192xf32>
    %350 = vector.shape_cast %349 : vector<8x1x192xf32> to vector<8x192xf32>
    %351 = vector.extract_strided_slice %350 {offsets = [0, 0], sizes = [8, 96], strides = [1, 1]} : vector<8x192xf32> to vector<8x96xf32>
    %cst_89 = arith.constant dense<0.000000e+00> : vector<8x96xf32>
    %352 = tpu.matmul %302, %10, %cst_89 {dimension_numbers = #tpu.dot_dimension_numbers<[1], [0], [0], [1], [0, 0, 1, 1], [], []>} : vector<8x32xf32>, vector<32x96xf32>, vector<8x96xf32> -> vector<8x96xf32>
    %353 = vector.broadcast %11 : vector<1x96xf32> to vector<8x96xf32>
    %354 = arith.addf %352, %353 : vector<8x96xf32>
    %355 = vector.extract_strided_slice %351 {offsets = [0, 0], sizes = [8, 32], strides = [1, 1]} : vector<8x96xf32> to vector<8x32xf32>
    %356 = vector.extract_strided_slice %354 {offsets = [0, 0], sizes = [8, 32], strides = [1, 1]} : vector<8x96xf32> to vector<8x32xf32>
    %357 = arith.addf %355, %356 : vector<8x32xf32>
    %358 = arith.negf %357 : vector<8x32xf32>
    %359 = math.exp %358 : vector<8x32xf32>
    %cst_90 = arith.constant 1.000000e+00 : f32
    %360 = vector.broadcast %cst_90 : f32 to vector<8x32xf32>
    %361 = arith.addf %360, %359 : vector<8x32xf32>
    %362 = arith.divf %360, %361 : vector<8x32xf32>
    %363 = vector.extract_strided_slice %351 {offsets = [0, 32], sizes = [8, 32], strides = [1, 1]} : vector<8x96xf32> to vector<8x32xf32>
    %364 = vector.extract_strided_slice %354 {offsets = [0, 32], sizes = [8, 32], strides = [1, 1]} : vector<8x96xf32> to vector<8x32xf32>
    %365 = arith.addf %363, %364 : vector<8x32xf32>
    %366 = arith.negf %365 : vector<8x32xf32>
    %367 = math.exp %366 : vector<8x32xf32>
    %cst_91 = arith.constant 1.000000e+00 : f32
    %368 = vector.broadcast %cst_91 : f32 to vector<8x32xf32>
    %369 = arith.addf %368, %367 : vector<8x32xf32>
    %370 = arith.divf %368, %369 : vector<8x32xf32>
    %371 = vector.extract_strided_slice %351 {offsets = [0, 64], sizes = [8, 32], strides = [1, 1]} : vector<8x96xf32> to vector<8x32xf32>
    %372 = vector.extract_strided_slice %354 {offsets = [0, 64], sizes = [8, 32], strides = [1, 1]} : vector<8x96xf32> to vector<8x32xf32>
    %373 = arith.mulf %362, %372 : vector<8x32xf32>
    %374 = arith.addf %371, %373 : vector<8x32xf32>
    %375 = math.tanh %374 : vector<8x32xf32>
    %cst_92 = arith.constant 1.000000e+00 : f32
    %376 = vector.broadcast %cst_92 : f32 to vector<8x32xf32>
    %377 = arith.subf %376, %370 : vector<8x32xf32>
    %378 = arith.mulf %377, %375 : vector<8x32xf32>
    %379 = arith.mulf %370, %302 : vector<8x32xf32>
    %380 = arith.addf %378, %379 : vector<8x32xf32>
    %381 = vector.broadcast %c4_i32 : i32 to vector<8x1xi32>
    %382 = arith.cmpi sgt, %0, %381 : vector<8x1xi32>
    %383 = vector.shape_cast %382 : vector<8x1xi1> to vector<8x1xi1>
    %384 = vector.broadcast %383 : vector<8x1xi1> to vector<8x32xi1>
    %385 = arith.select %384, %380, %302 : vector<8x32xi1>, vector<8x32xf32>
    %386 = vector.shape_cast %385 : vector<8x32xf32> to vector<8x1x32xf32>
    %c0_93 = arith.constant 0 : index
    %387 = arith.index_cast %c4_i32 : i32 to index
    %c0_94 = arith.constant 0 : index
    %388 = vector.load %arg16[%c0_93, %387, %c0_94] : memref<8x8x64xf32, #tpu.memory_space<vmem>>, vector<8x1x32xf32>
    tpu.vector_store %arg16[%c0_93, %387, %c0_94], %386 {strides = array<i32>} : memref<8x8x64xf32, #tpu.memory_space<vmem>>, vector<8x1x32xf32>,
    %c0_95 = arith.constant 0 : index
    %389 = arith.index_cast %347 : i32 to index
    %c0_96 = arith.constant 0 : index
    %390 = vector.load %arg15[%c0_95, %389, %c0_96] : memref<8x8x192xf32, #tpu.memory_space<vmem>>, vector<8x1x192xf32>
    %391 = vector.shape_cast %390 : vector<8x1x192xf32> to vector<8x192xf32>
    %392 = vector.extract_strided_slice %391 {offsets = [0, 96], sizes = [8, 96], strides = [1, 1]} : vector<8x192xf32> to vector<8x96xf32>
    %cst_97 = arith.constant dense<0.000000e+00> : vector<8x96xf32>
    %393 = tpu.matmul %343, %12, %cst_97 {dimension_numbers = #tpu.dot_dimension_numbers<[1], [0], [0], [1], [0, 0, 1, 1], [], []>} : vector<8x32xf32>, vector<32x96xf32>, vector<8x96xf32> -> vector<8x96xf32>
    %394 = vector.broadcast %13 : vector<1x96xf32> to vector<8x96xf32>
    %395 = arith.addf %393, %394 : vector<8x96xf32>
    %396 = vector.extract_strided_slice %392 {offsets = [0, 0], sizes = [8, 32], strides = [1, 1]} : vector<8x96xf32> to vector<8x32xf32>
    %397 = vector.extract_strided_slice %395 {offsets = [0, 0], sizes = [8, 32], strides = [1, 1]} : vector<8x96xf32> to vector<8x32xf32>
    %398 = arith.addf %396, %397 : vector<8x32xf32>
    %399 = arith.negf %398 : vector<8x32xf32>
    %400 = math.exp %399 : vector<8x32xf32>
    %cst_98 = arith.constant 1.000000e+00 : f32
    %401 = vector.broadcast %cst_98 : f32 to vector<8x32xf32>
    %402 = arith.addf %401, %400 : vector<8x32xf32>
    %403 = arith.divf %401, %402 : vector<8x32xf32>
    %404 = vector.extract_strided_slice %392 {offsets = [0, 32], sizes = [8, 32], strides = [1, 1]} : vector<8x96xf32> to vector<8x32xf32>
    %405 = vector.extract_strided_slice %395 {offsets = [0, 32], sizes = [8, 32], strides = [1, 1]} : vector<8x96xf32> to vector<8x32xf32>
    %406 = arith.addf %404, %405 : vector<8x32xf32>
    %407 = arith.negf %406 : vector<8x32xf32>
    %408 = math.exp %407 : vector<8x32xf32>
    %cst_99 = arith.constant 1.000000e+00 : f32
    %409 = vector.broadcast %cst_99 : f32 to vector<8x32xf32>
    %410 = arith.addf %409, %408 : vector<8x32xf32>
    %411 = arith.divf %409, %410 : vector<8x32xf32>
    %412 = vector.extract_strided_slice %392 {offsets = [0, 64], sizes = [8, 32], strides = [1, 1]} : vector<8x96xf32> to vector<8x32xf32>
    %413 = vector.extract_strided_slice %395 {offsets = [0, 64], sizes = [8, 32], strides = [1, 1]} : vector<8x96xf32> to vector<8x32xf32>
    %414 = arith.mulf %403, %413 : vector<8x32xf32>
    %415 = arith.addf %412, %414 : vector<8x32xf32>
    %416 = math.tanh %415 : vector<8x32xf32>
    %cst_100 = arith.constant 1.000000e+00 : f32
    %417 = vector.broadcast %cst_100 : f32 to vector<8x32xf32>
    %418 = arith.subf %417, %411 : vector<8x32xf32>
    %419 = arith.mulf %418, %416 : vector<8x32xf32>
    %420 = arith.mulf %411, %343 : vector<8x32xf32>
    %421 = arith.addf %419, %420 : vector<8x32xf32>
    %422 = vector.broadcast %347 : i32 to vector<8x1xi32>
    %423 = arith.cmpi sgt, %0, %422 : vector<8x1xi32>
    %424 = vector.shape_cast %423 : vector<8x1xi1> to vector<8x1xi1>
    %425 = vector.broadcast %424 : vector<8x1xi1> to vector<8x32xi1>
    %426 = arith.select %425, %421, %343 : vector<8x32xi1>, vector<8x32xf32>
    %427 = vector.shape_cast %426 : vector<8x32xf32> to vector<8x1x32xf32>
    %c0_101 = arith.constant 0 : index
    %428 = arith.index_cast %347 : i32 to index
    %c32_102 = arith.constant 32 : index
    %429 = vector.load %arg16[%c0_101, %428, %c32_102] : memref<8x8x64xf32, #tpu.memory_space<vmem>>, vector<8x1x32xf32>
    tpu.vector_store %arg16[%c0_101, %428, %c32_102], %427 {strides = array<i32>} : memref<8x8x64xf32, #tpu.memory_space<vmem>>, vector<8x1x32xf32>,
    %c5_i32 = arith.constant 5 : i32
    %c7_i32_103 = arith.constant 7 : i32
    %430 = arith.subi %c7_i32_103, %c5_i32 : i32
    %c0_104 = arith.constant 0 : index
    %431 = arith.index_cast %c5_i32 : i32 to index
    %c0_105 = arith.constant 0 : index
    %432 = vector.load %arg15[%c0_104, %431, %c0_105] : memref<8x8x192xf32, #tpu.memory_space<vmem>>, vector<8x1x192xf32>
    %433 = vector.shape_cast %432 : vector<8x1x192xf32> to vector<8x192xf32>
    %434 = vector.extract_strided_slice %433 {offsets = [0, 0], sizes = [8, 96], strides = [1, 1]} : vector<8x192xf32> to vector<8x96xf32>
    %cst_106 = arith.constant dense<0.000000e+00> : vector<8x96xf32>
    %435 = tpu.matmul %385, %10, %cst_106 {dimension_numbers = #tpu.dot_dimension_numbers<[1], [0], [0], [1], [0, 0, 1, 1], [], []>} : vector<8x32xf32>, vector<32x96xf32>, vector<8x96xf32> -> vector<8x96xf32>
    %436 = vector.broadcast %11 : vector<1x96xf32> to vector<8x96xf32>
    %437 = arith.addf %435, %436 : vector<8x96xf32>
    %438 = vector.extract_strided_slice %434 {offsets = [0, 0], sizes = [8, 32], strides = [1, 1]} : vector<8x96xf32> to vector<8x32xf32>
    %439 = vector.extract_strided_slice %437 {offsets = [0, 0], sizes = [8, 32], strides = [1, 1]} : vector<8x96xf32> to vector<8x32xf32>
    %440 = arith.addf %438, %439 : vector<8x32xf32>
    %441 = arith.negf %440 : vector<8x32xf32>
    %442 = math.exp %441 : vector<8x32xf32>
    %cst_107 = arith.constant 1.000000e+00 : f32
    %443 = vector.broadcast %cst_107 : f32 to vector<8x32xf32>
    %444 = arith.addf %443, %442 : vector<8x32xf32>
    %445 = arith.divf %443, %444 : vector<8x32xf32>
    %446 = vector.extract_strided_slice %434 {offsets = [0, 32], sizes = [8, 32], strides = [1, 1]} : vector<8x96xf32> to vector<8x32xf32>
    %447 = vector.extract_strided_slice %437 {offsets = [0, 32], sizes = [8, 32], strides = [1, 1]} : vector<8x96xf32> to vector<8x32xf32>
    %448 = arith.addf %446, %447 : vector<8x32xf32>
    %449 = arith.negf %448 : vector<8x32xf32>
    %450 = math.exp %449 : vector<8x32xf32>
    %cst_108 = arith.constant 1.000000e+00 : f32
    %451 = vector.broadcast %cst_108 : f32 to vector<8x32xf32>
    %452 = arith.addf %451, %450 : vector<8x32xf32>
    %453 = arith.divf %451, %452 : vector<8x32xf32>
    %454 = vector.extract_strided_slice %434 {offsets = [0, 64], sizes = [8, 32], strides = [1, 1]} : vector<8x96xf32> to vector<8x32xf32>
    %455 = vector.extract_strided_slice %437 {offsets = [0, 64], sizes = [8, 32], strides = [1, 1]} : vector<8x96xf32> to vector<8x32xf32>
    %456 = arith.mulf %445, %455 : vector<8x32xf32>
    %457 = arith.addf %454, %456 : vector<8x32xf32>
    %458 = math.tanh %457 : vector<8x32xf32>
    %cst_109 = arith.constant 1.000000e+00 : f32
    %459 = vector.broadcast %cst_109 : f32 to vector<8x32xf32>
    %460 = arith.subf %459, %453 : vector<8x32xf32>
    %461 = arith.mulf %460, %458 : vector<8x32xf32>
    %462 = arith.mulf %453, %385 : vector<8x32xf32>
    %463 = arith.addf %461, %462 : vector<8x32xf32>
    %464 = vector.broadcast %c5_i32 : i32 to vector<8x1xi32>
    %465 = arith.cmpi sgt, %0, %464 : vector<8x1xi32>
    %466 = vector.shape_cast %465 : vector<8x1xi1> to vector<8x1xi1>
    %467 = vector.broadcast %466 : vector<8x1xi1> to vector<8x32xi1>
    %468 = arith.select %467, %463, %385 : vector<8x32xi1>, vector<8x32xf32>
    %469 = vector.shape_cast %468 : vector<8x32xf32> to vector<8x1x32xf32>
    %c0_110 = arith.constant 0 : index
    %470 = arith.index_cast %c5_i32 : i32 to index
    %c0_111 = arith.constant 0 : index
    %471 = vector.load %arg16[%c0_110, %470, %c0_111] : memref<8x8x64xf32, #tpu.memory_space<vmem>>, vector<8x1x32xf32>
    tpu.vector_store %arg16[%c0_110, %470, %c0_111], %469 {strides = array<i32>} : memref<8x8x64xf32, #tpu.memory_space<vmem>>, vector<8x1x32xf32>,
    %c0_112 = arith.constant 0 : index
    %472 = arith.index_cast %430 : i32 to index
    %c0_113 = arith.constant 0 : index
    %473 = vector.load %arg15[%c0_112, %472, %c0_113] : memref<8x8x192xf32, #tpu.memory_space<vmem>>, vector<8x1x192xf32>
    %474 = vector.shape_cast %473 : vector<8x1x192xf32> to vector<8x192xf32>
    %475 = vector.extract_strided_slice %474 {offsets = [0, 96], sizes = [8, 96], strides = [1, 1]} : vector<8x192xf32> to vector<8x96xf32>
    %cst_114 = arith.constant dense<0.000000e+00> : vector<8x96xf32>
    %476 = tpu.matmul %426, %12, %cst_114 {dimension_numbers = #tpu.dot_dimension_numbers<[1], [0], [0], [1], [0, 0, 1, 1], [], []>} : vector<8x32xf32>, vector<32x96xf32>, vector<8x96xf32> -> vector<8x96xf32>
    %477 = vector.broadcast %13 : vector<1x96xf32> to vector<8x96xf32>
    %478 = arith.addf %476, %477 : vector<8x96xf32>
    %479 = vector.extract_strided_slice %475 {offsets = [0, 0], sizes = [8, 32], strides = [1, 1]} : vector<8x96xf32> to vector<8x32xf32>
    %480 = vector.extract_strided_slice %478 {offsets = [0, 0], sizes = [8, 32], strides = [1, 1]} : vector<8x96xf32> to vector<8x32xf32>
    %481 = arith.addf %479, %480 : vector<8x32xf32>
    %482 = arith.negf %481 : vector<8x32xf32>
    %483 = math.exp %482 : vector<8x32xf32>
    %cst_115 = arith.constant 1.000000e+00 : f32
    %484 = vector.broadcast %cst_115 : f32 to vector<8x32xf32>
    %485 = arith.addf %484, %483 : vector<8x32xf32>
    %486 = arith.divf %484, %485 : vector<8x32xf32>
    %487 = vector.extract_strided_slice %475 {offsets = [0, 32], sizes = [8, 32], strides = [1, 1]} : vector<8x96xf32> to vector<8x32xf32>
    %488 = vector.extract_strided_slice %478 {offsets = [0, 32], sizes = [8, 32], strides = [1, 1]} : vector<8x96xf32> to vector<8x32xf32>
    %489 = arith.addf %487, %488 : vector<8x32xf32>
    %490 = arith.negf %489 : vector<8x32xf32>
    %491 = math.exp %490 : vector<8x32xf32>
    %cst_116 = arith.constant 1.000000e+00 : f32
    %492 = vector.broadcast %cst_116 : f32 to vector<8x32xf32>
    %493 = arith.addf %492, %491 : vector<8x32xf32>
    %494 = arith.divf %492, %493 : vector<8x32xf32>
    %495 = vector.extract_strided_slice %475 {offsets = [0, 64], sizes = [8, 32], strides = [1, 1]} : vector<8x96xf32> to vector<8x32xf32>
    %496 = vector.extract_strided_slice %478 {offsets = [0, 64], sizes = [8, 32], strides = [1, 1]} : vector<8x96xf32> to vector<8x32xf32>
    %497 = arith.mulf %486, %496 : vector<8x32xf32>
    %498 = arith.addf %495, %497 : vector<8x32xf32>
    %499 = math.tanh %498 : vector<8x32xf32>
    %cst_117 = arith.constant 1.000000e+00 : f32
    %500 = vector.broadcast %cst_117 : f32 to vector<8x32xf32>
    %501 = arith.subf %500, %494 : vector<8x32xf32>
    %502 = arith.mulf %501, %499 : vector<8x32xf32>
    %503 = arith.mulf %494, %426 : vector<8x32xf32>
    %504 = arith.addf %502, %503 : vector<8x32xf32>
    %505 = vector.broadcast %430 : i32 to vector<8x1xi32>
    %506 = arith.cmpi sgt, %0, %505 : vector<8x1xi32>
    %507 = vector.shape_cast %506 : vector<8x1xi1> to vector<8x1xi1>
    %508 = vector.broadcast %507 : vector<8x1xi1> to vector<8x32xi1>
    %509 = arith.select %508, %504, %426 : vector<8x32xi1>, vector<8x32xf32>
    %510 = vector.shape_cast %509 : vector<8x32xf32> to vector<8x1x32xf32>
    %c0_118 = arith.constant 0 : index
    %511 = arith.index_cast %430 : i32 to index
    %c32_119 = arith.constant 32 : index
    %512 = vector.load %arg16[%c0_118, %511, %c32_119] : memref<8x8x64xf32, #tpu.memory_space<vmem>>, vector<8x1x32xf32>
    tpu.vector_store %arg16[%c0_118, %511, %c32_119], %510 {strides = array<i32>} : memref<8x8x64xf32, #tpu.memory_space<vmem>>, vector<8x1x32xf32>,
    %c6_i32 = arith.constant 6 : i32
    %c7_i32_120 = arith.constant 7 : i32
    %513 = arith.subi %c7_i32_120, %c6_i32 : i32
    %c0_121 = arith.constant 0 : index
    %514 = arith.index_cast %c6_i32 : i32 to index
    %c0_122 = arith.constant 0 : index
    %515 = vector.load %arg15[%c0_121, %514, %c0_122] : memref<8x8x192xf32, #tpu.memory_space<vmem>>, vector<8x1x192xf32>
    %516 = vector.shape_cast %515 : vector<8x1x192xf32> to vector<8x192xf32>
    %517 = vector.extract_strided_slice %516 {offsets = [0, 0], sizes = [8, 96], strides = [1, 1]} : vector<8x192xf32> to vector<8x96xf32>
    %cst_123 = arith.constant dense<0.000000e+00> : vector<8x96xf32>
    %518 = tpu.matmul %468, %10, %cst_123 {dimension_numbers = #tpu.dot_dimension_numbers<[1], [0], [0], [1], [0, 0, 1, 1], [], []>} : vector<8x32xf32>, vector<32x96xf32>, vector<8x96xf32> -> vector<8x96xf32>
    %519 = vector.broadcast %11 : vector<1x96xf32> to vector<8x96xf32>
    %520 = arith.addf %518, %519 : vector<8x96xf32>
    %521 = vector.extract_strided_slice %517 {offsets = [0, 0], sizes = [8, 32], strides = [1, 1]} : vector<8x96xf32> to vector<8x32xf32>
    %522 = vector.extract_strided_slice %520 {offsets = [0, 0], sizes = [8, 32], strides = [1, 1]} : vector<8x96xf32> to vector<8x32xf32>
    %523 = arith.addf %521, %522 : vector<8x32xf32>
    %524 = arith.negf %523 : vector<8x32xf32>
    %525 = math.exp %524 : vector<8x32xf32>
    %cst_124 = arith.constant 1.000000e+00 : f32
    %526 = vector.broadcast %cst_124 : f32 to vector<8x32xf32>
    %527 = arith.addf %526, %525 : vector<8x32xf32>
    %528 = arith.divf %526, %527 : vector<8x32xf32>
    %529 = vector.extract_strided_slice %517 {offsets = [0, 32], sizes = [8, 32], strides = [1, 1]} : vector<8x96xf32> to vector<8x32xf32>
    %530 = vector.extract_strided_slice %520 {offsets = [0, 32], sizes = [8, 32], strides = [1, 1]} : vector<8x96xf32> to vector<8x32xf32>
    %531 = arith.addf %529, %530 : vector<8x32xf32>
    %532 = arith.negf %531 : vector<8x32xf32>
    %533 = math.exp %532 : vector<8x32xf32>
    %cst_125 = arith.constant 1.000000e+00 : f32
    %534 = vector.broadcast %cst_125 : f32 to vector<8x32xf32>
    %535 = arith.addf %534, %533 : vector<8x32xf32>
    %536 = arith.divf %534, %535 : vector<8x32xf32>
    %537 = vector.extract_strided_slice %517 {offsets = [0, 64], sizes = [8, 32], strides = [1, 1]} : vector<8x96xf32> to vector<8x32xf32>
    %538 = vector.extract_strided_slice %520 {offsets = [0, 64], sizes = [8, 32], strides = [1, 1]} : vector<8x96xf32> to vector<8x32xf32>
    %539 = arith.mulf %528, %538 : vector<8x32xf32>
    %540 = arith.addf %537, %539 : vector<8x32xf32>
    %541 = math.tanh %540 : vector<8x32xf32>
    %cst_126 = arith.constant 1.000000e+00 : f32
    %542 = vector.broadcast %cst_126 : f32 to vector<8x32xf32>
    %543 = arith.subf %542, %536 : vector<8x32xf32>
    %544 = arith.mulf %543, %541 : vector<8x32xf32>
    %545 = arith.mulf %536, %468 : vector<8x32xf32>
    %546 = arith.addf %544, %545 : vector<8x32xf32>
    %547 = vector.broadcast %c6_i32 : i32 to vector<8x1xi32>
    %548 = arith.cmpi sgt, %0, %547 : vector<8x1xi32>
    %549 = vector.shape_cast %548 : vector<8x1xi1> to vector<8x1xi1>
    %550 = vector.broadcast %549 : vector<8x1xi1> to vector<8x32xi1>
    %551 = arith.select %550, %546, %468 : vector<8x32xi1>, vector<8x32xf32>
    %552 = vector.shape_cast %551 : vector<8x32xf32> to vector<8x1x32xf32>
    %c0_127 = arith.constant 0 : index
    %553 = arith.index_cast %c6_i32 : i32 to index
    %c0_128 = arith.constant 0 : index
    %554 = vector.load %arg16[%c0_127, %553, %c0_128] : memref<8x8x64xf32, #tpu.memory_space<vmem>>, vector<8x1x32xf32>
    tpu.vector_store %arg16[%c0_127, %553, %c0_128], %552 {strides = array<i32>} : memref<8x8x64xf32, #tpu.memory_space<vmem>>, vector<8x1x32xf32>,
    %c0_129 = arith.constant 0 : index
    %555 = arith.index_cast %513 : i32 to index
    %c0_130 = arith.constant 0 : index
    %556 = vector.load %arg15[%c0_129, %555, %c0_130] : memref<8x8x192xf32, #tpu.memory_space<vmem>>, vector<8x1x192xf32>
    %557 = vector.shape_cast %556 : vector<8x1x192xf32> to vector<8x192xf32>
    %558 = vector.extract_strided_slice %557 {offsets = [0, 96], sizes = [8, 96], strides = [1, 1]} : vector<8x192xf32> to vector<8x96xf32>
    %cst_131 = arith.constant dense<0.000000e+00> : vector<8x96xf32>
    %559 = tpu.matmul %509, %12, %cst_131 {dimension_numbers = #tpu.dot_dimension_numbers<[1], [0], [0], [1], [0, 0, 1, 1], [], []>} : vector<8x32xf32>, vector<32x96xf32>, vector<8x96xf32> -> vector<8x96xf32>
    %560 = vector.broadcast %13 : vector<1x96xf32> to vector<8x96xf32>
    %561 = arith.addf %559, %560 : vector<8x96xf32>
    %562 = vector.extract_strided_slice %558 {offsets = [0, 0], sizes = [8, 32], strides = [1, 1]} : vector<8x96xf32> to vector<8x32xf32>
    %563 = vector.extract_strided_slice %561 {offsets = [0, 0], sizes = [8, 32], strides = [1, 1]} : vector<8x96xf32> to vector<8x32xf32>
    %564 = arith.addf %562, %563 : vector<8x32xf32>
    %565 = arith.negf %564 : vector<8x32xf32>
    %566 = math.exp %565 : vector<8x32xf32>
    %cst_132 = arith.constant 1.000000e+00 : f32
    %567 = vector.broadcast %cst_132 : f32 to vector<8x32xf32>
    %568 = arith.addf %567, %566 : vector<8x32xf32>
    %569 = arith.divf %567, %568 : vector<8x32xf32>
    %570 = vector.extract_strided_slice %558 {offsets = [0, 32], sizes = [8, 32], strides = [1, 1]} : vector<8x96xf32> to vector<8x32xf32>
    %571 = vector.extract_strided_slice %561 {offsets = [0, 32], sizes = [8, 32], strides = [1, 1]} : vector<8x96xf32> to vector<8x32xf32>
    %572 = arith.addf %570, %571 : vector<8x32xf32>
    %573 = arith.negf %572 : vector<8x32xf32>
    %574 = math.exp %573 : vector<8x32xf32>
    %cst_133 = arith.constant 1.000000e+00 : f32
    %575 = vector.broadcast %cst_133 : f32 to vector<8x32xf32>
    %576 = arith.addf %575, %574 : vector<8x32xf32>
    %577 = arith.divf %575, %576 : vector<8x32xf32>
    %578 = vector.extract_strided_slice %558 {offsets = [0, 64], sizes = [8, 32], strides = [1, 1]} : vector<8x96xf32> to vector<8x32xf32>
    %579 = vector.extract_strided_slice %561 {offsets = [0, 64], sizes = [8, 32], strides = [1, 1]} : vector<8x96xf32> to vector<8x32xf32>
    %580 = arith.mulf %569, %579 : vector<8x32xf32>
    %581 = arith.addf %578, %580 : vector<8x32xf32>
    %582 = math.tanh %581 : vector<8x32xf32>
    %cst_134 = arith.constant 1.000000e+00 : f32
    %583 = vector.broadcast %cst_134 : f32 to vector<8x32xf32>
    %584 = arith.subf %583, %577 : vector<8x32xf32>
    %585 = arith.mulf %584, %582 : vector<8x32xf32>
    %586 = arith.mulf %577, %509 : vector<8x32xf32>
    %587 = arith.addf %585, %586 : vector<8x32xf32>
    %588 = vector.broadcast %513 : i32 to vector<8x1xi32>
    %589 = arith.cmpi sgt, %0, %588 : vector<8x1xi32>
    %590 = vector.shape_cast %589 : vector<8x1xi1> to vector<8x1xi1>
    %591 = vector.broadcast %590 : vector<8x1xi1> to vector<8x32xi1>
    %592 = arith.select %591, %587, %509 : vector<8x32xi1>, vector<8x32xf32>
    %593 = vector.shape_cast %592 : vector<8x32xf32> to vector<8x1x32xf32>
    %c0_135 = arith.constant 0 : index
    %594 = arith.index_cast %513 : i32 to index
    %c32_136 = arith.constant 32 : index
    %595 = vector.load %arg16[%c0_135, %594, %c32_136] : memref<8x8x64xf32, #tpu.memory_space<vmem>>, vector<8x1x32xf32>
    tpu.vector_store %arg16[%c0_135, %594, %c32_136], %593 {strides = array<i32>} : memref<8x8x64xf32, #tpu.memory_space<vmem>>, vector<8x1x32xf32>,
    %c7_i32_137 = arith.constant 7 : i32
    %c7_i32_138 = arith.constant 7 : i32
    %596 = arith.subi %c7_i32_138, %c7_i32_137 : i32
    %c0_139 = arith.constant 0 : index
    %597 = arith.index_cast %c7_i32_137 : i32 to index
    %c0_140 = arith.constant 0 : index
    %598 = vector.load %arg15[%c0_139, %597, %c0_140] : memref<8x8x192xf32, #tpu.memory_space<vmem>>, vector<8x1x192xf32>
    %599 = vector.shape_cast %598 : vector<8x1x192xf32> to vector<8x192xf32>
    %600 = vector.extract_strided_slice %599 {offsets = [0, 0], sizes = [8, 96], strides = [1, 1]} : vector<8x192xf32> to vector<8x96xf32>
    %cst_141 = arith.constant dense<0.000000e+00> : vector<8x96xf32>
    %601 = tpu.matmul %551, %10, %cst_141 {dimension_numbers = #tpu.dot_dimension_numbers<[1], [0], [0], [1], [0, 0, 1, 1], [], []>} : vector<8x32xf32>, vector<32x96xf32>, vector<8x96xf32> -> vector<8x96xf32>
    %602 = vector.broadcast %11 : vector<1x96xf32> to vector<8x96xf32>
    %603 = arith.addf %601, %602 : vector<8x96xf32>
    %604 = vector.extract_strided_slice %600 {offsets = [0, 0], sizes = [8, 32], strides = [1, 1]} : vector<8x96xf32> to vector<8x32xf32>
    %605 = vector.extract_strided_slice %603 {offsets = [0, 0], sizes = [8, 32], strides = [1, 1]} : vector<8x96xf32> to vector<8x32xf32>
    %606 = arith.addf %604, %605 : vector<8x32xf32>
    %607 = arith.negf %606 : vector<8x32xf32>
    %608 = math.exp %607 : vector<8x32xf32>
    %cst_142 = arith.constant 1.000000e+00 : f32
    %609 = vector.broadcast %cst_142 : f32 to vector<8x32xf32>
    %610 = arith.addf %609, %608 : vector<8x32xf32>
    %611 = arith.divf %609, %610 : vector<8x32xf32>
    %612 = vector.extract_strided_slice %600 {offsets = [0, 32], sizes = [8, 32], strides = [1, 1]} : vector<8x96xf32> to vector<8x32xf32>
    %613 = vector.extract_strided_slice %603 {offsets = [0, 32], sizes = [8, 32], strides = [1, 1]} : vector<8x96xf32> to vector<8x32xf32>
    %614 = arith.addf %612, %613 : vector<8x32xf32>
    %615 = arith.negf %614 : vector<8x32xf32>
    %616 = math.exp %615 : vector<8x32xf32>
    %cst_143 = arith.constant 1.000000e+00 : f32
    %617 = vector.broadcast %cst_143 : f32 to vector<8x32xf32>
    %618 = arith.addf %617, %616 : vector<8x32xf32>
    %619 = arith.divf %617, %618 : vector<8x32xf32>
    %620 = vector.extract_strided_slice %600 {offsets = [0, 64], sizes = [8, 32], strides = [1, 1]} : vector<8x96xf32> to vector<8x32xf32>
    %621 = vector.extract_strided_slice %603 {offsets = [0, 64], sizes = [8, 32], strides = [1, 1]} : vector<8x96xf32> to vector<8x32xf32>
    %622 = arith.mulf %611, %621 : vector<8x32xf32>
    %623 = arith.addf %620, %622 : vector<8x32xf32>
    %624 = math.tanh %623 : vector<8x32xf32>
    %cst_144 = arith.constant 1.000000e+00 : f32
    %625 = vector.broadcast %cst_144 : f32 to vector<8x32xf32>
    %626 = arith.subf %625, %619 : vector<8x32xf32>
    %627 = arith.mulf %626, %624 : vector<8x32xf32>
    %628 = arith.mulf %619, %551 : vector<8x32xf32>
    %629 = arith.addf %627, %628 : vector<8x32xf32>
    %630 = vector.broadcast %c7_i32_137 : i32 to vector<8x1xi32>
    %631 = arith.cmpi sgt, %0, %630 : vector<8x1xi32>
    %632 = vector.shape_cast %631 : vector<8x1xi1> to vector<8x1xi1>
    %633 = vector.broadcast %632 : vector<8x1xi1> to vector<8x32xi1>
    %634 = arith.select %633, %629, %551 : vector<8x32xi1>, vector<8x32xf32>
    %635 = vector.shape_cast %634 : vector<8x32xf32> to vector<8x1x32xf32>
    %c0_145 = arith.constant 0 : index
    %636 = arith.index_cast %c7_i32_137 : i32 to index
    %c0_146 = arith.constant 0 : index
    %637 = vector.load %arg16[%c0_145, %636, %c0_146] : memref<8x8x64xf32, #tpu.memory_space<vmem>>, vector<8x1x32xf32>
    tpu.vector_store %arg16[%c0_145, %636, %c0_146], %635 {strides = array<i32>} : memref<8x8x64xf32, #tpu.memory_space<vmem>>, vector<8x1x32xf32>,
    %c0_147 = arith.constant 0 : index
    %638 = arith.index_cast %596 : i32 to index
    %c0_148 = arith.constant 0 : index
    %639 = vector.load %arg15[%c0_147, %638, %c0_148] : memref<8x8x192xf32, #tpu.memory_space<vmem>>, vector<8x1x192xf32>
    %640 = vector.shape_cast %639 : vector<8x1x192xf32> to vector<8x192xf32>
    %641 = vector.extract_strided_slice %640 {offsets = [0, 96], sizes = [8, 96], strides = [1, 1]} : vector<8x192xf32> to vector<8x96xf32>
    %cst_149 = arith.constant dense<0.000000e+00> : vector<8x96xf32>
    %642 = tpu.matmul %592, %12, %cst_149 {dimension_numbers = #tpu.dot_dimension_numbers<[1], [0], [0], [1], [0, 0, 1, 1], [], []>} : vector<8x32xf32>, vector<32x96xf32>, vector<8x96xf32> -> vector<8x96xf32>
    %643 = vector.broadcast %13 : vector<1x96xf32> to vector<8x96xf32>
    %644 = arith.addf %642, %643 : vector<8x96xf32>
    %645 = vector.extract_strided_slice %641 {offsets = [0, 0], sizes = [8, 32], strides = [1, 1]} : vector<8x96xf32> to vector<8x32xf32>
    %646 = vector.extract_strided_slice %644 {offsets = [0, 0], sizes = [8, 32], strides = [1, 1]} : vector<8x96xf32> to vector<8x32xf32>
    %647 = arith.addf %645, %646 : vector<8x32xf32>
    %648 = arith.negf %647 : vector<8x32xf32>
    %649 = math.exp %648 : vector<8x32xf32>
    %cst_150 = arith.constant 1.000000e+00 : f32
    %650 = vector.broadcast %cst_150 : f32 to vector<8x32xf32>
    %651 = arith.addf %650, %649 : vector<8x32xf32>
    %652 = arith.divf %650, %651 : vector<8x32xf32>
    %653 = vector.extract_strided_slice %641 {offsets = [0, 32], sizes = [8, 32], strides = [1, 1]} : vector<8x96xf32> to vector<8x32xf32>
    %654 = vector.extract_strided_slice %644 {offsets = [0, 32], sizes = [8, 32], strides = [1, 1]} : vector<8x96xf32> to vector<8x32xf32>
    %655 = arith.addf %653, %654 : vector<8x32xf32>
    %656 = arith.negf %655 : vector<8x32xf32>
    %657 = math.exp %656 : vector<8x32xf32>
    %cst_151 = arith.constant 1.000000e+00 : f32
    %658 = vector.broadcast %cst_151 : f32 to vector<8x32xf32>
    %659 = arith.addf %658, %657 : vector<8x32xf32>
    %660 = arith.divf %658, %659 : vector<8x32xf32>
    %661 = vector.extract_strided_slice %641 {offsets = [0, 64], sizes = [8, 32], strides = [1, 1]} : vector<8x96xf32> to vector<8x32xf32>
    %662 = vector.extract_strided_slice %644 {offsets = [0, 64], sizes = [8, 32], strides = [1, 1]} : vector<8x96xf32> to vector<8x32xf32>
    %663 = arith.mulf %652, %662 : vector<8x32xf32>
    %664 = arith.addf %661, %663 : vector<8x32xf32>
    %665 = math.tanh %664 : vector<8x32xf32>
    %cst_152 = arith.constant 1.000000e+00 : f32
    %666 = vector.broadcast %cst_152 : f32 to vector<8x32xf32>
    %667 = arith.subf %666, %660 : vector<8x32xf32>
    %668 = arith.mulf %667, %665 : vector<8x32xf32>
    %669 = arith.mulf %660, %592 : vector<8x32xf32>
    %670 = arith.addf %668, %669 : vector<8x32xf32>
    %671 = vector.broadcast %596 : i32 to vector<8x1xi32>
    %672 = arith.cmpi sgt, %0, %671 : vector<8x1xi32>
    %673 = vector.shape_cast %672 : vector<8x1xi1> to vector<8x1xi1>
    %674 = vector.broadcast %673 : vector<8x1xi1> to vector<8x32xi1>
    %675 = arith.select %674, %670, %592 : vector<8x32xi1>, vector<8x32xf32>
    %676 = vector.shape_cast %675 : vector<8x32xf32> to vector<8x1x32xf32>
    %c0_153 = arith.constant 0 : index
    %677 = arith.index_cast %596 : i32 to index
    %c32_154 = arith.constant 32 : index
    %678 = vector.load %arg16[%c0_153, %677, %c32_154] : memref<8x8x64xf32, #tpu.memory_space<vmem>>, vector<8x1x32xf32>
    tpu.vector_store %arg16[%c0_153, %677, %c32_154], %676 {strides = array<i32>} : memref<8x8x64xf32, #tpu.memory_space<vmem>>, vector<8x1x32xf32>,
    %c8_i32 = arith.constant 8 : i32
    %679 = tpu.iota {dimensions = array<i32: 1>} : vector<8x8xi32>
    %680 = vector.broadcast %0 : vector<8x1xi32> to vector<8x8xi32>
    %681 = arith.cmpi slt, %679, %680 : vector<8x8xi32>
    %682 = arith.extui %681 : vector<8x8xi1> to vector<8x8xi32>
    %683 = arith.sitofp %682 : vector<8x8xi32> to vector<8x8xf32>
    %c0_155 = arith.constant 0 : index
    %c0_156 = arith.constant 0 : index
    %c0_157 = arith.constant 0 : index
    %684 = vector.load %arg16[%c0_155, %c0_156, %c0_157] : memref<8x8x64xf32, #tpu.memory_space<vmem>>, vector<8x8x64xf32>
    %685 = vector.shape_cast %684 : vector<8x8x64xf32> to vector<64x64xf32>
    %c0_158 = arith.constant 0 : index
    %c0_159 = arith.constant 0 : index
    %686 = vector.load %arg9[%c0_158, %c0_159] : memref<64x16xf32, #tpu.memory_space<vmem>>, vector<64x16xf32>
    %cst_160 = arith.constant dense<0.000000e+00> : vector<64x16xf32>
    %687 = tpu.matmul %685, %686, %cst_160 {dimension_numbers = #tpu.dot_dimension_numbers<[1], [0], [0], [1], [0, 0, 1, 1], [], []>} : vector<64x64xf32>, vector<64x16xf32>, vector<64x16xf32> -> vector<64x16xf32>
    %c0_161 = arith.constant 0 : index
    %c0_162 = arith.constant 0 : index
    %688 = vector.load %arg10[%c0_161, %c0_162] : memref<1x16xf32, #tpu.memory_space<vmem>>, vector<1x16xf32>
    %689 = vector.broadcast %688 : vector<1x16xf32> to vector<64x16xf32>
    %690 = arith.addf %687, %689 : vector<64x16xf32>
    %691 = math.tanh %690 : vector<64x16xf32>
    %c0_163 = arith.constant 0 : index
    %c0_164 = arith.constant 0 : index
    %692 = vector.load %arg11[%c0_163, %c0_164] : memref<1x16xf32, #tpu.memory_space<vmem>>, vector<1x16xf32>
    %693 = vector.broadcast %692 : vector<1x16xf32> to vector<64x16xf32>
    %694 = arith.mulf %691, %693 : vector<64x16xf32>
    %cst_165 = arith.constant dense<0.000000e+00> : vector<64xf32>
    %695 = vector.multi_reduction <add>, %694, %cst_165 [1] : vector<64x16xf32> to vector<64xf32>
    %696 = vector.shape_cast %695 : vector<64xf32> to vector<8x8xf32>
    %cst_166 = arith.constant -1.000000e+30 : f32
    %697 = vector.broadcast %cst_166 : f32 to vector<8x8xf32>
    %698 = arith.select %681, %696, %697 : vector<8x8xi1>, vector<8x8xf32>
    %cst_167 = arith.constant dense<0xFF800000> : vector<8xf32>
    %699 = vector.multi_reduction <maximumf>, %698, %cst_167 [1] : vector<8x8xf32> to vector<8xf32>
    %700 = vector.shape_cast %699 : vector<8xf32> to vector<8x1xf32>
    %701 = vector.broadcast %700 : vector<8x1xf32> to vector<8x8xf32>
    %702 = arith.subf %698, %701 : vector<8x8xf32>
    %703 = math.exp %702 : vector<8x8xf32>
    %704 = arith.mulf %703, %683 : vector<8x8xf32>
    %cst_168 = arith.constant dense<0.000000e+00> : vector<8xf32>
    %705 = vector.multi_reduction <add>, %704, %cst_168 [1] : vector<8x8xf32> to vector<8xf32>
    %706 = vector.shape_cast %705 : vector<8xf32> to vector<8x1xf32>
    %cst_169 = arith.constant 1.000000e-30 : f32
    %707 = vector.broadcast %cst_169 : f32 to vector<8x1xf32>
    %708 = arith.maximumf %706, %707 : vector<8x1xf32>
    %709 = tpu.reciprocal %708 {approx = true} : vector<8x1xf32> -> vector<8x1xf32>
    %710 = vector.broadcast %709 : vector<8x1xf32> to vector<8x8xf32>
    %711 = arith.mulf %704, %710 : vector<8x8xf32>
    %712 = vector.shape_cast %711 : vector<8x8xf32> to vector<8x8x1xf32>
    %713 = vector.broadcast %712 : vector<8x8x1xf32> to vector<8x8x64xf32>
    %714 = arith.mulf %684, %713 : vector<8x8x64xf32>
    %cst_170 = arith.constant dense<0.000000e+00> : vector<8x64xf32>
    %715 = vector.multi_reduction <add>, %714, %cst_170 [1] : vector<8x8x64xf32> to vector<8x64xf32>
    %c0_171 = arith.constant 0 : index
    %c0_172 = arith.constant 0 : index
    %716 = vector.load %arg12[%c0_171, %c0_172] : memref<64x128xf32, #tpu.memory_space<vmem>>, vector<64x128xf32>
    %cst_173 = arith.constant dense<0.000000e+00> : vector<8x128xf32>
    %717 = tpu.matmul %715, %716, %cst_173 {dimension_numbers = #tpu.dot_dimension_numbers<[1], [0], [0], [1], [0, 0, 1, 1], [], []>} : vector<8x64xf32>, vector<64x128xf32>, vector<8x128xf32> -> vector<8x128xf32>
    %c0_174 = arith.constant 0 : index
    %c0_175 = arith.constant 0 : index
    %718 = vector.load %arg13[%c0_174, %c0_175] : memref<1x128xf32, #tpu.memory_space<vmem>>, vector<1x128xf32>
    %719 = vector.broadcast %718 : vector<1x128xf32> to vector<8x128xf32>
    %720 = arith.addf %717, %719 : vector<8x128xf32>
    %721 = arith.negf %720 : vector<8x128xf32>
    %722 = math.exp %721 : vector<8x128xf32>
    %cst_176 = arith.constant 1.000000e+00 : f32
    %723 = vector.broadcast %cst_176 : f32 to vector<8x128xf32>
    %724 = arith.addf %723, %722 : vector<8x128xf32>
    %725 = arith.divf %723, %724 : vector<8x128xf32>
    %c0_177 = arith.constant 0 : index
    %c0_178 = arith.constant 0 : index
    %726 = vector.load %arg14[%c0_177, %c0_178] : memref<8x128xf32, #tpu.memory_space<vmem>>, vector<8x128xf32>
    tpu.vector_store %arg14[%c0_177, %c0_178], %725 {strides = array<i32>} : memref<8x128xf32, #tpu.memory_space<vmem>>, vector<8x128xf32>,
    return
  }
  func.func @transform_0(%arg0: i32) -> (i32, i32, i32) {
    %c0_i32 = arith.constant 0 : i32
    %c0_i32_0 = arith.constant 0 : i32
    %c0_i32_1 = arith.constant 0 : i32
    return %arg0, %c0_i32, %c0_i32_0 : i32, i32, i32
  }
  func.func @transform_1(%arg0: i32) -> (i32, i32) {
    %c0_i32 = arith.constant 0 : i32
    %c0_i32_0 = arith.constant 0 : i32
    return %arg0, %c0_i32 : i32, i32
  }
  func.func @transform_2(%arg0: i32) -> (i32, i32) {
    %c0_i32 = arith.constant 0 : i32
    %c0_i32_0 = arith.constant 0 : i32
    %c0_i32_1 = arith.constant 0 : i32
    return %c0_i32, %c0_i32_0 : i32, i32
  }
  func.func @transform_3(%arg0: i32) -> (i32, i32) {
    %c0_i32 = arith.constant 0 : i32
    %c0_i32_0 = arith.constant 0 : i32
    %c0_i32_1 = arith.constant 0 : i32
    return %c0_i32, %c0_i32_0 : i32, i32
  }
  func.func @transform_4(%arg0: i32) -> (i32, i32) {
    %c0_i32 = arith.constant 0 : i32
    %c0_i32_0 = arith.constant 0 : i32
    %c0_i32_1 = arith.constant 0 : i32
    return %c0_i32, %c0_i32_0 : i32, i32
  }
  func.func @transform_5(%arg0: i32) -> (i32, i32) {
    %c0_i32 = arith.constant 0 : i32
    %c0_i32_0 = arith.constant 0 : i32
    %c0_i32_1 = arith.constant 0 : i32
    return %c0_i32, %c0_i32_0 : i32, i32
  }
  func.func @transform_6(%arg0: i32) -> (i32, i32) {
    %c0_i32 = arith.constant 0 : i32
    %c0_i32_0 = arith.constant 0 : i32
    %c0_i32_1 = arith.constant 0 : i32
    return %c0_i32, %c0_i32_0 : i32, i32
  }
  func.func @transform_7(%arg0: i32) -> (i32, i32) {
    %c0_i32 = arith.constant 0 : i32
    %c0_i32_0 = arith.constant 0 : i32
    %c0_i32_1 = arith.constant 0 : i32
    return %c0_i32, %c0_i32_0 : i32, i32
  }
  func.func @transform_8(%arg0: i32) -> (i32, i32) {
    %c0_i32 = arith.constant 0 : i32
    %c0_i32_0 = arith.constant 0 : i32
    %c0_i32_1 = arith.constant 0 : i32
    return %c0_i32, %c0_i32_0 : i32, i32
  }
  func.func @transform_9(%arg0: i32) -> (i32, i32) {
    %c0_i32 = arith.constant 0 : i32
    %c0_i32_0 = arith.constant 0 : i32
    %c0_i32_1 = arith.constant 0 : i32
    return %c0_i32, %c0_i32_0 : i32, i32
  }
  func.func @transform_10(%arg0: i32) -> (i32, i32) {
    %c0_i32 = arith.constant 0 : i32
    %c0_i32_0 = arith.constant 0 : i32
    %c0_i32_1 = arith.constant 0 : i32
    return %c0_i32, %c0_i32_0 : i32, i32
  }
  func.func @transform_11(%arg0: i32) -> (i32, i32) {
    %c0_i32 = arith.constant 0 : i32
    %c0_i32_0 = arith.constant 0 : i32
    %c0_i32_1 = arith.constant 0 : i32
    return %c0_i32, %c0_i32_0 : i32, i32
  }
  func.func @transform_12(%arg0: i32) -> (i32, i32) {
    %c0_i32 = arith.constant 0 : i32
    %c0_i32_0 = arith.constant 0 : i32
    %c0_i32_1 = arith.constant 0 : i32
    return %c0_i32, %c0_i32_0 : i32, i32
  }
  func.func @transform_13(%arg0: i32) -> (i32, i32) {
    %c0_i32 = arith.constant 0 : i32
    %c0_i32_0 = arith.constant 0 : i32
    return %arg0, %c0_i32 : i32, i32
  }
}

</mosaic_0001>

<llo_original>
// kernel: tpu_custom_call.1
$region0: #{tpu_custom_call.1}
  #allocation0 [shape = 'u32[]', space=smem, size = 0x4, offset = 0x4, fixed_abs, tag = 'smem constant byte address 0x4 - core index']
  #allocation1 [shape = 'u32[144,128]{1,0:T(1,128)}', space=vmem, size = 0x12000, scoped, tag = 'internal scratch']
  #allocation2 [shape = 'f32[8,8,192]{2,1,0:T(8,128)}', space=vmem, size = 0x10000, scoped, tag = 'scratch operand']
  #allocation3 [shape = 'f32[8,8,64]{2,1,0:T(8,128)}', space=vmem, size = 0x8000, scoped, tag = 'scratch operand']
  %s0 = inlined_call_operand.vmem [shape: f32[8,8,16], index: 0, kind: input, shape index: {}]
  %s1 = inlined_call_operand.vmem [shape: s32[8,1], index: 1, kind: input, shape index: {}]
  %s2 = inlined_call_operand.hbm [shape: f32[16,192], index: 2, kind: input, shape index: {}]
  %s3 = inlined_call_operand.vmem [shape: f32[1,192], index: 3, kind: input, shape index: {}]
  %s4 = inlined_call_operand.hbm [shape: f32[32,96], index: 4, kind: input, shape index: {}]
  %s5 = inlined_call_operand.hbm [shape: f32[1,96], index: 5, kind: input, shape index: {}]
  %s6 = inlined_call_operand.hbm [shape: f32[32,96], index: 6, kind: input, shape index: {}]
  %s7 = inlined_call_operand.hbm [shape: f32[1,96], index: 7, kind: input, shape index: {}]
  %s8 = inlined_call_operand.vmem [shape: f32[64,16], index: 8, kind: input, shape index: {}]
  %s9 = inlined_call_operand.hbm [shape: f32[1,16], index: 9, kind: input, shape index: {}]
  %s10 = inlined_call_operand.hbm [shape: f32[1,16], index: 10, kind: input, shape index: {}]
  %s11 = inlined_call_operand.vmem [shape: f32[64,128], index: 11, kind: input, shape index: {}]
  %s12 = inlined_call_operand.vmem [shape: f32[1,128], index: 12, kind: input, shape index: {}]
  %s13 = inlined_call_operand.hbm [shape: f32[8,128], index: 13, kind: output, shape index: {}]
  %s14 = sld [smem:[#allocation0]]
  $region90: #{tpu_custom_call.1} parent=0
    _
  %s16 = ssub.s32 1, %s14
  %s17 = scalar_select 0, %s16, %s14
  $region1: #{tpu_custom_call.1} parent=0
    #allocation4 [shape = 'u8[16384]{0}', space=vmem, size = 0x4000, scoped, tag = 'input window, operand 2, single buffered']
    #allocation5 [shape = 's32[1]{0}', space=sflag, size = 0x4, scoped, tag = 'scoped memory for tpu_custom_call.1']
    #allocation6 [shape = 's32[1]{0}', space=sflag, size = 0x4, scoped, tag = 'scoped memory for tpu_custom_call.1']
    #allocation7 [shape = 'u8[16384]{0}', space=vmem, size = 0x4000, scoped, tag = 'input window, operand 4, single buffered']
    #allocation8 [shape = 's32[1]{0}', space=sflag, size = 0x4, scoped, tag = 'scoped memory for tpu_custom_call.1']
    #allocation9 [shape = 'u8[512]{0}', space=vmem, size = 0x400, scoped, tag = 'input window, operand 5, single buffered']
    #allocation10 [shape = 'u8[16384]{0}', space=vmem, size = 0x4000, scoped, tag = 'input window, operand 6, single buffered']
    #allocation11 [shape = 's32[1]{0}', space=sflag, size = 0x4, scoped, tag = 'scoped memory for tpu_custom_call.1']
    #allocation12 [shape = 'u8[512]{0}', space=vmem, size = 0x400, scoped, tag = 'input window, operand 7, single buffered']
    #allocation13 [shape = 'u8[512]{0}', space=vmem, size = 0x400, scoped, tag = 'input window, operand 9, single buffered']
    #allocation14 [shape = 's32[1]{0}', space=sflag, size = 0x4, scoped, tag = 'scoped memory for tpu_custom_call.1']
    #allocation15 [shape = 'u8[512]{0}', space=vmem, size = 0x400, scoped, tag = 'input window, operand 10, single buffered']
    #allocation16 [shape = 'u8[4096]{0}', space=vmem, size = 0x1000, scoped, tag = 'output window, operand 0, single buffered']
    %18 = vsyncpa [#allocation5], 0
    %19 = vsyncpa [#allocation8], 0
    %20 = vsyncpa [#allocation11], 0
    %21 = vsyncpa [#allocation14], 0
    %22 = vsyncpa [#allocation6], 0
    // Predicated region
    $region2: #{tpu_custom_call.1} parent=1 // pred_check
      _
    $region3: #{tpu_custom_call.1} parent=1 // pred_check_branch
      %24 = sbr.rel (0) target = $region5
    $region4: #{tpu_custom_call.1} parent=1 // pred_region
      _
    $region5: #{tpu_custom_call.1} parent=1 // pred_fallthru
      _
    // Predicated region
    $region6: #{tpu_custom_call.1} parent=1 // pred_check
      _
    $region7: #{tpu_custom_call.1} parent=1 // pred_check_branch
      %26 = sbr.rel (0) target = $region9
    $region8: #{tpu_custom_call.1} parent=1 // pred_region
      _
    $region9: #{tpu_custom_call.1} parent=1 // pred_fallthru
      _
    // Predicated region
    $region10: #{tpu_custom_call.1} parent=1 // pred_check
      _
    $region11: #{tpu_custom_call.1} parent=1 // pred_check_branch
      %28 = sbr.rel (0) target = $region13
    $region12: #{tpu_custom_call.1} parent=1 // pred_region
      %s30 = ssub.s32 512, 512
      %31 = vsyncadd [#allocation5], %s30
      %s32 = sshll.u32 [#allocation4], 4
      %s33 = int_to_ptr.vmem [resolvable:$true] %s32
      %38 = dma.hbm_to_vmem [thread:$0]  %s2, 512, %s33, [#allocation5], 256, 256, 16
    $region13: #{tpu_custom_call.1} parent=1 // pred_fallthru
      _
    // Predicated region
    $region14: #{tpu_custom_call.1} parent=1 // pred_check
      _
    $region15: #{tpu_custom_call.1} parent=1 // pred_check_branch
      %40 = sbr.rel (0) target = $region17
    $region16: #{tpu_custom_call.1} parent=1 // pred_region
      _
    $region17: #{tpu_custom_call.1} parent=1 // pred_fallthru
      _
    // Predicated region
    $region18: #{tpu_custom_call.1} parent=1 // pred_check
      _
    $region19: #{tpu_custom_call.1} parent=1 // pred_check_branch
      %42 = sbr.rel (0) target = $region21
    $region20: #{tpu_custom_call.1} parent=1 // pred_region
      %s44 = ssub.s32 512, 512
      %45 = vsyncadd [#allocation8], %s44
      %s46 = sshll.u32 [#allocation7], 4
      %s47 = int_to_ptr.vmem [resolvable:$true] %s46
      %52 = dma.hbm_to_vmem [thread:$0]  %s4, 512, %s47, [#allocation8], 128, 128, 8
    $region21: #{tpu_custom_call.1} parent=1 // pred_fallthru
      _
    // Predicated region
    $region22: #{tpu_custom_call.1} parent=1 // pred_check
      _
    $region23: #{tpu_custom_call.1} parent=1 // pred_check_branch
      %54 = sbr.rel (0) target = $region25
    $region24: #{tpu_custom_call.1} parent=1 // pred_region
      %s56 = ssub.s32 16, 16
      %57 = vsyncadd [#allocation8], %s56
      %s59 = sshll.u32 [#allocation9], 4
      %s60 = int_to_ptr.vmem [resolvable:$true] %s59
      %62 = dma.hbm_to_vmem [thread:$0]  %s5, 16, %s60, [#allocation8]
    $region25: #{tpu_custom_call.1} parent=1 // pred_fallthru
      _
    // Predicated region
    $region26: #{tpu_custom_call.1} parent=1 // pred_check
      _
    $region27: #{tpu_custom_call.1} parent=1 // pred_check_branch
      %64 = sbr.rel (0) target = $region29
    $region28: #{tpu_custom_call.1} parent=1 // pred_region
      %s66 = ssub.s32 512, 512
      %67 = vsyncadd [#allocation11], %s66
      %s68 = sshll.u32 [#allocation10], 4
      %s69 = int_to_ptr.vmem [resolvable:$true] %s68
      %74 = dma.hbm_to_vmem [thread:$0]  %s6, 512, %s69, [#allocation11], 128, 128, 8
    $region29: #{tpu_custom_call.1} parent=1 // pred_fallthru
      _
    // Predicated region
    $region30: #{tpu_custom_call.1} parent=1 // pred_check
      _
    $region31: #{tpu_custom_call.1} parent=1 // pred_check_branch
      %76 = sbr.rel (0) target = $region33
    $region32: #{tpu_custom_call.1} parent=1 // pred_region
      %s78 = ssub.s32 16, 16
      %79 = vsyncadd [#allocation11], %s78
      %s81 = sshll.u32 [#allocation12], 4
      %s82 = int_to_ptr.vmem [resolvable:$true] %s81
      %84 = dma.hbm_to_vmem [thread:$0]  %s7, 16, %s82, [#allocation11]
    $region33: #{tpu_custom_call.1} parent=1 // pred_fallthru
      _
    // Predicated region
    $region34: #{tpu_custom_call.1} parent=1 // pred_check
      _
    $region35: #{tpu_custom_call.1} parent=1 // pred_check_branch
      %86 = sbr.rel (0) target = $region37
    $region36: #{tpu_custom_call.1} parent=1 // pred_region
      _
    $region37: #{tpu_custom_call.1} parent=1 // pred_fallthru
      _
    // Predicated region
    $region38: #{tpu_custom_call.1} parent=1 // pred_check
      _
    $region39: #{tpu_custom_call.1} parent=1 // pred_check_branch
      %88 = sbr.rel (0) target = $region41
    $region40: #{tpu_custom_call.1} parent=1 // pred_region
      %s90 = ssub.s32 16, 16
      %91 = vsyncadd [#allocation14], %s90
      %s93 = sshll.u32 [#allocation13], 4
      %s94 = int_to_ptr.vmem [resolvable:$true] %s93
      %96 = dma.hbm_to_vmem [thread:$0]  %s9, 16, %s94, [#allocation14]
    $region41: #{tpu_custom_call.1} parent=1 // pred_fallthru
      _
    // Predicated region
    $region42: #{tpu_custom_call.1} parent=1 // pred_check
      _
    $region43: #{tpu_custom_call.1} parent=1 // pred_check_branch
      %98 = sbr.rel (0) target = $region45
    $region44: #{tpu_custom_call.1} parent=1 // pred_region
      %s100 = ssub.s32 16, 16
      %101 = vsyncadd [#allocation14], %s100
      %s103 = sshll.u32 [#allocation15], 4
      %s104 = int_to_ptr.vmem [resolvable:$true] %s103
      %106 = dma.hbm_to_vmem [thread:$0]  %s10, 16, %s104, [#allocation14]
    $region45: #{tpu_custom_call.1} parent=1 // pred_fallthru
      _
    // Predicated region
    $region46: #{tpu_custom_call.1} parent=1 // pred_check
      _
    $region47: #{tpu_custom_call.1} parent=1 // pred_check_branch
      %108 = sbr.rel (0) target = $region49
    $region48: #{tpu_custom_call.1} parent=1 // pred_region
      _
    $region49: #{tpu_custom_call.1} parent=1 // pred_fallthru
      _
    // Predicated region
    $region50: #{tpu_custom_call.1} parent=1 // pred_check
      _
    $region51: #{tpu_custom_call.1} parent=1 // pred_check_branch
      %110 = sbr.rel (0) target = $region53
    $region52: #{tpu_custom_call.1} parent=1 // pred_region
      _
    $region53: #{tpu_custom_call.1} parent=1 // pred_fallthru
      _
    // Predicated region
    $region54: #{tpu_custom_call.1} parent=1 // pred_check
      _
    $region55: #{tpu_custom_call.1} parent=1 // pred_check_branch
      %112 = sbr.rel (0) target = $region57
    $region56: #{tpu_custom_call.1} parent=1 // pred_region
      %113 = dma.done [#allocation5], 512
    $region57: #{tpu_custom_call.1} parent=1 // pred_fallthru
      _
    // Predicated region
    $region58: #{tpu_custom_call.1} parent=1 // pred_check
      _
    $region59: #{tpu_custom_call.1} parent=1 // pred_check_branch
      %115 = sbr.rel (0) target = $region61
    $region60: #{tpu_custom_call.1} parent=1 // pred_region
      %116 = dma.done [#allocation8], 512
    $region61: #{tpu_custom_call.1} parent=1 // pred_fallthru
      _
    // Predicated region
    $region62: #{tpu_custom_call.1} parent=1 // pred_check
      _
    $region63: #{tpu_custom_call.1} parent=1 // pred_check_branch
      %118 = sbr.rel (0) target = $region65
    $region64: #{tpu_custom_call.1} parent=1 // pred_region
      %119 = dma.done [#allocation8], 16
    $region65: #{tpu_custom_call.1} parent=1 // pred_fallthru
      _
    // Predicated region
    $region66: #{tpu_custom_call.1} parent=1 // pred_check
      _
    $region67: #{tpu_custom_call.1} parent=1 // pred_check_branch
      %121 = sbr.rel (0) target = $region69
    $region68: #{tpu_custom_call.1} parent=1 // pred_region
      %122 = dma.done [#allocation11], 512
    $region69: #{tpu_custom_call.1} parent=1 // pred_fallthru
      _
    // Predicated region
    $region70: #{tpu_custom_call.1} parent=1 // pred_check
      _
    $region71: #{tpu_custom_call.1} parent=1 // pred_check_branch
      %124 = sbr.rel (0) target = $region73
    $region72: #{tpu_custom_call.1} parent=1 // pred_region
      %125 = dma.done [#allocation11], 16
    $region73: #{tpu_custom_call.1} parent=1 // pred_fallthru
      _
    // Predicated region
    $region74: #{tpu_custom_call.1} parent=1 // pred_check
      _
    $region75: #{tpu_custom_call.1} parent=1 // pred_check_branch
      %127 = sbr.rel (0) target = $region77
    $region76: #{tpu_custom_call.1} parent=1 // pred_region
      %128 = dma.done [#allocation14], 16
    $region77: #{tpu_custom_call.1} parent=1 // pred_fallthru
      _
    // Predicated region
    $region78: #{tpu_custom_call.1} parent=1 // pred_check
      _
    $region79: #{tpu_custom_call.1} parent=1 // pred_check_branch
      %130 = sbr.rel (0) target = $region81
    $region80: #{tpu_custom_call.1} parent=1 // pred_region
      %131 = dma.done [#allocation14], 16
    $region81: #{tpu_custom_call.1} parent=1 // pred_fallthru
      _
    %v132 = vld [vmem:[%s1] sm:$0xff]
    %v133 = vld [vmem:[%s0] sm:$0xff]
    %v134 = vld [vmem:[%s0 + $0x8] sm:$0xff]
    %v135 = vld [vmem:[%s0 + $0x10] sm:$0xff]
    %v136 = vld [vmem:[%s0 + $0x18] sm:$0xff]
    %v137 = vld [vmem:[%s0 + $0x20] sm:$0xff]
    %v138 = vld [vmem:[%s0 + $0x28] sm:$0xff]
    %v139 = vld [vmem:[%s0 + $0x30] sm:$0xff]
    %v140 = vld [vmem:[%s0 + $0x38] sm:$0xff]
    %v141 = vld [vmem:[#allocation4] sm:$0xff]
    %v142 = vld [vmem:[#allocation4 + $0x8] sm:$0xff]
    %v143 = vld [vmem:[#allocation4 + $0x10] sm:$0xff]
    %v144 = vld [vmem:[#allocation4 + $0x18] sm:$0xff]
    %v145 = vld [vmem:[%s3] sm:$0x3]
    %v147 = vlaneseq
    %v148 = vshrl.u32 %v147, 7
    %v149 = vsub.s32 0, %v148
    %v150 = vrot.slane %v145, %v149
    %v151 = vlaneseq
    %v152 = vshrl.u32 %v151, 7
    %v153 = vsub.s32 1, %v152
    %v154 = vrot.slane %v145, %v153
    %vm157 = vcmask 130048
    %v159 = vsel %vm157, %v133, 0
    %v162 = vsel %vm157, %v134, 0
    %v165 = vsel %vm157, %v135, 0
    %v168 = vsel %vm157, %v136, 0
    %v171 = vsel %vm157, %v137, 0
    %v174 = vsel %vm157, %v138, 0
    %v177 = vsel %vm157, %v139, 0
    %v180 = vsel %vm157, %v140, 0
    %182 = vmatprep.subr.mxu0 %v142
    %183 = vmatpush1.msra.mxu0 %v141
    %184 = vmatprep.subr.mxu0 %v144
    %185 = vmatpush1.msra.mxu0 %v143
    %186 = vmatprep.subr.mxu0 0.0
    %187 = vmatpush1.msra.mxu0 0.0
    %188 = vmatprep.subr.mxu0 0.0
    %189 = vmatpush1.msra.mxu0 0.0
    %190 = vmatprep.subr.mxu0 0.0
    %191 = vmatpush1.msra.mxu0 0.0
    %192 = vmatprep.subr.mxu0 0.0
    %193 = vmatpush1.msra.mxu0 0.0
    %194 = vmatprep.subr.mxu0 0.0
    %195 = vmatpush1.msra.mxu0 0.0
    %196 = vmatprep.subr.mxu0 0.0
    %197 = vmatpush1.msra.mxu0 0.0
    %198 = vmatprep.subr.mxu0 0.0
    %199 = vmatpush1.msra.mxu0 0.0
    %200 = vmatprep.subr.mxu0 0.0
    %201 = vmatpush1.msra.mxu0 0.0
    %202 = vmatprep.subr.mxu0 0.0
    %203 = vmatpush1.msra.mxu0 0.0
    %204 = vmatprep.subr.mxu0 0.0
    %205 = vmatpush1.msra.mxu0 0.0
    %206 = vmatprep.subr.mxu0 0.0
    %207 = vmatpush1.msra.mxu0 0.0
    %208 = vmatprep.subr.mxu0 0.0
    %209 = vmatpush1.msra.mxu0 0.0
    %210 = vmatprep.subr.mxu0 0.0
    %211 = vmatpush1.msra.mxu0 0.0
    %212 = vmatprep.subr.mxu0 0.0
    %213 = vmatpush1.msra.mxu0 0.0
    %214 = vmatprep.subr.mxu0 0.0
    %215 = vmatpush1.msra.mxu0 0.0
    %216 = vmatprep.subr.mxu0 0.0
    %217 = vmatpush1.msra.mxu0 0.0
    %218 = vmatprep.subr.mxu0 0.0
    %219 = vmatpush1.msra.mxu0 0.0
    %220 = vmatprep.subr.mxu0 0.0
    %221 = vmatpush1.msra.mxu0 0.0
    %222 = vmatprep.subr.mxu0 0.0
    %223 = vmatpush1.msra.mxu0 0.0
    %224 = vmatprep.subr.mxu0 0.0
    %225 = vmatpush1.msra.mxu0 0.0
    %226 = vmatprep.subr.mxu0 0.0
    %227 = vmatpush1.msra.mxu0 0.0
    %228 = vmatprep.subr.mxu0 0.0
    %229 = vmatpush1.msra.mxu0 0.0
    %230 = vmatprep.subr.mxu0 0.0
    %231 = vmatpush1.msra.mxu0 0.0
    %232 = vmatprep.subr.mxu0 0.0
    %233 = vmatpush1.msra.mxu0 0.0
    %234 = vmatprep.subr.mxu0 0.0
    %235 = vmatpush1.msra.mxu0 0.0
    %236 = vmatprep.subr.mxu0 0.0
    %237 = vmatpush1.msra.mxu0 0.0
    %238 = vmatprep.subr.mxu0 0.0
    %239 = vmatpush1.msra.mxu0 0.0
    %240 = vmatprep.subr.mxu0 0.0
    %241 = vmatpush1.msra.mxu0 0.0
    %242 = vmatprep.subr.mxu0 0.0
    %243 = vmatpush1.msra.mxu0 0.0
    %244 = vmatprep.subr.mxu0 0.0
    %245 = vmatpush1.msra.mxu0 0.0
    %246 = vmatprep.mubr.f32.mxu0 0.0
    %247 = vmatmul.mubr.f32.gmra.mrb[0].mxu0 %v159
    %v248 = vpop.f32.mrb[0].mxu0
    %v249 = vadd.f32 %v150, %v248
    %v250 = vpop.f32.mrb[0].mxu0
    %v251 = vadd.f32 %v154, %v250
    %252 = vmatprep.mubr.f32.mxu0 0.0
    %253 = vmatmul.mubr.f32.gmra.mrb[0].mxu0 %v162
    %v254 = vpop.f32.mrb[0].mxu0
    %v255 = vadd.f32 %v150, %v254
    %v256 = vpop.f32.mrb[0].mxu0
    %v257 = vadd.f32 %v154, %v256
    %258 = vmatprep.mubr.f32.mxu0 0.0
    %259 = vmatmul.mubr.f32.gmra.mrb[0].mxu0 %v165
    %v260 = vpop.f32.mrb[0].mxu0
    %v261 = vadd.f32 %v150, %v260
    %v262 = vpop.f32.mrb[0].mxu0
    %v263 = vadd.f32 %v154, %v262
    %264 = vmatprep.mubr.f32.mxu0 0.0
    %265 = vmatmul.mubr.f32.gmra.mrb[0].mxu0 %v168
    %v266 = vpop.f32.mrb[0].mxu0
    %v267 = vadd.f32 %v150, %v266
    %v268 = vpop.f32.mrb[0].mxu0
    %v269 = vadd.f32 %v154, %v268
    %270 = vmatprep.mubr.f32.mxu0 0.0
    %271 = vmatmul.mubr.f32.gmra.mrb[0].mxu0 %v171
    %v272 = vpop.f32.mrb[0].mxu0
    %v273 = vadd.f32 %v150, %v272
    %v274 = vpop.f32.mrb[0].mxu0
    %v275 = vadd.f32 %v154, %v274
    %276 = vmatprep.mubr.f32.mxu0 0.0
    %277 = vmatmul.mubr.f32.gmra.mrb[0].mxu0 %v174
    %v278 = vpop.f32.mrb[0].mxu0
    %v279 = vadd.f32 %v150, %v278
    %v280 = vpop.f32.mrb[0].mxu0
    %v281 = vadd.f32 %v154, %v280
    %282 = vmatprep.mubr.f32.mxu0 0.0
    %283 = vmatmul.mubr.f32.gmra.mrb[0].mxu0 %v177
    %v284 = vpop.f32.mrb[0].mxu0
    %v285 = vadd.f32 %v150, %v284
    %v286 = vpop.f32.mrb[0].mxu0
    %v287 = vadd.f32 %v154, %v286
    %288 = vmatprep.mubr.f32.mxu0 0.0
    %289 = vmatmul.mubr.f32.gmra.mrb[0].mxu0 %v180
    %v290 = vpop.f32.mrb[0].mxu0
    %v291 = vadd.f32 %v150, %v290
    %v292 = vpop.f32.mrb[0].mxu0
    %v293 = vadd.f32 %v154, %v292
    %294 = vdwg.mxu0
    %295 = vst [vmem:[#allocation2] sm:$0xff] %v249
    %vm296 = vcmask 523264
    %297 = vst.msk [vmem:[#allocation2 + $0x8] sm:$0xff] %vm296, %v251
    %298 = vst [vmem:[#allocation2 + $0x10] sm:$0xff] %v255
    %299 = vst.msk [vmem:[#allocation2 + $0x18] sm:$0xff] %vm296, %v257
    %300 = vst [vmem:[#allocation2 + $0x20] sm:$0xff] %v261
    %301 = vst.msk [vmem:[#allocation2 + $0x28] sm:$0xff] %vm296, %v263
    %302 = vst [vmem:[#allocation2 + $0x30] sm:$0xff] %v267
    %303 = vst.msk [vmem:[#allocation2 + $0x38] sm:$0xff] %vm296, %v269
    %304 = vst [vmem:[#allocation2 + $0x40] sm:$0xff] %v273
    %305 = vst.msk [vmem:[#allocation2 + $0x48] sm:$0xff] %vm296, %v275
    %306 = vst [vmem:[#allocation2 + $0x50] sm:$0xff] %v279
    %307 = vst.msk [vmem:[#allocation2 + $0x58] sm:$0xff] %vm296, %v281
    %308 = vst [vmem:[#allocation2 + $0x60] sm:$0xff] %v285
    %309 = vst.msk [vmem:[#allocation2 + $0x68] sm:$0xff] %vm296, %v287
    %310 = vst [vmem:[#allocation2 + $0x70] sm:$0xff] %v291
    %311 = vst.msk [vmem:[#allocation2 + $0x78] sm:$0xff] %vm296, %v293
    %v312 = vld [vmem:[#allocation7] sm:$0xff]
    %v313 = vld [vmem:[#allocation7 + $0x8] sm:$0xff]
    %v314 = vld [vmem:[#allocation7 + $0x10] sm:$0xff]
    %v315 = vld [vmem:[#allocation7 + $0x18] sm:$0xff]
    %v316 = vld [vmem:[#allocation9] sm:$0x1]
    %v317 = vld [vmem:[#allocation10] sm:$0xff]
    %v318 = vld [vmem:[#allocation10 + $0x8] sm:$0xff]
    %v319 = vld [vmem:[#allocation10 + $0x10] sm:$0xff]
    %v320 = vld [vmem:[#allocation10 + $0x18] sm:$0xff]
    %v321 = vld [vmem:[#allocation12] sm:$0x1]
    %v322 = vld [vmem:[#allocation2] ss:$8 sm:$0x3]
    %s323 = scalar_lea.vmem [#allocation2], 16
    %v324 = vld [vmem:[%s323] ss:$8 sm:$0x3]
    %s325 = scalar_lea.vmem [#allocation2], 32
    %v326 = vld [vmem:[%s325] ss:$8 sm:$0x3]
    %s327 = scalar_lea.vmem [#allocation2], 48
    %v328 = vld [vmem:[%s327] ss:$8 sm:$0x3]
    %s329 = scalar_lea.vmem [#allocation2], 64
    %v330 = vld [vmem:[%s329] ss:$8 sm:$0x3]
    %s331 = scalar_lea.vmem [#allocation2], 80
    %v332 = vld [vmem:[%s331] ss:$8 sm:$0x3]
    %s333 = scalar_lea.vmem [#allocation2], 96
    %v334 = vld [vmem:[%s333] ss:$8 sm:$0x3]
    %s335 = scalar_lea.vmem [#allocation2], 112
    %v336 = vld [vmem:[%s335] ss:$8 sm:$0x3]
    %v338 = vlaneseq
    %v339 = vshrl.u32 %v338, 7
    %v340 = vsub.s32 0, %v339
    %v341 = vrot.slane %v316, %v340
    %vm343 = vcmask 261120
    %v345 = vsel %vm343, 0.0, 0
    %347 = vmatprep.subr.mxu0 0.0
    %348 = vmatpush1.msra.mxu0 %v312
    %349 = vmatprep.subr.mxu0 0.0
    %350 = vmatpush1.msra.mxu0 %v313
    %351 = vmatprep.subr.mxu0 0.0
    %352 = vmatpush1.msra.mxu0 %v314
    %353 = vmatprep.subr.mxu0 0.0
    %354 = vmatpush1.msra.mxu0 %v315
    %355 = vmatprep.subr.mxu0 0.0
    %356 = vmatpush1.msra.mxu0 0.0
    %357 = vmatprep.subr.mxu0 0.0
    %358 = vmatpush1.msra.mxu0 0.0
    %359 = vmatprep.subr.mxu0 0.0
    %360 = vmatpush1.msra.mxu0 0.0
    %361 = vmatprep.subr.mxu0 0.0
    %362 = vmatpush1.msra.mxu0 0.0
    %363 = vmatprep.subr.mxu0 0.0
    %364 = vmatpush1.msra.mxu0 0.0
    %365 = vmatprep.subr.mxu0 0.0
    %366 = vmatpush1.msra.mxu0 0.0
    %367 = vmatprep.subr.mxu0 0.0
    %368 = vmatpush1.msra.mxu0 0.0
    %369 = vmatprep.subr.mxu0 0.0
    %370 = vmatpush1.msra.mxu0 0.0
    %371 = vmatprep.subr.mxu0 0.0
    %372 = vmatpush1.msra.mxu0 0.0
    %373 = vmatprep.subr.mxu0 0.0
    %374 = vmatpush1.msra.mxu0 0.0
    %375 = vmatprep.subr.mxu0 0.0
    %376 = vmatpush1.msra.mxu0 0.0
    %377 = vmatprep.subr.mxu0 0.0
    %378 = vmatpush1.msra.mxu0 0.0
    %379 = vmatprep.subr.mxu0 0.0
    %380 = vmatpush1.msra.mxu0 0.0
    %381 = vmatprep.subr.mxu0 0.0
    %382 = vmatpush1.msra.mxu0 0.0
    %383 = vmatprep.subr.mxu0 0.0
    %384 = vmatpush1.msra.mxu0 0.0
    %385 = vmatprep.subr.mxu0 0.0
    %386 = vmatpush1.msra.mxu0 0.0
    %387 = vmatprep.subr.mxu0 0.0
    %388 = vmatpush1.msra.mxu0 0.0
    %389 = vmatprep.subr.mxu0 0.0
    %390 = vmatpush1.msra.mxu0 0.0
    %391 = vmatprep.subr.mxu0 0.0
    %392 = vmatpush1.msra.mxu0 0.0
    %393 = vmatprep.subr.mxu0 0.0
    %394 = vmatpush1.msra.mxu0 0.0
    %395 = vmatprep.subr.mxu0 0.0
    %396 = vmatpush1.msra.mxu0 0.0
    %397 = vmatprep.subr.mxu0 0.0
    %398 = vmatpush1.msra.mxu0 0.0
    %399 = vmatprep.subr.mxu0 0.0
    %400 = vmatpush1.msra.mxu0 0.0
    %401 = vmatprep.subr.mxu0 0.0
    %402 = vmatpush1.msra.mxu0 0.0
    %403 = vmatprep.subr.mxu0 0.0
    %404 = vmatpush1.msra.mxu0 0.0
    %405 = vmatprep.subr.mxu0 0.0
    %406 = vmatpush1.msra.mxu0 0.0
    %407 = vmatprep.subr.mxu0 0.0
    %408 = vmatpush1.msra.mxu0 0.0
    %409 = vmatprep.subr.mxu0 0.0
    %410 = vmatpush1.msra.mxu0 0.0
    %411 = vmatprep.mubr.f32.mxu0 0.0
    %412 = vmatmul.mubr.f32.gmra.mrb[0].mxu0 %v345
    %v413 = vpop.f32.mrb[0].mxu0
    %v414 = vadd.f32 %v341, %v413
    %v415 = vpop.f32.mrb[0].mxu0
    %416 = vdwg.mxu0
    %v418 = vcombine.high %v414, %v414
    %v420 = vunpack.c.l.s4 1966171168
    %v421 = vunpack.c.0.s8 %v420
    %v422 = vlaneseq
    %v423 = vshrl.u32 %v422, 7
    %v424 = vsub.s32 %v421, %v423
    %v425 = vrot.slane %v414, %v424
    %v427 = vunpack.c.l.s4 1966171168
    %v428 = vunpack.c.0.s8 %v427
    %v429 = vlaneseq
    %v430 = vshrl.u32 %v429, 7
    %v431 = vsub.s32 %v428, %v430
    %v432 = vrot.slane %v418, %v431
    %v433 = vcombine.high %v425, %v425
    %v434 = vcombine.high %v432, %v432
    %v436 = vunpack.c.l.s4 1966171168
    %v437 = vunpack.c.0.s8 %v436
    %v438 = vlaneseq
    %v439 = vshrl.u32 %v438, 7
    %v440 = vsub.s32 %v437, %v439
    %v441 = vrot.slane %v425, %v440
    %v443 = vunpack.c.l.s4 1966171168
    %v444 = vunpack.c.0.s8 %v443
    %v445 = vlaneseq
    %v446 = vshrl.u32 %v445, 7
    %v447 = vsub.s32 %v444, %v446
    %v448 = vrot.slane %v432, %v447
    %v450 = vunpack.c.l.s4 1966171168
    %v451 = vunpack.c.0.s8 %v450
    %v452 = vlaneseq
    %v453 = vshrl.u32 %v452, 7
    %v454 = vsub.s32 %v451, %v453
    %v455 = vrot.slane %v433, %v454
    %v457 = vunpack.c.l.s4 1966171168
    %v458 = vunpack.c.0.s8 %v457
    %v459 = vlaneseq
    %v460 = vshrl.u32 %v459, 7
    %v461 = vsub.s32 %v458, %v460
    %v462 = vrot.slane %v434, %v461
    %v463 = vcombine.high %v441, %v441
    %v464 = vcombine.high %v448, %v448
    %v465 = vcombine.high %v455, %v455
    %v466 = vcombine.high %v462, %v462
    %v475 = vadd.f32 %v322, %v441
    %v476 = vadd.f32 %v324, %v455
    %v477 = vadd.f32 %v326, %v463
    %v478 = vadd.f32 %v328, %v465
    %v479 = vadd.f32 %v330, %v448
    %v480 = vadd.f32 %v332, %v462
    %v481 = vadd.f32 %v334, %v464
    %v482 = vadd.f32 %v336, %v466
    %v483 = vxor.u32 %v475, 2147483648
    %v484 = vxor.u32 %v476, 2147483648
    %v485 = vxor.u32 %v477, 2147483648
    %v486 = vxor.u32 %v478, 2147483648
    %v487 = vxor.u32 %v479, 2147483648
    %v488 = vxor.u32 %v480, 2147483648
    %v489 = vxor.u32 %v481, 2147483648
    %v490 = vxor.u32 %v482, 2147483648
    %v491 = vmul.f32 %v483, 1.442695
    %v492 = vpow.pop %v491
    %v493 = vmul.f32 %v484, 1.442695
    %v494 = vpow.pop %v493
    %v495 = vmul.f32 %v485, 1.442695
    %v496 = vpow.pop %v495
    %v497 = vmul.f32 %v486, 1.442695
    %v498 = vpow.pop %v497
    %v499 = vmul.f32 %v487, 1.442695
    %v500 = vpow.pop %v499
    %v501 = vmul.f32 %v488, 1.442695
    %v502 = vpow.pop %v501
    %v503 = vmul.f32 %v489, 1.442695
    %v504 = vpow.pop %v503
    %v505 = vmul.f32 %v490, 1.442695
    %v506 = vpow.pop %v505
    %v507 = vadd.f32 %v492, 1.0
    %v508 = vadd.f32 %v494, 1.0
    %v509 = vadd.f32 %v496, 1.0
    %v510 = vadd.f32 %v498, 1.0
    %v511 = vadd.f32 %v500, 1.0
    %v512 = vadd.f32 %v502, 1.0
    %v513 = vadd.f32 %v504, 1.0
    %v514 = vadd.f32 %v506, 1.0
    %v515 = vrcp.pop %v507
    %v516 = vmul.f32 1.0, %v515
    %v517 = vrcp.pop %v508
    %v518 = vmul.f32 1.0, %v517
    %v519 = vrcp.pop %v509
    %v520 = vmul.f32 1.0, %v519
    %v521 = vrcp.pop %v510
    %v522 = vmul.f32 1.0, %v521
    %v523 = vrcp.pop %v511
    %v524 = vmul.f32 1.0, %v523
    %v525 = vrcp.pop %v512
    %v526 = vmul.f32 1.0, %v525
    %v527 = vrcp.pop %v513
    %v528 = vmul.f32 1.0, %v527
    %v529 = vrcp.pop %v514
    %v530 = vmul.f32 1.0, %v529
    %531 = vrot.lane.b32.xlu0 %v441, 64
    %v532 = vpop.permute.xlu0 %531
    %533 = vrot.lane.b32.xlu0 %v455, 64
    %v534 = vpop.permute.xlu0 %533
    %535 = vrot.lane.b32.xlu0 %v463, 64
    %v536 = vpop.permute.xlu0 %535
    %537 = vrot.lane.b32.xlu0 %v465, 64
    %v538 = vpop.permute.xlu0 %537
    %539 = vrot.lane.b32.xlu0 %v448, 64
    %v540 = vpop.permute.xlu0 %539
    %541 = vrot.lane.b32.xlu0 %v462, 64
    %v542 = vpop.permute.xlu0 %541
    %543 = vrot.lane.b32.xlu0 %v464, 64
    %v544 = vpop.permute.xlu0 %543
    %545 = vrot.lane.b32.xlu0 %v466, 64
    %v546 = vpop.permute.xlu0 %545
    %v555 = vmul.f32 %v516, %v532
    %v556 = vmul.f32 %v518, %v534
    %v557 = vmul.f32 %v520, %v536
    %v558 = vmul.f32 %v522, %v538
    %v559 = vmul.f32 %v524, %v540
    %v560 = vmul.f32 %v526, %v542
    %v561 = vmul.f32 %v528, %v544
    %v562 = vmul.f32 %v530, %v546
    %571 = vrot.lane.b32.xlu0 %v555, 64
    %v572 = vpop.permute.xlu0 %571
    %573 = vrot.lane.b32.xlu0 %v556, 64
    %v574 = vpop.permute.xlu0 %573
    %575 = vrot.lane.b32.xlu0 %v557, 64
    %v576 = vpop.permute.xlu0 %575
    %577 = vrot.lane.b32.xlu0 %v558, 64
    %v578 = vpop.permute.xlu0 %577
    %579 = vrot.lane.b32.xlu0 %v559, 64
    %v580 = vpop.permute.xlu0 %579
    %581 = vrot.lane.b32.xlu0 %v560, 64
    %v582 = vpop.permute.xlu0 %581
    %583 = vrot.lane.b32.xlu0 %v561, 64
    %v584 = vpop.permute.xlu0 %583
    %585 = vrot.lane.b32.xlu0 %v562, 64
    %v586 = vpop.permute.xlu0 %585
    %v595 = vadd.f32 %v322, %v572
    %v596 = vadd.f32 %v324, %v574
    %v597 = vadd.f32 %v326, %v576
    %v598 = vadd.f32 %v328, %v578
    %v599 = vadd.f32 %v330, %v580
    %v600 = vadd.f32 %v332, %v582
    %v601 = vadd.f32 %v334, %v584
    %v602 = vadd.f32 %v336, %v586
    %v603 = vtanh.pop %v595
    %v604 = vtanh.pop %v596
    %v605 = vtanh.pop %v597
    %v606 = vtanh.pop %v598
    %v607 = vtanh.pop %v599
    %v608 = vtanh.pop %v600
    %v609 = vtanh.pop %v601
    %v610 = vtanh.pop %v602
    %v611 = vsub.f32 1.0, %v516
    %v612 = vsub.f32 1.0, %v518
    %v613 = vsub.f32 1.0, %v520
    %v614 = vsub.f32 1.0, %v522
    %v615 = vsub.f32 1.0, %v524
    %v616 = vsub.f32 1.0, %v526
    %v617 = vsub.f32 1.0, %v528
    %v618 = vsub.f32 1.0, %v530
    %627 = vrot.lane.b32.xlu0 %v603, 96
    %v628 = vpop.permute.xlu0 %627
    %629 = vrot.lane.b32.xlu0 %v604, 96
    %v630 = vpop.permute.xlu0 %629
    %631 = vrot.lane.b32.xlu0 %v605, 96
    %v632 = vpop.permute.xlu0 %631
    %633 = vrot.lane.b32.xlu0 %v606, 96
    %v634 = vpop.permute.xlu0 %633
    %635 = vrot.lane.b32.xlu0 %v607, 96
    %v636 = vpop.permute.xlu0 %635
    %637 = vrot.lane.b32.xlu0 %v608, 96
    %v638 = vpop.permute.xlu0 %637
    %639 = vrot.lane.b32.xlu0 %v609, 96
    %v640 = vpop.permute.xlu0 %639
    %641 = vrot.lane.b32.xlu0 %v610, 96
    %v642 = vpop.permute.xlu0 %641
    %v651 = vmul.f32 %v611, %v628
    %v652 = vmul.f32 %v612, %v630
    %v653 = vmul.f32 %v613, %v632
    %v654 = vmul.f32 %v614, %v634
    %v655 = vmul.f32 %v615, %v636
    %v656 = vmul.f32 %v616, %v638
    %v657 = vmul.f32 %v617, %v640
    %v658 = vmul.f32 %v618, %v642
    %v659 = vmul.f32 %v516, 0.0
    %v660 = vmul.f32 %v518, 0.0
    %v661 = vmul.f32 %v520, 0.0
    %v662 = vmul.f32 %v522, 0.0
    %v663 = vmul.f32 %v524, 0.0
    %v664 = vmul.f32 %v526, 0.0
    %v665 = vmul.f32 %v528, 0.0
    %v666 = vmul.f32 %v530, 0.0
    %v667 = vadd.f32 %v651, %v659
    %v668 = vadd.f32 %v652, %v660
    %v669 = vadd.f32 %v653, %v661
    %v670 = vadd.f32 %v654, %v662
    %v671 = vadd.f32 %v655, %v663
    %v672 = vadd.f32 %v656, %v664
    %v673 = vadd.f32 %v657, %v665
    %v674 = vadd.f32 %v658, %v666
    %vm675 = vcmp.gt.s32.totalorder %v132, 0
    %v676 = vsel %vm675, 1, 0
    %677 = vset.pattern.permute.xlu0 0
    %678 = vperm.xlu0 %677, %v676
    %v679 = vpop.permute.xlu0 %678
    %vm680 = vcmp.eq.s32.totalorder %v679, 1
    %v689 = vcombine.low %v667, %v668
    %v690 = vcombine.low %v669, %v670
    %v691 = vcombine.low %v671, %v672
    %v692 = vcombine.low %v673, %v674
    %v694 = vunpack.c.l.s4 1966171168
    %v695 = vunpack.c.0.s8 %v694
    %v696 = vlaneseq
    %v697 = vshrl.u32 %v696, 7
    %v698 = vsub.s32 %v695, %v697
    %v699 = vrot.slane %v689, %v698
    %v701 = vunpack.c.l.s4 1966171168
    %v702 = vunpack.c.0.s8 %v701
    %v703 = vlaneseq
    %v704 = vshrl.u32 %v703, 7
    %v705 = vsub.s32 %v702, %v704
    %v706 = vrot.slane %v690, %v705
    %v708 = vunpack.c.l.s4 1966171168
    %v709 = vunpack.c.0.s8 %v708
    %v710 = vlaneseq
    %v711 = vshrl.u32 %v710, 7
    %v712 = vsub.s32 %v709, %v711
    %v713 = vrot.slane %v691, %v712
    %v715 = vunpack.c.l.s4 1966171168
    %v716 = vunpack.c.0.s8 %v715
    %v717 = vlaneseq
    %v718 = vshrl.u32 %v717, 7
    %v719 = vsub.s32 %v716, %v718
    %v720 = vrot.slane %v692, %v719
    %v721 = vcombine.low %v699, %v706
    %v722 = vcombine.low %v713, %v720
    %v724 = vunpack.c.l.s4 1966171168
    %v725 = vunpack.c.0.s8 %v724
    %v726 = vlaneseq
    %v727 = vshrl.u32 %v726, 7
    %v728 = vsub.s32 %v725, %v727
    %v729 = vrot.slane %v721, %v728
    %v731 = vunpack.c.l.s4 1966171168
    %v732 = vunpack.c.0.s8 %v731
    %v733 = vlaneseq
    %v734 = vshrl.u32 %v733, 7
    %v735 = vsub.s32 %v732, %v734
    %v736 = vrot.slane %v722, %v735
    %v737 = vcombine.low %v729, %v736
    %738 = vrot.lane.b32.xlu0 %v737, 96
    %v739 = vpop.permute.xlu0 %738
    %v741 = vsel %vm680, %v739, 0.0
    %v743 = vcombine.high %v741, %v741
    %v745 = vunpack.c.l.s4 1966171168
    %v746 = vunpack.c.0.s8 %v745
    %v747 = vlaneseq
    %v748 = vshrl.u32 %v747, 7
    %v749 = vsub.s32 %v746, %v748
    %v750 = vrot.slane %v741, %v749
    %v752 = vunpack.c.l.s4 1966171168
    %v753 = vunpack.c.0.s8 %v752
    %v754 = vlaneseq
    %v755 = vshrl.u32 %v754, 7
    %v756 = vsub.s32 %v753, %v755
    %v757 = vrot.slane %v743, %v756
    %v758 = vcombine.high %v750, %v750
    %v759 = vcombine.high %v757, %v757
    %v761 = vunpack.c.l.s4 1966171168
    %v762 = vunpack.c.0.s8 %v761
    %v763 = vlaneseq
    %v764 = vshrl.u32 %v763, 7
    %v765 = vsub.s32 %v762, %v764
    %v766 = vrot.slane %v750, %v765
    %v768 = vunpack.c.l.s4 1966171168
    %v769 = vunpack.c.0.s8 %v768
    %v770 = vlaneseq
    %v771 = vshrl.u32 %v770, 7
    %v772 = vsub.s32 %v769, %v771
    %v773 = vrot.slane %v757, %v772
    %v775 = vunpack.c.l.s4 1966171168
    %v776 = vunpack.c.0.s8 %v775
    %v777 = vlaneseq
    %v778 = vshrl.u32 %v777, 7
    %v779 = vsub.s32 %v776, %v778
    %v780 = vrot.slane %v758, %v779
    %v782 = vunpack.c.l.s4 1966171168
    %v783 = vunpack.c.0.s8 %v782
    %v784 = vlaneseq
    %v785 = vshrl.u32 %v784, 7
    %v786 = vsub.s32 %v783, %v785
    %v787 = vrot.slane %v759, %v786
    %v788 = vcombine.high %v766, %v766
    %v789 = vcombine.high %v773, %v773
    %v790 = vcombine.high %v780, %v780
    %v791 = vcombine.high %v787, %v787
    %vm800 = vcmask 253952
    %801 = vst.msk [vmem:[#allocation3] sm:$0x1] %vm800, %v766
    %802 = vst.msk [vmem:[#allocation3 + $0x8] sm:$0x1] %vm800, %v780
    %803 = vst.msk [vmem:[#allocation3 + $0x10] sm:$0x1] %vm800, %v788
    %804 = vst.msk [vmem:[#allocation3 + $0x18] sm:$0x1] %vm800, %v790
    %805 = vst.msk [vmem:[#allocation3 + $0x20] sm:$0x1] %vm800, %v773
    %806 = vst.msk [vmem:[#allocation3 + $0x28] sm:$0x1] %vm800, %v787
    %807 = vst.msk [vmem:[#allocation3 + $0x30] sm:$0x1] %vm800, %v789
    %808 = vst.msk [vmem:[#allocation3 + $0x38] sm:$0x1] %vm800, %v791
    %s809 = scalar_lea.vmem [#allocation2], 7
    %v810 = vld [vmem:[%s809] ss:$8 sm:$0x3]
    %s811 = scalar_lea.vmem [#allocation2], 23
    %v812 = vld [vmem:[%s811] ss:$8 sm:$0x3]
    %s813 = scalar_lea.vmem [#allocation2], 39
    %v814 = vld [vmem:[%s813] ss:$8 sm:$0x3]
    %s815 = scalar_lea.vmem [#allocation2], 55
    %v816 = vld [vmem:[%s815] ss:$8 sm:$0x3]
    %s817 = scalar_lea.vmem [#allocation2], 71
    %v818 = vld [vmem:[%s817] ss:$8 sm:$0x3]
    %s819 = scalar_lea.vmem [#allocation2], 87
    %v820 = vld [vmem:[%s819] ss:$8 sm:$0x3]
    %s821 = scalar_lea.vmem [#allocation2], 103
    %v822 = vld [vmem:[%s821] ss:$8 sm:$0x3]
    %s823 = scalar_lea.vmem [#allocation2], 119
    %v824 = vld [vmem:[%s823] ss:$8 sm:$0x3]
    %v826 = vlaneseq
    %v827 = vshrl.u32 %v826, 7
    %v828 = vsub.s32 0, %v827
    %v829 = vrot.slane %v321, %v828
    %831 = vmatprep.subr.mxu0 0.0
    %832 = vmatpush1.msra.mxu0 %v317
    %833 = vmatprep.subr.mxu0 0.0
    %834 = vmatpush1.msra.mxu0 %v318
    %835 = vmatprep.subr.mxu0 0.0
    %836 = vmatpush1.msra.mxu0 %v319
    %837 = vmatprep.subr.mxu0 0.0
    %838 = vmatpush1.msra.mxu0 %v320
    %839 = vmatprep.subr.mxu0 0.0
    %840 = vmatpush1.msra.mxu0 0.0
    %841 = vmatprep.subr.mxu0 0.0
    %842 = vmatpush1.msra.mxu0 0.0
    %843 = vmatprep.subr.mxu0 0.0
    %844 = vmatpush1.msra.mxu0 0.0
    %845 = vmatprep.subr.mxu0 0.0
    %846 = vmatpush1.msra.mxu0 0.0
    %847 = vmatprep.subr.mxu0 0.0
    %848 = vmatpush1.msra.mxu0 0.0
    %849 = vmatprep.subr.mxu0 0.0
    %850 = vmatpush1.msra.mxu0 0.0
    %851 = vmatprep.subr.mxu0 0.0
    %852 = vmatpush1.msra.mxu0 0.0
    %853 = vmatprep.subr.mxu0 0.0
    %854 = vmatpush1.msra.mxu0 0.0
    %855 = vmatprep.subr.mxu0 0.0
    %856 = vmatpush1.msra.mxu0 0.0
    %857 = vmatprep.subr.mxu0 0.0
    %858 = vmatpush1.msra.mxu0 0.0
    %859 = vmatprep.subr.mxu0 0.0
    %860 = vmatpush1.msra.mxu0 0.0
    %861 = vmatprep.subr.mxu0 0.0
    %862 = vmatpush1.msra.mxu0 0.0
    %863 = vmatprep.subr.mxu0 0.0
    %864 = vmatpush1.msra.mxu0 0.0
    %865 = vmatprep.subr.mxu0 0.0
    %866 = vmatpush1.msra.mxu0 0.0
    %867 = vmatprep.subr.mxu0 0.0
    %868 = vmatpush1.msra.mxu0 0.0
    %869 = vmatprep.subr.mxu0 0.0
    %870 = vmatpush1.msra.mxu0 0.0
    %871 = vmatprep.subr.mxu0 0.0
    %872 = vmatpush1.msra.mxu0 0.0
    %873 = vmatprep.subr.mxu0 0.0
    %874 = vmatpush1.msra.mxu0 0.0
    %875 = vmatprep.subr.mxu0 0.0
    %876 = vmatpush1.msra.mxu0 0.0
    %877 = vmatprep.subr.mxu0 0.0
    %878 = vmatpush1.msra.mxu0 0.0
    %879 = vmatprep.subr.mxu0 0.0
    %880 = vmatpush1.msra.mxu0 0.0
    %881 = vmatprep.subr.mxu0 0.0
    %882 = vmatpush1.msra.mxu0 0.0
    %883 = vmatprep.subr.mxu0 0.0
    %884 = vmatpush1.msra.mxu0 0.0
    %885 = vmatprep.subr.mxu0 0.0
    %886 = vmatpush1.msra.mxu0 0.0
    %887 = vmatprep.subr.mxu0 0.0
    %888 = vmatpush1.msra.mxu0 0.0
    %889 = vmatprep.subr.mxu0 0.0
    %890 = vmatpush1.msra.mxu0 0.0
    %891 = vmatprep.subr.mxu0 0.0
    %892 = vmatpush1.msra.mxu0 0.0
    %893 = vmatprep.subr.mxu0 0.0
    %894 = vmatpush1.msra.mxu0 0.0
    %895 = vmatprep.mubr.f32.mxu0 0.0
    %896 = vmatmul.mubr.f32.gmra.mrb[0].mxu0 %v345
    %v897 = vpop.f32.mrb[0].mxu0
    %v898 = vadd.f32 %v829, %v897
    %v899 = vpop.f32.mrb[0].mxu0
    %900 = vdwg.mxu0
    %v902 = vcombine.high %v898, %v898
    %v904 = vunpack.c.l.s4 1966171168
    %v905 = vunpack.c.0.s8 %v904
    %v906 = vlaneseq
    %v907 = vshrl.u32 %v906, 7
    %v908 = vsub.s32 %v905, %v907
    %v909 = vrot.slane %v898, %v908
    %v911 = vunpack.c.l.s4 1966171168
    %v912 = vunpack.c.0.s8 %v911
    %v913 = vlaneseq
    %v914 = vshrl.u32 %v913, 7
    %v915 = vsub.s32 %v912, %v914
    %v916 = vrot.slane %v902, %v915
    %v917 = vcombine.high %v909, %v909
    %v918 = vcombine.high %v916, %v916
    %v920 = vunpack.c.l.s4 1966171168
    %v921 = vunpack.c.0.s8 %v920
    %v922 = vlaneseq
    %v923 = vshrl.u32 %v922, 7
    %v924 = vsub.s32 %v921, %v923
    %v925 = vrot.slane %v909, %v924
    %v927 = vunpack.c.l.s4 1966171168
    %v928 = vunpack.c.0.s8 %v927
    %v929 = vlaneseq
    %v930 = vshrl.u32 %v929, 7
    %v931 = vsub.s32 %v928, %v930
    %v932 = vrot.slane %v916, %v931
    %v934 = vunpack.c.l.s4 1966171168
    %v935 = vunpack.c.0.s8 %v934
    %v936 = vlaneseq
    %v937 = vshrl.u32 %v936, 7
    %v938 = vsub.s32 %v935, %v937
    %v939 = vrot.slane %v917, %v938
    %v941 = vunpack.c.l.s4 1966171168
    %v942 = vunpack.c.0.s8 %v941
    %v943 = vlaneseq
    %v944 = vshrl.u32 %v943, 7
    %v945 = vsub.s32 %v942, %v944
    %v946 = vrot.slane %v918, %v945
    %v947 = vcombine.high %v925, %v925
    %v948 = vcombine.high %v932, %v932
    %v949 = vcombine.high %v939, %v939
    %v950 = vcombine.high %v946, %v946
    %951 = vrot.lane.b32.xlu0 %v925, 96
    %v952 = vpop.permute.xlu0 %951
    %953 = vrot.lane.b32.xlu0 %v939, 96
    %v954 = vpop.permute.xlu0 %953
    %955 = vrot.lane.b32.xlu0 %v947, 96
    %v956 = vpop.permute.xlu0 %955
    %957 = vrot.lane.b32.xlu0 %v949, 96
    %v958 = vpop.permute.xlu0 %957
    %959 = vrot.lane.b32.xlu0 %v932, 96
    %v960 = vpop.permute.xlu0 %959
    %961 = vrot.lane.b32.xlu0 %v946, 96
    %v962 = vpop.permute.xlu0 %961
    %963 = vrot.lane.b32.xlu0 %v948, 96
    %v964 = vpop.permute.xlu0 %963
    %965 = vrot.lane.b32.xlu0 %v950, 96
    %v966 = vpop.permute.xlu0 %965
    %v975 = vadd.f32 %v810, %v952
    %v976 = vadd.f32 %v812, %v954
    %v977 = vadd.f32 %v814, %v956
    %v978 = vadd.f32 %v816, %v958
    %v979 = vadd.f32 %v818, %v960
    %v980 = vadd.f32 %v820, %v962
    %v981 = vadd.f32 %v822, %v964
    %v982 = vadd.f32 %v824, %v966
    %v983 = vxor.u32 %v975, 2147483648
    %v984 = vxor.u32 %v976, 2147483648
    %v985 = vxor.u32 %v977, 2147483648
    %v986 = vxor.u32 %v978, 2147483648
    %v987 = vxor.u32 %v979, 2147483648
    %v988 = vxor.u32 %v980, 2147483648
    %v989 = vxor.u32 %v981, 2147483648
    %v990 = vxor.u32 %v982, 2147483648
    %v991 = vmul.f32 %v983, 1.442695
    %v992 = vpow.pop %v991
    %v993 = vmul.f32 %v984, 1.442695
    %v994 = vpow.pop %v993
    %v995 = vmul.f32 %v985, 1.442695
    %v996 = vpow.pop %v995
    %v997 = vmul.f32 %v986, 1.442695
    %v998 = vpow.pop %v997
    %v999 = vmul.f32 %v987, 1.442695
    %v1000 = vpow.pop %v999
    %v1001 = vmul.f32 %v988, 1.442695
    %v1002 = vpow.pop %v1001
    %v1003 = vmul.f32 %v989, 1.442695
    %v1004 = vpow.pop %v1003
    %v1005 = vmul.f32 %v990, 1.442695
    %v1006 = vpow.pop %v1005
    %v1007 = vadd.f32 %v992, 1.0
    %v1008 = vadd.f32 %v994, 1.0
    %v1009 = vadd.f32 %v996, 1.0
    %v1010 = vadd.f32 %v998, 1.0
    %v1011 = vadd.f32 %v1000, 1.0
    %v1012 = vadd.f32 %v1002, 1.0
    %v1013 = vadd.f32 %v1004, 1.0
    %v1014 = vadd.f32 %v1006, 1.0
    %v1015 = vrcp.pop %v1007
    %v1016 = vmul.f32 1.0, %v1015
    %v1017 = vrcp.pop %v1008
    %v1018 = vmul.f32 1.0, %v1017
    %v1019 = vrcp.pop %v1009
    %v1020 = vmul.f32 1.0, %v1019
    %v1021 = vrcp.pop %v1010
    %v1022 = vmul.f32 1.0, %v1021
    %v1023 = vrcp.pop %v1011
    %v1024 = vmul.f32 1.0, %v1023
    %v1025 = vrcp.pop %v1012
    %v1026 = vmul.f32 1.0, %v1025
    %v1027 = vrcp.pop %v1013
    %v1028 = vmul.f32 1.0, %v1027
    %v1029 = vrcp.pop %v1014
    %v1030 = vmul.f32 1.0, %v1029
    %v1039 = vrot.slane %v810, 1
    %v1040 = vrot.slane %v812, 1
    %v1041 = vrot.slane %v814, 1
    %v1042 = vrot.slane %v816, 1
    %v1043 = vrot.slane %v818, 1
    %v1044 = vrot.slane %v820, 1
    %v1045 = vrot.slane %v822, 1
    %v1046 = vrot.slane %v824, 1
    %v1055 = vadd.f32 %v1039, %v952
    %v1056 = vadd.f32 %v1040, %v954
    %v1057 = vadd.f32 %v1041, %v956
    %v1058 = vadd.f32 %v1042, %v958
    %v1059 = vadd.f32 %v1043, %v960
    %v1060 = vadd.f32 %v1044, %v962
    %v1061 = vadd.f32 %v1045, %v964
    %v1062 = vadd.f32 %v1046, %v966
    %v1063 = vxor.u32 %v1055, 2147483648
    %v1064 = vxor.u32 %v1056, 2147483648
    %v1065 = vxor.u32 %v1057, 2147483648
    %v1066 = vxor.u32 %v1058, 2147483648
    %v1067 = vxor.u32 %v1059, 2147483648
    %v1068 = vxor.u32 %v1060, 2147483648
    %v1069 = vxor.u32 %v1061, 2147483648
    %v1070 = vxor.u32 %v1062, 2147483648
    %v1071 = vmul.f32 %v1063, 1.442695
    %v1072 = vpow.pop %v1071
    %v1073 = vmul.f32 %v1064, 1.442695
    %v1074 = vpow.pop %v1073
    %v1075 = vmul.f32 %v1065, 1.442695
    %v1076 = vpow.pop %v1075
    %v1077 = vmul.f32 %v1066, 1.442695
    %v1078 = vpow.pop %v1077
    %v1079 = vmul.f32 %v1067, 1.442695
    %v1080 = vpow.pop %v1079
    %v1081 = vmul.f32 %v1068, 1.442695
    %v1082 = vpow.pop %v1081
    %v1083 = vmul.f32 %v1069, 1.442695
    %v1084 = vpow.pop %v1083
    %v1085 = vmul.f32 %v1070, 1.442695
    %v1086 = vpow.pop %v1085
    %v1087 = vadd.f32 %v1072, 1.0
    %v1088 = vadd.f32 %v1074, 1.0
    %v1089 = vadd.f32 %v1076, 1.0
    %v1090 = vadd.f32 %v1078, 1.0
    %v1091 = vadd.f32 %v1080, 1.0
    %v1092 = vadd.f32 %v1082, 1.0
    %v1093 = vadd.f32 %v1084, 1.0
    %v1094 = vadd.f32 %v1086, 1.0
    %v1095 = vrcp.pop %v1087
    %v1096 = vmul.f32 1.0, %v1095
    %v1097 = vrcp.pop %v1088
    %v1098 = vmul.f32 1.0, %v1097
    %v1099 = vrcp.pop %v1089
    %v1100 = vmul.f32 1.0, %v1099
    %v1101 = vrcp.pop %v1090
    %v1102 = vmul.f32 1.0, %v1101
    %v1103 = vrcp.pop %v1091
    %v1104 = vmul.f32 1.0, %v1103
    %v1105 = vrcp.pop %v1092
    %v1106 = vmul.f32 1.0, %v1105
    %v1107 = vrcp.pop %v1093
    %v1108 = vmul.f32 1.0, %v1107
    %v1109 = vrcp.pop %v1094
    %v1110 = vmul.f32 1.0, %v1109
    %1111 = vrot.lane.b32.xlu0 %v925, 32
    %v1112 = vpop.permute.xlu0 %1111
    %1113 = vrot.lane.b32.xlu0 %v939, 32
    %v1114 = vpop.permute.xlu0 %1113
    %1115 = vrot.lane.b32.xlu0 %v947, 32
    %v1116 = vpop.permute.xlu0 %1115
    %1117 = vrot.lane.b32.xlu0 %v949, 32
    %v1118 = vpop.permute.xlu0 %1117
    %1119 = vrot.lane.b32.xlu0 %v932, 32
    %v1120 = vpop.permute.xlu0 %1119
    %1121 = vrot.lane.b32.xlu0 %v946, 32
    %v1122 = vpop.permute.xlu0 %1121
    %1123 = vrot.lane.b32.xlu0 %v948, 32
    %v1124 = vpop.permute.xlu0 %1123
    %1125 = vrot.lane.b32.xlu0 %v950, 32
    %v1126 = vpop.permute.xlu0 %1125
    %v1135 = vmul.f32 %v1016, %v1112
    %v1136 = vmul.f32 %v1018, %v1114
    %v1137 = vmul.f32 %v1020, %v1116
    %v1138 = vmul.f32 %v1022, %v1118
    %v1139 = vmul.f32 %v1024, %v1120
    %v1140 = vmul.f32 %v1026, %v1122
    %v1141 = vmul.f32 %v1028, %v1124
    %v1142 = vmul.f32 %v1030, %v1126
    %1143 = vrot.lane.b32.xlu0 %v810, 96
    %v1144 = vpop.permute.xlu0 %1143
    %1145 = vrot.lane.b32.xlu0 %v812, 96
    %v1146 = vpop.permute.xlu0 %1145
    %1147 = vrot.lane.b32.xlu0 %v814, 96
    %v1148 = vpop.permute.xlu0 %1147
    %1149 = vrot.lane.b32.xlu0 %v816, 96
    %v1150 = vpop.permute.xlu0 %1149
    %1151 = vrot.lane.b32.xlu0 %v818, 96
    %v1152 = vpop.permute.xlu0 %1151
    %1153 = vrot.lane.b32.xlu0 %v820, 96
    %v1154 = vpop.permute.xlu0 %1153
    %1155 = vrot.lane.b32.xlu0 %v822, 96
    %v1156 = vpop.permute.xlu0 %1155
    %1157 = vrot.lane.b32.xlu0 %v824, 96
    %v1158 = vpop.permute.xlu0 %1157
    %v1159 = vrot.slane %v1144, 1
    %v1160 = vrot.slane %v1146, 1
    %v1161 = vrot.slane %v1148, 1
    %v1162 = vrot.slane %v1150, 1
    %v1163 = vrot.slane %v1152, 1
    %v1164 = vrot.slane %v1154, 1
    %v1165 = vrot.slane %v1156, 1
    %v1166 = vrot.slane %v1158, 1
    %1183 = vrot.lane.b32.xlu0 %v1135, 32
    %v1184 = vpop.permute.xlu0 %1183
    %1185 = vrot.lane.b32.xlu0 %v1136, 32
    %v1186 = vpop.permute.xlu0 %1185
    %1187 = vrot.lane.b32.xlu0 %v1137, 32
    %v1188 = vpop.permute.xlu0 %1187
    %1189 = vrot.lane.b32.xlu0 %v1138, 32
    %v1190 = vpop.permute.xlu0 %1189
    %1191 = vrot.lane.b32.xlu0 %v1139, 32
    %v1192 = vpop.permute.xlu0 %1191
    %1193 = vrot.lane.b32.xlu0 %v1140, 32
    %v1194 = vpop.permute.xlu0 %1193
    %1195 = vrot.lane.b32.xlu0 %v1141, 32
    %v1196 = vpop.permute.xlu0 %1195
    %1197 = vrot.lane.b32.xlu0 %v1142, 32
    %v1198 = vpop.permute.xlu0 %1197
    %v1207 = vadd.f32 %v1159, %v1184
    %v1208 = vadd.f32 %v1160, %v1186
    %v1209 = vadd.f32 %v1161, %v1188
    %v1210 = vadd.f32 %v1162, %v1190
    %v1211 = vadd.f32 %v1163, %v1192
    %v1212 = vadd.f32 %v1164, %v1194
    %v1213 = vadd.f32 %v1165, %v1196
    %v1214 = vadd.f32 %v1166, %v1198
    %v1215 = vtanh.pop %v1207
    %v1216 = vtanh.pop %v1208
    %v1217 = vtanh.pop %v1209
    %v1218 = vtanh.pop %v1210
    %v1219 = vtanh.pop %v1211
    %v1220 = vtanh.pop %v1212
    %v1221 = vtanh.pop %v1213
    %v1222 = vtanh.pop %v1214
    %v1223 = vsub.f32 1.0, %v1096
    %v1224 = vsub.f32 1.0, %v1098
    %v1225 = vsub.f32 1.0, %v1100
    %v1226 = vsub.f32 1.0, %v1102
    %v1227 = vsub.f32 1.0, %v1104
    %v1228 = vsub.f32 1.0, %v1106
    %v1229 = vsub.f32 1.0, %v1108
    %v1230 = vsub.f32 1.0, %v1110
    %v1231 = vmul.f32 %v1223, %v1215
    %v1232 = vmul.f32 %v1224, %v1216
    %v1233 = vmul.f32 %v1225, %v1217
    %v1234 = vmul.f32 %v1226, %v1218
    %v1235 = vmul.f32 %v1227, %v1219
    %v1236 = vmul.f32 %v1228, %v1220
    %v1237 = vmul.f32 %v1229, %v1221
    %v1238 = vmul.f32 %v1230, %v1222
    %v1239 = vmul.f32 %v1096, 0.0
    %v1240 = vmul.f32 %v1098, 0.0
    %v1241 = vmul.f32 %v1100, 0.0
    %v1242 = vmul.f32 %v1102, 0.0
    %v1243 = vmul.f32 %v1104, 0.0
    %v1244 = vmul.f32 %v1106, 0.0
    %v1245 = vmul.f32 %v1108, 0.0
    %v1246 = vmul.f32 %v1110, 0.0
    %v1247 = vadd.f32 %v1231, %v1239
    %v1248 = vadd.f32 %v1232, %v1240
    %v1249 = vadd.f32 %v1233, %v1241
    %v1250 = vadd.f32 %v1234, %v1242
    %v1251 = vadd.f32 %v1235, %v1243
    %v1252 = vadd.f32 %v1236, %v1244
    %v1253 = vadd.f32 %v1237, %v1245
    %v1254 = vadd.f32 %v1238, %v1246
    %vm1255 = vcmp.gt.s32.totalorder %v132, 7
    %v1256 = vsel %vm1255, 1, 0
    %1257 = vset.pattern.permute.xlu0 0
    %1258 = vperm.xlu0 %1257, %v1256
    %v1259 = vpop.permute.xlu0 %1258
    %vm1260 = vcmp.eq.s32.totalorder %v1259, 1
    %v1269 = vcombine.low %v1247, %v1248
    %v1270 = vcombine.low %v1249, %v1250
    %v1271 = vcombine.low %v1251, %v1252
    %v1272 = vcombine.low %v1253, %v1254
    %v1274 = vunpack.c.l.s4 1966171168
    %v1275 = vunpack.c.0.s8 %v1274
    %v1276 = vlaneseq
    %v1277 = vshrl.u32 %v1276, 7
    %v1278 = vsub.s32 %v1275, %v1277
    %v1279 = vrot.slane %v1269, %v1278
    %v1281 = vunpack.c.l.s4 1966171168
    %v1282 = vunpack.c.0.s8 %v1281
    %v1283 = vlaneseq
    %v1284 = vshrl.u32 %v1283, 7
    %v1285 = vsub.s32 %v1282, %v1284
    %v1286 = vrot.slane %v1270, %v1285
    %v1288 = vunpack.c.l.s4 1966171168
    %v1289 = vunpack.c.0.s8 %v1288
    %v1290 = vlaneseq
    %v1291 = vshrl.u32 %v1290, 7
    %v1292 = vsub.s32 %v1289, %v1291
    %v1293 = vrot.slane %v1271, %v1292
    %v1295 = vunpack.c.l.s4 1966171168
    %v1296 = vunpack.c.0.s8 %v1295
    %v1297 = vlaneseq
    %v1298 = vshrl.u32 %v1297, 7
    %v1299 = vsub.s32 %v1296, %v1298
    %v1300 = vrot.slane %v1272, %v1299
    %v1301 = vcombine.low %v1279, %v1286
    %v1302 = vcombine.low %v1293, %v1300
    %v1304 = vunpack.c.l.s4 1966171168
    %v1305 = vunpack.c.0.s8 %v1304
    %v1306 = vlaneseq
    %v1307 = vshrl.u32 %v1306, 7
    %v1308 = vsub.s32 %v1305, %v1307
    %v1309 = vrot.slane %v1301, %v1308
    %v1311 = vunpack.c.l.s4 1966171168
    %v1312 = vunpack.c.0.s8 %v1311
    %v1313 = vlaneseq
    %v1314 = vshrl.u32 %v1313, 7
    %v1315 = vsub.s32 %v1312, %v1314
    %v1316 = vrot.slane %v1302, %v1315
    %v1317 = vcombine.low %v1309, %v1316
    %v1319 = vsel %vm1260, %v1317, 0.0
    %v1321 = vcombine.high %v1319, %v1319
    %v1323 = vunpack.c.l.s4 1966171168
    %v1324 = vunpack.c.0.s8 %v1323
    %v1325 = vlaneseq
    %v1326 = vshrl.u32 %v1325, 7
    %v1327 = vsub.s32 %v1324, %v1326
    %v1328 = vrot.slane %v1319, %v1327
    %v1330 = vunpack.c.l.s4 1966171168
    %v1331 = vunpack.c.0.s8 %v1330
    %v1332 = vlaneseq
    %v1333 = vshrl.u32 %v1332, 7
    %v1334 = vsub.s32 %v1331, %v1333
    %v1335 = vrot.slane %v1321, %v1334
    %v1336 = vcombine.high %v1328, %v1328
    %v1337 = vcombine.high %v1335, %v1335
    %v1339 = vunpack.c.l.s4 1966171168
    %v1340 = vunpack.c.0.s8 %v1339
    %v1341 = vlaneseq
    %v1342 = vshrl.u32 %v1341, 7
    %v1343 = vsub.s32 %v1340, %v1342
    %v1344 = vrot.slane %v1328, %v1343
    %v1346 = vunpack.c.l.s4 1966171168
    %v1347 = vunpack.c.0.s8 %v1346
    %v1348 = vlaneseq
    %v1349 = vshrl.u32 %v1348, 7
    %v1350 = vsub.s32 %v1347, %v1349
    %v1351 = vrot.slane %v1335, %v1350
    %v1353 = vunpack.c.l.s4 1966171168
    %v1354 = vunpack.c.0.s8 %v1353
    %v1355 = vlaneseq
    %v1356 = vshrl.u32 %v1355, 7
    %v1357 = vsub.s32 %v1354, %v1356
    %v1358 = vrot.slane %v1336, %v1357
    %v1360 = vunpack.c.l.s4 1966171168
    %v1361 = vunpack.c.0.s8 %v1360
    %v1362 = vlaneseq
    %v1363 = vshrl.u32 %v1362, 7
    %v1364 = vsub.s32 %v1361, %v1363
    %v1365 = vrot.slane %v1337, %v1364
    %v1366 = vcombine.high %v1344, %v1344
    %v1367 = vcombine.high %v1351, %v1351
    %v1368 = vcombine.high %v1358, %v1358
    %v1369 = vcombine.high %v1365, %v1365
    %v1370 = vlaneseq
    %v1371 = vshrl.u32 %v1370, 7
    %v1372 = vsub.s32 0, %v1371
    %v1373 = vrot.slane %v1344, %v1372
    %v1374 = vlaneseq
    %v1375 = vshrl.u32 %v1374, 7
    %v1376 = vsub.s32 0, %v1375
    %v1377 = vrot.slane %v1358, %v1376
    %v1378 = vlaneseq
    %v1379 = vshrl.u32 %v1378, 7
    %v1380 = vsub.s32 0, %v1379
    %v1381 = vrot.slane %v1366, %v1380
    %v1382 = vlaneseq
    %v1383 = vshrl.u32 %v1382, 7
    %v1384 = vsub.s32 0, %v1383
    %v1385 = vrot.slane %v1368, %v1384
    %v1386 = vlaneseq
    %v1387 = vshrl.u32 %v1386, 7
    %v1388 = vsub.s32 0, %v1387
    %v1389 = vrot.slane %v1351, %v1388
    %v1390 = vlaneseq
    %v1391 = vshrl.u32 %v1390, 7
    %v1392 = vsub.s32 0, %v1391
    %v1393 = vrot.slane %v1365, %v1392
    %v1394 = vlaneseq
    %v1395 = vshrl.u32 %v1394, 7
    %v1396 = vsub.s32 0, %v1395
    %v1397 = vrot.slane %v1367, %v1396
    %v1398 = vlaneseq
    %v1399 = vshrl.u32 %v1398, 7
    %v1400 = vsub.s32 0, %v1399
    %v1401 = vrot.slane %v1369, %v1400
    %1402 = vrot.lane.b32.xlu0 %v1373, 32
    %v1403 = vpop.permute.xlu0 %1402
    %1404 = vrot.lane.b32.xlu0 %v1377, 32
    %v1405 = vpop.permute.xlu0 %1404
    %1406 = vrot.lane.b32.xlu0 %v1381, 32
    %v1407 = vpop.permute.xlu0 %1406
    %1408 = vrot.lane.b32.xlu0 %v1385, 32
    %v1409 = vpop.permute.xlu0 %1408
    %1410 = vrot.lane.b32.xlu0 %v1389, 32
    %v1411 = vpop.permute.xlu0 %1410
    %1412 = vrot.lane.b32.xlu0 %v1393, 32
    %v1413 = vpop.permute.xlu0 %1412
    %1414 = vrot.lane.b32.xlu0 %v1397, 32
    %v1415 = vpop.permute.xlu0 %1414
    %1416 = vrot.lane.b32.xlu0 %v1401, 32
    %v1417 = vpop.permute.xlu0 %1416
    %vm1426 = vcmask 516352
    %1427 = vst.msk [vmem:[#allocation3 + $0x7] sm:$0x1] %vm1426, %v1403
    %1428 = vst.msk [vmem:[#allocation3 + $0xf] sm:$0x1] %vm1426, %v1405
    %1429 = vst.msk [vmem:[#allocation3 + $0x17] sm:$0x1] %vm1426, %v1407
    %1430 = vst.msk [vmem:[#allocation3 + $0x1f] sm:$0x1] %vm1426, %v1409
    %1431 = vst.msk [vmem:[#allocation3 + $0x27] sm:$0x1] %vm1426, %v1411
    %1432 = vst.msk [vmem:[#allocation3 + $0x2f] sm:$0x1] %vm1426, %v1413
    %1433 = vst.msk [vmem:[#allocation3 + $0x37] sm:$0x1] %vm1426, %v1415
    %1434 = vst.msk [vmem:[#allocation3 + $0x3f] sm:$0x1] %vm1426, %v1417
    %s1435 = scalar_lea.vmem [#allocation2], 1
    %v1436 = vld [vmem:[%s1435] ss:$8 sm:$0x3]
    %s1437 = scalar_lea.vmem [#allocation2], 17
    %v1438 = vld [vmem:[%s1437] ss:$8 sm:$0x3]
    %s1439 = scalar_lea.vmem [#allocation2], 33
    %v1440 = vld [vmem:[%s1439] ss:$8 sm:$0x3]
    %s1441 = scalar_lea.vmem [#allocation2], 49
    %v1442 = vld [vmem:[%s1441] ss:$8 sm:$0x3]
    %s1443 = scalar_lea.vmem [#allocation2], 65
    %v1444 = vld [vmem:[%s1443] ss:$8 sm:$0x3]
    %s1445 = scalar_lea.vmem [#allocation2], 81
    %v1446 = vld [vmem:[%s1445] ss:$8 sm:$0x3]
    %s1447 = scalar_lea.vmem [#allocation2], 97
    %v1448 = vld [vmem:[%s1447] ss:$8 sm:$0x3]
    %s1449 = scalar_lea.vmem [#allocation2], 113
    %v1450 = vld [vmem:[%s1449] ss:$8 sm:$0x3]
    %v1451 = vsel %vm343, %v741, 0
    %1453 = vmatprep.subr.mxu0 0.0
    %1454 = vmatpush1.msra.mxu0 %v312
    %1455 = vmatprep.subr.mxu0 0.0
    %1456 = vmatpush1.msra.mxu0 %v313
    %1457 = vmatprep.subr.mxu0 0.0
    %1458 = vmatpush1.msra.mxu0 %v314
    %1459 = vmatprep.subr.mxu0 0.0
    %1460 = vmatpush1.msra.mxu0 %v315
    %1461 = vmatprep.subr.mxu0 0.0
    %1462 = vmatpush1.msra.mxu0 0.0
    %1463 = vmatprep.subr.mxu0 0.0
    %1464 = vmatpush1.msra.mxu0 0.0
    %1465 = vmatprep.subr.mxu0 0.0
    %1466 = vmatpush1.msra.mxu0 0.0
    %1467 = vmatprep.subr.mxu0 0.0
    %1468 = vmatpush1.msra.mxu0 0.0
    %1469 = vmatprep.subr.mxu0 0.0
    %1470 = vmatpush1.msra.mxu0 0.0
    %1471 = vmatprep.subr.mxu0 0.0
    %1472 = vmatpush1.msra.mxu0 0.0
    %1473 = vmatprep.subr.mxu0 0.0
    %1474 = vmatpush1.msra.mxu0 0.0
    %1475 = vmatprep.subr.mxu0 0.0
    %1476 = vmatpush1.msra.mxu0 0.0
    %1477 = vmatprep.subr.mxu0 0.0
    %1478 = vmatpush1.msra.mxu0 0.0
    %1479 = vmatprep.subr.mxu0 0.0
    %1480 = vmatpush1.msra.mxu0 0.0
    %1481 = vmatprep.subr.mxu0 0.0
    %1482 = vmatpush1.msra.mxu0 0.0
    %1483 = vmatprep.subr.mxu0 0.0
    %1484 = vmatpush1.msra.mxu0 0.0
    %1485 = vmatprep.subr.mxu0 0.0
    %1486 = vmatpush1.msra.mxu0 0.0
    %1487 = vmatprep.subr.mxu0 0.0
    %1488 = vmatpush1.msra.mxu0 0.0
    %1489 = vmatprep.subr.mxu0 0.0
    %1490 = vmatpush1.msra.mxu0 0.0
    %1491 = vmatprep.subr.mxu0 0.0
    %1492 = vmatpush1.msra.mxu0 0.0
    %1493 = vmatprep.subr.mxu0 0.0
    %1494 = vmatpush1.msra.mxu0 0.0
    %1495 = vmatprep.subr.mxu0 0.0
    %1496 = vmatpush1.msra.mxu0 0.0
    %1497 = vmatprep.subr.mxu0 0.0
    %1498 = vmatpush1.msra.mxu0 0.0
    %1499 = vmatprep.subr.mxu0 0.0
    %1500 = vmatpush1.msra.mxu0 0.0
    %1501 = vmatprep.subr.mxu0 0.0
    %1502 = vmatpush1.msra.mxu0 0.0
    %1503 = vmatprep.subr.mxu0 0.0
    %1504 = vmatpush1.msra.mxu0 0.0
    %1505 = vmatprep.subr.mxu0 0.0
    %1506 = vmatpush1.msra.mxu0 0.0
    %1507 = vmatprep.subr.mxu0 0.0
    %1508 = vmatpush1.msra.mxu0 0.0
    %1509 = vmatprep.subr.mxu0 0.0
    %1510 = vmatpush1.msra.mxu0 0.0
    %1511 = vmatprep.subr.mxu0 0.0
    %1512 = vmatpush1.msra.mxu0 0.0
    %1513 = vmatprep.subr.mxu0 0.0
    %1514 = vmatpush1.msra.mxu0 0.0
    %1515 = vmatprep.subr.mxu0 0.0
    %1516 = vmatpush1.msra.mxu0 0.0
    %1517 = vmatprep.mubr.f32.mxu0 0.0
    %1518 = vmatmul.mubr.f32.gmra.mrb[0].mxu0 %v1451
    %v1519 = vpop.f32.mrb[0].mxu0
    %v1520 = vadd.f32 %v341, %v1519
    %v1521 = vpop.f32.mrb[0].mxu0
    %1522 = vdwg.mxu0
    %v1524 = vcombine.high %v1520, %v1520
    %v1526 = vunpack.c.l.s4 1966171168
    %v1527 = vunpack.c.0.s8 %v1526
    %v1528 = vlaneseq
    %v1529 = vshrl.u32 %v1528, 7
    %v1530 = vsub.s32 %v1527, %v1529
    %v1531 = vrot.slane %v1520, %v1530
    %v1533 = vunpack.c.l.s4 1966171168
    %v1534 = vunpack.c.0.s8 %v1533
    %v1535 = vlaneseq
    %v1536 = vshrl.u32 %v1535, 7
    %v1537 = vsub.s32 %v1534, %v1536
    %v1538 = vrot.slane %v1524, %v1537
    %v1539 = vcombine.high %v1531, %v1531
    %v1540 = vcombine.high %v1538, %v1538
    %v1542 = vunpack.c.l.s4 1966171168
    %v1543 = vunpack.c.0.s8 %v1542
    %v1544 = vlaneseq
    %v1545 = vshrl.u32 %v1544, 7
    %v1546 = vsub.s32 %v1543, %v1545
    %v1547 = vrot.slane %v1531, %v1546
    %v1549 = vunpack.c.l.s4 1966171168
    %v1550 = vunpack.c.0.s8 %v1549
    %v1551 = vlaneseq
    %v1552 = vshrl.u32 %v1551, 7
    %v1553 = vsub.s32 %v1550, %v1552
    %v1554 = vrot.slane %v1538, %v1553
    %v1556 = vunpack.c.l.s4 1966171168
    %v1557 = vunpack.c.0.s8 %v1556
    %v1558 = vlaneseq
    %v1559 = vshrl.u32 %v1558, 7
    %v1560 = vsub.s32 %v1557, %v1559
    %v1561 = vrot.slane %v1539, %v1560
    %v1563 = vunpack.c.l.s4 1966171168
    %v1564 = vunpack.c.0.s8 %v1563
    %v1565 = vlaneseq
    %v1566 = vshrl.u32 %v1565, 7
    %v1567 = vsub.s32 %v1564, %v1566
    %v1568 = vrot.slane %v1540, %v1567
    %v1569 = vcombine.high %v1547, %v1547
    %v1570 = vcombine.high %v1554, %v1554
    %v1571 = vcombine.high %v1561, %v1561
    %v1572 = vcombine.high %v1568, %v1568
    %v1581 = vadd.f32 %v1436, %v1547
    %v1582 = vadd.f32 %v1438, %v1561
    %v1583 = vadd.f32 %v1440, %v1569
    %v1584 = vadd.f32 %v1442, %v1571
    %v1585 = vadd.f32 %v1444, %v1554
    %v1586 = vadd.f32 %v1446, %v1568
    %v1587 = vadd.f32 %v1448, %v1570
    %v1588 = vadd.f32 %v1450, %v1572
    %v1589 = vxor.u32 %v1581, 2147483648
    %v1590 = vxor.u32 %v1582, 2147483648
    %v1591 = vxor.u32 %v1583, 2147483648
    %v1592 = vxor.u32 %v1584, 2147483648
    %v1593 = vxor.u32 %v1585, 2147483648
    %v1594 = vxor.u32 %v1586, 2147483648
    %v1595 = vxor.u32 %v1587, 2147483648
    %v1596 = vxor.u32 %v1588, 2147483648
    %v1597 = vmul.f32 %v1589, 1.442695
    %v1598 = vpow.pop %v1597
    %v1599 = vmul.f32 %v1590, 1.442695
    %v1600 = vpow.pop %v1599
    %v1601 = vmul.f32 %v1591, 1.442695
    %v1602 = vpow.pop %v1601
    %v1603 = vmul.f32 %v1592, 1.442695
    %v1604 = vpow.pop %v1603
    %v1605 = vmul.f32 %v1593, 1.442695
    %v1606 = vpow.pop %v1605
    %v1607 = vmul.f32 %v1594, 1.442695
    %v1608 = vpow.pop %v1607
    %v1609 = vmul.f32 %v1595, 1.442695
    %v1610 = vpow.pop %v1609
    %v1611 = vmul.f32 %v1596, 1.442695
    %v1612 = vpow.pop %v1611
    %v1613 = vadd.f32 %v1598, 1.0
    %v1614 = vadd.f32 %v1600, 1.0
    %v1615 = vadd.f32 %v1602, 1.0
    %v1616 = vadd.f32 %v1604, 1.0
    %v1617 = vadd.f32 %v1606, 1.0
    %v1618 = vadd.f32 %v1608, 1.0
    %v1619 = vadd.f32 %v1610, 1.0
    %v1620 = vadd.f32 %v1612, 1.0
    %v1621 = vrcp.pop %v1613
    %v1622 = vmul.f32 1.0, %v1621
    %v1623 = vrcp.pop %v1614
    %v1624 = vmul.f32 1.0, %v1623
    %v1625 = vrcp.pop %v1615
    %v1626 = vmul.f32 1.0, %v1625
    %v1627 = vrcp.pop %v1616
    %v1628 = vmul.f32 1.0, %v1627
    %v1629 = vrcp.pop %v1617
    %v1630 = vmul.f32 1.0, %v1629
    %v1631 = vrcp.pop %v1618
    %v1632 = vmul.f32 1.0, %v1631
    %v1633 = vrcp.pop %v1619
    %v1634 = vmul.f32 1.0, %v1633
    %v1635 = vrcp.pop %v1620
    %v1636 = vmul.f32 1.0, %v1635
    %1637 = vrot.lane.b32.xlu0 %v1547, 64
    %v1638 = vpop.permute.xlu0 %1637
    %1639 = vrot.lane.b32.xlu0 %v1561, 64
    %v1640 = vpop.permute.xlu0 %1639
    %1641 = vrot.lane.b32.xlu0 %v1569, 64
    %v1642 = vpop.permute.xlu0 %1641
    %1643 = vrot.lane.b32.xlu0 %v1571, 64
    %v1644 = vpop.permute.xlu0 %1643
    %1645 = vrot.lane.b32.xlu0 %v1554, 64
    %v1646 = vpop.permute.xlu0 %1645
    %1647 = vrot.lane.b32.xlu0 %v1568, 64
    %v1648 = vpop.permute.xlu0 %1647
    %1649 = vrot.lane.b32.xlu0 %v1570, 64
    %v1650 = vpop.permute.xlu0 %1649
    %1651 = vrot.lane.b32.xlu0 %v1572, 64
    %v1652 = vpop.permute.xlu0 %1651
    %v1661 = vmul.f32 %v1622, %v1638
    %v1662 = vmul.f32 %v1624, %v1640
    %v1663 = vmul.f32 %v1626, %v1642
    %v1664 = vmul.f32 %v1628, %v1644
    %v1665 = vmul.f32 %v1630, %v1646
    %v1666 = vmul.f32 %v1632, %v1648
    %v1667 = vmul.f32 %v1634, %v1650
    %v1668 = vmul.f32 %v1636, %v1652
    %1677 = vrot.lane.b32.xlu0 %v1661, 64
    %v1678 = vpop.permute.xlu0 %1677
    %1679 = vrot.lane.b32.xlu0 %v1662, 64
    %v1680 = vpop.permute.xlu0 %1679
    %1681 = vrot.lane.b32.xlu0 %v1663, 64
    %v1682 = vpop.permute.xlu0 %1681
    %1683 = vrot.lane.b32.xlu0 %v1664, 64
    %v1684 = vpop.permute.xlu0 %1683
    %1685 = vrot.lane.b32.xlu0 %v1665, 64
    %v1686 = vpop.permute.xlu0 %1685
    %1687 = vrot.lane.b32.xlu0 %v1666, 64
    %v1688 = vpop.permute.xlu0 %1687
    %1689 = vrot.lane.b32.xlu0 %v1667, 64
    %v1690 = vpop.permute.xlu0 %1689
    %1691 = vrot.lane.b32.xlu0 %v1668, 64
    %v1692 = vpop.permute.xlu0 %1691
    %v1701 = vadd.f32 %v1436, %v1678
    %v1702 = vadd.f32 %v1438, %v1680
    %v1703 = vadd.f32 %v1440, %v1682
    %v1704 = vadd.f32 %v1442, %v1684
    %v1705 = vadd.f32 %v1444, %v1686
    %v1706 = vadd.f32 %v1446, %v1688
    %v1707 = vadd.f32 %v1448, %v1690
    %v1708 = vadd.f32 %v1450, %v1692
    %v1709 = vtanh.pop %v1701
    %v1710 = vtanh.pop %v1702
    %v1711 = vtanh.pop %v1703
    %v1712 = vtanh.pop %v1704
    %v1713 = vtanh.pop %v1705
    %v1714 = vtanh.pop %v1706
    %v1715 = vtanh.pop %v1707
    %v1716 = vtanh.pop %v1708
    %v1717 = vsub.f32 1.0, %v1622
    %v1718 = vsub.f32 1.0, %v1624
    %v1719 = vsub.f32 1.0, %v1626
    %v1720 = vsub.f32 1.0, %v1628
    %v1721 = vsub.f32 1.0, %v1630
    %v1722 = vsub.f32 1.0, %v1632
    %v1723 = vsub.f32 1.0, %v1634
    %v1724 = vsub.f32 1.0, %v1636
    %1733 = vrot.lane.b32.xlu0 %v1709, 96
    %v1734 = vpop.permute.xlu0 %1733
    %1735 = vrot.lane.b32.xlu0 %v1710, 96
    %v1736 = vpop.permute.xlu0 %1735
    %1737 = vrot.lane.b32.xlu0 %v1711, 96
    %v1738 = vpop.permute.xlu0 %1737
    %1739 = vrot.lane.b32.xlu0 %v1712, 96
    %v1740 = vpop.permute.xlu0 %1739
    %1741 = vrot.lane.b32.xlu0 %v1713, 96
    %v1742 = vpop.permute.xlu0 %1741
    %1743 = vrot.lane.b32.xlu0 %v1714, 96
    %v1744 = vpop.permute.xlu0 %1743
    %1745 = vrot.lane.b32.xlu0 %v1715, 96
    %v1746 = vpop.permute.xlu0 %1745
    %1747 = vrot.lane.b32.xlu0 %v1716, 96
    %v1748 = vpop.permute.xlu0 %1747
    %v1757 = vmul.f32 %v1717, %v1734
    %v1758 = vmul.f32 %v1718, %v1736
    %v1759 = vmul.f32 %v1719, %v1738
    %v1760 = vmul.f32 %v1720, %v1740
    %v1761 = vmul.f32 %v1721, %v1742
    %v1762 = vmul.f32 %v1722, %v1744
    %v1763 = vmul.f32 %v1723, %v1746
    %v1764 = vmul.f32 %v1724, %v1748
    %1765 = vrot.lane.b32.xlu0 %v766, 32
    %v1766 = vpop.permute.xlu0 %1765
    %1767 = vrot.lane.b32.xlu0 %v780, 32
    %v1768 = vpop.permute.xlu0 %1767
    %1769 = vrot.lane.b32.xlu0 %v788, 32
    %v1770 = vpop.permute.xlu0 %1769
    %1771 = vrot.lane.b32.xlu0 %v790, 32
    %v1772 = vpop.permute.xlu0 %1771
    %1773 = vrot.lane.b32.xlu0 %v773, 32
    %v1774 = vpop.permute.xlu0 %1773
    %1775 = vrot.lane.b32.xlu0 %v787, 32
    %v1776 = vpop.permute.xlu0 %1775
    %1777 = vrot.lane.b32.xlu0 %v789, 32
    %v1778 = vpop.permute.xlu0 %1777
    %1779 = vrot.lane.b32.xlu0 %v791, 32
    %v1780 = vpop.permute.xlu0 %1779
    %v1789 = vmul.f32 %v1622, %v1766
    %v1790 = vmul.f32 %v1624, %v1768
    %v1791 = vmul.f32 %v1626, %v1770
    %v1792 = vmul.f32 %v1628, %v1772
    %v1793 = vmul.f32 %v1630, %v1774
    %v1794 = vmul.f32 %v1632, %v1776
    %v1795 = vmul.f32 %v1634, %v1778
    %v1796 = vmul.f32 %v1636, %v1780
    %v1797 = vadd.f32 %v1757, %v1789
    %v1798 = vadd.f32 %v1758, %v1790
    %v1799 = vadd.f32 %v1759, %v1791
    %v1800 = vadd.f32 %v1760, %v1792
    %v1801 = vadd.f32 %v1761, %v1793
    %v1802 = vadd.f32 %v1762, %v1794
    %v1803 = vadd.f32 %v1763, %v1795
    %v1804 = vadd.f32 %v1764, %v1796
    %vm1805 = vcmp.gt.s32.totalorder %v132, 1
    %v1806 = vsel %vm1805, 1, 0
    %1807 = vset.pattern.permute.xlu0 0
    %1808 = vperm.xlu0 %1807, %v1806
    %v1809 = vpop.permute.xlu0 %1808
    %vm1810 = vcmp.eq.s32.totalorder %v1809, 1
    %v1819 = vcombine.low %v1797, %v1798
    %v1820 = vcombine.low %v1799, %v1800
    %v1821 = vcombine.low %v1801, %v1802
    %v1822 = vcombine.low %v1803, %v1804
    %v1824 = vunpack.c.l.s4 1966171168
    %v1825 = vunpack.c.0.s8 %v1824
    %v1826 = vlaneseq
    %v1827 = vshrl.u32 %v1826, 7
    %v1828 = vsub.s32 %v1825, %v1827
    %v1829 = vrot.slane %v1819, %v1828
    %v1831 = vunpack.c.l.s4 1966171168
    %v1832 = vunpack.c.0.s8 %v1831
    %v1833 = vlaneseq
    %v1834 = vshrl.u32 %v1833, 7
    %v1835 = vsub.s32 %v1832, %v1834
    %v1836 = vrot.slane %v1820, %v1835
    %v1838 = vunpack.c.l.s4 1966171168
    %v1839 = vunpack.c.0.s8 %v1838
    %v1840 = vlaneseq
    %v1841 = vshrl.u32 %v1840, 7
    %v1842 = vsub.s32 %v1839, %v1841
    %v1843 = vrot.slane %v1821, %v1842
    %v1845 = vunpack.c.l.s4 1966171168
    %v1846 = vunpack.c.0.s8 %v1845
    %v1847 = vlaneseq
    %v1848 = vshrl.u32 %v1847, 7
    %v1849 = vsub.s32 %v1846, %v1848
    %v1850 = vrot.slane %v1822, %v1849
    %v1851 = vcombine.low %v1829, %v1836
    %v1852 = vcombine.low %v1843, %v1850
    %v1854 = vunpack.c.l.s4 1966171168
    %v1855 = vunpack.c.0.s8 %v1854
    %v1856 = vlaneseq
    %v1857 = vshrl.u32 %v1856, 7
    %v1858 = vsub.s32 %v1855, %v1857
    %v1859 = vrot.slane %v1851, %v1858
    %v1861 = vunpack.c.l.s4 1966171168
    %v1862 = vunpack.c.0.s8 %v1861
    %v1863 = vlaneseq
    %v1864 = vshrl.u32 %v1863, 7
    %v1865 = vsub.s32 %v1862, %v1864
    %v1866 = vrot.slane %v1852, %v1865
    %v1867 = vcombine.low %v1859, %v1866
    %1868 = vrot.lane.b32.xlu0 %v1867, 96
    %v1869 = vpop.permute.xlu0 %1868
    %v1871 = vsel %vm1810, %v1869, %v741
    %v1873 = vcombine.high %v1871, %v1871
    %v1875 = vunpack.c.l.s4 1966171168
    %v1876 = vunpack.c.0.s8 %v1875
    %v1877 = vlaneseq
    %v1878 = vshrl.u32 %v1877, 7
    %v1879 = vsub.s32 %v1876, %v1878
    %v1880 = vrot.slane %v1871, %v1879
    %v1882 = vunpack.c.l.s4 1966171168
    %v1883 = vunpack.c.0.s8 %v1882
    %v1884 = vlaneseq
    %v1885 = vshrl.u32 %v1884, 7
    %v1886 = vsub.s32 %v1883, %v1885
    %v1887 = vrot.slane %v1873, %v1886
    %v1888 = vcombine.high %v1880, %v1880
    %v1889 = vcombine.high %v1887, %v1887
    %v1891 = vunpack.c.l.s4 1966171168
    %v1892 = vunpack.c.0.s8 %v1891
    %v1893 = vlaneseq
    %v1894 = vshrl.u32 %v1893, 7
    %v1895 = vsub.s32 %v1892, %v1894
    %v1896 = vrot.slane %v1880, %v1895
    %v1898 = vunpack.c.l.s4 1966171168
    %v1899 = vunpack.c.0.s8 %v1898
    %v1900 = vlaneseq
    %v1901 = vshrl.u32 %v1900, 7
    %v1902 = vsub.s32 %v1899, %v1901
    %v1903 = vrot.slane %v1887, %v1902
    %v1905 = vunpack.c.l.s4 1966171168
    %v1906 = vunpack.c.0.s8 %v1905
    %v1907 = vlaneseq
    %v1908 = vshrl.u32 %v1907, 7
    %v1909 = vsub.s32 %v1906, %v1908
    %v1910 = vrot.slane %v1888, %v1909
    %v1912 = vunpack.c.l.s4 1966171168
    %v1913 = vunpack.c.0.s8 %v1912
    %v1914 = vlaneseq
    %v1915 = vshrl.u32 %v1914, 7
    %v1916 = vsub.s32 %v1913, %v1915
    %v1917 = vrot.slane %v1889, %v1916
    %v1918 = vcombine.high %v1896, %v1896
    %v1919 = vcombine.high %v1903, %v1903
    %v1920 = vcombine.high %v1910, %v1910
    %v1921 = vcombine.high %v1917, %v1917
    %1930 = vst.msk [vmem:[#allocation3 + $0x1] sm:$0x1] %vm800, %v1896
    %1931 = vst.msk [vmem:[#allocation3 + $0x9] sm:$0x1] %vm800, %v1910
    %1932 = vst.msk [vmem:[#allocation3 + $0x11] sm:$0x1] %vm800, %v1918
    %1933 = vst.msk [vmem:[#allocation3 + $0x19] sm:$0x1] %vm800, %v1920
    %1934 = vst.msk [vmem:[#allocation3 + $0x21] sm:$0x1] %vm800, %v1903
    %1935 = vst.msk [vmem:[#allocation3 + $0x29] sm:$0x1] %vm800, %v1917
    %1936 = vst.msk [vmem:[#allocation3 + $0x31] sm:$0x1] %vm800, %v1919
    %1937 = vst.msk [vmem:[#allocation3 + $0x39] sm:$0x1] %vm800, %v1921
    %s1938 = scalar_lea.vmem [#allocation2], 6
    %v1939 = vld [vmem:[%s1938] ss:$8 sm:$0x3]
    %s1940 = scalar_lea.vmem [#allocation2], 22
    %v1941 = vld [vmem:[%s1940] ss:$8 sm:$0x3]
    %s1942 = scalar_lea.vmem [#allocation2], 38
    %v1943 = vld [vmem:[%s1942] ss:$8 sm:$0x3]
    %s1944 = scalar_lea.vmem [#allocation2], 54
    %v1945 = vld [vmem:[%s1944] ss:$8 sm:$0x3]
    %s1946 = scalar_lea.vmem [#allocation2], 70
    %v1947 = vld [vmem:[%s1946] ss:$8 sm:$0x3]
    %s1948 = scalar_lea.vmem [#allocation2], 86
    %v1949 = vld [vmem:[%s1948] ss:$8 sm:$0x3]
    %s1950 = scalar_lea.vmem [#allocation2], 102
    %v1951 = vld [vmem:[%s1950] ss:$8 sm:$0x3]
    %s1952 = scalar_lea.vmem [#allocation2], 118
    %v1953 = vld [vmem:[%s1952] ss:$8 sm:$0x3]
    %v1954 = vsel %vm343, %v1319, 0
    %1956 = vmatprep.subr.mxu0 0.0
    %1957 = vmatpush1.msra.mxu0 %v317
    %1958 = vmatprep.subr.mxu0 0.0
    %1959 = vmatpush1.msra.mxu0 %v318
    %1960 = vmatprep.subr.mxu0 0.0
    %1961 = vmatpush1.msra.mxu0 %v319
    %1962 = vmatprep.subr.mxu0 0.0
    %1963 = vmatpush1.msra.mxu0 %v320
    %1964 = vmatprep.subr.mxu0 0.0
    %1965 = vmatpush1.msra.mxu0 0.0
    %1966 = vmatprep.subr.mxu0 0.0
    %1967 = vmatpush1.msra.mxu0 0.0
    %1968 = vmatprep.subr.mxu0 0.0
    %1969 = vmatpush1.msra.mxu0 0.0
    %1970 = vmatprep.subr.mxu0 0.0
    %1971 = vmatpush1.msra.mxu0 0.0
    %1972 = vmatprep.subr.mxu0 0.0
    %1973 = vmatpush1.msra.mxu0 0.0
    %1974 = vmatprep.subr.mxu0 0.0
    %1975 = vmatpush1.msra.mxu0 0.0
    %1976 = vmatprep.subr.mxu0 0.0
    %1977 = vmatpush1.msra.mxu0 0.0
    %1978 = vmatprep.subr.mxu0 0.0
    %1979 = vmatpush1.msra.mxu0 0.0
    %1980 = vmatprep.subr.mxu0 0.0
    %1981 = vmatpush1.msra.mxu0 0.0
    %1982 = vmatprep.subr.mxu0 0.0
    %1983 = vmatpush1.msra.mxu0 0.0
    %1984 = vmatprep.subr.mxu0 0.0
    %1985 = vmatpush1.msra.mxu0 0.0
    %1986 = vmatprep.subr.mxu0 0.0
    %1987 = vmatpush1.msra.mxu0 0.0
    %1988 = vmatprep.subr.mxu0 0.0
    %1989 = vmatpush1.msra.mxu0 0.0
    %1990 = vmatprep.subr.mxu0 0.0
    %1991 = vmatpush1.msra.mxu0 0.0
    %1992 = vmatprep.subr.mxu0 0.0
    %1993 = vmatpush1.msra.mxu0 0.0
    %1994 = vmatprep.subr.mxu0 0.0
    %1995 = vmatpush1.msra.mxu0 0.0
    %1996 = vmatprep.subr.mxu0 0.0
    %1997 = vmatpush1.msra.mxu0 0.0
    %1998 = vmatprep.subr.mxu0 0.0
    %1999 = vmatpush1.msra.mxu0 0.0
    %2000 = vmatprep.subr.mxu0 0.0
    %2001 = vmatpush1.msra.mxu0 0.0
    %2002 = vmatprep.subr.mxu0 0.0
    %2003 = vmatpush1.msra.mxu0 0.0
    %2004 = vmatprep.subr.mxu0 0.0
    %2005 = vmatpush1.msra.mxu0 0.0
    %2006 = vmatprep.subr.mxu0 0.0
    %2007 = vmatpush1.msra.mxu0 0.0
    %2008 = vmatprep.subr.mxu0 0.0
    %2009 = vmatpush1.msra.mxu0 0.0
    %2010 = vmatprep.subr.mxu0 0.0
    %2011 = vmatpush1.msra.mxu0 0.0
    %2012 = vmatprep.subr.mxu0 0.0
    %2013 = vmatpush1.msra.mxu0 0.0
    %2014 = vmatprep.subr.mxu0 0.0
    %2015 = vmatpush1.msra.mxu0 0.0
    %2016 = vmatprep.subr.mxu0 0.0
    %2017 = vmatpush1.msra.mxu0 0.0
    %2018 = vmatprep.subr.mxu0 0.0
    %2019 = vmatpush1.msra.mxu0 0.0
    %2020 = vmatprep.mubr.f32.mxu0 0.0
    %2021 = vmatmul.mubr.f32.gmra.mrb[0].mxu0 %v1954
    %v2022 = vpop.f32.mrb[0].mxu0
    %v2023 = vadd.f32 %v829, %v2022
    %v2024 = vpop.f32.mrb[0].mxu0
    %2025 = vdwg.mxu0
    %v2027 = vcombine.high %v2023, %v2023
    %v2029 = vunpack.c.l.s4 1966171168
    %v2030 = vunpack.c.0.s8 %v2029
    %v2031 = vlaneseq
    %v2032 = vshrl.u32 %v2031, 7
    %v2033 = vsub.s32 %v2030, %v2032
    %v2034 = vrot.slane %v2023, %v2033
    %v2036 = vunpack.c.l.s4 1966171168
    %v2037 = vunpack.c.0.s8 %v2036
    %v2038 = vlaneseq
    %v2039 = vshrl.u32 %v2038, 7
    %v2040 = vsub.s32 %v2037, %v2039
    %v2041 = vrot.slane %v2027, %v2040
    %v2042 = vcombine.high %v2034, %v2034
    %v2043 = vcombine.high %v2041, %v2041
    %v2045 = vunpack.c.l.s4 1966171168
    %v2046 = vunpack.c.0.s8 %v2045
    %v2047 = vlaneseq
    %v2048 = vshrl.u32 %v2047, 7
    %v2049 = vsub.s32 %v2046, %v2048
    %v2050 = vrot.slane %v2034, %v2049
    %v2052 = vunpack.c.l.s4 1966171168
    %v2053 = vunpack.c.0.s8 %v2052
    %v2054 = vlaneseq
    %v2055 = vshrl.u32 %v2054, 7
    %v2056 = vsub.s32 %v2053, %v2055
    %v2057 = vrot.slane %v2041, %v2056
    %v2059 = vunpack.c.l.s4 1966171168
    %v2060 = vunpack.c.0.s8 %v2059
    %v2061 = vlaneseq
    %v2062 = vshrl.u32 %v2061, 7
    %v2063 = vsub.s32 %v2060, %v2062
    %v2064 = vrot.slane %v2042, %v2063
    %v2066 = vunpack.c.l.s4 1966171168
    %v2067 = vunpack.c.0.s8 %v2066
    %v2068 = vlaneseq
    %v2069 = vshrl.u32 %v2068, 7
    %v2070 = vsub.s32 %v2067, %v2069
    %v2071 = vrot.slane %v2043, %v2070
    %v2072 = vcombine.high %v2050, %v2050
    %v2073 = vcombine.high %v2057, %v2057
    %v2074 = vcombine.high %v2064, %v2064
    %v2075 = vcombine.high %v2071, %v2071
    %2076 = vrot.lane.b32.xlu0 %v2050, 96
    %v2077 = vpop.permute.xlu0 %2076
    %2078 = vrot.lane.b32.xlu0 %v2064, 96
    %v2079 = vpop.permute.xlu0 %2078
    %2080 = vrot.lane.b32.xlu0 %v2072, 96
    %v2081 = vpop.permute.xlu0 %2080
    %2082 = vrot.lane.b32.xlu0 %v2074, 96
    %v2083 = vpop.permute.xlu0 %2082
    %2084 = vrot.lane.b32.xlu0 %v2057, 96
    %v2085 = vpop.permute.xlu0 %2084
    %2086 = vrot.lane.b32.xlu0 %v2071, 96
    %v2087 = vpop.permute.xlu0 %2086
    %2088 = vrot.lane.b32.xlu0 %v2073, 96
    %v2089 = vpop.permute.xlu0 %2088
    %2090 = vrot.lane.b32.xlu0 %v2075, 96
    %v2091 = vpop.permute.xlu0 %2090
    %v2100 = vadd.f32 %v1939, %v2077
    %v2101 = vadd.f32 %v1941, %v2079
    %v2102 = vadd.f32 %v1943, %v2081
    %v2103 = vadd.f32 %v1945, %v2083
    %v2104 = vadd.f32 %v1947, %v2085
    %v2105 = vadd.f32 %v1949, %v2087
    %v2106 = vadd.f32 %v1951, %v2089
    %v2107 = vadd.f32 %v1953, %v2091
    %v2108 = vxor.u32 %v2100, 2147483648
    %v2109 = vxor.u32 %v2101, 2147483648
    %v2110 = vxor.u32 %v2102, 2147483648
    %v2111 = vxor.u32 %v2103, 2147483648
    %v2112 = vxor.u32 %v2104, 2147483648
    %v2113 = vxor.u32 %v2105, 2147483648
    %v2114 = vxor.u32 %v2106, 2147483648
    %v2115 = vxor.u32 %v2107, 2147483648
    %v2116 = vmul.f32 %v2108, 1.442695
    %v2117 = vpow.pop %v2116
    %v2118 = vmul.f32 %v2109, 1.442695
    %v2119 = vpow.pop %v2118
    %v2120 = vmul.f32 %v2110, 1.442695
    %v2121 = vpow.pop %v2120
    %v2122 = vmul.f32 %v2111, 1.442695
    %v2123 = vpow.pop %v2122
    %v2124 = vmul.f32 %v2112, 1.442695
    %v2125 = vpow.pop %v2124
    %v2126 = vmul.f32 %v2113, 1.442695
    %v2127 = vpow.pop %v2126
    %v2128 = vmul.f32 %v2114, 1.442695
    %v2129 = vpow.pop %v2128
    %v2130 = vmul.f32 %v2115, 1.442695
    %v2131 = vpow.pop %v2130
    %v2132 = vadd.f32 %v2117, 1.0
    %v2133 = vadd.f32 %v2119, 1.0
    %v2134 = vadd.f32 %v2121, 1.0
    %v2135 = vadd.f32 %v2123, 1.0
    %v2136 = vadd.f32 %v2125, 1.0
    %v2137 = vadd.f32 %v2127, 1.0
    %v2138 = vadd.f32 %v2129, 1.0
    %v2139 = vadd.f32 %v2131, 1.0
    %v2140 = vrcp.pop %v2132
    %v2141 = vmul.f32 1.0, %v2140
    %v2142 = vrcp.pop %v2133
    %v2143 = vmul.f32 1.0, %v2142
    %v2144 = vrcp.pop %v2134
    %v2145 = vmul.f32 1.0, %v2144
    %v2146 = vrcp.pop %v2135
    %v2147 = vmul.f32 1.0, %v2146
    %v2148 = vrcp.pop %v2136
    %v2149 = vmul.f32 1.0, %v2148
    %v2150 = vrcp.pop %v2137
    %v2151 = vmul.f32 1.0, %v2150
    %v2152 = vrcp.pop %v2138
    %v2153 = vmul.f32 1.0, %v2152
    %v2154 = vrcp.pop %v2139
    %v2155 = vmul.f32 1.0, %v2154
    %v2164 = vrot.slane %v1939, 1
    %v2165 = vrot.slane %v1941, 1
    %v2166 = vrot.slane %v1943, 1
    %v2167 = vrot.slane %v1945, 1
    %v2168 = vrot.slane %v1947, 1
    %v2169 = vrot.slane %v1949, 1
    %v2170 = vrot.slane %v1951, 1
    %v2171 = vrot.slane %v1953, 1
    %v2180 = vadd.f32 %v2164, %v2077
    %v2181 = vadd.f32 %v2165, %v2079
    %v2182 = vadd.f32 %v2166, %v2081
    %v2183 = vadd.f32 %v2167, %v2083
    %v2184 = vadd.f32 %v2168, %v2085
    %v2185 = vadd.f32 %v2169, %v2087
    %v2186 = vadd.f32 %v2170, %v2089
    %v2187 = vadd.f32 %v2171, %v2091
    %v2188 = vxor.u32 %v2180, 2147483648
    %v2189 = vxor.u32 %v2181, 2147483648
    %v2190 = vxor.u32 %v2182, 2147483648
    %v2191 = vxor.u32 %v2183, 2147483648
    %v2192 = vxor.u32 %v2184, 2147483648
    %v2193 = vxor.u32 %v2185, 2147483648
    %v2194 = vxor.u32 %v2186, 2147483648
    %v2195 = vxor.u32 %v2187, 2147483648
    %v2196 = vmul.f32 %v2188, 1.442695
    %v2197 = vpow.pop %v2196
    %v2198 = vmul.f32 %v2189, 1.442695
    %v2199 = vpow.pop %v2198
    %v2200 = vmul.f32 %v2190, 1.442695
    %v2201 = vpow.pop %v2200
    %v2202 = vmul.f32 %v2191, 1.442695
    %v2203 = vpow.pop %v2202
    %v2204 = vmul.f32 %v2192, 1.442695
    %v2205 = vpow.pop %v2204
    %v2206 = vmul.f32 %v2193, 1.442695
    %v2207 = vpow.pop %v2206
    %v2208 = vmul.f32 %v2194, 1.442695
    %v2209 = vpow.pop %v2208
    %v2210 = vmul.f32 %v2195, 1.442695
    %v2211 = vpow.pop %v2210
    %v2212 = vadd.f32 %v2197, 1.0
    %v2213 = vadd.f32 %v2199, 1.0
    %v2214 = vadd.f32 %v2201, 1.0
    %v2215 = vadd.f32 %v2203, 1.0
    %v2216 = vadd.f32 %v2205, 1.0
    %v2217 = vadd.f32 %v2207, 1.0
    %v2218 = vadd.f32 %v2209, 1.0
    %v2219 = vadd.f32 %v2211, 1.0
    %v2220 = vrcp.pop %v2212
    %v2221 = vmul.f32 1.0, %v2220
    %v2222 = vrcp.pop %v2213
    %v2223 = vmul.f32 1.0, %v2222
    %v2224 = vrcp.pop %v2214
    %v2225 = vmul.f32 1.0, %v2224
    %v2226 = vrcp.pop %v2215
    %v2227 = vmul.f32 1.0, %v2226
    %v2228 = vrcp.pop %v2216
    %v2229 = vmul.f32 1.0, %v2228
    %v2230 = vrcp.pop %v2217
    %v2231 = vmul.f32 1.0, %v2230
    %v2232 = vrcp.pop %v2218
    %v2233 = vmul.f32 1.0, %v2232
    %v2234 = vrcp.pop %v2219
    %v2235 = vmul.f32 1.0, %v2234
    %2236 = vrot.lane.b32.xlu0 %v2050, 32
    %v2237 = vpop.permute.xlu0 %2236
    %2238 = vrot.lane.b32.xlu0 %v2064, 32
    %v2239 = vpop.permute.xlu0 %2238
    %2240 = vrot.lane.b32.xlu0 %v2072, 32
    %v2241 = vpop.permute.xlu0 %2240
    %2242 = vrot.lane.b32.xlu0 %v2074, 32
    %v2243 = vpop.permute.xlu0 %2242
    %2244 = vrot.lane.b32.xlu0 %v2057, 32
    %v2245 = vpop.permute.xlu0 %2244
    %2246 = vrot.lane.b32.xlu0 %v2071, 32
    %v2247 = vpop.permute.xlu0 %2246
    %2248 = vrot.lane.b32.xlu0 %v2073, 32
    %v2249 = vpop.permute.xlu0 %2248
    %2250 = vrot.lane.b32.xlu0 %v2075, 32
    %v2251 = vpop.permute.xlu0 %2250
    %v2260 = vmul.f32 %v2141, %v2237
    %v2261 = vmul.f32 %v2143, %v2239
    %v2262 = vmul.f32 %v2145, %v2241
    %v2263 = vmul.f32 %v2147, %v2243
    %v2264 = vmul.f32 %v2149, %v2245
    %v2265 = vmul.f32 %v2151, %v2247
    %v2266 = vmul.f32 %v2153, %v2249
    %v2267 = vmul.f32 %v2155, %v2251
    %2268 = vrot.lane.b32.xlu0 %v1939, 96
    %v2269 = vpop.permute.xlu0 %2268
    %2270 = vrot.lane.b32.xlu0 %v1941, 96
    %v2271 = vpop.permute.xlu0 %2270
    %2272 = vrot.lane.b32.xlu0 %v1943, 96
    %v2273 = vpop.permute.xlu0 %2272
    %2274 = vrot.lane.b32.xlu0 %v1945, 96
    %v2275 = vpop.permute.xlu0 %2274
    %2276 = vrot.lane.b32.xlu0 %v1947, 96
    %v2277 = vpop.permute.xlu0 %2276
    %2278 = vrot.lane.b32.xlu0 %v1949, 96
    %v2279 = vpop.permute.xlu0 %2278
    %2280 = vrot.lane.b32.xlu0 %v1951, 96
    %v2281 = vpop.permute.xlu0 %2280
    %2282 = vrot.lane.b32.xlu0 %v1953, 96
    %v2283 = vpop.permute.xlu0 %2282
    %v2284 = vrot.slane %v2269, 1
    %v2285 = vrot.slane %v2271, 1
    %v2286 = vrot.slane %v2273, 1
    %v2287 = vrot.slane %v2275, 1
    %v2288 = vrot.slane %v2277, 1
    %v2289 = vrot.slane %v2279, 1
    %v2290 = vrot.slane %v2281, 1
    %v2291 = vrot.slane %v2283, 1
    %2308 = vrot.lane.b32.xlu0 %v2260, 32
    %v2309 = vpop.permute.xlu0 %2308
    %2310 = vrot.lane.b32.xlu0 %v2261, 32
    %v2311 = vpop.permute.xlu0 %2310
    %2312 = vrot.lane.b32.xlu0 %v2262, 32
    %v2313 = vpop.permute.xlu0 %2312
    %2314 = vrot.lane.b32.xlu0 %v2263, 32
    %v2315 = vpop.permute.xlu0 %2314
    %2316 = vrot.lane.b32.xlu0 %v2264, 32
    %v2317 = vpop.permute.xlu0 %2316
    %2318 = vrot.lane.b32.xlu0 %v2265, 32
    %v2319 = vpop.permute.xlu0 %2318
    %2320 = vrot.lane.b32.xlu0 %v2266, 32
    %v2321 = vpop.permute.xlu0 %2320
    %2322 = vrot.lane.b32.xlu0 %v2267, 32
    %v2323 = vpop.permute.xlu0 %2322
    %v2332 = vadd.f32 %v2284, %v2309
    %v2333 = vadd.f32 %v2285, %v2311
    %v2334 = vadd.f32 %v2286, %v2313
    %v2335 = vadd.f32 %v2287, %v2315
    %v2336 = vadd.f32 %v2288, %v2317
    %v2337 = vadd.f32 %v2289, %v2319
    %v2338 = vadd.f32 %v2290, %v2321
    %v2339 = vadd.f32 %v2291, %v2323
    %v2340 = vtanh.pop %v2332
    %v2341 = vtanh.pop %v2333
    %v2342 = vtanh.pop %v2334
    %v2343 = vtanh.pop %v2335
    %v2344 = vtanh.pop %v2336
    %v2345 = vtanh.pop %v2337
    %v2346 = vtanh.pop %v2338
    %v2347 = vtanh.pop %v2339
    %v2348 = vsub.f32 1.0, %v2221
    %v2349 = vsub.f32 1.0, %v2223
    %v2350 = vsub.f32 1.0, %v2225
    %v2351 = vsub.f32 1.0, %v2227
    %v2352 = vsub.f32 1.0, %v2229
    %v2353 = vsub.f32 1.0, %v2231
    %v2354 = vsub.f32 1.0, %v2233
    %v2355 = vsub.f32 1.0, %v2235
    %v2356 = vmul.f32 %v2348, %v2340
    %v2357 = vmul.f32 %v2349, %v2341
    %v2358 = vmul.f32 %v2350, %v2342
    %v2359 = vmul.f32 %v2351, %v2343
    %v2360 = vmul.f32 %v2352, %v2344
    %v2361 = vmul.f32 %v2353, %v2345
    %v2362 = vmul.f32 %v2354, %v2346
    %v2363 = vmul.f32 %v2355, %v2347
    %v2372 = vmul.f32 %v2221, %v1344
    %v2373 = vmul.f32 %v2223, %v1358
    %v2374 = vmul.f32 %v2225, %v1366
    %v2375 = vmul.f32 %v2227, %v1368
    %v2376 = vmul.f32 %v2229, %v1351
    %v2377 = vmul.f32 %v2231, %v1365
    %v2378 = vmul.f32 %v2233, %v1367
    %v2379 = vmul.f32 %v2235, %v1369
    %v2380 = vadd.f32 %v2356, %v2372
    %v2381 = vadd.f32 %v2357, %v2373
    %v2382 = vadd.f32 %v2358, %v2374
    %v2383 = vadd.f32 %v2359, %v2375
    %v2384 = vadd.f32 %v2360, %v2376
    %v2385 = vadd.f32 %v2361, %v2377
    %v2386 = vadd.f32 %v2362, %v2378
    %v2387 = vadd.f32 %v2363, %v2379
    %vm2388 = vcmp.gt.s32.totalorder %v132, 6
    %v2389 = vsel %vm2388, 1, 0
    %2390 = vset.pattern.permute.xlu0 0
    %2391 = vperm.xlu0 %2390, %v2389
    %v2392 = vpop.permute.xlu0 %2391
    %vm2393 = vcmp.eq.s32.totalorder %v2392, 1
    %v2402 = vcombine.low %v2380, %v2381
    %v2403 = vcombine.low %v2382, %v2383
    %v2404 = vcombine.low %v2384, %v2385
    %v2405 = vcombine.low %v2386, %v2387
    %v2407 = vunpack.c.l.s4 1966171168
    %v2408 = vunpack.c.0.s8 %v2407
    %v2409 = vlaneseq
    %v2410 = vshrl.u32 %v2409, 7
    %v2411 = vsub.s32 %v2408, %v2410
    %v2412 = vrot.slane %v2402, %v2411
    %v2414 = vunpack.c.l.s4 1966171168
    %v2415 = vunpack.c.0.s8 %v2414
    %v2416 = vlaneseq
    %v2417 = vshrl.u32 %v2416, 7
    %v2418 = vsub.s32 %v2415, %v2417
    %v2419 = vrot.slane %v2403, %v2418
    %v2421 = vunpack.c.l.s4 1966171168
    %v2422 = vunpack.c.0.s8 %v2421
    %v2423 = vlaneseq
    %v2424 = vshrl.u32 %v2423, 7
    %v2425 = vsub.s32 %v2422, %v2424
    %v2426 = vrot.slane %v2404, %v2425
    %v2428 = vunpack.c.l.s4 1966171168
    %v2429 = vunpack.c.0.s8 %v2428
    %v2430 = vlaneseq
    %v2431 = vshrl.u32 %v2430, 7
    %v2432 = vsub.s32 %v2429, %v2431
    %v2433 = vrot.slane %v2405, %v2432
    %v2434 = vcombine.low %v2412, %v2419
    %v2435 = vcombine.low %v2426, %v2433
    %v2437 = vunpack.c.l.s4 1966171168
    %v2438 = vunpack.c.0.s8 %v2437
    %v2439 = vlaneseq
    %v2440 = vshrl.u32 %v2439, 7
    %v2441 = vsub.s32 %v2438, %v2440
    %v2442 = vrot.slane %v2434, %v2441
    %v2444 = vunpack.c.l.s4 1966171168
    %v2445 = vunpack.c.0.s8 %v2444
    %v2446 = vlaneseq
    %v2447 = vshrl.u32 %v2446, 7
    %v2448 = vsub.s32 %v2445, %v2447
    %v2449 = vrot.slane %v2435, %v2448
    %v2450 = vcombine.low %v2442, %v2449
    %v2452 = vsel %vm2393, %v2450, %v1319
    %v2454 = vcombine.high %v2452, %v2452
    %v2456 = vunpack.c.l.s4 1966171168
    %v2457 = vunpack.c.0.s8 %v2456
    %v2458 = vlaneseq
    %v2459 = vshrl.u32 %v2458, 7
    %v2460 = vsub.s32 %v2457, %v2459
    %v2461 = vrot.slane %v2452, %v2460
    %v2463 = vunpack.c.l.s4 1966171168
    %v2464 = vunpack.c.0.s8 %v2463
    %v2465 = vlaneseq
    %v2466 = vshrl.u32 %v2465, 7
    %v2467 = vsub.s32 %v2464, %v2466
    %v2468 = vrot.slane %v2454, %v2467
    %v2469 = vcombine.high %v2461, %v2461
    %v2470 = vcombine.high %v2468, %v2468
    %v2472 = vunpack.c.l.s4 1966171168
    %v2473 = vunpack.c.0.s8 %v2472
    %v2474 = vlaneseq
    %v2475 = vshrl.u32 %v2474, 7
    %v2476 = vsub.s32 %v2473, %v2475
    %v2477 = vrot.slane %v2461, %v2476
    %v2479 = vunpack.c.l.s4 1966171168
    %v2480 = vunpack.c.0.s8 %v2479
    %v2481 = vlaneseq
    %v2482 = vshrl.u32 %v2481, 7
    %v2483 = vsub.s32 %v2480, %v2482
    %v2484 = vrot.slane %v2468, %v2483
    %v2486 = vunpack.c.l.s4 1966171168
    %v2487 = vunpack.c.0.s8 %v2486
    %v2488 = vlaneseq
    %v2489 = vshrl.u32 %v2488, 7
    %v2490 = vsub.s32 %v2487, %v2489
    %v2491 = vrot.slane %v2469, %v2490
    %v2493 = vunpack.c.l.s4 1966171168
    %v2494 = vunpack.c.0.s8 %v2493
    %v2495 = vlaneseq
    %v2496 = vshrl.u32 %v2495, 7
    %v2497 = vsub.s32 %v2494, %v2496
    %v2498 = vrot.slane %v2470, %v2497
    %v2499 = vcombine.high %v2477, %v2477
    %v2500 = vcombine.high %v2484, %v2484
    %v2501 = vcombine.high %v2491, %v2491
    %v2502 = vcombine.high %v2498, %v2498
    %v2503 = vlaneseq
    %v2504 = vshrl.u32 %v2503, 7
    %v2505 = vsub.s32 0, %v2504
    %v2506 = vrot.slane %v2477, %v2505
    %v2507 = vlaneseq
    %v2508 = vshrl.u32 %v2507, 7
    %v2509 = vsub.s32 0, %v2508
    %v2510 = vrot.slane %v2491, %v2509
    %v2511 = vlaneseq
    %v2512 = vshrl.u32 %v2511, 7
    %v2513 = vsub.s32 0, %v2512
    %v2514 = vrot.slane %v2499, %v2513
    %v2515 = vlaneseq
    %v2516 = vshrl.u32 %v2515, 7
    %v2517 = vsub.s32 0, %v2516
    %v2518 = vrot.slane %v2501, %v2517
    %v2519 = vlaneseq
    %v2520 = vshrl.u32 %v2519, 7
    %v2521 = vsub.s32 0, %v2520
    %v2522 = vrot.slane %v2484, %v2521
    %v2523 = vlaneseq
    %v2524 = vshrl.u32 %v2523, 7
    %v2525 = vsub.s32 0, %v2524
    %v2526 = vrot.slane %v2498, %v2525
    %v2527 = vlaneseq
    %v2528 = vshrl.u32 %v2527, 7
    %v2529 = vsub.s32 0, %v2528
    %v2530 = vrot.slane %v2500, %v2529
    %v2531 = vlaneseq
    %v2532 = vshrl.u32 %v2531, 7
    %v2533 = vsub.s32 0, %v2532
    %v2534 = vrot.slane %v2502, %v2533
    %2535 = vrot.lane.b32.xlu0 %v2506, 32
    %v2536 = vpop.permute.xlu0 %2535
    %2537 = vrot.lane.b32.xlu0 %v2510, 32
    %v2538 = vpop.permute.xlu0 %2537
    %2539 = vrot.lane.b32.xlu0 %v2514, 32
    %v2540 = vpop.permute.xlu0 %2539
    %2541 = vrot.lane.b32.xlu0 %v2518, 32
    %v2542 = vpop.permute.xlu0 %2541
    %2543 = vrot.lane.b32.xlu0 %v2522, 32
    %v2544 = vpop.permute.xlu0 %2543
    %2545 = vrot.lane.b32.xlu0 %v2526, 32
    %v2546 = vpop.permute.xlu0 %2545
    %2547 = vrot.lane.b32.xlu0 %v2530, 32
    %v2548 = vpop.permute.xlu0 %2547
    %2549 = vrot.lane.b32.xlu0 %v2534, 32
    %v2550 = vpop.permute.xlu0 %2549
    %2559 = vst.msk [vmem:[#allocation3 + $0x6] sm:$0x1] %vm1426, %v2536
    %2560 = vst.msk [vmem:[#allocation3 + $0xe] sm:$0x1] %vm1426, %v2538
    %2561 = vst.msk [vmem:[#allocation3 + $0x16] sm:$0x1] %vm1426, %v2540
    %2562 = vst.msk [vmem:[#allocation3 + $0x1e] sm:$0x1] %vm1426, %v2542
    %2563 = vst.msk [vmem:[#allocation3 + $0x26] sm:$0x1] %vm1426, %v2544
    %2564 = vst.msk [vmem:[#allocation3 + $0x2e] sm:$0x1] %vm1426, %v2546
    %2565 = vst.msk [vmem:[#allocation3 + $0x36] sm:$0x1] %vm1426, %v2548
    %2566 = vst.msk [vmem:[#allocation3 + $0x3e] sm:$0x1] %vm1426, %v2550
    %s2567 = scalar_lea.vmem [#allocation2], 2
    %v2568 = vld [vmem:[%s2567] ss:$8 sm:$0x3]
    %s2569 = scalar_lea.vmem [#allocation2], 18
    %v2570 = vld [vmem:[%s2569] ss:$8 sm:$0x3]
    %s2571 = scalar_lea.vmem [#allocation2], 34
    %v2572 = vld [vmem:[%s2571] ss:$8 sm:$0x3]
    %s2573 = scalar_lea.vmem [#allocation2], 50
    %v2574 = vld [vmem:[%s2573] ss:$8 sm:$0x3]
    %s2575 = scalar_lea.vmem [#allocation2], 66
    %v2576 = vld [vmem:[%s2575] ss:$8 sm:$0x3]
    %s2577 = scalar_lea.vmem [#allocation2], 82
    %v2578 = vld [vmem:[%s2577] ss:$8 sm:$0x3]
    %s2579 = scalar_lea.vmem [#allocation2], 98
    %v2580 = vld [vmem:[%s2579] ss:$8 sm:$0x3]
    %s2581 = scalar_lea.vmem [#allocation2], 114
    %v2582 = vld [vmem:[%s2581] ss:$8 sm:$0x3]
    %v2583 = vsel %vm343, %v1871, 0
    %2585 = vmatprep.subr.mxu0 0.0
    %2586 = vmatpush1.msra.mxu0 %v312
    %2587 = vmatprep.subr.mxu0 0.0
    %2588 = vmatpush1.msra.mxu0 %v313
    %2589 = vmatprep.subr.mxu0 0.0
    %2590 = vmatpush1.msra.mxu0 %v314
    %2591 = vmatprep.subr.mxu0 0.0
    %2592 = vmatpush1.msra.mxu0 %v315
    %2593 = vmatprep.subr.mxu0 0.0
    %2594 = vmatpush1.msra.mxu0 0.0
    %2595 = vmatprep.subr.mxu0 0.0
    %2596 = vmatpush1.msra.mxu0 0.0
    %2597 = vmatprep.subr.mxu0 0.0
    %2598 = vmatpush1.msra.mxu0 0.0
    %2599 = vmatprep.subr.mxu0 0.0
    %2600 = vmatpush1.msra.mxu0 0.0
    %2601 = vmatprep.subr.mxu0 0.0
    %2602 = vmatpush1.msra.mxu0 0.0
    %2603 = vmatprep.subr.mxu0 0.0
    %2604 = vmatpush1.msra.mxu0 0.0
    %2605 = vmatprep.subr.mxu0 0.0
    %2606 = vmatpush1.msra.mxu0 0.0
    %2607 = vmatprep.subr.mxu0 0.0
    %2608 = vmatpush1.msra.mxu0 0.0
    %2609 = vmatprep.subr.mxu0 0.0
    %2610 = vmatpush1.msra.mxu0 0.0
    %2611 = vmatprep.subr.mxu0 0.0
    %2612 = vmatpush1.msra.mxu0 0.0
    %2613 = vmatprep.subr.mxu0 0.0
    %2614 = vmatpush1.msra.mxu0 0.0
    %2615 = vmatprep.subr.mxu0 0.0
    %2616 = vmatpush1.msra.mxu0 0.0
    %2617 = vmatprep.subr.mxu0 0.0
    %2618 = vmatpush1.msra.mxu0 0.0
    %2619 = vmatprep.subr.mxu0 0.0
    %2620 = vmatpush1.msra.mxu0 0.0
    %2621 = vmatprep.subr.mxu0 0.0
    %2622 = vmatpush1.msra.mxu0 0.0
    %2623 = vmatprep.subr.mxu0 0.0
    %2624 = vmatpush1.msra.mxu0 0.0
    %2625 = vmatprep.subr.mxu0 0.0
    %2626 = vmatpush1.msra.mxu0 0.0
    %2627 = vmatprep.subr.mxu0 0.0
    %2628 = vmatpush1.msra.mxu0 0.0
    %2629 = vmatprep.subr.mxu0 0.0
    %2630 = vmatpush1.msra.mxu0 0.0
    %2631 = vmatprep.subr.mxu0 0.0
    %2632 = vmatpush1.msra.mxu0 0.0
    %2633 = vmatprep.subr.mxu0 0.0
    %2634 = vmatpush1.msra.mxu0 0.0
    %2635 = vmatprep.subr.mxu0 0.0
    %2636 = vmatpush1.msra.mxu0 0.0
    %2637 = vmatprep.subr.mxu0 0.0
    %2638 = vmatpush1.msra.mxu0 0.0
    %2639 = vmatprep.subr.mxu0 0.0
    %2640 = vmatpush1.msra.mxu0 0.0
    %2641 = vmatprep.subr.mxu0 0.0
    %2642 = vmatpush1.msra.mxu0 0.0
    %2643 = vmatprep.subr.mxu0 0.0
    %2644 = vmatpush1.msra.mxu0 0.0
    %2645 = vmatprep.subr.mxu0 0.0
    %2646 = vmatpush1.msra.mxu0 0.0
    %2647 = vmatprep.subr.mxu0 0.0
    %2648 = vmatpush1.msra.mxu0 0.0
    %2649 = vmatprep.mubr.f32.mxu0 0.0
    %2650 = vmatmul.mubr.f32.gmra.mrb[0].mxu0 %v2583
    %v2651 = vpop.f32.mrb[0].mxu0
    %v2652 = vadd.f32 %v341, %v2651
    %v2653 = vpop.f32.mrb[0].mxu0
    %2654 = vdwg.mxu0
    %v2656 = vcombine.high %v2652, %v2652
    %v2658 = vunpack.c.l.s4 1966171168
    %v2659 = vunpack.c.0.s8 %v2658
    %v2660 = vlaneseq
    %v2661 = vshrl.u32 %v2660, 7
    %v2662 = vsub.s32 %v2659, %v2661
    %v2663 = vrot.slane %v2652, %v2662
    %v2665 = vunpack.c.l.s4 1966171168
    %v2666 = vunpack.c.0.s8 %v2665
    %v2667 = vlaneseq
    %v2668 = vshrl.u32 %v2667, 7
    %v2669 = vsub.s32 %v2666, %v2668
    %v2670 = vrot.slane %v2656, %v2669
    %v2671 = vcombine.high %v2663, %v2663
    %v2672 = vcombine.high %v2670, %v2670
    %v2674 = vunpack.c.l.s4 1966171168
    %v2675 = vunpack.c.0.s8 %v2674
    %v2676 = vlaneseq
    %v2677 = vshrl.u32 %v2676, 7
    %v2678 = vsub.s32 %v2675, %v2677
    %v2679 = vrot.slane %v2663, %v2678
    %v2681 = vunpack.c.l.s4 1966171168
    %v2682 = vunpack.c.0.s8 %v2681
    %v2683 = vlaneseq
    %v2684 = vshrl.u32 %v2683, 7
    %v2685 = vsub.s32 %v2682, %v2684
    %v2686 = vrot.slane %v2670, %v2685
    %v2688 = vunpack.c.l.s4 1966171168
    %v2689 = vunpack.c.0.s8 %v2688
    %v2690 = vlaneseq
    %v2691 = vshrl.u32 %v2690, 7
    %v2692 = vsub.s32 %v2689, %v2691
    %v2693 = vrot.slane %v2671, %v2692
    %v2695 = vunpack.c.l.s4 1966171168
    %v2696 = vunpack.c.0.s8 %v2695
    %v2697 = vlaneseq
    %v2698 = vshrl.u32 %v2697, 7
    %v2699 = vsub.s32 %v2696, %v2698
    %v2700 = vrot.slane %v2672, %v2699
    %v2701 = vcombine.high %v2679, %v2679
    %v2702 = vcombine.high %v2686, %v2686
    %v2703 = vcombine.high %v2693, %v2693
    %v2704 = vcombine.high %v2700, %v2700
    %v2713 = vadd.f32 %v2568, %v2679
    %v2714 = vadd.f32 %v2570, %v2693
    %v2715 = vadd.f32 %v2572, %v2701
    %v2716 = vadd.f32 %v2574, %v2703
    %v2717 = vadd.f32 %v2576, %v2686
    %v2718 = vadd.f32 %v2578, %v2700
    %v2719 = vadd.f32 %v2580, %v2702
    %v2720 = vadd.f32 %v2582, %v2704
    %v2721 = vxor.u32 %v2713, 2147483648
    %v2722 = vxor.u32 %v2714, 2147483648
    %v2723 = vxor.u32 %v2715, 2147483648
    %v2724 = vxor.u32 %v2716, 2147483648
    %v2725 = vxor.u32 %v2717, 2147483648
    %v2726 = vxor.u32 %v2718, 2147483648
    %v2727 = vxor.u32 %v2719, 2147483648
    %v2728 = vxor.u32 %v2720, 2147483648
    %v2729 = vmul.f32 %v2721, 1.442695
    %v2730 = vpow.pop %v2729
    %v2731 = vmul.f32 %v2722, 1.442695
    %v2732 = vpow.pop %v2731
    %v2733 = vmul.f32 %v2723, 1.442695
    %v2734 = vpow.pop %v2733
    %v2735 = vmul.f32 %v2724, 1.442695
    %v2736 = vpow.pop %v2735
    %v2737 = vmul.f32 %v2725, 1.442695
    %v2738 = vpow.pop %v2737
    %v2739 = vmul.f32 %v2726, 1.442695
    %v2740 = vpow.pop %v2739
    %v2741 = vmul.f32 %v2727, 1.442695
    %v2742 = vpow.pop %v2741
    %v2743 = vmul.f32 %v2728, 1.442695
    %v2744 = vpow.pop %v2743
    %v2745 = vadd.f32 %v2730, 1.0
    %v2746 = vadd.f32 %v2732, 1.0
    %v2747 = vadd.f32 %v2734, 1.0
    %v2748 = vadd.f32 %v2736, 1.0
    %v2749 = vadd.f32 %v2738, 1.0
    %v2750 = vadd.f32 %v2740, 1.0
    %v2751 = vadd.f32 %v2742, 1.0
    %v2752 = vadd.f32 %v2744, 1.0
    %v2753 = vrcp.pop %v2745
    %v2754 = vmul.f32 1.0, %v2753
    %v2755 = vrcp.pop %v2746
    %v2756 = vmul.f32 1.0, %v2755
    %v2757 = vrcp.pop %v2747
    %v2758 = vmul.f32 1.0, %v2757
    %v2759 = vrcp.pop %v2748
    %v2760 = vmul.f32 1.0, %v2759
    %v2761 = vrcp.pop %v2749
    %v2762 = vmul.f32 1.0, %v2761
    %v2763 = vrcp.pop %v2750
    %v2764 = vmul.f32 1.0, %v2763
    %v2765 = vrcp.pop %v2751
    %v2766 = vmul.f32 1.0, %v2765
    %v2767 = vrcp.pop %v2752
    %v2768 = vmul.f32 1.0, %v2767
    %2769 = vrot.lane.b32.xlu0 %v2679, 64
    %v2770 = vpop.permute.xlu0 %2769
    %2771 = vrot.lane.b32.xlu0 %v2693, 64
    %v2772 = vpop.permute.xlu0 %2771
    %2773 = vrot.lane.b32.xlu0 %v2701, 64
    %v2774 = vpop.permute.xlu0 %2773
    %2775 = vrot.lane.b32.xlu0 %v2703, 64
    %v2776 = vpop.permute.xlu0 %2775
    %2777 = vrot.lane.b32.xlu0 %v2686, 64
    %v2778 = vpop.permute.xlu0 %2777
    %2779 = vrot.lane.b32.xlu0 %v2700, 64
    %v2780 = vpop.permute.xlu0 %2779
    %2781 = vrot.lane.b32.xlu0 %v2702, 64
    %v2782 = vpop.permute.xlu0 %2781
    %2783 = vrot.lane.b32.xlu0 %v2704, 64
    %v2784 = vpop.permute.xlu0 %2783
    %v2793 = vmul.f32 %v2754, %v2770
    %v2794 = vmul.f32 %v2756, %v2772
    %v2795 = vmul.f32 %v2758, %v2774
    %v2796 = vmul.f32 %v2760, %v2776
    %v2797 = vmul.f32 %v2762, %v2778
    %v2798 = vmul.f32 %v2764, %v2780
    %v2799 = vmul.f32 %v2766, %v2782
    %v2800 = vmul.f32 %v2768, %v2784
    %2809 = vrot.lane.b32.xlu0 %v2793, 64
    %v2810 = vpop.permute.xlu0 %2809
    %2811 = vrot.lane.b32.xlu0 %v2794, 64
    %v2812 = vpop.permute.xlu0 %2811
    %2813 = vrot.lane.b32.xlu0 %v2795, 64
    %v2814 = vpop.permute.xlu0 %2813
    %2815 = vrot.lane.b32.xlu0 %v2796, 64
    %v2816 = vpop.permute.xlu0 %2815
    %2817 = vrot.lane.b32.xlu0 %v2797, 64
    %v2818 = vpop.permute.xlu0 %2817
    %2819 = vrot.lane.b32.xlu0 %v2798, 64
    %v2820 = vpop.permute.xlu0 %2819
    %2821 = vrot.lane.b32.xlu0 %v2799, 64
    %v2822 = vpop.permute.xlu0 %2821
    %2823 = vrot.lane.b32.xlu0 %v2800, 64
    %v2824 = vpop.permute.xlu0 %2823
    %v2833 = vadd.f32 %v2568, %v2810
    %v2834 = vadd.f32 %v2570, %v2812
    %v2835 = vadd.f32 %v2572, %v2814
    %v2836 = vadd.f32 %v2574, %v2816
    %v2837 = vadd.f32 %v2576, %v2818
    %v2838 = vadd.f32 %v2578, %v2820
    %v2839 = vadd.f32 %v2580, %v2822
    %v2840 = vadd.f32 %v2582, %v2824
    %v2841 = vtanh.pop %v2833
    %v2842 = vtanh.pop %v2834
    %v2843 = vtanh.pop %v2835
    %v2844 = vtanh.pop %v2836
    %v2845 = vtanh.pop %v2837
    %v2846 = vtanh.pop %v2838
    %v2847 = vtanh.pop %v2839
    %v2848 = vtanh.pop %v2840
    %v2849 = vsub.f32 1.0, %v2754
    %v2850 = vsub.f32 1.0, %v2756
    %v2851 = vsub.f32 1.0, %v2758
    %v2852 = vsub.f32 1.0, %v2760
    %v2853 = vsub.f32 1.0, %v2762
    %v2854 = vsub.f32 1.0, %v2764
    %v2855 = vsub.f32 1.0, %v2766
    %v2856 = vsub.f32 1.0, %v2768
    %2865 = vrot.lane.b32.xlu0 %v2841, 96
    %v2866 = vpop.permute.xlu0 %2865
    %2867 = vrot.lane.b32.xlu0 %v2842, 96
    %v2868 = vpop.permute.xlu0 %2867
    %2869 = vrot.lane.b32.xlu0 %v2843, 96
    %v2870 = vpop.permute.xlu0 %2869
    %2871 = vrot.lane.b32.xlu0 %v2844, 96
    %v2872 = vpop.permute.xlu0 %2871
    %2873 = vrot.lane.b32.xlu0 %v2845, 96
    %v2874 = vpop.permute.xlu0 %2873
    %2875 = vrot.lane.b32.xlu0 %v2846, 96
    %v2876 = vpop.permute.xlu0 %2875
    %2877 = vrot.lane.b32.xlu0 %v2847, 96
    %v2878 = vpop.permute.xlu0 %2877
    %2879 = vrot.lane.b32.xlu0 %v2848, 96
    %v2880 = vpop.permute.xlu0 %2879
    %v2889 = vmul.f32 %v2849, %v2866
    %v2890 = vmul.f32 %v2850, %v2868
    %v2891 = vmul.f32 %v2851, %v2870
    %v2892 = vmul.f32 %v2852, %v2872
    %v2893 = vmul.f32 %v2853, %v2874
    %v2894 = vmul.f32 %v2854, %v2876
    %v2895 = vmul.f32 %v2855, %v2878
    %v2896 = vmul.f32 %v2856, %v2880
    %2897 = vrot.lane.b32.xlu0 %v1896, 32
    %v2898 = vpop.permute.xlu0 %2897
    %2899 = vrot.lane.b32.xlu0 %v1910, 32
    %v2900 = vpop.permute.xlu0 %2899
    %2901 = vrot.lane.b32.xlu0 %v1918, 32
    %v2902 = vpop.permute.xlu0 %2901
    %2903 = vrot.lane.b32.xlu0 %v1920, 32
    %v2904 = vpop.permute.xlu0 %2903
    %2905 = vrot.lane.b32.xlu0 %v1903, 32
    %v2906 = vpop.permute.xlu0 %2905
    %2907 = vrot.lane.b32.xlu0 %v1917, 32
    %v2908 = vpop.permute.xlu0 %2907
    %2909 = vrot.lane.b32.xlu0 %v1919, 32
    %v2910 = vpop.permute.xlu0 %2909
    %2911 = vrot.lane.b32.xlu0 %v1921, 32
    %v2912 = vpop.permute.xlu0 %2911
    %v2921 = vmul.f32 %v2754, %v2898
    %v2922 = vmul.f32 %v2756, %v2900
    %v2923 = vmul.f32 %v2758, %v2902
    %v2924 = vmul.f32 %v2760, %v2904
    %v2925 = vmul.f32 %v2762, %v2906
    %v2926 = vmul.f32 %v2764, %v2908
    %v2927 = vmul.f32 %v2766, %v2910
    %v2928 = vmul.f32 %v2768, %v2912
    %v2929 = vadd.f32 %v2889, %v2921
    %v2930 = vadd.f32 %v2890, %v2922
    %v2931 = vadd.f32 %v2891, %v2923
    %v2932 = vadd.f32 %v2892, %v2924
    %v2933 = vadd.f32 %v2893, %v2925
    %v2934 = vadd.f32 %v2894, %v2926
    %v2935 = vadd.f32 %v2895, %v2927
    %v2936 = vadd.f32 %v2896, %v2928
    %vm2937 = vcmp.gt.s32.totalorder %v132, 2
    %v2938 = vsel %vm2937, 1, 0
    %2939 = vset.pattern.permute.xlu0 0
    %2940 = vperm.xlu0 %2939, %v2938
    %v2941 = vpop.permute.xlu0 %2940
    %vm2942 = vcmp.eq.s32.totalorder %v2941, 1
    %v2951 = vcombine.low %v2929, %v2930
    %v2952 = vcombine.low %v2931, %v2932
    %v2953 = vcombine.low %v2933, %v2934
    %v2954 = vcombine.low %v2935, %v2936
    %v2956 = vunpack.c.l.s4 1966171168
    %v2957 = vunpack.c.0.s8 %v2956
    %v2958 = vlaneseq
    %v2959 = vshrl.u32 %v2958, 7
    %v2960 = vsub.s32 %v2957, %v2959
    %v2961 = vrot.slane %v2951, %v2960
    %v2963 = vunpack.c.l.s4 1966171168
    %v2964 = vunpack.c.0.s8 %v2963
    %v2965 = vlaneseq
    %v2966 = vshrl.u32 %v2965, 7
    %v2967 = vsub.s32 %v2964, %v2966
    %v2968 = vrot.slane %v2952, %v2967
    %v2970 = vunpack.c.l.s4 1966171168
    %v2971 = vunpack.c.0.s8 %v2970
    %v2972 = vlaneseq
    %v2973 = vshrl.u32 %v2972, 7
    %v2974 = vsub.s32 %v2971, %v2973
    %v2975 = vrot.slane %v2953, %v2974
    %v2977 = vunpack.c.l.s4 1966171168
    %v2978 = vunpack.c.0.s8 %v2977
    %v2979 = vlaneseq
    %v2980 = vshrl.u32 %v2979, 7
    %v2981 = vsub.s32 %v2978, %v2980
    %v2982 = vrot.slane %v2954, %v2981
    %v2983 = vcombine.low %v2961, %v2968
    %v2984 = vcombine.low %v2975, %v2982
    %v2986 = vunpack.c.l.s4 1966171168
    %v2987 = vunpack.c.0.s8 %v2986
    %v2988 = vlaneseq
    %v2989 = vshrl.u32 %v2988, 7
    %v2990 = vsub.s32 %v2987, %v2989
    %v2991 = vrot.slane %v2983, %v2990
    %v2993 = vunpack.c.l.s4 1966171168
    %v2994 = vunpack.c.0.s8 %v2993
    %v2995 = vlaneseq
    %v2996 = vshrl.u32 %v2995, 7
    %v2997 = vsub.s32 %v2994, %v2996
    %v2998 = vrot.slane %v2984, %v2997
    %v2999 = vcombine.low %v2991, %v2998
    %3000 = vrot.lane.b32.xlu0 %v2999, 96
    %v3001 = vpop.permute.xlu0 %3000
    %v3003 = vsel %vm2942, %v3001, %v1871
    %v3005 = vcombine.high %v3003, %v3003
    %v3007 = vunpack.c.l.s4 1966171168
    %v3008 = vunpack.c.0.s8 %v3007
    %v3009 = vlaneseq
    %v3010 = vshrl.u32 %v3009, 7
    %v3011 = vsub.s32 %v3008, %v3010
    %v3012 = vrot.slane %v3003, %v3011
    %v3014 = vunpack.c.l.s4 1966171168
    %v3015 = vunpack.c.0.s8 %v3014
    %v3016 = vlaneseq
    %v3017 = vshrl.u32 %v3016, 7
    %v3018 = vsub.s32 %v3015, %v3017
    %v3019 = vrot.slane %v3005, %v3018
    %v3020 = vcombine.high %v3012, %v3012
    %v3021 = vcombine.high %v3019, %v3019
    %v3023 = vunpack.c.l.s4 1966171168
    %v3024 = vunpack.c.0.s8 %v3023
    %v3025 = vlaneseq
    %v3026 = vshrl.u32 %v3025, 7
    %v3027 = vsub.s32 %v3024, %v3026
    %v3028 = vrot.slane %v3012, %v3027
    %v3030 = vunpack.c.l.s4 1966171168
    %v3031 = vunpack.c.0.s8 %v3030
    %v3032 = vlaneseq
    %v3033 = vshrl.u32 %v3032, 7
    %v3034 = vsub.s32 %v3031, %v3033
    %v3035 = vrot.slane %v3019, %v3034
    %v3037 = vunpack.c.l.s4 1966171168
    %v3038 = vunpack.c.0.s8 %v3037
    %v3039 = vlaneseq
    %v3040 = vshrl.u32 %v3039, 7
    %v3041 = vsub.s32 %v3038, %v3040
    %v3042 = vrot.slane %v3020, %v3041
    %v3044 = vunpack.c.l.s4 1966171168
    %v3045 = vunpack.c.0.s8 %v3044
    %v3046 = vlaneseq
    %v3047 = vshrl.u32 %v3046, 7
    %v3048 = vsub.s32 %v3045, %v3047
    %v3049 = vrot.slane %v3021, %v3048
    %v3050 = vcombine.high %v3028, %v3028
    %v3051 = vcombine.high %v3035, %v3035
    %v3052 = vcombine.high %v3042, %v3042
    %v3053 = vcombine.high %v3049, %v3049
    %3062 = vst.msk [vmem:[#allocation3 + $0x2] sm:$0x1] %vm800, %v3028
    %3063 = vst.msk [vmem:[#allocation3 + $0xa] sm:$0x1] %vm800, %v3042
    %3064 = vst.msk [vmem:[#allocation3 + $0x12] sm:$0x1] %vm800, %v3050
    %3065 = vst.msk [vmem:[#allocation3 + $0x1a] sm:$0x1] %vm800, %v3052
    %3066 = vst.msk [vmem:[#allocation3 + $0x22] sm:$0x1] %vm800, %v3035
    %3067 = vst.msk [vmem:[#allocation3 + $0x2a] sm:$0x1] %vm800, %v3049
    %3068 = vst.msk [vmem:[#allocation3 + $0x32] sm:$0x1] %vm800, %v3051
    %3069 = vst.msk [vmem:[#allocation3 + $0x3a] sm:$0x1] %vm800, %v3053
    %s3070 = scalar_lea.vmem [#allocation2], 5
    %v3071 = vld [vmem:[%s3070] ss:$8 sm:$0x3]
    %s3072 = scalar_lea.vmem [#allocation2], 21
    %v3073 = vld [vmem:[%s3072] ss:$8 sm:$0x3]
    %s3074 = scalar_lea.vmem [#allocation2], 37
    %v3075 = vld [vmem:[%s3074] ss:$8 sm:$0x3]
    %s3076 = scalar_lea.vmem [#allocation2], 53
    %v3077 = vld [vmem:[%s3076] ss:$8 sm:$0x3]
    %s3078 = scalar_lea.vmem [#allocation2], 69
    %v3079 = vld [vmem:[%s3078] ss:$8 sm:$0x3]
    %s3080 = scalar_lea.vmem [#allocation2], 85
    %v3081 = vld [vmem:[%s3080] ss:$8 sm:$0x3]
    %s3082 = scalar_lea.vmem [#allocation2], 101
    %v3083 = vld [vmem:[%s3082] ss:$8 sm:$0x3]
    %s3084 = scalar_lea.vmem [#allocation2], 117
    %v3085 = vld [vmem:[%s3084] ss:$8 sm:$0x3]
    %v3086 = vsel %vm343, %v2452, 0
    %3088 = vmatprep.subr.mxu0 0.0
    %3089 = vmatpush1.msra.mxu0 %v317
    %3090 = vmatprep.subr.mxu0 0.0
    %3091 = vmatpush1.msra.mxu0 %v318
    %3092 = vmatprep.subr.mxu0 0.0
    %3093 = vmatpush1.msra.mxu0 %v319
    %3094 = vmatprep.subr.mxu0 0.0
    %3095 = vmatpush1.msra.mxu0 %v320
    %3096 = vmatprep.subr.mxu0 0.0
    %3097 = vmatpush1.msra.mxu0 0.0
    %3098 = vmatprep.subr.mxu0 0.0
    %3099 = vmatpush1.msra.mxu0 0.0
    %3100 = vmatprep.subr.mxu0 0.0
    %3101 = vmatpush1.msra.mxu0 0.0
    %3102 = vmatprep.subr.mxu0 0.0
    %3103 = vmatpush1.msra.mxu0 0.0
    %3104 = vmatprep.subr.mxu0 0.0
    %3105 = vmatpush1.msra.mxu0 0.0
    %3106 = vmatprep.subr.mxu0 0.0
    %3107 = vmatpush1.msra.mxu0 0.0
    %3108 = vmatprep.subr.mxu0 0.0
    %3109 = vmatpush1.msra.mxu0 0.0
    %3110 = vmatprep.subr.mxu0 0.0
    %3111 = vmatpush1.msra.mxu0 0.0
    %3112 = vmatprep.subr.mxu0 0.0
    %3113 = vmatpush1.msra.mxu0 0.0
    %3114 = vmatprep.subr.mxu0 0.0
    %3115 = vmatpush1.msra.mxu0 0.0
    %3116 = vmatprep.subr.mxu0 0.0
    %3117 = vmatpush1.msra.mxu0 0.0
    %3118 = vmatprep.subr.mxu0 0.0
    %3119 = vmatpush1.msra.mxu0 0.0
    %3120 = vmatprep.subr.mxu0 0.0
    %3121 = vmatpush1.msra.mxu0 0.0
    %3122 = vmatprep.subr.mxu0 0.0
    %3123 = vmatpush1.msra.mxu0 0.0
    %3124 = vmatprep.subr.mxu0 0.0
    %3125 = vmatpush1.msra.mxu0 0.0
    %3126 = vmatprep.subr.mxu0 0.0
    %3127 = vmatpush1.msra.mxu0 0.0
    %3128 = vmatprep.subr.mxu0 0.0
    %3129 = vmatpush1.msra.mxu0 0.0
    %3130 = vmatprep.subr.mxu0 0.0
    %3131 = vmatpush1.msra.mxu0 0.0
    %3132 = vmatprep.subr.mxu0 0.0
    %3133 = vmatpush1.msra.mxu0 0.0
    %3134 = vmatprep.subr.mxu0 0.0
    %3135 = vmatpush1.msra.mxu0 0.0
    %3136 = vmatprep.subr.mxu0 0.0
    %3137 = vmatpush1.msra.mxu0 0.0
    %3138 = vmatprep.subr.mxu0 0.0
    %3139 = vmatpush1.msra.mxu0 0.0
    %3140 = vmatprep.subr.mxu0 0.0
    %3141 = vmatpush1.msra.mxu0 0.0
    %3142 = vmatprep.subr.mxu0 0.0
    %3143 = vmatpush1.msra.mxu0 0.0
    %3144 = vmatprep.subr.mxu0 0.0
    %3145 = vmatpush1.msra.mxu0 0.0
    %3146 = vmatprep.subr.mxu0 0.0
    %3147 = vmatpush1.msra.mxu0 0.0
    %3148 = vmatprep.subr.mxu0 0.0
    %3149 = vmatpush1.msra.mxu0 0.0
    %3150 = vmatprep.subr.mxu0 0.0
    %3151 = vmatpush1.msra.mxu0 0.0
    %3152 = vmatprep.mubr.f32.mxu0 0.0
    %3153 = vmatmul.mubr.f32.gmra.mrb[0].mxu0 %v3086
    %v3154 = vpop.f32.mrb[0].mxu0
    %v3155 = vadd.f32 %v829, %v3154
    %v3156 = vpop.f32.mrb[0].mxu0
    %3157 = vdwg.mxu0
    %v3159 = vcombine.high %v3155, %v3155
    %v3161 = vunpack.c.l.s4 1966171168
    %v3162 = vunpack.c.0.s8 %v3161
    %v3163 = vlaneseq
    %v3164 = vshrl.u32 %v3163, 7
    %v3165 = vsub.s32 %v3162, %v3164
    %v3166 = vrot.slane %v3155, %v3165
    %v3168 = vunpack.c.l.s4 1966171168
    %v3169 = vunpack.c.0.s8 %v3168
    %v3170 = vlaneseq
    %v3171 = vshrl.u32 %v3170, 7
    %v3172 = vsub.s32 %v3169, %v3171
    %v3173 = vrot.slane %v3159, %v3172
    %v3174 = vcombine.high %v3166, %v3166
    %v3175 = vcombine.high %v3173, %v3173
    %v3177 = vunpack.c.l.s4 1966171168
    %v3178 = vunpack.c.0.s8 %v3177
    %v3179 = vlaneseq
    %v3180 = vshrl.u32 %v3179, 7
    %v3181 = vsub.s32 %v3178, %v3180
    %v3182 = vrot.slane %v3166, %v3181
    %v3184 = vunpack.c.l.s4 1966171168
    %v3185 = vunpack.c.0.s8 %v3184
    %v3186 = vlaneseq
    %v3187 = vshrl.u32 %v3186, 7
    %v3188 = vsub.s32 %v3185, %v3187
    %v3189 = vrot.slane %v3173, %v3188
    %v3191 = vunpack.c.l.s4 1966171168
    %v3192 = vunpack.c.0.s8 %v3191
    %v3193 = vlaneseq
    %v3194 = vshrl.u32 %v3193, 7
    %v3195 = vsub.s32 %v3192, %v3194
    %v3196 = vrot.slane %v3174, %v3195
    %v3198 = vunpack.c.l.s4 1966171168
    %v3199 = vunpack.c.0.s8 %v3198
    %v3200 = vlaneseq
    %v3201 = vshrl.u32 %v3200, 7
    %v3202 = vsub.s32 %v3199, %v3201
    %v3203 = vrot.slane %v3175, %v3202
    %v3204 = vcombine.high %v3182, %v3182
    %v3205 = vcombine.high %v3189, %v3189
    %v3206 = vcombine.high %v3196, %v3196
    %v3207 = vcombine.high %v3203, %v3203
    %3208 = vrot.lane.b32.xlu0 %v3182, 96
    %v3209 = vpop.permute.xlu0 %3208
    %3210 = vrot.lane.b32.xlu0 %v3196, 96
    %v3211 = vpop.permute.xlu0 %3210
    %3212 = vrot.lane.b32.xlu0 %v3204, 96
    %v3213 = vpop.permute.xlu0 %3212
    %3214 = vrot.lane.b32.xlu0 %v3206, 96
    %v3215 = vpop.permute.xlu0 %3214
    %3216 = vrot.lane.b32.xlu0 %v3189, 96
    %v3217 = vpop.permute.xlu0 %3216
    %3218 = vrot.lane.b32.xlu0 %v3203, 96
    %v3219 = vpop.permute.xlu0 %3218
    %3220 = vrot.lane.b32.xlu0 %v3205, 96
    %v3221 = vpop.permute.xlu0 %3220
    %3222 = vrot.lane.b32.xlu0 %v3207, 96
    %v3223 = vpop.permute.xlu0 %3222
    %v3232 = vadd.f32 %v3071, %v3209
    %v3233 = vadd.f32 %v3073, %v3211
    %v3234 = vadd.f32 %v3075, %v3213
    %v3235 = vadd.f32 %v3077, %v3215
    %v3236 = vadd.f32 %v3079, %v3217
    %v3237 = vadd.f32 %v3081, %v3219
    %v3238 = vadd.f32 %v3083, %v3221
    %v3239 = vadd.f32 %v3085, %v3223
    %v3240 = vxor.u32 %v3232, 2147483648
    %v3241 = vxor.u32 %v3233, 2147483648
    %v3242 = vxor.u32 %v3234, 2147483648
    %v3243 = vxor.u32 %v3235, 2147483648
    %v3244 = vxor.u32 %v3236, 2147483648
    %v3245 = vxor.u32 %v3237, 2147483648
    %v3246 = vxor.u32 %v3238, 2147483648
    %v3247 = vxor.u32 %v3239, 2147483648
    %v3248 = vmul.f32 %v3240, 1.442695
    %v3249 = vpow.pop %v3248
    %v3250 = vmul.f32 %v3241, 1.442695
    %v3251 = vpow.pop %v3250
    %v3252 = vmul.f32 %v3242, 1.442695
    %v3253 = vpow.pop %v3252
    %v3254 = vmul.f32 %v3243, 1.442695
    %v3255 = vpow.pop %v3254
    %v3256 = vmul.f32 %v3244, 1.442695
    %v3257 = vpow.pop %v3256
    %v3258 = vmul.f32 %v3245, 1.442695
    %v3259 = vpow.pop %v3258
    %v3260 = vmul.f32 %v3246, 1.442695
    %v3261 = vpow.pop %v3260
    %v3262 = vmul.f32 %v3247, 1.442695
    %v3263 = vpow.pop %v3262
    %v3264 = vadd.f32 %v3249, 1.0
    %v3265 = vadd.f32 %v3251, 1.0
    %v3266 = vadd.f32 %v3253, 1.0
    %v3267 = vadd.f32 %v3255, 1.0
    %v3268 = vadd.f32 %v3257, 1.0
    %v3269 = vadd.f32 %v3259, 1.0
    %v3270 = vadd.f32 %v3261, 1.0
    %v3271 = vadd.f32 %v3263, 1.0
    %v3272 = vrcp.pop %v3264
    %v3273 = vmul.f32 1.0, %v3272
    %v3274 = vrcp.pop %v3265
    %v3275 = vmul.f32 1.0, %v3274
    %v3276 = vrcp.pop %v3266
    %v3277 = vmul.f32 1.0, %v3276
    %v3278 = vrcp.pop %v3267
    %v3279 = vmul.f32 1.0, %v3278
    %v3280 = vrcp.pop %v3268
    %v3281 = vmul.f32 1.0, %v3280
    %v3282 = vrcp.pop %v3269
    %v3283 = vmul.f32 1.0, %v3282
    %v3284 = vrcp.pop %v3270
    %v3285 = vmul.f32 1.0, %v3284
    %v3286 = vrcp.pop %v3271
    %v3287 = vmul.f32 1.0, %v3286
    %v3296 = vrot.slane %v3071, 1
    %v3297 = vrot.slane %v3073, 1
    %v3298 = vrot.slane %v3075, 1
    %v3299 = vrot.slane %v3077, 1
    %v3300 = vrot.slane %v3079, 1
    %v3301 = vrot.slane %v3081, 1
    %v3302 = vrot.slane %v3083, 1
    %v3303 = vrot.slane %v3085, 1
    %v3312 = vadd.f32 %v3296, %v3209
    %v3313 = vadd.f32 %v3297, %v3211
    %v3314 = vadd.f32 %v3298, %v3213
    %v3315 = vadd.f32 %v3299, %v3215
    %v3316 = vadd.f32 %v3300, %v3217
    %v3317 = vadd.f32 %v3301, %v3219
    %v3318 = vadd.f32 %v3302, %v3221
    %v3319 = vadd.f32 %v3303, %v3223
    %v3320 = vxor.u32 %v3312, 2147483648
    %v3321 = vxor.u32 %v3313, 2147483648
    %v3322 = vxor.u32 %v3314, 2147483648
    %v3323 = vxor.u32 %v3315, 2147483648
    %v3324 = vxor.u32 %v3316, 2147483648
    %v3325 = vxor.u32 %v3317, 2147483648
    %v3326 = vxor.u32 %v3318, 2147483648
    %v3327 = vxor.u32 %v3319, 2147483648
    %v3328 = vmul.f32 %v3320, 1.442695
    %v3329 = vpow.pop %v3328
    %v3330 = vmul.f32 %v3321, 1.442695
    %v3331 = vpow.pop %v3330
    %v3332 = vmul.f32 %v3322, 1.442695
    %v3333 = vpow.pop %v3332
    %v3334 = vmul.f32 %v3323, 1.442695
    %v3335 = vpow.pop %v3334
    %v3336 = vmul.f32 %v3324, 1.442695
    %v3337 = vpow.pop %v3336
    %v3338 = vmul.f32 %v3325, 1.442695
    %v3339 = vpow.pop %v3338
    %v3340 = vmul.f32 %v3326, 1.442695
    %v3341 = vpow.pop %v3340
    %v3342 = vmul.f32 %v3327, 1.442695
    %v3343 = vpow.pop %v3342
    %v3344 = vadd.f32 %v3329, 1.0
    %v3345 = vadd.f32 %v3331, 1.0
    %v3346 = vadd.f32 %v3333, 1.0
    %v3347 = vadd.f32 %v3335, 1.0
    %v3348 = vadd.f32 %v3337, 1.0
    %v3349 = vadd.f32 %v3339, 1.0
    %v3350 = vadd.f32 %v3341, 1.0
    %v3351 = vadd.f32 %v3343, 1.0
    %v3352 = vrcp.pop %v3344
    %v3353 = vmul.f32 1.0, %v3352
    %v3354 = vrcp.pop %v3345
    %v3355 = vmul.f32 1.0, %v3354
    %v3356 = vrcp.pop %v3346
    %v3357 = vmul.f32 1.0, %v3356
    %v3358 = vrcp.pop %v3347
    %v3359 = vmul.f32 1.0, %v3358
    %v3360 = vrcp.pop %v3348
    %v3361 = vmul.f32 1.0, %v3360
    %v3362 = vrcp.pop %v3349
    %v3363 = vmul.f32 1.0, %v3362
    %v3364 = vrcp.pop %v3350
    %v3365 = vmul.f32 1.0, %v3364
    %v3366 = vrcp.pop %v3351
    %v3367 = vmul.f32 1.0, %v3366
    %3368 = vrot.lane.b32.xlu0 %v3182, 32
    %v3369 = vpop.permute.xlu0 %3368
    %3370 = vrot.lane.b32.xlu0 %v3196, 32
    %v3371 = vpop.permute.xlu0 %3370
    %3372 = vrot.lane.b32.xlu0 %v3204, 32
    %v3373 = vpop.permute.xlu0 %3372
    %3374 = vrot.lane.b32.xlu0 %v3206, 32
    %v3375 = vpop.permute.xlu0 %3374
    %3376 = vrot.lane.b32.xlu0 %v3189, 32
    %v3377 = vpop.permute.xlu0 %3376
    %3378 = vrot.lane.b32.xlu0 %v3203, 32
    %v3379 = vpop.permute.xlu0 %3378
    %3380 = vrot.lane.b32.xlu0 %v3205, 32
    %v3381 = vpop.permute.xlu0 %3380
    %3382 = vrot.lane.b32.xlu0 %v3207, 32
    %v3383 = vpop.permute.xlu0 %3382
    %v3392 = vmul.f32 %v3273, %v3369
    %v3393 = vmul.f32 %v3275, %v3371
    %v3394 = vmul.f32 %v3277, %v3373
    %v3395 = vmul.f32 %v3279, %v3375
    %v3396 = vmul.f32 %v3281, %v3377
    %v3397 = vmul.f32 %v3283, %v3379
    %v3398 = vmul.f32 %v3285, %v3381
    %v3399 = vmul.f32 %v3287, %v3383
    %3400 = vrot.lane.b32.xlu0 %v3071, 96
    %v3401 = vpop.permute.xlu0 %3400
    %3402 = vrot.lane.b32.xlu0 %v3073, 96
    %v3403 = vpop.permute.xlu0 %3402
    %3404 = vrot.lane.b32.xlu0 %v3075, 96
    %v3405 = vpop.permute.xlu0 %3404
    %3406 = vrot.lane.b32.xlu0 %v3077, 96
    %v3407 = vpop.permute.xlu0 %3406
    %3408 = vrot.lane.b32.xlu0 %v3079, 96
    %v3409 = vpop.permute.xlu0 %3408
    %3410 = vrot.lane.b32.xlu0 %v3081, 96
    %v3411 = vpop.permute.xlu0 %3410
    %3412 = vrot.lane.b32.xlu0 %v3083, 96
    %v3413 = vpop.permute.xlu0 %3412
    %3414 = vrot.lane.b32.xlu0 %v3085, 96
    %v3415 = vpop.permute.xlu0 %3414
    %v3416 = vrot.slane %v3401, 1
    %v3417 = vrot.slane %v3403, 1
    %v3418 = vrot.slane %v3405, 1
    %v3419 = vrot.slane %v3407, 1
    %v3420 = vrot.slane %v3409, 1
    %v3421 = vrot.slane %v3411, 1
    %v3422 = vrot.slane %v3413, 1
    %v3423 = vrot.slane %v3415, 1
    %3440 = vrot.lane.b32.xlu0 %v3392, 32
    %v3441 = vpop.permute.xlu0 %3440
    %3442 = vrot.lane.b32.xlu0 %v3393, 32
    %v3443 = vpop.permute.xlu0 %3442
    %3444 = vrot.lane.b32.xlu0 %v3394, 32
    %v3445 = vpop.permute.xlu0 %3444
    %3446 = vrot.lane.b32.xlu0 %v3395, 32
    %v3447 = vpop.permute.xlu0 %3446
    %3448 = vrot.lane.b32.xlu0 %v3396, 32
    %v3449 = vpop.permute.xlu0 %3448
    %3450 = vrot.lane.b32.xlu0 %v3397, 32
    %v3451 = vpop.permute.xlu0 %3450
    %3452 = vrot.lane.b32.xlu0 %v3398, 32
    %v3453 = vpop.permute.xlu0 %3452
    %3454 = vrot.lane.b32.xlu0 %v3399, 32
    %v3455 = vpop.permute.xlu0 %3454
    %v3464 = vadd.f32 %v3416, %v3441
    %v3465 = vadd.f32 %v3417, %v3443
    %v3466 = vadd.f32 %v3418, %v3445
    %v3467 = vadd.f32 %v3419, %v3447
    %v3468 = vadd.f32 %v3420, %v3449
    %v3469 = vadd.f32 %v3421, %v3451
    %v3470 = vadd.f32 %v3422, %v3453
    %v3471 = vadd.f32 %v3423, %v3455
    %v3472 = vtanh.pop %v3464
    %v3473 = vtanh.pop %v3465
    %v3474 = vtanh.pop %v3466
    %v3475 = vtanh.pop %v3467
    %v3476 = vtanh.pop %v3468
    %v3477 = vtanh.pop %v3469
    %v3478 = vtanh.pop %v3470
    %v3479 = vtanh.pop %v3471
    %v3480 = vsub.f32 1.0, %v3353
    %v3481 = vsub.f32 1.0, %v3355
    %v3482 = vsub.f32 1.0, %v3357
    %v3483 = vsub.f32 1.0, %v3359
    %v3484 = vsub.f32 1.0, %v3361
    %v3485 = vsub.f32 1.0, %v3363
    %v3486 = vsub.f32 1.0, %v3365
    %v3487 = vsub.f32 1.0, %v3367
    %v3488 = vmul.f32 %v3480, %v3472
    %v3489 = vmul.f32 %v3481, %v3473
    %v3490 = vmul.f32 %v3482, %v3474
    %v3491 = vmul.f32 %v3483, %v3475
    %v3492 = vmul.f32 %v3484, %v3476
    %v3493 = vmul.f32 %v3485, %v3477
    %v3494 = vmul.f32 %v3486, %v3478
    %v3495 = vmul.f32 %v3487, %v3479
    %v3504 = vmul.f32 %v3353, %v2477
    %v3505 = vmul.f32 %v3355, %v2491
    %v3506 = vmul.f32 %v3357, %v2499
    %v3507 = vmul.f32 %v3359, %v2501
    %v3508 = vmul.f32 %v3361, %v2484
    %v3509 = vmul.f32 %v3363, %v2498
    %v3510 = vmul.f32 %v3365, %v2500
    %v3511 = vmul.f32 %v3367, %v2502
    %v3512 = vadd.f32 %v3488, %v3504
    %v3513 = vadd.f32 %v3489, %v3505
    %v3514 = vadd.f32 %v3490, %v3506
    %v3515 = vadd.f32 %v3491, %v3507
    %v3516 = vadd.f32 %v3492, %v3508
    %v3517 = vadd.f32 %v3493, %v3509
    %v3518 = vadd.f32 %v3494, %v3510
    %v3519 = vadd.f32 %v3495, %v3511
    %vm3520 = vcmp.gt.s32.totalorder %v132, 5
    %v3521 = vsel %vm3520, 1, 0
    %3522 = vset.pattern.permute.xlu0 0
    %3523 = vperm.xlu0 %3522, %v3521
    %v3524 = vpop.permute.xlu0 %3523
    %vm3525 = vcmp.eq.s32.totalorder %v3524, 1
    %v3534 = vcombine.low %v3512, %v3513
    %v3535 = vcombine.low %v3514, %v3515
    %v3536 = vcombine.low %v3516, %v3517
    %v3537 = vcombine.low %v3518, %v3519
    %v3539 = vunpack.c.l.s4 1966171168
    %v3540 = vunpack.c.0.s8 %v3539
    %v3541 = vlaneseq
    %v3542 = vshrl.u32 %v3541, 7
    %v3543 = vsub.s32 %v3540, %v3542
    %v3544 = vrot.slane %v3534, %v3543
    %v3546 = vunpack.c.l.s4 1966171168
    %v3547 = vunpack.c.0.s8 %v3546
    %v3548 = vlaneseq
    %v3549 = vshrl.u32 %v3548, 7
    %v3550 = vsub.s32 %v3547, %v3549
    %v3551 = vrot.slane %v3535, %v3550
    %v3553 = vunpack.c.l.s4 1966171168
    %v3554 = vunpack.c.0.s8 %v3553
    %v3555 = vlaneseq
    %v3556 = vshrl.u32 %v3555, 7
    %v3557 = vsub.s32 %v3554, %v3556
    %v3558 = vrot.slane %v3536, %v3557
    %v3560 = vunpack.c.l.s4 1966171168
    %v3561 = vunpack.c.0.s8 %v3560
    %v3562 = vlaneseq
    %v3563 = vshrl.u32 %v3562, 7
    %v3564 = vsub.s32 %v3561, %v3563
    %v3565 = vrot.slane %v3537, %v3564
    %v3566 = vcombine.low %v3544, %v3551
    %v3567 = vcombine.low %v3558, %v3565
    %v3569 = vunpack.c.l.s4 1966171168
    %v3570 = vunpack.c.0.s8 %v3569
    %v3571 = vlaneseq
    %v3572 = vshrl.u32 %v3571, 7
    %v3573 = vsub.s32 %v3570, %v3572
    %v3574 = vrot.slane %v3566, %v3573
    %v3576 = vunpack.c.l.s4 1966171168
    %v3577 = vunpack.c.0.s8 %v3576
    %v3578 = vlaneseq
    %v3579 = vshrl.u32 %v3578, 7
    %v3580 = vsub.s32 %v3577, %v3579
    %v3581 = vrot.slane %v3567, %v3580
    %v3582 = vcombine.low %v3574, %v3581
    %v3584 = vsel %vm3525, %v3582, %v2452
    %v3586 = vcombine.high %v3584, %v3584
    %v3588 = vunpack.c.l.s4 1966171168
    %v3589 = vunpack.c.0.s8 %v3588
    %v3590 = vlaneseq
    %v3591 = vshrl.u32 %v3590, 7
    %v3592 = vsub.s32 %v3589, %v3591
    %v3593 = vrot.slane %v3584, %v3592
    %v3595 = vunpack.c.l.s4 1966171168
    %v3596 = vunpack.c.0.s8 %v3595
    %v3597 = vlaneseq
    %v3598 = vshrl.u32 %v3597, 7
    %v3599 = vsub.s32 %v3596, %v3598
    %v3600 = vrot.slane %v3586, %v3599
    %v3601 = vcombine.high %v3593, %v3593
    %v3602 = vcombine.high %v3600, %v3600
    %v3604 = vunpack.c.l.s4 1966171168
    %v3605 = vunpack.c.0.s8 %v3604
    %v3606 = vlaneseq
    %v3607 = vshrl.u32 %v3606, 7
    %v3608 = vsub.s32 %v3605, %v3607
    %v3609 = vrot.slane %v3593, %v3608
    %v3611 = vunpack.c.l.s4 1966171168
    %v3612 = vunpack.c.0.s8 %v3611
    %v3613 = vlaneseq
    %v3614 = vshrl.u32 %v3613, 7
    %v3615 = vsub.s32 %v3612, %v3614
    %v3616 = vrot.slane %v3600, %v3615
    %v3618 = vunpack.c.l.s4 1966171168
    %v3619 = vunpack.c.0.s8 %v3618
    %v3620 = vlaneseq
    %v3621 = vshrl.u32 %v3620, 7
    %v3622 = vsub.s32 %v3619, %v3621
    %v3623 = vrot.slane %v3601, %v3622
    %v3625 = vunpack.c.l.s4 1966171168
    %v3626 = vunpack.c.0.s8 %v3625
    %v3627 = vlaneseq
    %v3628 = vshrl.u32 %v3627, 7
    %v3629 = vsub.s32 %v3626, %v3628
    %v3630 = vrot.slane %v3602, %v3629
    %v3631 = vcombine.high %v3609, %v3609
    %v3632 = vcombine.high %v3616, %v3616
    %v3633 = vcombine.high %v3623, %v3623
    %v3634 = vcombine.high %v3630, %v3630
    %v3635 = vlaneseq
    %v3636 = vshrl.u32 %v3635, 7
    %v3637 = vsub.s32 0, %v3636
    %v3638 = vrot.slane %v3609, %v3637
    %v3639 = vlaneseq
    %v3640 = vshrl.u32 %v3639, 7
    %v3641 = vsub.s32 0, %v3640
    %v3642 = vrot.slane %v3623, %v3641
    %v3643 = vlaneseq
    %v3644 = vshrl.u32 %v3643, 7
    %v3645 = vsub.s32 0, %v3644
    %v3646 = vrot.slane %v3631, %v3645
    %v3647 = vlaneseq
    %v3648 = vshrl.u32 %v3647, 7
    %v3649 = vsub.s32 0, %v3648
    %v3650 = vrot.slane %v3633, %v3649
    %v3651 = vlaneseq
    %v3652 = vshrl.u32 %v3651, 7
    %v3653 = vsub.s32 0, %v3652
    %v3654 = vrot.slane %v3616, %v3653
    %v3655 = vlaneseq
    %v3656 = vshrl.u32 %v3655, 7
    %v3657 = vsub.s32 0, %v3656
    %v3658 = vrot.slane %v3630, %v3657
    %v3659 = vlaneseq
    %v3660 = vshrl.u32 %v3659, 7
    %v3661 = vsub.s32 0, %v3660
    %v3662 = vrot.slane %v3632, %v3661
    %v3663 = vlaneseq
    %v3664 = vshrl.u32 %v3663, 7
    %v3665 = vsub.s32 0, %v3664
    %v3666 = vrot.slane %v3634, %v3665
    %3667 = vrot.lane.b32.xlu0 %v3638, 32
    %v3668 = vpop.permute.xlu0 %3667
    %3669 = vrot.lane.b32.xlu0 %v3642, 32
    %v3670 = vpop.permute.xlu0 %3669
    %3671 = vrot.lane.b32.xlu0 %v3646, 32
    %v3672 = vpop.permute.xlu0 %3671
    %3673 = vrot.lane.b32.xlu0 %v3650, 32
    %v3674 = vpop.permute.xlu0 %3673
    %3675 = vrot.lane.b32.xlu0 %v3654, 32
    %v3676 = vpop.permute.xlu0 %3675
    %3677 = vrot.lane.b32.xlu0 %v3658, 32
    %v3678 = vpop.permute.xlu0 %3677
    %3679 = vrot.lane.b32.xlu0 %v3662, 32
    %v3680 = vpop.permute.xlu0 %3679
    %3681 = vrot.lane.b32.xlu0 %v3666, 32
    %v3682 = vpop.permute.xlu0 %3681
    %3691 = vst.msk [vmem:[#allocation3 + $0x5] sm:$0x1] %vm1426, %v3668
    %3692 = vst.msk [vmem:[#allocation3 + $0xd] sm:$0x1] %vm1426, %v3670
    %3693 = vst.msk [vmem:[#allocation3 + $0x15] sm:$0x1] %vm1426, %v3672
    %3694 = vst.msk [vmem:[#allocation3 + $0x1d] sm:$0x1] %vm1426, %v3674
    %3695 = vst.msk [vmem:[#allocation3 + $0x25] sm:$0x1] %vm1426, %v3676
    %3696 = vst.msk [vmem:[#allocation3 + $0x2d] sm:$0x1] %vm1426, %v3678
    %3697 = vst.msk [vmem:[#allocation3 + $0x35] sm:$0x1] %vm1426, %v3680
    %3698 = vst.msk [vmem:[#allocation3 + $0x3d] sm:$0x1] %vm1426, %v3682
    %s3699 = scalar_lea.vmem [#allocation2], 3
    %v3700 = vld [vmem:[%s3699] ss:$8 sm:$0x3]
    %s3701 = scalar_lea.vmem [#allocation2], 19
    %v3702 = vld [vmem:[%s3701] ss:$8 sm:$0x3]
    %s3703 = scalar_lea.vmem [#allocation2], 35
    %v3704 = vld [vmem:[%s3703] ss:$8 sm:$0x3]
    %s3705 = scalar_lea.vmem [#allocation2], 51
    %v3706 = vld [vmem:[%s3705] ss:$8 sm:$0x3]
    %s3707 = scalar_lea.vmem [#allocation2], 67
    %v3708 = vld [vmem:[%s3707] ss:$8 sm:$0x3]
    %s3709 = scalar_lea.vmem [#allocation2], 83
    %v3710 = vld [vmem:[%s3709] ss:$8 sm:$0x3]
    %s3711 = scalar_lea.vmem [#allocation2], 99
    %v3712 = vld [vmem:[%s3711] ss:$8 sm:$0x3]
    %s3713 = scalar_lea.vmem [#allocation2], 115
    %v3714 = vld [vmem:[%s3713] ss:$8 sm:$0x3]
    %v3715 = vsel %vm343, %v3003, 0
    %3717 = vmatprep.subr.mxu0 0.0
    %3718 = vmatpush1.msra.mxu0 %v312
    %3719 = vmatprep.subr.mxu0 0.0
    %3720 = vmatpush1.msra.mxu0 %v313
    %3721 = vmatprep.subr.mxu0 0.0
    %3722 = vmatpush1.msra.mxu0 %v314
    %3723 = vmatprep.subr.mxu0 0.0
    %3724 = vmatpush1.msra.mxu0 %v315
    %3725 = vmatprep.subr.mxu0 0.0
    %3726 = vmatpush1.msra.mxu0 0.0
    %3727 = vmatprep.subr.mxu0 0.0
    %3728 = vmatpush1.msra.mxu0 0.0
    %3729 = vmatprep.subr.mxu0 0.0
    %3730 = vmatpush1.msra.mxu0 0.0
    %3731 = vmatprep.subr.mxu0 0.0
    %3732 = vmatpush1.msra.mxu0 0.0
    %3733 = vmatprep.subr.mxu0 0.0
    %3734 = vmatpush1.msra.mxu0 0.0
    %3735 = vmatprep.subr.mxu0 0.0
    %3736 = vmatpush1.msra.mxu0 0.0
    %3737 = vmatprep.subr.mxu0 0.0
    %3738 = vmatpush1.msra.mxu0 0.0
    %3739 = vmatprep.subr.mxu0 0.0
    %3740 = vmatpush1.msra.mxu0 0.0
    %3741 = vmatprep.subr.mxu0 0.0
    %3742 = vmatpush1.msra.mxu0 0.0
    %3743 = vmatprep.subr.mxu0 0.0
    %3744 = vmatpush1.msra.mxu0 0.0
    %3745 = vmatprep.subr.mxu0 0.0
    %3746 = vmatpush1.msra.mxu0 0.0
    %3747 = vmatprep.subr.mxu0 0.0
    %3748 = vmatpush1.msra.mxu0 0.0
    %3749 = vmatprep.subr.mxu0 0.0
    %3750 = vmatpush1.msra.mxu0 0.0
    %3751 = vmatprep.subr.mxu0 0.0
    %3752 = vmatpush1.msra.mxu0 0.0
    %3753 = vmatprep.subr.mxu0 0.0
    %3754 = vmatpush1.msra.mxu0 0.0
    %3755 = vmatprep.subr.mxu0 0.0
    %3756 = vmatpush1.msra.mxu0 0.0
    %3757 = vmatprep.subr.mxu0 0.0
    %3758 = vmatpush1.msra.mxu0 0.0
    %3759 = vmatprep.subr.mxu0 0.0
    %3760 = vmatpush1.msra.mxu0 0.0
    %3761 = vmatprep.subr.mxu0 0.0
    %3762 = vmatpush1.msra.mxu0 0.0
    %3763 = vmatprep.subr.mxu0 0.0
    %3764 = vmatpush1.msra.mxu0 0.0
    %3765 = vmatprep.subr.mxu0 0.0
    %3766 = vmatpush1.msra.mxu0 0.0
    %3767 = vmatprep.subr.mxu0 0.0
    %3768 = vmatpush1.msra.mxu0 0.0
    %3769 = vmatprep.subr.mxu0 0.0
    %3770 = vmatpush1.msra.mxu0 0.0
    %3771 = vmatprep.subr.mxu0 0.0
    %3772 = vmatpush1.msra.mxu0 0.0
    %3773 = vmatprep.subr.mxu0 0.0
    %3774 = vmatpush1.msra.mxu0 0.0
    %3775 = vmatprep.subr.mxu0 0.0
    %3776 = vmatpush1.msra.mxu0 0.0
    %3777 = vmatprep.subr.mxu0 0.0
    %3778 = vmatpush1.msra.mxu0 0.0
    %3779 = vmatprep.subr.mxu0 0.0
    %3780 = vmatpush1.msra.mxu0 0.0
    %3781 = vmatprep.mubr.f32.mxu0 0.0
    %3782 = vmatmul.mubr.f32.gmra.mrb[0].mxu0 %v3715
    %v3783 = vpop.f32.mrb[0].mxu0
    %v3784 = vadd.f32 %v341, %v3783
    %v3785 = vpop.f32.mrb[0].mxu0
    %3786 = vdwg.mxu0
    %v3788 = vcombine.high %v3784, %v3784
    %v3790 = vunpack.c.l.s4 1966171168
    %v3791 = vunpack.c.0.s8 %v3790
    %v3792 = vlaneseq
    %v3793 = vshrl.u32 %v3792, 7
    %v3794 = vsub.s32 %v3791, %v3793
    %v3795 = vrot.slane %v3784, %v3794
    %v3797 = vunpack.c.l.s4 1966171168
    %v3798 = vunpack.c.0.s8 %v3797
    %v3799 = vlaneseq
    %v3800 = vshrl.u32 %v3799, 7
    %v3801 = vsub.s32 %v3798, %v3800
    %v3802 = vrot.slane %v3788, %v3801
    %v3803 = vcombine.high %v3795, %v3795
    %v3804 = vcombine.high %v3802, %v3802
    %v3806 = vunpack.c.l.s4 1966171168
    %v3807 = vunpack.c.0.s8 %v3806
    %v3808 = vlaneseq
    %v3809 = vshrl.u32 %v3808, 7
    %v3810 = vsub.s32 %v3807, %v3809
    %v3811 = vrot.slane %v3795, %v3810
    %v3813 = vunpack.c.l.s4 1966171168
    %v3814 = vunpack.c.0.s8 %v3813
    %v3815 = vlaneseq
    %v3816 = vshrl.u32 %v3815, 7
    %v3817 = vsub.s32 %v3814, %v3816
    %v3818 = vrot.slane %v3802, %v3817
    %v3820 = vunpack.c.l.s4 1966171168
    %v3821 = vunpack.c.0.s8 %v3820
    %v3822 = vlaneseq
    %v3823 = vshrl.u32 %v3822, 7
    %v3824 = vsub.s32 %v3821, %v3823
    %v3825 = vrot.slane %v3803, %v3824
    %v3827 = vunpack.c.l.s4 1966171168
    %v3828 = vunpack.c.0.s8 %v3827
    %v3829 = vlaneseq
    %v3830 = vshrl.u32 %v3829, 7
    %v3831 = vsub.s32 %v3828, %v3830
    %v3832 = vrot.slane %v3804, %v3831
    %v3833 = vcombine.high %v3811, %v3811
    %v3834 = vcombine.high %v3818, %v3818
    %v3835 = vcombine.high %v3825, %v3825
    %v3836 = vcombine.high %v3832, %v3832
    %v3845 = vadd.f32 %v3700, %v3811
    %v3846 = vadd.f32 %v3702, %v3825
    %v3847 = vadd.f32 %v3704, %v3833
    %v3848 = vadd.f32 %v3706, %v3835
    %v3849 = vadd.f32 %v3708, %v3818
    %v3850 = vadd.f32 %v3710, %v3832
    %v3851 = vadd.f32 %v3712, %v3834
    %v3852 = vadd.f32 %v3714, %v3836
    %v3853 = vxor.u32 %v3845, 2147483648
    %v3854 = vxor.u32 %v3846, 2147483648
    %v3855 = vxor.u32 %v3847, 2147483648
    %v3856 = vxor.u32 %v3848, 2147483648
    %v3857 = vxor.u32 %v3849, 2147483648
    %v3858 = vxor.u32 %v3850, 2147483648
    %v3859 = vxor.u32 %v3851, 2147483648
    %v3860 = vxor.u32 %v3852, 2147483648
    %v3861 = vmul.f32 %v3853, 1.442695
    %v3862 = vpow.pop %v3861
    %v3863 = vmul.f32 %v3854, 1.442695
    %v3864 = vpow.pop %v3863
    %v3865 = vmul.f32 %v3855, 1.442695
    %v3866 = vpow.pop %v3865
    %v3867 = vmul.f32 %v3856, 1.442695
    %v3868 = vpow.pop %v3867
    %v3869 = vmul.f32 %v3857, 1.442695
    %v3870 = vpow.pop %v3869
    %v3871 = vmul.f32 %v3858, 1.442695
    %v3872 = vpow.pop %v3871
    %v3873 = vmul.f32 %v3859, 1.442695
    %v3874 = vpow.pop %v3873
    %v3875 = vmul.f32 %v3860, 1.442695
    %v3876 = vpow.pop %v3875
    %v3877 = vadd.f32 %v3862, 1.0
    %v3878 = vadd.f32 %v3864, 1.0
    %v3879 = vadd.f32 %v3866, 1.0
    %v3880 = vadd.f32 %v3868, 1.0
    %v3881 = vadd.f32 %v3870, 1.0
    %v3882 = vadd.f32 %v3872, 1.0
    %v3883 = vadd.f32 %v3874, 1.0
    %v3884 = vadd.f32 %v3876, 1.0
    %v3885 = vrcp.pop %v3877
    %v3886 = vmul.f32 1.0, %v3885
    %v3887 = vrcp.pop %v3878
    %v3888 = vmul.f32 1.0, %v3887
    %v3889 = vrcp.pop %v3879
    %v3890 = vmul.f32 1.0, %v3889
    %v3891 = vrcp.pop %v3880
    %v3892 = vmul.f32 1.0, %v3891
    %v3893 = vrcp.pop %v3881
    %v3894 = vmul.f32 1.0, %v3893
    %v3895 = vrcp.pop %v3882
    %v3896 = vmul.f32 1.0, %v3895
    %v3897 = vrcp.pop %v3883
    %v3898 = vmul.f32 1.0, %v3897
    %v3899 = vrcp.pop %v3884
    %v3900 = vmul.f32 1.0, %v3899
    %3901 = vrot.lane.b32.xlu0 %v3811, 64
    %v3902 = vpop.permute.xlu0 %3901
    %3903 = vrot.lane.b32.xlu0 %v3825, 64
    %v3904 = vpop.permute.xlu0 %3903
    %3905 = vrot.lane.b32.xlu0 %v3833, 64
    %v3906 = vpop.permute.xlu0 %3905
    %3907 = vrot.lane.b32.xlu0 %v3835, 64
    %v3908 = vpop.permute.xlu0 %3907
    %3909 = vrot.lane.b32.xlu0 %v3818, 64
    %v3910 = vpop.permute.xlu0 %3909
    %3911 = vrot.lane.b32.xlu0 %v3832, 64
    %v3912 = vpop.permute.xlu0 %3911
    %3913 = vrot.lane.b32.xlu0 %v3834, 64
    %v3914 = vpop.permute.xlu0 %3913
    %3915 = vrot.lane.b32.xlu0 %v3836, 64
    %v3916 = vpop.permute.xlu0 %3915
    %v3925 = vmul.f32 %v3886, %v3902
    %v3926 = vmul.f32 %v3888, %v3904
    %v3927 = vmul.f32 %v3890, %v3906
    %v3928 = vmul.f32 %v3892, %v3908
    %v3929 = vmul.f32 %v3894, %v3910
    %v3930 = vmul.f32 %v3896, %v3912
    %v3931 = vmul.f32 %v3898, %v3914
    %v3932 = vmul.f32 %v3900, %v3916
    %3941 = vrot.lane.b32.xlu0 %v3925, 64
    %v3942 = vpop.permute.xlu0 %3941
    %3943 = vrot.lane.b32.xlu0 %v3926, 64
    %v3944 = vpop.permute.xlu0 %3943
    %3945 = vrot.lane.b32.xlu0 %v3927, 64
    %v3946 = vpop.permute.xlu0 %3945
    %3947 = vrot.lane.b32.xlu0 %v3928, 64
    %v3948 = vpop.permute.xlu0 %3947
    %3949 = vrot.lane.b32.xlu0 %v3929, 64
    %v3950 = vpop.permute.xlu0 %3949
    %3951 = vrot.lane.b32.xlu0 %v3930, 64
    %v3952 = vpop.permute.xlu0 %3951
    %3953 = vrot.lane.b32.xlu0 %v3931, 64
    %v3954 = vpop.permute.xlu0 %3953
    %3955 = vrot.lane.b32.xlu0 %v3932, 64
    %v3956 = vpop.permute.xlu0 %3955
    %v3965 = vadd.f32 %v3700, %v3942
    %v3966 = vadd.f32 %v3702, %v3944
    %v3967 = vadd.f32 %v3704, %v3946
    %v3968 = vadd.f32 %v3706, %v3948
    %v3969 = vadd.f32 %v3708, %v3950
    %v3970 = vadd.f32 %v3710, %v3952
    %v3971 = vadd.f32 %v3712, %v3954
    %v3972 = vadd.f32 %v3714, %v3956
    %v3973 = vtanh.pop %v3965
    %v3974 = vtanh.pop %v3966
    %v3975 = vtanh.pop %v3967
    %v3976 = vtanh.pop %v3968
    %v3977 = vtanh.pop %v3969
    %v3978 = vtanh.pop %v3970
    %v3979 = vtanh.pop %v3971
    %v3980 = vtanh.pop %v3972
    %v3981 = vsub.f32 1.0, %v3886
    %v3982 = vsub.f32 1.0, %v3888
    %v3983 = vsub.f32 1.0, %v3890
    %v3984 = vsub.f32 1.0, %v3892
    %v3985 = vsub.f32 1.0, %v3894
    %v3986 = vsub.f32 1.0, %v3896
    %v3987 = vsub.f32 1.0, %v3898
    %v3988 = vsub.f32 1.0, %v3900
    %3997 = vrot.lane.b32.xlu0 %v3973, 96
    %v3998 = vpop.permute.xlu0 %3997
    %3999 = vrot.lane.b32.xlu0 %v3974, 96
    %v4000 = vpop.permute.xlu0 %3999
    %4001 = vrot.lane.b32.xlu0 %v3975, 96
    %v4002 = vpop.permute.xlu0 %4001
    %4003 = vrot.lane.b32.xlu0 %v3976, 96
    %v4004 = vpop.permute.xlu0 %4003
    %4005 = vrot.lane.b32.xlu0 %v3977, 96
    %v4006 = vpop.permute.xlu0 %4005
    %4007 = vrot.lane.b32.xlu0 %v3978, 96
    %v4008 = vpop.permute.xlu0 %4007
    %4009 = vrot.lane.b32.xlu0 %v3979, 96
    %v4010 = vpop.permute.xlu0 %4009
    %4011 = vrot.lane.b32.xlu0 %v3980, 96
    %v4012 = vpop.permute.xlu0 %4011
    %v4021 = vmul.f32 %v3981, %v3998
    %v4022 = vmul.f32 %v3982, %v4000
    %v4023 = vmul.f32 %v3983, %v4002
    %v4024 = vmul.f32 %v3984, %v4004
    %v4025 = vmul.f32 %v3985, %v4006
    %v4026 = vmul.f32 %v3986, %v4008
    %v4027 = vmul.f32 %v3987, %v4010
    %v4028 = vmul.f32 %v3988, %v4012
    %4029 = vrot.lane.b32.xlu0 %v3028, 32
    %v4030 = vpop.permute.xlu0 %4029
    %4031 = vrot.lane.b32.xlu0 %v3042, 32
    %v4032 = vpop.permute.xlu0 %4031
    %4033 = vrot.lane.b32.xlu0 %v3050, 32
    %v4034 = vpop.permute.xlu0 %4033
    %4035 = vrot.lane.b32.xlu0 %v3052, 32
    %v4036 = vpop.permute.xlu0 %4035
    %4037 = vrot.lane.b32.xlu0 %v3035, 32
    %v4038 = vpop.permute.xlu0 %4037
    %4039 = vrot.lane.b32.xlu0 %v3049, 32
    %v4040 = vpop.permute.xlu0 %4039
    %4041 = vrot.lane.b32.xlu0 %v3051, 32
    %v4042 = vpop.permute.xlu0 %4041
    %4043 = vrot.lane.b32.xlu0 %v3053, 32
    %v4044 = vpop.permute.xlu0 %4043
    %v4053 = vmul.f32 %v3886, %v4030
    %v4054 = vmul.f32 %v3888, %v4032
    %v4055 = vmul.f32 %v3890, %v4034
    %v4056 = vmul.f32 %v3892, %v4036
    %v4057 = vmul.f32 %v3894, %v4038
    %v4058 = vmul.f32 %v3896, %v4040
    %v4059 = vmul.f32 %v3898, %v4042
    %v4060 = vmul.f32 %v3900, %v4044
    %v4061 = vadd.f32 %v4021, %v4053
    %v4062 = vadd.f32 %v4022, %v4054
    %v4063 = vadd.f32 %v4023, %v4055
    %v4064 = vadd.f32 %v4024, %v4056
    %v4065 = vadd.f32 %v4025, %v4057
    %v4066 = vadd.f32 %v4026, %v4058
    %v4067 = vadd.f32 %v4027, %v4059
    %v4068 = vadd.f32 %v4028, %v4060
    %vm4069 = vcmp.gt.s32.totalorder %v132, 3
    %v4070 = vsel %vm4069, 1, 0
    %4071 = vset.pattern.permute.xlu0 0
    %4072 = vperm.xlu0 %4071, %v4070
    %v4073 = vpop.permute.xlu0 %4072
    %vm4074 = vcmp.eq.s32.totalorder %v4073, 1
    %v4083 = vcombine.low %v4061, %v4062
    %v4084 = vcombine.low %v4063, %v4064
    %v4085 = vcombine.low %v4065, %v4066
    %v4086 = vcombine.low %v4067, %v4068
    %v4088 = vunpack.c.l.s4 1966171168
    %v4089 = vunpack.c.0.s8 %v4088
    %v4090 = vlaneseq
    %v4091 = vshrl.u32 %v4090, 7
    %v4092 = vsub.s32 %v4089, %v4091
    %v4093 = vrot.slane %v4083, %v4092
    %v4095 = vunpack.c.l.s4 1966171168
    %v4096 = vunpack.c.0.s8 %v4095
    %v4097 = vlaneseq
    %v4098 = vshrl.u32 %v4097, 7
    %v4099 = vsub.s32 %v4096, %v4098
    %v4100 = vrot.slane %v4084, %v4099
    %v4102 = vunpack.c.l.s4 1966171168
    %v4103 = vunpack.c.0.s8 %v4102
    %v4104 = vlaneseq
    %v4105 = vshrl.u32 %v4104, 7
    %v4106 = vsub.s32 %v4103, %v4105
    %v4107 = vrot.slane %v4085, %v4106
    %v4109 = vunpack.c.l.s4 1966171168
    %v4110 = vunpack.c.0.s8 %v4109
    %v4111 = vlaneseq
    %v4112 = vshrl.u32 %v4111, 7
    %v4113 = vsub.s32 %v4110, %v4112
    %v4114 = vrot.slane %v4086, %v4113
    %v4115 = vcombine.low %v4093, %v4100
    %v4116 = vcombine.low %v4107, %v4114
    %v4118 = vunpack.c.l.s4 1966171168
    %v4119 = vunpack.c.0.s8 %v4118
    %v4120 = vlaneseq
    %v4121 = vshrl.u32 %v4120, 7
    %v4122 = vsub.s32 %v4119, %v4121
    %v4123 = vrot.slane %v4115, %v4122
    %v4125 = vunpack.c.l.s4 1966171168
    %v4126 = vunpack.c.0.s8 %v4125
    %v4127 = vlaneseq
    %v4128 = vshrl.u32 %v4127, 7
    %v4129 = vsub.s32 %v4126, %v4128
    %v4130 = vrot.slane %v4116, %v4129
    %v4131 = vcombine.low %v4123, %v4130
    %4132 = vrot.lane.b32.xlu0 %v4131, 96
    %v4133 = vpop.permute.xlu0 %4132
    %v4135 = vsel %vm4074, %v4133, %v3003
    %v4137 = vcombine.high %v4135, %v4135
    %v4139 = vunpack.c.l.s4 1966171168
    %v4140 = vunpack.c.0.s8 %v4139
    %v4141 = vlaneseq
    %v4142 = vshrl.u32 %v4141, 7
    %v4143 = vsub.s32 %v4140, %v4142
    %v4144 = vrot.slane %v4135, %v4143
    %v4146 = vunpack.c.l.s4 1966171168
    %v4147 = vunpack.c.0.s8 %v4146
    %v4148 = vlaneseq
    %v4149 = vshrl.u32 %v4148, 7
    %v4150 = vsub.s32 %v4147, %v4149
    %v4151 = vrot.slane %v4137, %v4150
    %v4152 = vcombine.high %v4144, %v4144
    %v4153 = vcombine.high %v4151, %v4151
    %v4155 = vunpack.c.l.s4 1966171168
    %v4156 = vunpack.c.0.s8 %v4155
    %v4157 = vlaneseq
    %v4158 = vshrl.u32 %v4157, 7
    %v4159 = vsub.s32 %v4156, %v4158
    %v4160 = vrot.slane %v4144, %v4159
    %v4162 = vunpack.c.l.s4 1966171168
    %v4163 = vunpack.c.0.s8 %v4162
    %v4164 = vlaneseq
    %v4165 = vshrl.u32 %v4164, 7
    %v4166 = vsub.s32 %v4163, %v4165
    %v4167 = vrot.slane %v4151, %v4166
    %v4169 = vunpack.c.l.s4 1966171168
    %v4170 = vunpack.c.0.s8 %v4169
    %v4171 = vlaneseq
    %v4172 = vshrl.u32 %v4171, 7
    %v4173 = vsub.s32 %v4170, %v4172
    %v4174 = vrot.slane %v4152, %v4173
    %v4176 = vunpack.c.l.s4 1966171168
    %v4177 = vunpack.c.0.s8 %v4176
    %v4178 = vlaneseq
    %v4179 = vshrl.u32 %v4178, 7
    %v4180 = vsub.s32 %v4177, %v4179
    %v4181 = vrot.slane %v4153, %v4180
    %v4182 = vcombine.high %v4160, %v4160
    %v4183 = vcombine.high %v4167, %v4167
    %v4184 = vcombine.high %v4174, %v4174
    %v4185 = vcombine.high %v4181, %v4181
    %4194 = vst.msk [vmem:[#allocation3 + $0x3] sm:$0x1] %vm800, %v4160
    %4195 = vst.msk [vmem:[#allocation3 + $0xb] sm:$0x1] %vm800, %v4174
    %4196 = vst.msk [vmem:[#allocation3 + $0x13] sm:$0x1] %vm800, %v4182
    %4197 = vst.msk [vmem:[#allocation3 + $0x1b] sm:$0x1] %vm800, %v4184
    %4198 = vst.msk [vmem:[#allocation3 + $0x23] sm:$0x1] %vm800, %v4167
    %4199 = vst.msk [vmem:[#allocation3 + $0x2b] sm:$0x1] %vm800, %v4181
    %4200 = vst.msk [vmem:[#allocation3 + $0x33] sm:$0x1] %vm800, %v4183
    %4201 = vst.msk [vmem:[#allocation3 + $0x3b] sm:$0x1] %vm800, %v4185
    %s4202 = scalar_lea.vmem [#allocation2], 4
    %v4203 = vld [vmem:[%s4202] ss:$8 sm:$0x3]
    %s4204 = scalar_lea.vmem [#allocation2], 20
    %v4205 = vld [vmem:[%s4204] ss:$8 sm:$0x3]
    %s4206 = scalar_lea.vmem [#allocation2], 36
    %v4207 = vld [vmem:[%s4206] ss:$8 sm:$0x3]
    %s4208 = scalar_lea.vmem [#allocation2], 52
    %v4209 = vld [vmem:[%s4208] ss:$8 sm:$0x3]
    %s4210 = scalar_lea.vmem [#allocation2], 68
    %v4211 = vld [vmem:[%s4210] ss:$8 sm:$0x3]
    %s4212 = scalar_lea.vmem [#allocation2], 84
    %v4213 = vld [vmem:[%s4212] ss:$8 sm:$0x3]
    %s4214 = scalar_lea.vmem [#allocation2], 100
    %v4215 = vld [vmem:[%s4214] ss:$8 sm:$0x3]
    %s4216 = scalar_lea.vmem [#allocation2], 116
    %v4217 = vld [vmem:[%s4216] ss:$8 sm:$0x3]
    %v4218 = vsel %vm343, %v3584, 0
    %4220 = vmatprep.subr.mxu0 0.0
    %4221 = vmatpush1.msra.mxu0 %v317
    %4222 = vmatprep.subr.mxu0 0.0
    %4223 = vmatpush1.msra.mxu0 %v318
    %4224 = vmatprep.subr.mxu0 0.0
    %4225 = vmatpush1.msra.mxu0 %v319
    %4226 = vmatprep.subr.mxu0 0.0
    %4227 = vmatpush1.msra.mxu0 %v320
    %4228 = vmatprep.subr.mxu0 0.0
    %4229 = vmatpush1.msra.mxu0 0.0
    %4230 = vmatprep.subr.mxu0 0.0
    %4231 = vmatpush1.msra.mxu0 0.0
    %4232 = vmatprep.subr.mxu0 0.0
    %4233 = vmatpush1.msra.mxu0 0.0
    %4234 = vmatprep.subr.mxu0 0.0
    %4235 = vmatpush1.msra.mxu0 0.0
    %4236 = vmatprep.subr.mxu0 0.0
    %4237 = vmatpush1.msra.mxu0 0.0
    %4238 = vmatprep.subr.mxu0 0.0
    %4239 = vmatpush1.msra.mxu0 0.0
    %4240 = vmatprep.subr.mxu0 0.0
    %4241 = vmatpush1.msra.mxu0 0.0
    %4242 = vmatprep.subr.mxu0 0.0
    %4243 = vmatpush1.msra.mxu0 0.0
    %4244 = vmatprep.subr.mxu0 0.0
    %4245 = vmatpush1.msra.mxu0 0.0
    %4246 = vmatprep.subr.mxu0 0.0
    %4247 = vmatpush1.msra.mxu0 0.0
    %4248 = vmatprep.subr.mxu0 0.0
    %4249 = vmatpush1.msra.mxu0 0.0
    %4250 = vmatprep.subr.mxu0 0.0
    %4251 = vmatpush1.msra.mxu0 0.0
    %4252 = vmatprep.subr.mxu0 0.0
    %4253 = vmatpush1.msra.mxu0 0.0
    %4254 = vmatprep.subr.mxu0 0.0
    %4255 = vmatpush1.msra.mxu0 0.0
    %4256 = vmatprep.subr.mxu0 0.0
    %4257 = vmatpush1.msra.mxu0 0.0
    %4258 = vmatprep.subr.mxu0 0.0
    %4259 = vmatpush1.msra.mxu0 0.0
    %4260 = vmatprep.subr.mxu0 0.0
    %4261 = vmatpush1.msra.mxu0 0.0
    %4262 = vmatprep.subr.mxu0 0.0
    %4263 = vmatpush1.msra.mxu0 0.0
    %4264 = vmatprep.subr.mxu0 0.0
    %4265 = vmatpush1.msra.mxu0 0.0
    %4266 = vmatprep.subr.mxu0 0.0
    %4267 = vmatpush1.msra.mxu0 0.0
    %4268 = vmatprep.subr.mxu0 0.0
    %4269 = vmatpush1.msra.mxu0 0.0
    %4270 = vmatprep.subr.mxu0 0.0
    %4271 = vmatpush1.msra.mxu0 0.0
    %4272 = vmatprep.subr.mxu0 0.0
    %4273 = vmatpush1.msra.mxu0 0.0
    %4274 = vmatprep.subr.mxu0 0.0
    %4275 = vmatpush1.msra.mxu0 0.0
    %4276 = vmatprep.subr.mxu0 0.0
    %4277 = vmatpush1.msra.mxu0 0.0
    %4278 = vmatprep.subr.mxu0 0.0
    %4279 = vmatpush1.msra.mxu0 0.0
    %4280 = vmatprep.subr.mxu0 0.0
    %4281 = vmatpush1.msra.mxu0 0.0
    %4282 = vmatprep.subr.mxu0 0.0
    %4283 = vmatpush1.msra.mxu0 0.0
    %4284 = vmatprep.mubr.f32.mxu0 0.0
    %4285 = vmatmul.mubr.f32.gmra.mrb[0].mxu0 %v4218
    %v4286 = vpop.f32.mrb[0].mxu0
    %v4287 = vadd.f32 %v829, %v4286
    %v4288 = vpop.f32.mrb[0].mxu0
    %4289 = vdwg.mxu0
    %v4291 = vcombine.high %v4287, %v4287
    %v4293 = vunpack.c.l.s4 1966171168
    %v4294 = vunpack.c.0.s8 %v4293
    %v4295 = vlaneseq
    %v4296 = vshrl.u32 %v4295, 7
    %v4297 = vsub.s32 %v4294, %v4296
    %v4298 = vrot.slane %v4287, %v4297
    %v4300 = vunpack.c.l.s4 1966171168
    %v4301 = vunpack.c.0.s8 %v4300
    %v4302 = vlaneseq
    %v4303 = vshrl.u32 %v4302, 7
    %v4304 = vsub.s32 %v4301, %v4303
    %v4305 = vrot.slane %v4291, %v4304
    %v4306 = vcombine.high %v4298, %v4298
    %v4307 = vcombine.high %v4305, %v4305
    %v4309 = vunpack.c.l.s4 1966171168
    %v4310 = vunpack.c.0.s8 %v4309
    %v4311 = vlaneseq
    %v4312 = vshrl.u32 %v4311, 7
    %v4313 = vsub.s32 %v4310, %v4312
    %v4314 = vrot.slane %v4298, %v4313
    %v4316 = vunpack.c.l.s4 1966171168
    %v4317 = vunpack.c.0.s8 %v4316
    %v4318 = vlaneseq
    %v4319 = vshrl.u32 %v4318, 7
    %v4320 = vsub.s32 %v4317, %v4319
    %v4321 = vrot.slane %v4305, %v4320
    %v4323 = vunpack.c.l.s4 1966171168
    %v4324 = vunpack.c.0.s8 %v4323
    %v4325 = vlaneseq
    %v4326 = vshrl.u32 %v4325, 7
    %v4327 = vsub.s32 %v4324, %v4326
    %v4328 = vrot.slane %v4306, %v4327
    %v4330 = vunpack.c.l.s4 1966171168
    %v4331 = vunpack.c.0.s8 %v4330
    %v4332 = vlaneseq
    %v4333 = vshrl.u32 %v4332, 7
    %v4334 = vsub.s32 %v4331, %v4333
    %v4335 = vrot.slane %v4307, %v4334
    %v4336 = vcombine.high %v4314, %v4314
    %v4337 = vcombine.high %v4321, %v4321
    %v4338 = vcombine.high %v4328, %v4328
    %v4339 = vcombine.high %v4335, %v4335
    %4340 = vrot.lane.b32.xlu0 %v4314, 96
    %v4341 = vpop.permute.xlu0 %4340
    %4342 = vrot.lane.b32.xlu0 %v4328, 96
    %v4343 = vpop.permute.xlu0 %4342
    %4344 = vrot.lane.b32.xlu0 %v4336, 96
    %v4345 = vpop.permute.xlu0 %4344
    %4346 = vrot.lane.b32.xlu0 %v4338, 96
    %v4347 = vpop.permute.xlu0 %4346
    %4348 = vrot.lane.b32.xlu0 %v4321, 96
    %v4349 = vpop.permute.xlu0 %4348
    %4350 = vrot.lane.b32.xlu0 %v4335, 96
    %v4351 = vpop.permute.xlu0 %4350
    %4352 = vrot.lane.b32.xlu0 %v4337, 96
    %v4353 = vpop.permute.xlu0 %4352
    %4354 = vrot.lane.b32.xlu0 %v4339, 96
    %v4355 = vpop.permute.xlu0 %4354
    %v4364 = vadd.f32 %v4203, %v4341
    %v4365 = vadd.f32 %v4205, %v4343
    %v4366 = vadd.f32 %v4207, %v4345
    %v4367 = vadd.f32 %v4209, %v4347
    %v4368 = vadd.f32 %v4211, %v4349
    %v4369 = vadd.f32 %v4213, %v4351
    %v4370 = vadd.f32 %v4215, %v4353
    %v4371 = vadd.f32 %v4217, %v4355
    %v4372 = vxor.u32 %v4364, 2147483648
    %v4373 = vxor.u32 %v4365, 2147483648
    %v4374 = vxor.u32 %v4366, 2147483648
    %v4375 = vxor.u32 %v4367, 2147483648
    %v4376 = vxor.u32 %v4368, 2147483648
    %v4377 = vxor.u32 %v4369, 2147483648
    %v4378 = vxor.u32 %v4370, 2147483648
    %v4379 = vxor.u32 %v4371, 2147483648
    %v4380 = vmul.f32 %v4372, 1.442695
    %v4381 = vpow.pop %v4380
    %v4382 = vmul.f32 %v4373, 1.442695
    %v4383 = vpow.pop %v4382
    %v4384 = vmul.f32 %v4374, 1.442695
    %v4385 = vpow.pop %v4384
    %v4386 = vmul.f32 %v4375, 1.442695
    %v4387 = vpow.pop %v4386
    %v4388 = vmul.f32 %v4376, 1.442695
    %v4389 = vpow.pop %v4388
    %v4390 = vmul.f32 %v4377, 1.442695
    %v4391 = vpow.pop %v4390
    %v4392 = vmul.f32 %v4378, 1.442695
    %v4393 = vpow.pop %v4392
    %v4394 = vmul.f32 %v4379, 1.442695
    %v4395 = vpow.pop %v4394
    %v4396 = vadd.f32 %v4381, 1.0
    %v4397 = vadd.f32 %v4383, 1.0
    %v4398 = vadd.f32 %v4385, 1.0
    %v4399 = vadd.f32 %v4387, 1.0
    %v4400 = vadd.f32 %v4389, 1.0
    %v4401 = vadd.f32 %v4391, 1.0
    %v4402 = vadd.f32 %v4393, 1.0
    %v4403 = vadd.f32 %v4395, 1.0
    %v4404 = vrcp.pop %v4396
    %v4405 = vmul.f32 1.0, %v4404
    %v4406 = vrcp.pop %v4397
    %v4407 = vmul.f32 1.0, %v4406
    %v4408 = vrcp.pop %v4398
    %v4409 = vmul.f32 1.0, %v4408
    %v4410 = vrcp.pop %v4399
    %v4411 = vmul.f32 1.0, %v4410
    %v4412 = vrcp.pop %v4400
    %v4413 = vmul.f32 1.0, %v4412
    %v4414 = vrcp.pop %v4401
    %v4415 = vmul.f32 1.0, %v4414
    %v4416 = vrcp.pop %v4402
    %v4417 = vmul.f32 1.0, %v4416
    %v4418 = vrcp.pop %v4403
    %v4419 = vmul.f32 1.0, %v4418
    %v4428 = vrot.slane %v4203, 1
    %v4429 = vrot.slane %v4205, 1
    %v4430 = vrot.slane %v4207, 1
    %v4431 = vrot.slane %v4209, 1
    %v4432 = vrot.slane %v4211, 1
    %v4433 = vrot.slane %v4213, 1
    %v4434 = vrot.slane %v4215, 1
    %v4435 = vrot.slane %v4217, 1
    %v4444 = vadd.f32 %v4428, %v4341
    %v4445 = vadd.f32 %v4429, %v4343
    %v4446 = vadd.f32 %v4430, %v4345
    %v4447 = vadd.f32 %v4431, %v4347
    %v4448 = vadd.f32 %v4432, %v4349
    %v4449 = vadd.f32 %v4433, %v4351
    %v4450 = vadd.f32 %v4434, %v4353
    %v4451 = vadd.f32 %v4435, %v4355
    %v4452 = vxor.u32 %v4444, 2147483648
    %v4453 = vxor.u32 %v4445, 2147483648
    %v4454 = vxor.u32 %v4446, 2147483648
    %v4455 = vxor.u32 %v4447, 2147483648
    %v4456 = vxor.u32 %v4448, 2147483648
    %v4457 = vxor.u32 %v4449, 2147483648
    %v4458 = vxor.u32 %v4450, 2147483648
    %v4459 = vxor.u32 %v4451, 2147483648
    %v4460 = vmul.f32 %v4452, 1.442695
    %v4461 = vpow.pop %v4460
    %v4462 = vmul.f32 %v4453, 1.442695
    %v4463 = vpow.pop %v4462
    %v4464 = vmul.f32 %v4454, 1.442695
    %v4465 = vpow.pop %v4464
    %v4466 = vmul.f32 %v4455, 1.442695
    %v4467 = vpow.pop %v4466
    %v4468 = vmul.f32 %v4456, 1.442695
    %v4469 = vpow.pop %v4468
    %v4470 = vmul.f32 %v4457, 1.442695
    %v4471 = vpow.pop %v4470
    %v4472 = vmul.f32 %v4458, 1.442695
    %v4473 = vpow.pop %v4472
    %v4474 = vmul.f32 %v4459, 1.442695
    %v4475 = vpow.pop %v4474
    %v4476 = vadd.f32 %v4461, 1.0
    %v4477 = vadd.f32 %v4463, 1.0
    %v4478 = vadd.f32 %v4465, 1.0
    %v4479 = vadd.f32 %v4467, 1.0
    %v4480 = vadd.f32 %v4469, 1.0
    %v4481 = vadd.f32 %v4471, 1.0
    %v4482 = vadd.f32 %v4473, 1.0
    %v4483 = vadd.f32 %v4475, 1.0
    %v4484 = vrcp.pop %v4476
    %v4485 = vmul.f32 1.0, %v4484
    %v4486 = vrcp.pop %v4477
    %v4487 = vmul.f32 1.0, %v4486
    %v4488 = vrcp.pop %v4478
    %v4489 = vmul.f32 1.0, %v4488
    %v4490 = vrcp.pop %v4479
    %v4491 = vmul.f32 1.0, %v4490
    %v4492 = vrcp.pop %v4480
    %v4493 = vmul.f32 1.0, %v4492
    %v4494 = vrcp.pop %v4481
    %v4495 = vmul.f32 1.0, %v4494
    %v4496 = vrcp.pop %v4482
    %v4497 = vmul.f32 1.0, %v4496
    %v4498 = vrcp.pop %v4483
    %v4499 = vmul.f32 1.0, %v4498
    %4500 = vrot.lane.b32.xlu0 %v4314, 32
    %v4501 = vpop.permute.xlu0 %4500
    %4502 = vrot.lane.b32.xlu0 %v4328, 32
    %v4503 = vpop.permute.xlu0 %4502
    %4504 = vrot.lane.b32.xlu0 %v4336, 32
    %v4505 = vpop.permute.xlu0 %4504
    %4506 = vrot.lane.b32.xlu0 %v4338, 32
    %v4507 = vpop.permute.xlu0 %4506
    %4508 = vrot.lane.b32.xlu0 %v4321, 32
    %v4509 = vpop.permute.xlu0 %4508
    %4510 = vrot.lane.b32.xlu0 %v4335, 32
    %v4511 = vpop.permute.xlu0 %4510
    %4512 = vrot.lane.b32.xlu0 %v4337, 32
    %v4513 = vpop.permute.xlu0 %4512
    %4514 = vrot.lane.b32.xlu0 %v4339, 32
    %v4515 = vpop.permute.xlu0 %4514
    %v4524 = vmul.f32 %v4405, %v4501
    %v4525 = vmul.f32 %v4407, %v4503
    %v4526 = vmul.f32 %v4409, %v4505
    %v4527 = vmul.f32 %v4411, %v4507
    %v4528 = vmul.f32 %v4413, %v4509
    %v4529 = vmul.f32 %v4415, %v4511
    %v4530 = vmul.f32 %v4417, %v4513
    %v4531 = vmul.f32 %v4419, %v4515
    %4532 = vrot.lane.b32.xlu0 %v4203, 96
    %v4533 = vpop.permute.xlu0 %4532
    %4534 = vrot.lane.b32.xlu0 %v4205, 96
    %v4535 = vpop.permute.xlu0 %4534
    %4536 = vrot.lane.b32.xlu0 %v4207, 96
    %v4537 = vpop.permute.xlu0 %4536
    %4538 = vrot.lane.b32.xlu0 %v4209, 96
    %v4539 = vpop.permute.xlu0 %4538
    %4540 = vrot.lane.b32.xlu0 %v4211, 96
    %v4541 = vpop.permute.xlu0 %4540
    %4542 = vrot.lane.b32.xlu0 %v4213, 96
    %v4543 = vpop.permute.xlu0 %4542
    %4544 = vrot.lane.b32.xlu0 %v4215, 96
    %v4545 = vpop.permute.xlu0 %4544
    %4546 = vrot.lane.b32.xlu0 %v4217, 96
    %v4547 = vpop.permute.xlu0 %4546
    %v4548 = vrot.slane %v4533, 1
    %v4549 = vrot.slane %v4535, 1
    %v4550 = vrot.slane %v4537, 1
    %v4551 = vrot.slane %v4539, 1
    %v4552 = vrot.slane %v4541, 1
    %v4553 = vrot.slane %v4543, 1
    %v4554 = vrot.slane %v4545, 1
    %v4555 = vrot.slane %v4547, 1
    %4572 = vrot.lane.b32.xlu0 %v4524, 32
    %v4573 = vpop.permute.xlu0 %4572
    %4574 = vrot.lane.b32.xlu0 %v4525, 32
    %v4575 = vpop.permute.xlu0 %4574
    %4576 = vrot.lane.b32.xlu0 %v4526, 32
    %v4577 = vpop.permute.xlu0 %4576
    %4578 = vrot.lane.b32.xlu0 %v4527, 32
    %v4579 = vpop.permute.xlu0 %4578
    %4580 = vrot.lane.b32.xlu0 %v4528, 32
    %v4581 = vpop.permute.xlu0 %4580
    %4582 = vrot.lane.b32.xlu0 %v4529, 32
    %v4583 = vpop.permute.xlu0 %4582
    %4584 = vrot.lane.b32.xlu0 %v4530, 32
    %v4585 = vpop.permute.xlu0 %4584
    %4586 = vrot.lane.b32.xlu0 %v4531, 32
    %v4587 = vpop.permute.xlu0 %4586
    %v4596 = vadd.f32 %v4548, %v4573
    %v4597 = vadd.f32 %v4549, %v4575
    %v4598 = vadd.f32 %v4550, %v4577
    %v4599 = vadd.f32 %v4551, %v4579
    %v4600 = vadd.f32 %v4552, %v4581
    %v4601 = vadd.f32 %v4553, %v4583
    %v4602 = vadd.f32 %v4554, %v4585
    %v4603 = vadd.f32 %v4555, %v4587
    %v4604 = vtanh.pop %v4596
    %v4605 = vtanh.pop %v4597
    %v4606 = vtanh.pop %v4598
    %v4607 = vtanh.pop %v4599
    %v4608 = vtanh.pop %v4600
    %v4609 = vtanh.pop %v4601
    %v4610 = vtanh.pop %v4602
    %v4611 = vtanh.pop %v4603
    %v4612 = vsub.f32 1.0, %v4485
    %v4613 = vsub.f32 1.0, %v4487
    %v4614 = vsub.f32 1.0, %v4489
    %v4615 = vsub.f32 1.0, %v4491
    %v4616 = vsub.f32 1.0, %v4493
    %v4617 = vsub.f32 1.0, %v4495
    %v4618 = vsub.f32 1.0, %v4497
    %v4619 = vsub.f32 1.0, %v4499
    %v4620 = vmul.f32 %v4612, %v4604
    %v4621 = vmul.f32 %v4613, %v4605
    %v4622 = vmul.f32 %v4614, %v4606
    %v4623 = vmul.f32 %v4615, %v4607
    %v4624 = vmul.f32 %v4616, %v4608
    %v4625 = vmul.f32 %v4617, %v4609
    %v4626 = vmul.f32 %v4618, %v4610
    %v4627 = vmul.f32 %v4619, %v4611
    %v4636 = vmul.f32 %v4485, %v3609
    %v4637 = vmul.f32 %v4487, %v3623
    %v4638 = vmul.f32 %v4489, %v3631
    %v4639 = vmul.f32 %v4491, %v3633
    %v4640 = vmul.f32 %v4493, %v3616
    %v4641 = vmul.f32 %v4495, %v3630
    %v4642 = vmul.f32 %v4497, %v3632
    %v4643 = vmul.f32 %v4499, %v3634
    %v4644 = vadd.f32 %v4620, %v4636
    %v4645 = vadd.f32 %v4621, %v4637
    %v4646 = vadd.f32 %v4622, %v4638
    %v4647 = vadd.f32 %v4623, %v4639
    %v4648 = vadd.f32 %v4624, %v4640
    %v4649 = vadd.f32 %v4625, %v4641
    %v4650 = vadd.f32 %v4626, %v4642
    %v4651 = vadd.f32 %v4627, %v4643
    %vm4652 = vcmp.gt.s32.totalorder %v132, 4
    %v4653 = vsel %vm4652, 1, 0
    %4654 = vset.pattern.permute.xlu0 0
    %4655 = vperm.xlu0 %4654, %v4653
    %v4656 = vpop.permute.xlu0 %4655
    %vm4657 = vcmp.eq.s32.totalorder %v4656, 1
    %v4666 = vcombine.low %v4644, %v4645
    %v4667 = vcombine.low %v4646, %v4647
    %v4668 = vcombine.low %v4648, %v4649
    %v4669 = vcombine.low %v4650, %v4651
    %v4671 = vunpack.c.l.s4 1966171168
    %v4672 = vunpack.c.0.s8 %v4671
    %v4673 = vlaneseq
    %v4674 = vshrl.u32 %v4673, 7
    %v4675 = vsub.s32 %v4672, %v4674
    %v4676 = vrot.slane %v4666, %v4675
    %v4678 = vunpack.c.l.s4 1966171168
    %v4679 = vunpack.c.0.s8 %v4678
    %v4680 = vlaneseq
    %v4681 = vshrl.u32 %v4680, 7
    %v4682 = vsub.s32 %v4679, %v4681
    %v4683 = vrot.slane %v4667, %v4682
    %v4685 = vunpack.c.l.s4 1966171168
    %v4686 = vunpack.c.0.s8 %v4685
    %v4687 = vlaneseq
    %v4688 = vshrl.u32 %v4687, 7
    %v4689 = vsub.s32 %v4686, %v4688
    %v4690 = vrot.slane %v4668, %v4689
    %v4692 = vunpack.c.l.s4 1966171168
    %v4693 = vunpack.c.0.s8 %v4692
    %v4694 = vlaneseq
    %v4695 = vshrl.u32 %v4694, 7
    %v4696 = vsub.s32 %v4693, %v4695
    %v4697 = vrot.slane %v4669, %v4696
    %v4698 = vcombine.low %v4676, %v4683
    %v4699 = vcombine.low %v4690, %v4697
    %v4701 = vunpack.c.l.s4 1966171168
    %v4702 = vunpack.c.0.s8 %v4701
    %v4703 = vlaneseq
    %v4704 = vshrl.u32 %v4703, 7
    %v4705 = vsub.s32 %v4702, %v4704
    %v4706 = vrot.slane %v4698, %v4705
    %v4708 = vunpack.c.l.s4 1966171168
    %v4709 = vunpack.c.0.s8 %v4708
    %v4710 = vlaneseq
    %v4711 = vshrl.u32 %v4710, 7
    %v4712 = vsub.s32 %v4709, %v4711
    %v4713 = vrot.slane %v4699, %v4712
    %v4714 = vcombine.low %v4706, %v4713
    %v4716 = vsel %vm4657, %v4714, %v3584
    %v4718 = vcombine.high %v4716, %v4716
    %v4720 = vunpack.c.l.s4 1966171168
    %v4721 = vunpack.c.0.s8 %v4720
    %v4722 = vlaneseq
    %v4723 = vshrl.u32 %v4722, 7
    %v4724 = vsub.s32 %v4721, %v4723
    %v4725 = vrot.slane %v4716, %v4724
    %v4727 = vunpack.c.l.s4 1966171168
    %v4728 = vunpack.c.0.s8 %v4727
    %v4729 = vlaneseq
    %v4730 = vshrl.u32 %v4729, 7
    %v4731 = vsub.s32 %v4728, %v4730
    %v4732 = vrot.slane %v4718, %v4731
    %v4733 = vcombine.high %v4725, %v4725
    %v4734 = vcombine.high %v4732, %v4732
    %v4736 = vunpack.c.l.s4 1966171168
    %v4737 = vunpack.c.0.s8 %v4736
    %v4738 = vlaneseq
    %v4739 = vshrl.u32 %v4738, 7
    %v4740 = vsub.s32 %v4737, %v4739
    %v4741 = vrot.slane %v4725, %v4740
    %v4743 = vunpack.c.l.s4 1966171168
    %v4744 = vunpack.c.0.s8 %v4743
    %v4745 = vlaneseq
    %v4746 = vshrl.u32 %v4745, 7
    %v4747 = vsub.s32 %v4744, %v4746
    %v4748 = vrot.slane %v4732, %v4747
    %v4750 = vunpack.c.l.s4 1966171168
    %v4751 = vunpack.c.0.s8 %v4750
    %v4752 = vlaneseq
    %v4753 = vshrl.u32 %v4752, 7
    %v4754 = vsub.s32 %v4751, %v4753
    %v4755 = vrot.slane %v4733, %v4754
    %v4757 = vunpack.c.l.s4 1966171168
    %v4758 = vunpack.c.0.s8 %v4757
    %v4759 = vlaneseq
    %v4760 = vshrl.u32 %v4759, 7
    %v4761 = vsub.s32 %v4758, %v4760
    %v4762 = vrot.slane %v4734, %v4761
    %v4763 = vcombine.high %v4741, %v4741
    %v4764 = vcombine.high %v4748, %v4748
    %v4765 = vcombine.high %v4755, %v4755
    %v4766 = vcombine.high %v4762, %v4762
    %v4767 = vlaneseq
    %v4768 = vshrl.u32 %v4767, 7
    %v4769 = vsub.s32 0, %v4768
    %v4770 = vrot.slane %v4741, %v4769
    %v4771 = vlaneseq
    %v4772 = vshrl.u32 %v4771, 7
    %v4773 = vsub.s32 0, %v4772
    %v4774 = vrot.slane %v4755, %v4773
    %v4775 = vlaneseq
    %v4776 = vshrl.u32 %v4775, 7
    %v4777 = vsub.s32 0, %v4776
    %v4778 = vrot.slane %v4763, %v4777
    %v4779 = vlaneseq
    %v4780 = vshrl.u32 %v4779, 7
    %v4781 = vsub.s32 0, %v4780
    %v4782 = vrot.slane %v4765, %v4781
    %v4783 = vlaneseq
    %v4784 = vshrl.u32 %v4783, 7
    %v4785 = vsub.s32 0, %v4784
    %v4786 = vrot.slane %v4748, %v4785
    %v4787 = vlaneseq
    %v4788 = vshrl.u32 %v4787, 7
    %v4789 = vsub.s32 0, %v4788
    %v4790 = vrot.slane %v4762, %v4789
    %v4791 = vlaneseq
    %v4792 = vshrl.u32 %v4791, 7
    %v4793 = vsub.s32 0, %v4792
    %v4794 = vrot.slane %v4764, %v4793
    %v4795 = vlaneseq
    %v4796 = vshrl.u32 %v4795, 7
    %v4797 = vsub.s32 0, %v4796
    %v4798 = vrot.slane %v4766, %v4797
    %4799 = vrot.lane.b32.xlu0 %v4770, 32
    %v4800 = vpop.permute.xlu0 %4799
    %4801 = vrot.lane.b32.xlu0 %v4774, 32
    %v4802 = vpop.permute.xlu0 %4801
    %4803 = vrot.lane.b32.xlu0 %v4778, 32
    %v4804 = vpop.permute.xlu0 %4803
    %4805 = vrot.lane.b32.xlu0 %v4782, 32
    %v4806 = vpop.permute.xlu0 %4805
    %4807 = vrot.lane.b32.xlu0 %v4786, 32
    %v4808 = vpop.permute.xlu0 %4807
    %4809 = vrot.lane.b32.xlu0 %v4790, 32
    %v4810 = vpop.permute.xlu0 %4809
    %4811 = vrot.lane.b32.xlu0 %v4794, 32
    %v4812 = vpop.permute.xlu0 %4811
    %4813 = vrot.lane.b32.xlu0 %v4798, 32
    %v4814 = vpop.permute.xlu0 %4813
    %4823 = vst.msk [vmem:[#allocation3 + $0x4] sm:$0x1] %vm1426, %v4800
    %4824 = vst.msk [vmem:[#allocation3 + $0xc] sm:$0x1] %vm1426, %v4802
    %4825 = vst.msk [vmem:[#allocation3 + $0x14] sm:$0x1] %vm1426, %v4804
    %4826 = vst.msk [vmem:[#allocation3 + $0x1c] sm:$0x1] %vm1426, %v4806
    %4827 = vst.msk [vmem:[#allocation3 + $0x24] sm:$0x1] %vm1426, %v4808
    %4828 = vst.msk [vmem:[#allocation3 + $0x2c] sm:$0x1] %vm1426, %v4810
    %4829 = vst.msk [vmem:[#allocation3 + $0x34] sm:$0x1] %vm1426, %v4812
    %4830 = vst.msk [vmem:[#allocation3 + $0x3c] sm:$0x1] %vm1426, %v4814
    %v4831 = vld [vmem:[%s4202] ss:$8 sm:$0x3]
    %v4832 = vld [vmem:[%s4204] ss:$8 sm:$0x3]
    %v4833 = vld [vmem:[%s4206] ss:$8 sm:$0x3]
    %v4834 = vld [vmem:[%s4208] ss:$8 sm:$0x3]
    %v4835 = vld [vmem:[%s4210] ss:$8 sm:$0x3]
    %v4836 = vld [vmem:[%s4212] ss:$8 sm:$0x3]
    %v4837 = vld [vmem:[%s4214] ss:$8 sm:$0x3]
    %v4838 = vld [vmem:[%s4216] ss:$8 sm:$0x3]
    %v4839 = vsel %vm343, %v4135, 0
    %4841 = vmatprep.subr.mxu0 0.0
    %4842 = vmatpush1.msra.mxu0 %v312
    %4843 = vmatprep.subr.mxu0 0.0
    %4844 = vmatpush1.msra.mxu0 %v313
    %4845 = vmatprep.subr.mxu0 0.0
    %4846 = vmatpush1.msra.mxu0 %v314
    %4847 = vmatprep.subr.mxu0 0.0
    %4848 = vmatpush1.msra.mxu0 %v315
    %4849 = vmatprep.subr.mxu0 0.0
    %4850 = vmatpush1.msra.mxu0 0.0
    %4851 = vmatprep.subr.mxu0 0.0
    %4852 = vmatpush1.msra.mxu0 0.0
    %4853 = vmatprep.subr.mxu0 0.0
    %4854 = vmatpush1.msra.mxu0 0.0
    %4855 = vmatprep.subr.mxu0 0.0
    %4856 = vmatpush1.msra.mxu0 0.0
    %4857 = vmatprep.subr.mxu0 0.0
    %4858 = vmatpush1.msra.mxu0 0.0
    %4859 = vmatprep.subr.mxu0 0.0
    %4860 = vmatpush1.msra.mxu0 0.0
    %4861 = vmatprep.subr.mxu0 0.0
    %4862 = vmatpush1.msra.mxu0 0.0
    %4863 = vmatprep.subr.mxu0 0.0
    %4864 = vmatpush1.msra.mxu0 0.0
    %4865 = vmatprep.subr.mxu0 0.0
    %4866 = vmatpush1.msra.mxu0 0.0
    %4867 = vmatprep.subr.mxu0 0.0
    %4868 = vmatpush1.msra.mxu0 0.0
    %4869 = vmatprep.subr.mxu0 0.0
    %4870 = vmatpush1.msra.mxu0 0.0
    %4871 = vmatprep.subr.mxu0 0.0
    %4872 = vmatpush1.msra.mxu0 0.0
    %4873 = vmatprep.subr.mxu0 0.0
    %4874 = vmatpush1.msra.mxu0 0.0
    %4875 = vmatprep.subr.mxu0 0.0
    %4876 = vmatpush1.msra.mxu0 0.0
    %4877 = vmatprep.subr.mxu0 0.0
    %4878 = vmatpush1.msra.mxu0 0.0
    %4879 = vmatprep.subr.mxu0 0.0
    %4880 = vmatpush1.msra.mxu0 0.0
    %4881 = vmatprep.subr.mxu0 0.0
    %4882 = vmatpush1.msra.mxu0 0.0
    %4883 = vmatprep.subr.mxu0 0.0
    %4884 = vmatpush1.msra.mxu0 0.0
    %4885 = vmatprep.subr.mxu0 0.0
    %4886 = vmatpush1.msra.mxu0 0.0
    %4887 = vmatprep.subr.mxu0 0.0
    %4888 = vmatpush1.msra.mxu0 0.0
    %4889 = vmatprep.subr.mxu0 0.0
    %4890 = vmatpush1.msra.mxu0 0.0
    %4891 = vmatprep.subr.mxu0 0.0
    %4892 = vmatpush1.msra.mxu0 0.0
    %4893 = vmatprep.subr.mxu0 0.0
    %4894 = vmatpush1.msra.mxu0 0.0
    %4895 = vmatprep.subr.mxu0 0.0
    %4896 = vmatpush1.msra.mxu0 0.0
    %4897 = vmatprep.subr.mxu0 0.0
    %4898 = vmatpush1.msra.mxu0 0.0
    %4899 = vmatprep.subr.mxu0 0.0
    %4900 = vmatpush1.msra.mxu0 0.0
    %4901 = vmatprep.subr.mxu0 0.0
    %4902 = vmatpush1.msra.mxu0 0.0
    %4903 = vmatprep.subr.mxu0 0.0
    %4904 = vmatpush1.msra.mxu0 0.0
    %4905 = vmatprep.mubr.f32.mxu0 0.0
    %4906 = vmatmul.mubr.f32.gmra.mrb[0].mxu0 %v4839
    %v4907 = vpop.f32.mrb[0].mxu0
    %v4908 = vadd.f32 %v341, %v4907
    %v4909 = vpop.f32.mrb[0].mxu0
    %4910 = vdwg.mxu0
    %v4912 = vcombine.high %v4908, %v4908
    %v4914 = vunpack.c.l.s4 1966171168
    %v4915 = vunpack.c.0.s8 %v4914
    %v4916 = vlaneseq
    %v4917 = vshrl.u32 %v4916, 7
    %v4918 = vsub.s32 %v4915, %v4917
    %v4919 = vrot.slane %v4908, %v4918
    %v4921 = vunpack.c.l.s4 1966171168
    %v4922 = vunpack.c.0.s8 %v4921
    %v4923 = vlaneseq
    %v4924 = vshrl.u32 %v4923, 7
    %v4925 = vsub.s32 %v4922, %v4924
    %v4926 = vrot.slane %v4912, %v4925
    %v4927 = vcombine.high %v4919, %v4919
    %v4928 = vcombine.high %v4926, %v4926
    %v4930 = vunpack.c.l.s4 1966171168
    %v4931 = vunpack.c.0.s8 %v4930
    %v4932 = vlaneseq
    %v4933 = vshrl.u32 %v4932, 7
    %v4934 = vsub.s32 %v4931, %v4933
    %v4935 = vrot.slane %v4919, %v4934
    %v4937 = vunpack.c.l.s4 1966171168
    %v4938 = vunpack.c.0.s8 %v4937
    %v4939 = vlaneseq
    %v4940 = vshrl.u32 %v4939, 7
    %v4941 = vsub.s32 %v4938, %v4940
    %v4942 = vrot.slane %v4926, %v4941
    %v4944 = vunpack.c.l.s4 1966171168
    %v4945 = vunpack.c.0.s8 %v4944
    %v4946 = vlaneseq
    %v4947 = vshrl.u32 %v4946, 7
    %v4948 = vsub.s32 %v4945, %v4947
    %v4949 = vrot.slane %v4927, %v4948
    %v4951 = vunpack.c.l.s4 1966171168
    %v4952 = vunpack.c.0.s8 %v4951
    %v4953 = vlaneseq
    %v4954 = vshrl.u32 %v4953, 7
    %v4955 = vsub.s32 %v4952, %v4954
    %v4956 = vrot.slane %v4928, %v4955
    %v4957 = vcombine.high %v4935, %v4935
    %v4958 = vcombine.high %v4942, %v4942
    %v4959 = vcombine.high %v4949, %v4949
    %v4960 = vcombine.high %v4956, %v4956
    %v4969 = vadd.f32 %v4831, %v4935
    %v4970 = vadd.f32 %v4832, %v4949
    %v4971 = vadd.f32 %v4833, %v4957
    %v4972 = vadd.f32 %v4834, %v4959
    %v4973 = vadd.f32 %v4835, %v4942
    %v4974 = vadd.f32 %v4836, %v4956
    %v4975 = vadd.f32 %v4837, %v4958
    %v4976 = vadd.f32 %v4838, %v4960
    %v4977 = vxor.u32 %v4969, 2147483648
    %v4978 = vxor.u32 %v4970, 2147483648
    %v4979 = vxor.u32 %v4971, 2147483648
    %v4980 = vxor.u32 %v4972, 2147483648
    %v4981 = vxor.u32 %v4973, 2147483648
    %v4982 = vxor.u32 %v4974, 2147483648
    %v4983 = vxor.u32 %v4975, 2147483648
    %v4984 = vxor.u32 %v4976, 2147483648
    %v4985 = vmul.f32 %v4977, 1.442695
    %v4986 = vpow.pop %v4985
    %v4987 = vmul.f32 %v4978, 1.442695
    %v4988 = vpow.pop %v4987
    %v4989 = vmul.f32 %v4979, 1.442695
    %v4990 = vpow.pop %v4989
    %v4991 = vmul.f32 %v4980, 1.442695
    %v4992 = vpow.pop %v4991
    %v4993 = vmul.f32 %v4981, 1.442695
    %v4994 = vpow.pop %v4993
    %v4995 = vmul.f32 %v4982, 1.442695
    %v4996 = vpow.pop %v4995
    %v4997 = vmul.f32 %v4983, 1.442695
    %v4998 = vpow.pop %v4997
    %v4999 = vmul.f32 %v4984, 1.442695
    %v5000 = vpow.pop %v4999
    %v5001 = vadd.f32 %v4986, 1.0
    %v5002 = vadd.f32 %v4988, 1.0
    %v5003 = vadd.f32 %v4990, 1.0
    %v5004 = vadd.f32 %v4992, 1.0
    %v5005 = vadd.f32 %v4994, 1.0
    %v5006 = vadd.f32 %v4996, 1.0
    %v5007 = vadd.f32 %v4998, 1.0
    %v5008 = vadd.f32 %v5000, 1.0
    %v5009 = vrcp.pop %v5001
    %v5010 = vmul.f32 1.0, %v5009
    %v5011 = vrcp.pop %v5002
    %v5012 = vmul.f32 1.0, %v5011
    %v5013 = vrcp.pop %v5003
    %v5014 = vmul.f32 1.0, %v5013
    %v5015 = vrcp.pop %v5004
    %v5016 = vmul.f32 1.0, %v5015
    %v5017 = vrcp.pop %v5005
    %v5018 = vmul.f32 1.0, %v5017
    %v5019 = vrcp.pop %v5006
    %v5020 = vmul.f32 1.0, %v5019
    %v5021 = vrcp.pop %v5007
    %v5022 = vmul.f32 1.0, %v5021
    %v5023 = vrcp.pop %v5008
    %v5024 = vmul.f32 1.0, %v5023
    %5025 = vrot.lane.b32.xlu0 %v4935, 64
    %v5026 = vpop.permute.xlu0 %5025
    %5027 = vrot.lane.b32.xlu0 %v4949, 64
    %v5028 = vpop.permute.xlu0 %5027
    %5029 = vrot.lane.b32.xlu0 %v4957, 64
    %v5030 = vpop.permute.xlu0 %5029
    %5031 = vrot.lane.b32.xlu0 %v4959, 64
    %v5032 = vpop.permute.xlu0 %5031
    %5033 = vrot.lane.b32.xlu0 %v4942, 64
    %v5034 = vpop.permute.xlu0 %5033
    %5035 = vrot.lane.b32.xlu0 %v4956, 64
    %v5036 = vpop.permute.xlu0 %5035
    %5037 = vrot.lane.b32.xlu0 %v4958, 64
    %v5038 = vpop.permute.xlu0 %5037
    %5039 = vrot.lane.b32.xlu0 %v4960, 64
    %v5040 = vpop.permute.xlu0 %5039
    %v5049 = vmul.f32 %v5010, %v5026
    %v5050 = vmul.f32 %v5012, %v5028
    %v5051 = vmul.f32 %v5014, %v5030
    %v5052 = vmul.f32 %v5016, %v5032
    %v5053 = vmul.f32 %v5018, %v5034
    %v5054 = vmul.f32 %v5020, %v5036
    %v5055 = vmul.f32 %v5022, %v5038
    %v5056 = vmul.f32 %v5024, %v5040
    %5065 = vrot.lane.b32.xlu0 %v5049, 64
    %v5066 = vpop.permute.xlu0 %5065
    %5067 = vrot.lane.b32.xlu0 %v5050, 64
    %v5068 = vpop.permute.xlu0 %5067
    %5069 = vrot.lane.b32.xlu0 %v5051, 64
    %v5070 = vpop.permute.xlu0 %5069
    %5071 = vrot.lane.b32.xlu0 %v5052, 64
    %v5072 = vpop.permute.xlu0 %5071
    %5073 = vrot.lane.b32.xlu0 %v5053, 64
    %v5074 = vpop.permute.xlu0 %5073
    %5075 = vrot.lane.b32.xlu0 %v5054, 64
    %v5076 = vpop.permute.xlu0 %5075
    %5077 = vrot.lane.b32.xlu0 %v5055, 64
    %v5078 = vpop.permute.xlu0 %5077
    %5079 = vrot.lane.b32.xlu0 %v5056, 64
    %v5080 = vpop.permute.xlu0 %5079
    %v5089 = vadd.f32 %v4831, %v5066
    %v5090 = vadd.f32 %v4832, %v5068
    %v5091 = vadd.f32 %v4833, %v5070
    %v5092 = vadd.f32 %v4834, %v5072
    %v5093 = vadd.f32 %v4835, %v5074
    %v5094 = vadd.f32 %v4836, %v5076
    %v5095 = vadd.f32 %v4837, %v5078
    %v5096 = vadd.f32 %v4838, %v5080
    %v5097 = vtanh.pop %v5089
    %v5098 = vtanh.pop %v5090
    %v5099 = vtanh.pop %v5091
    %v5100 = vtanh.pop %v5092
    %v5101 = vtanh.pop %v5093
    %v5102 = vtanh.pop %v5094
    %v5103 = vtanh.pop %v5095
    %v5104 = vtanh.pop %v5096
    %v5105 = vsub.f32 1.0, %v5010
    %v5106 = vsub.f32 1.0, %v5012
    %v5107 = vsub.f32 1.0, %v5014
    %v5108 = vsub.f32 1.0, %v5016
    %v5109 = vsub.f32 1.0, %v5018
    %v5110 = vsub.f32 1.0, %v5020
    %v5111 = vsub.f32 1.0, %v5022
    %v5112 = vsub.f32 1.0, %v5024
    %5121 = vrot.lane.b32.xlu0 %v5097, 96
    %v5122 = vpop.permute.xlu0 %5121
    %5123 = vrot.lane.b32.xlu0 %v5098, 96
    %v5124 = vpop.permute.xlu0 %5123
    %5125 = vrot.lane.b32.xlu0 %v5099, 96
    %v5126 = vpop.permute.xlu0 %5125
    %5127 = vrot.lane.b32.xlu0 %v5100, 96
    %v5128 = vpop.permute.xlu0 %5127
    %5129 = vrot.lane.b32.xlu0 %v5101, 96
    %v5130 = vpop.permute.xlu0 %5129
    %5131 = vrot.lane.b32.xlu0 %v5102, 96
    %v5132 = vpop.permute.xlu0 %5131
    %5133 = vrot.lane.b32.xlu0 %v5103, 96
    %v5134 = vpop.permute.xlu0 %5133
    %5135 = vrot.lane.b32.xlu0 %v5104, 96
    %v5136 = vpop.permute.xlu0 %5135
    %v5145 = vmul.f32 %v5105, %v5122
    %v5146 = vmul.f32 %v5106, %v5124
    %v5147 = vmul.f32 %v5107, %v5126
    %v5148 = vmul.f32 %v5108, %v5128
    %v5149 = vmul.f32 %v5109, %v5130
    %v5150 = vmul.f32 %v5110, %v5132
    %v5151 = vmul.f32 %v5111, %v5134
    %v5152 = vmul.f32 %v5112, %v5136
    %5153 = vrot.lane.b32.xlu0 %v4160, 32
    %v5154 = vpop.permute.xlu0 %5153
    %5155 = vrot.lane.b32.xlu0 %v4174, 32
    %v5156 = vpop.permute.xlu0 %5155
    %5157 = vrot.lane.b32.xlu0 %v4182, 32
    %v5158 = vpop.permute.xlu0 %5157
    %5159 = vrot.lane.b32.xlu0 %v4184, 32
    %v5160 = vpop.permute.xlu0 %5159
    %5161 = vrot.lane.b32.xlu0 %v4167, 32
    %v5162 = vpop.permute.xlu0 %5161
    %5163 = vrot.lane.b32.xlu0 %v4181, 32
    %v5164 = vpop.permute.xlu0 %5163
    %5165 = vrot.lane.b32.xlu0 %v4183, 32
    %v5166 = vpop.permute.xlu0 %5165
    %5167 = vrot.lane.b32.xlu0 %v4185, 32
    %v5168 = vpop.permute.xlu0 %5167
    %v5177 = vmul.f32 %v5010, %v5154
    %v5178 = vmul.f32 %v5012, %v5156
    %v5179 = vmul.f32 %v5014, %v5158
    %v5180 = vmul.f32 %v5016, %v5160
    %v5181 = vmul.f32 %v5018, %v5162
    %v5182 = vmul.f32 %v5020, %v5164
    %v5183 = vmul.f32 %v5022, %v5166
    %v5184 = vmul.f32 %v5024, %v5168
    %v5185 = vadd.f32 %v5145, %v5177
    %v5186 = vadd.f32 %v5146, %v5178
    %v5187 = vadd.f32 %v5147, %v5179
    %v5188 = vadd.f32 %v5148, %v5180
    %v5189 = vadd.f32 %v5149, %v5181
    %v5190 = vadd.f32 %v5150, %v5182
    %v5191 = vadd.f32 %v5151, %v5183
    %v5192 = vadd.f32 %v5152, %v5184
    %v5201 = vcombine.low %v5185, %v5186
    %v5202 = vcombine.low %v5187, %v5188
    %v5203 = vcombine.low %v5189, %v5190
    %v5204 = vcombine.low %v5191, %v5192
    %v5206 = vunpack.c.l.s4 1966171168
    %v5207 = vunpack.c.0.s8 %v5206
    %v5208 = vlaneseq
    %v5209 = vshrl.u32 %v5208, 7
    %v5210 = vsub.s32 %v5207, %v5209
    %v5211 = vrot.slane %v5201, %v5210
    %v5213 = vunpack.c.l.s4 1966171168
    %v5214 = vunpack.c.0.s8 %v5213
    %v5215 = vlaneseq
    %v5216 = vshrl.u32 %v5215, 7
    %v5217 = vsub.s32 %v5214, %v5216
    %v5218 = vrot.slane %v5202, %v5217
    %v5220 = vunpack.c.l.s4 1966171168
    %v5221 = vunpack.c.0.s8 %v5220
    %v5222 = vlaneseq
    %v5223 = vshrl.u32 %v5222, 7
    %v5224 = vsub.s32 %v5221, %v5223
    %v5225 = vrot.slane %v5203, %v5224
    %v5227 = vunpack.c.l.s4 1966171168
    %v5228 = vunpack.c.0.s8 %v5227
    %v5229 = vlaneseq
    %v5230 = vshrl.u32 %v5229, 7
    %v5231 = vsub.s32 %v5228, %v5230
    %v5232 = vrot.slane %v5204, %v5231
    %v5233 = vcombine.low %v5211, %v5218
    %v5234 = vcombine.low %v5225, %v5232
    %v5236 = vunpack.c.l.s4 1966171168
    %v5237 = vunpack.c.0.s8 %v5236
    %v5238 = vlaneseq
    %v5239 = vshrl.u32 %v5238, 7
    %v5240 = vsub.s32 %v5237, %v5239
    %v5241 = vrot.slane %v5233, %v5240
    %v5243 = vunpack.c.l.s4 1966171168
    %v5244 = vunpack.c.0.s8 %v5243
    %v5245 = vlaneseq
    %v5246 = vshrl.u32 %v5245, 7
    %v5247 = vsub.s32 %v5244, %v5246
    %v5248 = vrot.slane %v5234, %v5247
    %v5249 = vcombine.low %v5241, %v5248
    %5250 = vrot.lane.b32.xlu0 %v5249, 96
    %v5251 = vpop.permute.xlu0 %5250
    %v5253 = vsel %vm4657, %v5251, %v4135
    %v5255 = vcombine.high %v5253, %v5253
    %v5257 = vunpack.c.l.s4 1966171168
    %v5258 = vunpack.c.0.s8 %v5257
    %v5259 = vlaneseq
    %v5260 = vshrl.u32 %v5259, 7
    %v5261 = vsub.s32 %v5258, %v5260
    %v5262 = vrot.slane %v5253, %v5261
    %v5264 = vunpack.c.l.s4 1966171168
    %v5265 = vunpack.c.0.s8 %v5264
    %v5266 = vlaneseq
    %v5267 = vshrl.u32 %v5266, 7
    %v5268 = vsub.s32 %v5265, %v5267
    %v5269 = vrot.slane %v5255, %v5268
    %v5270 = vcombine.high %v5262, %v5262
    %v5271 = vcombine.high %v5269, %v5269
    %v5273 = vunpack.c.l.s4 1966171168
    %v5274 = vunpack.c.0.s8 %v5273
    %v5275 = vlaneseq
    %v5276 = vshrl.u32 %v5275, 7
    %v5277 = vsub.s32 %v5274, %v5276
    %v5278 = vrot.slane %v5262, %v5277
    %v5280 = vunpack.c.l.s4 1966171168
    %v5281 = vunpack.c.0.s8 %v5280
    %v5282 = vlaneseq
    %v5283 = vshrl.u32 %v5282, 7
    %v5284 = vsub.s32 %v5281, %v5283
    %v5285 = vrot.slane %v5269, %v5284
    %v5287 = vunpack.c.l.s4 1966171168
    %v5288 = vunpack.c.0.s8 %v5287
    %v5289 = vlaneseq
    %v5290 = vshrl.u32 %v5289, 7
    %v5291 = vsub.s32 %v5288, %v5290
    %v5292 = vrot.slane %v5270, %v5291
    %v5294 = vunpack.c.l.s4 1966171168
    %v5295 = vunpack.c.0.s8 %v5294
    %v5296 = vlaneseq
    %v5297 = vshrl.u32 %v5296, 7
    %v5298 = vsub.s32 %v5295, %v5297
    %v5299 = vrot.slane %v5271, %v5298
    %v5300 = vcombine.high %v5278, %v5278
    %v5301 = vcombine.high %v5285, %v5285
    %v5302 = vcombine.high %v5292, %v5292
    %v5303 = vcombine.high %v5299, %v5299
    %5312 = vst.msk [vmem:[#allocation3 + $0x4] sm:$0x1] %vm800, %v5278
    %5313 = vst.msk [vmem:[#allocation3 + $0xc] sm:$0x1] %vm800, %v5292
    %5314 = vst.msk [vmem:[#allocation3 + $0x14] sm:$0x1] %vm800, %v5300
    %5315 = vst.msk [vmem:[#allocation3 + $0x1c] sm:$0x1] %vm800, %v5302
    %5316 = vst.msk [vmem:[#allocation3 + $0x24] sm:$0x1] %vm800, %v5285
    %5317 = vst.msk [vmem:[#allocation3 + $0x2c] sm:$0x1] %vm800, %v5299
    %5318 = vst.msk [vmem:[#allocation3 + $0x34] sm:$0x1] %vm800, %v5301
    %5319 = vst.msk [vmem:[#allocation3 + $0x3c] sm:$0x1] %vm800, %v5303
    %v5320 = vld [vmem:[%s3699] ss:$8 sm:$0x3]
    %v5321 = vld [vmem:[%s3701] ss:$8 sm:$0x3]
    %v5322 = vld [vmem:[%s3703] ss:$8 sm:$0x3]
    %v5323 = vld [vmem:[%s3705] ss:$8 sm:$0x3]
    %v5324 = vld [vmem:[%s3707] ss:$8 sm:$0x3]
    %v5325 = vld [vmem:[%s3709] ss:$8 sm:$0x3]
    %v5326 = vld [vmem:[%s3711] ss:$8 sm:$0x3]
    %v5327 = vld [vmem:[%s3713] ss:$8 sm:$0x3]
    %v5328 = vsel %vm343, %v4716, 0
    %5330 = vmatprep.subr.mxu0 0.0
    %5331 = vmatpush1.msra.mxu0 %v317
    %5332 = vmatprep.subr.mxu0 0.0
    %5333 = vmatpush1.msra.mxu0 %v318
    %5334 = vmatprep.subr.mxu0 0.0
    %5335 = vmatpush1.msra.mxu0 %v319
    %5336 = vmatprep.subr.mxu0 0.0
    %5337 = vmatpush1.msra.mxu0 %v320
    %5338 = vmatprep.subr.mxu0 0.0
    %5339 = vmatpush1.msra.mxu0 0.0
    %5340 = vmatprep.subr.mxu0 0.0
    %5341 = vmatpush1.msra.mxu0 0.0
    %5342 = vmatprep.subr.mxu0 0.0
    %5343 = vmatpush1.msra.mxu0 0.0
    %5344 = vmatprep.subr.mxu0 0.0
    %5345 = vmatpush1.msra.mxu0 0.0
    %5346 = vmatprep.subr.mxu0 0.0
    %5347 = vmatpush1.msra.mxu0 0.0
    %5348 = vmatprep.subr.mxu0 0.0
    %5349 = vmatpush1.msra.mxu0 0.0
    %5350 = vmatprep.subr.mxu0 0.0
    %5351 = vmatpush1.msra.mxu0 0.0
    %5352 = vmatprep.subr.mxu0 0.0
    %5353 = vmatpush1.msra.mxu0 0.0
    %5354 = vmatprep.subr.mxu0 0.0
    %5355 = vmatpush1.msra.mxu0 0.0
    %5356 = vmatprep.subr.mxu0 0.0
    %5357 = vmatpush1.msra.mxu0 0.0
    %5358 = vmatprep.subr.mxu0 0.0
    %5359 = vmatpush1.msra.mxu0 0.0
    %5360 = vmatprep.subr.mxu0 0.0
    %5361 = vmatpush1.msra.mxu0 0.0
    %5362 = vmatprep.subr.mxu0 0.0
    %5363 = vmatpush1.msra.mxu0 0.0
    %5364 = vmatprep.subr.mxu0 0.0
    %5365 = vmatpush1.msra.mxu0 0.0
    %5366 = vmatprep.subr.mxu0 0.0
    %5367 = vmatpush1.msra.mxu0 0.0
    %5368 = vmatprep.subr.mxu0 0.0
    %5369 = vmatpush1.msra.mxu0 0.0
    %5370 = vmatprep.subr.mxu0 0.0
    %5371 = vmatpush1.msra.mxu0 0.0
    %5372 = vmatprep.subr.mxu0 0.0
    %5373 = vmatpush1.msra.mxu0 0.0
    %5374 = vmatprep.subr.mxu0 0.0
    %5375 = vmatpush1.msra.mxu0 0.0
    %5376 = vmatprep.subr.mxu0 0.0
    %5377 = vmatpush1.msra.mxu0 0.0
    %5378 = vmatprep.subr.mxu0 0.0
    %5379 = vmatpush1.msra.mxu0 0.0
    %5380 = vmatprep.subr.mxu0 0.0
    %5381 = vmatpush1.msra.mxu0 0.0
    %5382 = vmatprep.subr.mxu0 0.0
    %5383 = vmatpush1.msra.mxu0 0.0
    %5384 = vmatprep.subr.mxu0 0.0
    %5385 = vmatpush1.msra.mxu0 0.0
    %5386 = vmatprep.subr.mxu0 0.0
    %5387 = vmatpush1.msra.mxu0 0.0
    %5388 = vmatprep.subr.mxu0 0.0
    %5389 = vmatpush1.msra.mxu0 0.0
    %5390 = vmatprep.subr.mxu0 0.0
    %5391 = vmatpush1.msra.mxu0 0.0
    %5392 = vmatprep.subr.mxu0 0.0
    %5393 = vmatpush1.msra.mxu0 0.0
    %5394 = vmatprep.mubr.f32.mxu0 0.0
    %5395 = vmatmul.mubr.f32.gmra.mrb[0].mxu0 %v5328
    %v5396 = vpop.f32.mrb[0].mxu0
    %v5397 = vadd.f32 %v829, %v5396
    %v5398 = vpop.f32.mrb[0].mxu0
    %5399 = vdwg.mxu0
    %v5401 = vcombine.high %v5397, %v5397
    %v5403 = vunpack.c.l.s4 1966171168
    %v5404 = vunpack.c.0.s8 %v5403
    %v5405 = vlaneseq
    %v5406 = vshrl.u32 %v5405, 7
    %v5407 = vsub.s32 %v5404, %v5406
    %v5408 = vrot.slane %v5397, %v5407
    %v5410 = vunpack.c.l.s4 1966171168
    %v5411 = vunpack.c.0.s8 %v5410
    %v5412 = vlaneseq
    %v5413 = vshrl.u32 %v5412, 7
    %v5414 = vsub.s32 %v5411, %v5413
    %v5415 = vrot.slane %v5401, %v5414
    %v5416 = vcombine.high %v5408, %v5408
    %v5417 = vcombine.high %v5415, %v5415
    %v5419 = vunpack.c.l.s4 1966171168
    %v5420 = vunpack.c.0.s8 %v5419
    %v5421 = vlaneseq
    %v5422 = vshrl.u32 %v5421, 7
    %v5423 = vsub.s32 %v5420, %v5422
    %v5424 = vrot.slane %v5408, %v5423
    %v5426 = vunpack.c.l.s4 1966171168
    %v5427 = vunpack.c.0.s8 %v5426
    %v5428 = vlaneseq
    %v5429 = vshrl.u32 %v5428, 7
    %v5430 = vsub.s32 %v5427, %v5429
    %v5431 = vrot.slane %v5415, %v5430
    %v5433 = vunpack.c.l.s4 1966171168
    %v5434 = vunpack.c.0.s8 %v5433
    %v5435 = vlaneseq
    %v5436 = vshrl.u32 %v5435, 7
    %v5437 = vsub.s32 %v5434, %v5436
    %v5438 = vrot.slane %v5416, %v5437
    %v5440 = vunpack.c.l.s4 1966171168
    %v5441 = vunpack.c.0.s8 %v5440
    %v5442 = vlaneseq
    %v5443 = vshrl.u32 %v5442, 7
    %v5444 = vsub.s32 %v5441, %v5443
    %v5445 = vrot.slane %v5417, %v5444
    %v5446 = vcombine.high %v5424, %v5424
    %v5447 = vcombine.high %v5431, %v5431
    %v5448 = vcombine.high %v5438, %v5438
    %v5449 = vcombine.high %v5445, %v5445
    %5450 = vrot.lane.b32.xlu0 %v5424, 96
    %v5451 = vpop.permute.xlu0 %5450
    %5452 = vrot.lane.b32.xlu0 %v5438, 96
    %v5453 = vpop.permute.xlu0 %5452
    %5454 = vrot.lane.b32.xlu0 %v5446, 96
    %v5455 = vpop.permute.xlu0 %5454
    %5456 = vrot.lane.b32.xlu0 %v5448, 96
    %v5457 = vpop.permute.xlu0 %5456
    %5458 = vrot.lane.b32.xlu0 %v5431, 96
    %v5459 = vpop.permute.xlu0 %5458
    %5460 = vrot.lane.b32.xlu0 %v5445, 96
    %v5461 = vpop.permute.xlu0 %5460
    %5462 = vrot.lane.b32.xlu0 %v5447, 96
    %v5463 = vpop.permute.xlu0 %5462
    %5464 = vrot.lane.b32.xlu0 %v5449, 96
    %v5465 = vpop.permute.xlu0 %5464
    %v5474 = vadd.f32 %v5320, %v5451
    %v5475 = vadd.f32 %v5321, %v5453
    %v5476 = vadd.f32 %v5322, %v5455
    %v5477 = vadd.f32 %v5323, %v5457
    %v5478 = vadd.f32 %v5324, %v5459
    %v5479 = vadd.f32 %v5325, %v5461
    %v5480 = vadd.f32 %v5326, %v5463
    %v5481 = vadd.f32 %v5327, %v5465
    %v5482 = vxor.u32 %v5474, 2147483648
    %v5483 = vxor.u32 %v5475, 2147483648
    %v5484 = vxor.u32 %v5476, 2147483648
    %v5485 = vxor.u32 %v5477, 2147483648
    %v5486 = vxor.u32 %v5478, 2147483648
    %v5487 = vxor.u32 %v5479, 2147483648
    %v5488 = vxor.u32 %v5480, 2147483648
    %v5489 = vxor.u32 %v5481, 2147483648
    %v5490 = vmul.f32 %v5482, 1.442695
    %v5491 = vpow.pop %v5490
    %v5492 = vmul.f32 %v5483, 1.442695
    %v5493 = vpow.pop %v5492
    %v5494 = vmul.f32 %v5484, 1.442695
    %v5495 = vpow.pop %v5494
    %v5496 = vmul.f32 %v5485, 1.442695
    %v5497 = vpow.pop %v5496
    %v5498 = vmul.f32 %v5486, 1.442695
    %v5499 = vpow.pop %v5498
    %v5500 = vmul.f32 %v5487, 1.442695
    %v5501 = vpow.pop %v5500
    %v5502 = vmul.f32 %v5488, 1.442695
    %v5503 = vpow.pop %v5502
    %v5504 = vmul.f32 %v5489, 1.442695
    %v5505 = vpow.pop %v5504
    %v5506 = vadd.f32 %v5491, 1.0
    %v5507 = vadd.f32 %v5493, 1.0
    %v5508 = vadd.f32 %v5495, 1.0
    %v5509 = vadd.f32 %v5497, 1.0
    %v5510 = vadd.f32 %v5499, 1.0
    %v5511 = vadd.f32 %v5501, 1.0
    %v5512 = vadd.f32 %v5503, 1.0
    %v5513 = vadd.f32 %v5505, 1.0
    %v5514 = vrcp.pop %v5506
    %v5515 = vmul.f32 1.0, %v5514
    %v5516 = vrcp.pop %v5507
    %v5517 = vmul.f32 1.0, %v5516
    %v5518 = vrcp.pop %v5508
    %v5519 = vmul.f32 1.0, %v5518
    %v5520 = vrcp.pop %v5509
    %v5521 = vmul.f32 1.0, %v5520
    %v5522 = vrcp.pop %v5510
    %v5523 = vmul.f32 1.0, %v5522
    %v5524 = vrcp.pop %v5511
    %v5525 = vmul.f32 1.0, %v5524
    %v5526 = vrcp.pop %v5512
    %v5527 = vmul.f32 1.0, %v5526
    %v5528 = vrcp.pop %v5513
    %v5529 = vmul.f32 1.0, %v5528
    %v5538 = vrot.slane %v5320, 1
    %v5539 = vrot.slane %v5321, 1
    %v5540 = vrot.slane %v5322, 1
    %v5541 = vrot.slane %v5323, 1
    %v5542 = vrot.slane %v5324, 1
    %v5543 = vrot.slane %v5325, 1
    %v5544 = vrot.slane %v5326, 1
    %v5545 = vrot.slane %v5327, 1
    %v5554 = vadd.f32 %v5538, %v5451
    %v5555 = vadd.f32 %v5539, %v5453
    %v5556 = vadd.f32 %v5540, %v5455
    %v5557 = vadd.f32 %v5541, %v5457
    %v5558 = vadd.f32 %v5542, %v5459
    %v5559 = vadd.f32 %v5543, %v5461
    %v5560 = vadd.f32 %v5544, %v5463
    %v5561 = vadd.f32 %v5545, %v5465
    %v5562 = vxor.u32 %v5554, 2147483648
    %v5563 = vxor.u32 %v5555, 2147483648
    %v5564 = vxor.u32 %v5556, 2147483648
    %v5565 = vxor.u32 %v5557, 2147483648
    %v5566 = vxor.u32 %v5558, 2147483648
    %v5567 = vxor.u32 %v5559, 2147483648
    %v5568 = vxor.u32 %v5560, 2147483648
    %v5569 = vxor.u32 %v5561, 2147483648
    %v5570 = vmul.f32 %v5562, 1.442695
    %v5571 = vpow.pop %v5570
    %v5572 = vmul.f32 %v5563, 1.442695
    %v5573 = vpow.pop %v5572
    %v5574 = vmul.f32 %v5564, 1.442695
    %v5575 = vpow.pop %v5574
    %v5576 = vmul.f32 %v5565, 1.442695
    %v5577 = vpow.pop %v5576
    %v5578 = vmul.f32 %v5566, 1.442695
    %v5579 = vpow.pop %v5578
    %v5580 = vmul.f32 %v5567, 1.442695
    %v5581 = vpow.pop %v5580
    %v5582 = vmul.f32 %v5568, 1.442695
    %v5583 = vpow.pop %v5582
    %v5584 = vmul.f32 %v5569, 1.442695
    %v5585 = vpow.pop %v5584
    %v5586 = vadd.f32 %v5571, 1.0
    %v5587 = vadd.f32 %v5573, 1.0
    %v5588 = vadd.f32 %v5575, 1.0
    %v5589 = vadd.f32 %v5577, 1.0
    %v5590 = vadd.f32 %v5579, 1.0
    %v5591 = vadd.f32 %v5581, 1.0
    %v5592 = vadd.f32 %v5583, 1.0
    %v5593 = vadd.f32 %v5585, 1.0
    %v5594 = vrcp.pop %v5586
    %v5595 = vmul.f32 1.0, %v5594
    %v5596 = vrcp.pop %v5587
    %v5597 = vmul.f32 1.0, %v5596
    %v5598 = vrcp.pop %v5588
    %v5599 = vmul.f32 1.0, %v5598
    %v5600 = vrcp.pop %v5589
    %v5601 = vmul.f32 1.0, %v5600
    %v5602 = vrcp.pop %v5590
    %v5603 = vmul.f32 1.0, %v5602
    %v5604 = vrcp.pop %v5591
    %v5605 = vmul.f32 1.0, %v5604
    %v5606 = vrcp.pop %v5592
    %v5607 = vmul.f32 1.0, %v5606
    %v5608 = vrcp.pop %v5593
    %v5609 = vmul.f32 1.0, %v5608
    %5610 = vrot.lane.b32.xlu0 %v5424, 32
    %v5611 = vpop.permute.xlu0 %5610
    %5612 = vrot.lane.b32.xlu0 %v5438, 32
    %v5613 = vpop.permute.xlu0 %5612
    %5614 = vrot.lane.b32.xlu0 %v5446, 32
    %v5615 = vpop.permute.xlu0 %5614
    %5616 = vrot.lane.b32.xlu0 %v5448, 32
    %v5617 = vpop.permute.xlu0 %5616
    %5618 = vrot.lane.b32.xlu0 %v5431, 32
    %v5619 = vpop.permute.xlu0 %5618
    %5620 = vrot.lane.b32.xlu0 %v5445, 32
    %v5621 = vpop.permute.xlu0 %5620
    %5622 = vrot.lane.b32.xlu0 %v5447, 32
    %v5623 = vpop.permute.xlu0 %5622
    %5624 = vrot.lane.b32.xlu0 %v5449, 32
    %v5625 = vpop.permute.xlu0 %5624
    %v5634 = vmul.f32 %v5515, %v5611
    %v5635 = vmul.f32 %v5517, %v5613
    %v5636 = vmul.f32 %v5519, %v5615
    %v5637 = vmul.f32 %v5521, %v5617
    %v5638 = vmul.f32 %v5523, %v5619
    %v5639 = vmul.f32 %v5525, %v5621
    %v5640 = vmul.f32 %v5527, %v5623
    %v5641 = vmul.f32 %v5529, %v5625
    %5642 = vrot.lane.b32.xlu0 %v5320, 96
    %v5643 = vpop.permute.xlu0 %5642
    %5644 = vrot.lane.b32.xlu0 %v5321, 96
    %v5645 = vpop.permute.xlu0 %5644
    %5646 = vrot.lane.b32.xlu0 %v5322, 96
    %v5647 = vpop.permute.xlu0 %5646
    %5648 = vrot.lane.b32.xlu0 %v5323, 96
    %v5649 = vpop.permute.xlu0 %5648
    %5650 = vrot.lane.b32.xlu0 %v5324, 96
    %v5651 = vpop.permute.xlu0 %5650
    %5652 = vrot.lane.b32.xlu0 %v5325, 96
    %v5653 = vpop.permute.xlu0 %5652
    %5654 = vrot.lane.b32.xlu0 %v5326, 96
    %v5655 = vpop.permute.xlu0 %5654
    %5656 = vrot.lane.b32.xlu0 %v5327, 96
    %v5657 = vpop.permute.xlu0 %5656
    %v5658 = vrot.slane %v5643, 1
    %v5659 = vrot.slane %v5645, 1
    %v5660 = vrot.slane %v5647, 1
    %v5661 = vrot.slane %v5649, 1
    %v5662 = vrot.slane %v5651, 1
    %v5663 = vrot.slane %v5653, 1
    %v5664 = vrot.slane %v5655, 1
    %v5665 = vrot.slane %v5657, 1
    %5682 = vrot.lane.b32.xlu0 %v5634, 32
    %v5683 = vpop.permute.xlu0 %5682
    %5684 = vrot.lane.b32.xlu0 %v5635, 32
    %v5685 = vpop.permute.xlu0 %5684
    %5686 = vrot.lane.b32.xlu0 %v5636, 32
    %v5687 = vpop.permute.xlu0 %5686
    %5688 = vrot.lane.b32.xlu0 %v5637, 32
    %v5689 = vpop.permute.xlu0 %5688
    %5690 = vrot.lane.b32.xlu0 %v5638, 32
    %v5691 = vpop.permute.xlu0 %5690
    %5692 = vrot.lane.b32.xlu0 %v5639, 32
    %v5693 = vpop.permute.xlu0 %5692
    %5694 = vrot.lane.b32.xlu0 %v5640, 32
    %v5695 = vpop.permute.xlu0 %5694
    %5696 = vrot.lane.b32.xlu0 %v5641, 32
    %v5697 = vpop.permute.xlu0 %5696
    %v5706 = vadd.f32 %v5658, %v5683
    %v5707 = vadd.f32 %v5659, %v5685
    %v5708 = vadd.f32 %v5660, %v5687
    %v5709 = vadd.f32 %v5661, %v5689
    %v5710 = vadd.f32 %v5662, %v5691
    %v5711 = vadd.f32 %v5663, %v5693
    %v5712 = vadd.f32 %v5664, %v5695
    %v5713 = vadd.f32 %v5665, %v5697
    %v5714 = vtanh.pop %v5706
    %v5715 = vtanh.pop %v5707
    %v5716 = vtanh.pop %v5708
    %v5717 = vtanh.pop %v5709
    %v5718 = vtanh.pop %v5710
    %v5719 = vtanh.pop %v5711
    %v5720 = vtanh.pop %v5712
    %v5721 = vtanh.pop %v5713
    %v5722 = vsub.f32 1.0, %v5595
    %v5723 = vsub.f32 1.0, %v5597
    %v5724 = vsub.f32 1.0, %v5599
    %v5725 = vsub.f32 1.0, %v5601
    %v5726 = vsub.f32 1.0, %v5603
    %v5727 = vsub.f32 1.0, %v5605
    %v5728 = vsub.f32 1.0, %v5607
    %v5729 = vsub.f32 1.0, %v5609
    %v5730 = vmul.f32 %v5722, %v5714
    %v5731 = vmul.f32 %v5723, %v5715
    %v5732 = vmul.f32 %v5724, %v5716
    %v5733 = vmul.f32 %v5725, %v5717
    %v5734 = vmul.f32 %v5726, %v5718
    %v5735 = vmul.f32 %v5727, %v5719
    %v5736 = vmul.f32 %v5728, %v5720
    %v5737 = vmul.f32 %v5729, %v5721
    %v5746 = vmul.f32 %v5595, %v4741
    %v5747 = vmul.f32 %v5597, %v4755
    %v5748 = vmul.f32 %v5599, %v4763
    %v5749 = vmul.f32 %v5601, %v4765
    %v5750 = vmul.f32 %v5603, %v4748
    %v5751 = vmul.f32 %v5605, %v4762
    %v5752 = vmul.f32 %v5607, %v4764
    %v5753 = vmul.f32 %v5609, %v4766
    %v5754 = vadd.f32 %v5730, %v5746
    %v5755 = vadd.f32 %v5731, %v5747
    %v5756 = vadd.f32 %v5732, %v5748
    %v5757 = vadd.f32 %v5733, %v5749
    %v5758 = vadd.f32 %v5734, %v5750
    %v5759 = vadd.f32 %v5735, %v5751
    %v5760 = vadd.f32 %v5736, %v5752
    %v5761 = vadd.f32 %v5737, %v5753
    %v5770 = vcombine.low %v5754, %v5755
    %v5771 = vcombine.low %v5756, %v5757
    %v5772 = vcombine.low %v5758, %v5759
    %v5773 = vcombine.low %v5760, %v5761
    %v5775 = vunpack.c.l.s4 1966171168
    %v5776 = vunpack.c.0.s8 %v5775
    %v5777 = vlaneseq
    %v5778 = vshrl.u32 %v5777, 7
    %v5779 = vsub.s32 %v5776, %v5778
    %v5780 = vrot.slane %v5770, %v5779
    %v5782 = vunpack.c.l.s4 1966171168
    %v5783 = vunpack.c.0.s8 %v5782
    %v5784 = vlaneseq
    %v5785 = vshrl.u32 %v5784, 7
    %v5786 = vsub.s32 %v5783, %v5785
    %v5787 = vrot.slane %v5771, %v5786
    %v5789 = vunpack.c.l.s4 1966171168
    %v5790 = vunpack.c.0.s8 %v5789
    %v5791 = vlaneseq
    %v5792 = vshrl.u32 %v5791, 7
    %v5793 = vsub.s32 %v5790, %v5792
    %v5794 = vrot.slane %v5772, %v5793
    %v5796 = vunpack.c.l.s4 1966171168
    %v5797 = vunpack.c.0.s8 %v5796
    %v5798 = vlaneseq
    %v5799 = vshrl.u32 %v5798, 7
    %v5800 = vsub.s32 %v5797, %v5799
    %v5801 = vrot.slane %v5773, %v5800
    %v5802 = vcombine.low %v5780, %v5787
    %v5803 = vcombine.low %v5794, %v5801
    %v5805 = vunpack.c.l.s4 1966171168
    %v5806 = vunpack.c.0.s8 %v5805
    %v5807 = vlaneseq
    %v5808 = vshrl.u32 %v5807, 7
    %v5809 = vsub.s32 %v5806, %v5808
    %v5810 = vrot.slane %v5802, %v5809
    %v5812 = vunpack.c.l.s4 1966171168
    %v5813 = vunpack.c.0.s8 %v5812
    %v5814 = vlaneseq
    %v5815 = vshrl.u32 %v5814, 7
    %v5816 = vsub.s32 %v5813, %v5815
    %v5817 = vrot.slane %v5803, %v5816
    %v5818 = vcombine.low %v5810, %v5817
    %v5820 = vsel %vm4074, %v5818, %v4716
    %v5822 = vcombine.high %v5820, %v5820
    %v5824 = vunpack.c.l.s4 1966171168
    %v5825 = vunpack.c.0.s8 %v5824
    %v5826 = vlaneseq
    %v5827 = vshrl.u32 %v5826, 7
    %v5828 = vsub.s32 %v5825, %v5827
    %v5829 = vrot.slane %v5820, %v5828
    %v5831 = vunpack.c.l.s4 1966171168
    %v5832 = vunpack.c.0.s8 %v5831
    %v5833 = vlaneseq
    %v5834 = vshrl.u32 %v5833, 7
    %v5835 = vsub.s32 %v5832, %v5834
    %v5836 = vrot.slane %v5822, %v5835
    %v5837 = vcombine.high %v5829, %v5829
    %v5838 = vcombine.high %v5836, %v5836
    %v5840 = vunpack.c.l.s4 1966171168
    %v5841 = vunpack.c.0.s8 %v5840
    %v5842 = vlaneseq
    %v5843 = vshrl.u32 %v5842, 7
    %v5844 = vsub.s32 %v5841, %v5843
    %v5845 = vrot.slane %v5829, %v5844
    %v5847 = vunpack.c.l.s4 1966171168
    %v5848 = vunpack.c.0.s8 %v5847
    %v5849 = vlaneseq
    %v5850 = vshrl.u32 %v5849, 7
    %v5851 = vsub.s32 %v5848, %v5850
    %v5852 = vrot.slane %v5836, %v5851
    %v5854 = vunpack.c.l.s4 1966171168
    %v5855 = vunpack.c.0.s8 %v5854
    %v5856 = vlaneseq
    %v5857 = vshrl.u32 %v5856, 7
    %v5858 = vsub.s32 %v5855, %v5857
    %v5859 = vrot.slane %v5837, %v5858
    %v5861 = vunpack.c.l.s4 1966171168
    %v5862 = vunpack.c.0.s8 %v5861
    %v5863 = vlaneseq
    %v5864 = vshrl.u32 %v5863, 7
    %v5865 = vsub.s32 %v5862, %v5864
    %v5866 = vrot.slane %v5838, %v5865
    %v5867 = vcombine.high %v5845, %v5845
    %v5868 = vcombine.high %v5852, %v5852
    %v5869 = vcombine.high %v5859, %v5859
    %v5870 = vcombine.high %v5866, %v5866
    %v5871 = vlaneseq
    %v5872 = vshrl.u32 %v5871, 7
    %v5873 = vsub.s32 0, %v5872
    %v5874 = vrot.slane %v5845, %v5873
    %v5875 = vlaneseq
    %v5876 = vshrl.u32 %v5875, 7
    %v5877 = vsub.s32 0, %v5876
    %v5878 = vrot.slane %v5859, %v5877
    %v5879 = vlaneseq
    %v5880 = vshrl.u32 %v5879, 7
    %v5881 = vsub.s32 0, %v5880
    %v5882 = vrot.slane %v5867, %v5881
    %v5883 = vlaneseq
    %v5884 = vshrl.u32 %v5883, 7
    %v5885 = vsub.s32 0, %v5884
    %v5886 = vrot.slane %v5869, %v5885
    %v5887 = vlaneseq
    %v5888 = vshrl.u32 %v5887, 7
    %v5889 = vsub.s32 0, %v5888
    %v5890 = vrot.slane %v5852, %v5889
    %v5891 = vlaneseq
    %v5892 = vshrl.u32 %v5891, 7
    %v5893 = vsub.s32 0, %v5892
    %v5894 = vrot.slane %v5866, %v5893
    %v5895 = vlaneseq
    %v5896 = vshrl.u32 %v5895, 7
    %v5897 = vsub.s32 0, %v5896
    %v5898 = vrot.slane %v5868, %v5897
    %v5899 = vlaneseq
    %v5900 = vshrl.u32 %v5899, 7
    %v5901 = vsub.s32 0, %v5900
    %v5902 = vrot.slane %v5870, %v5901
    %5903 = vrot.lane.b32.xlu0 %v5874, 32
    %v5904 = vpop.permute.xlu0 %5903
    %5905 = vrot.lane.b32.xlu0 %v5878, 32
    %v5906 = vpop.permute.xlu0 %5905
    %5907 = vrot.lane.b32.xlu0 %v5882, 32
    %v5908 = vpop.permute.xlu0 %5907
    %5909 = vrot.lane.b32.xlu0 %v5886, 32
    %v5910 = vpop.permute.xlu0 %5909
    %5911 = vrot.lane.b32.xlu0 %v5890, 32
    %v5912 = vpop.permute.xlu0 %5911
    %5913 = vrot.lane.b32.xlu0 %v5894, 32
    %v5914 = vpop.permute.xlu0 %5913
    %5915 = vrot.lane.b32.xlu0 %v5898, 32
    %v5916 = vpop.permute.xlu0 %5915
    %5917 = vrot.lane.b32.xlu0 %v5902, 32
    %v5918 = vpop.permute.xlu0 %5917
    %5927 = vst.msk [vmem:[#allocation3 + $0x3] sm:$0x1] %vm1426, %v5904
    %5928 = vst.msk [vmem:[#allocation3 + $0xb] sm:$0x1] %vm1426, %v5906
    %5929 = vst.msk [vmem:[#allocation3 + $0x13] sm:$0x1] %vm1426, %v5908
    %5930 = vst.msk [vmem:[#allocation3 + $0x1b] sm:$0x1] %vm1426, %v5910
    %5931 = vst.msk [vmem:[#allocation3 + $0x23] sm:$0x1] %vm1426, %v5912
    %5932 = vst.msk [vmem:[#allocation3 + $0x2b] sm:$0x1] %vm1426, %v5914
    %5933 = vst.msk [vmem:[#allocation3 + $0x33] sm:$0x1] %vm1426, %v5916
    %5934 = vst.msk [vmem:[#allocation3 + $0x3b] sm:$0x1] %vm1426, %v5918
    %v5935 = vld [vmem:[%s3070] ss:$8 sm:$0x3]
    %v5936 = vld [vmem:[%s3072] ss:$8 sm:$0x3]
    %v5937 = vld [vmem:[%s3074] ss:$8 sm:$0x3]
    %v5938 = vld [vmem:[%s3076] ss:$8 sm:$0x3]
    %v5939 = vld [vmem:[%s3078] ss:$8 sm:$0x3]
    %v5940 = vld [vmem:[%s3080] ss:$8 sm:$0x3]
    %v5941 = vld [vmem:[%s3082] ss:$8 sm:$0x3]
    %v5942 = vld [vmem:[%s3084] ss:$8 sm:$0x3]
    %v5943 = vsel %vm343, %v5253, 0
    %5945 = vmatprep.subr.mxu0 0.0
    %5946 = vmatpush1.msra.mxu0 %v312
    %5947 = vmatprep.subr.mxu0 0.0
    %5948 = vmatpush1.msra.mxu0 %v313
    %5949 = vmatprep.subr.mxu0 0.0
    %5950 = vmatpush1.msra.mxu0 %v314
    %5951 = vmatprep.subr.mxu0 0.0
    %5952 = vmatpush1.msra.mxu0 %v315
    %5953 = vmatprep.subr.mxu0 0.0
    %5954 = vmatpush1.msra.mxu0 0.0
    %5955 = vmatprep.subr.mxu0 0.0
    %5956 = vmatpush1.msra.mxu0 0.0
    %5957 = vmatprep.subr.mxu0 0.0
    %5958 = vmatpush1.msra.mxu0 0.0
    %5959 = vmatprep.subr.mxu0 0.0
    %5960 = vmatpush1.msra.mxu0 0.0
    %5961 = vmatprep.subr.mxu0 0.0
    %5962 = vmatpush1.msra.mxu0 0.0
    %5963 = vmatprep.subr.mxu0 0.0
    %5964 = vmatpush1.msra.mxu0 0.0
    %5965 = vmatprep.subr.mxu0 0.0
    %5966 = vmatpush1.msra.mxu0 0.0
    %5967 = vmatprep.subr.mxu0 0.0
    %5968 = vmatpush1.msra.mxu0 0.0
    %5969 = vmatprep.subr.mxu0 0.0
    %5970 = vmatpush1.msra.mxu0 0.0
    %5971 = vmatprep.subr.mxu0 0.0
    %5972 = vmatpush1.msra.mxu0 0.0
    %5973 = vmatprep.subr.mxu0 0.0
    %5974 = vmatpush1.msra.mxu0 0.0
    %5975 = vmatprep.subr.mxu0 0.0
    %5976 = vmatpush1.msra.mxu0 0.0
    %5977 = vmatprep.subr.mxu0 0.0
    %5978 = vmatpush1.msra.mxu0 0.0
    %5979 = vmatprep.subr.mxu0 0.0
    %5980 = vmatpush1.msra.mxu0 0.0
    %5981 = vmatprep.subr.mxu0 0.0
    %5982 = vmatpush1.msra.mxu0 0.0
    %5983 = vmatprep.subr.mxu0 0.0
    %5984 = vmatpush1.msra.mxu0 0.0
    %5985 = vmatprep.subr.mxu0 0.0
    %5986 = vmatpush1.msra.mxu0 0.0
    %5987 = vmatprep.subr.mxu0 0.0
    %5988 = vmatpush1.msra.mxu0 0.0
    %5989 = vmatprep.subr.mxu0 0.0
    %5990 = vmatpush1.msra.mxu0 0.0
    %5991 = vmatprep.subr.mxu0 0.0
    %5992 = vmatpush1.msra.mxu0 0.0
    %5993 = vmatprep.subr.mxu0 0.0
    %5994 = vmatpush1.msra.mxu0 0.0
    %5995 = vmatprep.subr.mxu0 0.0
    %5996 = vmatpush1.msra.mxu0 0.0
    %5997 = vmatprep.subr.mxu0 0.0
    %5998 = vmatpush1.msra.mxu0 0.0
    %5999 = vmatprep.subr.mxu0 0.0
    %6000 = vmatpush1.msra.mxu0 0.0
    %6001 = vmatprep.subr.mxu0 0.0
    %6002 = vmatpush1.msra.mxu0 0.0
    %6003 = vmatprep.subr.mxu0 0.0
    %6004 = vmatpush1.msra.mxu0 0.0
    %6005 = vmatprep.subr.mxu0 0.0
    %6006 = vmatpush1.msra.mxu0 0.0
    %6007 = vmatprep.subr.mxu0 0.0
    %6008 = vmatpush1.msra.mxu0 0.0
    %6009 = vmatprep.mubr.f32.mxu0 0.0
    %6010 = vmatmul.mubr.f32.gmra.mrb[0].mxu0 %v5943
    %v6011 = vpop.f32.mrb[0].mxu0
    %v6012 = vadd.f32 %v341, %v6011
    %v6013 = vpop.f32.mrb[0].mxu0
    %6014 = vdwg.mxu0
    %v6016 = vcombine.high %v6012, %v6012
    %v6018 = vunpack.c.l.s4 1966171168
    %v6019 = vunpack.c.0.s8 %v6018
    %v6020 = vlaneseq
    %v6021 = vshrl.u32 %v6020, 7
    %v6022 = vsub.s32 %v6019, %v6021
    %v6023 = vrot.slane %v6012, %v6022
    %v6025 = vunpack.c.l.s4 1966171168
    %v6026 = vunpack.c.0.s8 %v6025
    %v6027 = vlaneseq
    %v6028 = vshrl.u32 %v6027, 7
    %v6029 = vsub.s32 %v6026, %v6028
    %v6030 = vrot.slane %v6016, %v6029
    %v6031 = vcombine.high %v6023, %v6023
    %v6032 = vcombine.high %v6030, %v6030
    %v6034 = vunpack.c.l.s4 1966171168
    %v6035 = vunpack.c.0.s8 %v6034
    %v6036 = vlaneseq
    %v6037 = vshrl.u32 %v6036, 7
    %v6038 = vsub.s32 %v6035, %v6037
    %v6039 = vrot.slane %v6023, %v6038
    %v6041 = vunpack.c.l.s4 1966171168
    %v6042 = vunpack.c.0.s8 %v6041
    %v6043 = vlaneseq
    %v6044 = vshrl.u32 %v6043, 7
    %v6045 = vsub.s32 %v6042, %v6044
    %v6046 = vrot.slane %v6030, %v6045
    %v6048 = vunpack.c.l.s4 1966171168
    %v6049 = vunpack.c.0.s8 %v6048
    %v6050 = vlaneseq
    %v6051 = vshrl.u32 %v6050, 7
    %v6052 = vsub.s32 %v6049, %v6051
    %v6053 = vrot.slane %v6031, %v6052
    %v6055 = vunpack.c.l.s4 1966171168
    %v6056 = vunpack.c.0.s8 %v6055
    %v6057 = vlaneseq
    %v6058 = vshrl.u32 %v6057, 7
    %v6059 = vsub.s32 %v6056, %v6058
    %v6060 = vrot.slane %v6032, %v6059
    %v6061 = vcombine.high %v6039, %v6039
    %v6062 = vcombine.high %v6046, %v6046
    %v6063 = vcombine.high %v6053, %v6053
    %v6064 = vcombine.high %v6060, %v6060
    %v6073 = vadd.f32 %v5935, %v6039
    %v6074 = vadd.f32 %v5936, %v6053
    %v6075 = vadd.f32 %v5937, %v6061
    %v6076 = vadd.f32 %v5938, %v6063
    %v6077 = vadd.f32 %v5939, %v6046
    %v6078 = vadd.f32 %v5940, %v6060
    %v6079 = vadd.f32 %v5941, %v6062
    %v6080 = vadd.f32 %v5942, %v6064
    %v6081 = vxor.u32 %v6073, 2147483648
    %v6082 = vxor.u32 %v6074, 2147483648
    %v6083 = vxor.u32 %v6075, 2147483648
    %v6084 = vxor.u32 %v6076, 2147483648
    %v6085 = vxor.u32 %v6077, 2147483648
    %v6086 = vxor.u32 %v6078, 2147483648
    %v6087 = vxor.u32 %v6079, 2147483648
    %v6088 = vxor.u32 %v6080, 2147483648
    %v6089 = vmul.f32 %v6081, 1.442695
    %v6090 = vpow.pop %v6089
    %v6091 = vmul.f32 %v6082, 1.442695
    %v6092 = vpow.pop %v6091
    %v6093 = vmul.f32 %v6083, 1.442695
    %v6094 = vpow.pop %v6093
    %v6095 = vmul.f32 %v6084, 1.442695
    %v6096 = vpow.pop %v6095
    %v6097 = vmul.f32 %v6085, 1.442695
    %v6098 = vpow.pop %v6097
    %v6099 = vmul.f32 %v6086, 1.442695
    %v6100 = vpow.pop %v6099
    %v6101 = vmul.f32 %v6087, 1.442695
    %v6102 = vpow.pop %v6101
    %v6103 = vmul.f32 %v6088, 1.442695
    %v6104 = vpow.pop %v6103
    %v6105 = vadd.f32 %v6090, 1.0
    %v6106 = vadd.f32 %v6092, 1.0
    %v6107 = vadd.f32 %v6094, 1.0
    %v6108 = vadd.f32 %v6096, 1.0
    %v6109 = vadd.f32 %v6098, 1.0
    %v6110 = vadd.f32 %v6100, 1.0
    %v6111 = vadd.f32 %v6102, 1.0
    %v6112 = vadd.f32 %v6104, 1.0
    %v6113 = vrcp.pop %v6105
    %v6114 = vmul.f32 1.0, %v6113
    %v6115 = vrcp.pop %v6106
    %v6116 = vmul.f32 1.0, %v6115
    %v6117 = vrcp.pop %v6107
    %v6118 = vmul.f32 1.0, %v6117
    %v6119 = vrcp.pop %v6108
    %v6120 = vmul.f32 1.0, %v6119
    %v6121 = vrcp.pop %v6109
    %v6122 = vmul.f32 1.0, %v6121
    %v6123 = vrcp.pop %v6110
    %v6124 = vmul.f32 1.0, %v6123
    %v6125 = vrcp.pop %v6111
    %v6126 = vmul.f32 1.0, %v6125
    %v6127 = vrcp.pop %v6112
    %v6128 = vmul.f32 1.0, %v6127
    %6129 = vrot.lane.b32.xlu0 %v6039, 64
    %v6130 = vpop.permute.xlu0 %6129
    %6131 = vrot.lane.b32.xlu0 %v6053, 64
    %v6132 = vpop.permute.xlu0 %6131
    %6133 = vrot.lane.b32.xlu0 %v6061, 64
    %v6134 = vpop.permute.xlu0 %6133
    %6135 = vrot.lane.b32.xlu0 %v6063, 64
    %v6136 = vpop.permute.xlu0 %6135
    %6137 = vrot.lane.b32.xlu0 %v6046, 64
    %v6138 = vpop.permute.xlu0 %6137
    %6139 = vrot.lane.b32.xlu0 %v6060, 64
    %v6140 = vpop.permute.xlu0 %6139
    %6141 = vrot.lane.b32.xlu0 %v6062, 64
    %v6142 = vpop.permute.xlu0 %6141
    %6143 = vrot.lane.b32.xlu0 %v6064, 64
    %v6144 = vpop.permute.xlu0 %6143
    %v6153 = vmul.f32 %v6114, %v6130
    %v6154 = vmul.f32 %v6116, %v6132
    %v6155 = vmul.f32 %v6118, %v6134
    %v6156 = vmul.f32 %v6120, %v6136
    %v6157 = vmul.f32 %v6122, %v6138
    %v6158 = vmul.f32 %v6124, %v6140
    %v6159 = vmul.f32 %v6126, %v6142
    %v6160 = vmul.f32 %v6128, %v6144
    %6169 = vrot.lane.b32.xlu0 %v6153, 64
    %v6170 = vpop.permute.xlu0 %6169
    %6171 = vrot.lane.b32.xlu0 %v6154, 64
    %v6172 = vpop.permute.xlu0 %6171
    %6173 = vrot.lane.b32.xlu0 %v6155, 64
    %v6174 = vpop.permute.xlu0 %6173
    %6175 = vrot.lane.b32.xlu0 %v6156, 64
    %v6176 = vpop.permute.xlu0 %6175
    %6177 = vrot.lane.b32.xlu0 %v6157, 64
    %v6178 = vpop.permute.xlu0 %6177
    %6179 = vrot.lane.b32.xlu0 %v6158, 64
    %v6180 = vpop.permute.xlu0 %6179
    %6181 = vrot.lane.b32.xlu0 %v6159, 64
    %v6182 = vpop.permute.xlu0 %6181
    %6183 = vrot.lane.b32.xlu0 %v6160, 64
    %v6184 = vpop.permute.xlu0 %6183
    %v6193 = vadd.f32 %v5935, %v6170
    %v6194 = vadd.f32 %v5936, %v6172
    %v6195 = vadd.f32 %v5937, %v6174
    %v6196 = vadd.f32 %v5938, %v6176
    %v6197 = vadd.f32 %v5939, %v6178
    %v6198 = vadd.f32 %v5940, %v6180
    %v6199 = vadd.f32 %v5941, %v6182
    %v6200 = vadd.f32 %v5942, %v6184
    %v6201 = vtanh.pop %v6193
    %v6202 = vtanh.pop %v6194
    %v6203 = vtanh.pop %v6195
    %v6204 = vtanh.pop %v6196
    %v6205 = vtanh.pop %v6197
    %v6206 = vtanh.pop %v6198
    %v6207 = vtanh.pop %v6199
    %v6208 = vtanh.pop %v6200
    %v6209 = vsub.f32 1.0, %v6114
    %v6210 = vsub.f32 1.0, %v6116
    %v6211 = vsub.f32 1.0, %v6118
    %v6212 = vsub.f32 1.0, %v6120
    %v6213 = vsub.f32 1.0, %v6122
    %v6214 = vsub.f32 1.0, %v6124
    %v6215 = vsub.f32 1.0, %v6126
    %v6216 = vsub.f32 1.0, %v6128
    %6225 = vrot.lane.b32.xlu0 %v6201, 96
    %v6226 = vpop.permute.xlu0 %6225
    %6227 = vrot.lane.b32.xlu0 %v6202, 96
    %v6228 = vpop.permute.xlu0 %6227
    %6229 = vrot.lane.b32.xlu0 %v6203, 96
    %v6230 = vpop.permute.xlu0 %6229
    %6231 = vrot.lane.b32.xlu0 %v6204, 96
    %v6232 = vpop.permute.xlu0 %6231
    %6233 = vrot.lane.b32.xlu0 %v6205, 96
    %v6234 = vpop.permute.xlu0 %6233
    %6235 = vrot.lane.b32.xlu0 %v6206, 96
    %v6236 = vpop.permute.xlu0 %6235
    %6237 = vrot.lane.b32.xlu0 %v6207, 96
    %v6238 = vpop.permute.xlu0 %6237
    %6239 = vrot.lane.b32.xlu0 %v6208, 96
    %v6240 = vpop.permute.xlu0 %6239
    %v6249 = vmul.f32 %v6209, %v6226
    %v6250 = vmul.f32 %v6210, %v6228
    %v6251 = vmul.f32 %v6211, %v6230
    %v6252 = vmul.f32 %v6212, %v6232
    %v6253 = vmul.f32 %v6213, %v6234
    %v6254 = vmul.f32 %v6214, %v6236
    %v6255 = vmul.f32 %v6215, %v6238
    %v6256 = vmul.f32 %v6216, %v6240
    %6257 = vrot.lane.b32.xlu0 %v5278, 32
    %v6258 = vpop.permute.xlu0 %6257
    %6259 = vrot.lane.b32.xlu0 %v5292, 32
    %v6260 = vpop.permute.xlu0 %6259
    %6261 = vrot.lane.b32.xlu0 %v5300, 32
    %v6262 = vpop.permute.xlu0 %6261
    %6263 = vrot.lane.b32.xlu0 %v5302, 32
    %v6264 = vpop.permute.xlu0 %6263
    %6265 = vrot.lane.b32.xlu0 %v5285, 32
    %v6266 = vpop.permute.xlu0 %6265
    %6267 = vrot.lane.b32.xlu0 %v5299, 32
    %v6268 = vpop.permute.xlu0 %6267
    %6269 = vrot.lane.b32.xlu0 %v5301, 32
    %v6270 = vpop.permute.xlu0 %6269
    %6271 = vrot.lane.b32.xlu0 %v5303, 32
    %v6272 = vpop.permute.xlu0 %6271
    %v6281 = vmul.f32 %v6114, %v6258
    %v6282 = vmul.f32 %v6116, %v6260
    %v6283 = vmul.f32 %v6118, %v6262
    %v6284 = vmul.f32 %v6120, %v6264
    %v6285 = vmul.f32 %v6122, %v6266
    %v6286 = vmul.f32 %v6124, %v6268
    %v6287 = vmul.f32 %v6126, %v6270
    %v6288 = vmul.f32 %v6128, %v6272
    %v6289 = vadd.f32 %v6249, %v6281
    %v6290 = vadd.f32 %v6250, %v6282
    %v6291 = vadd.f32 %v6251, %v6283
    %v6292 = vadd.f32 %v6252, %v6284
    %v6293 = vadd.f32 %v6253, %v6285
    %v6294 = vadd.f32 %v6254, %v6286
    %v6295 = vadd.f32 %v6255, %v6287
    %v6296 = vadd.f32 %v6256, %v6288
    %v6305 = vcombine.low %v6289, %v6290
    %v6306 = vcombine.low %v6291, %v6292
    %v6307 = vcombine.low %v6293, %v6294
    %v6308 = vcombine.low %v6295, %v6296
    %v6310 = vunpack.c.l.s4 1966171168
    %v6311 = vunpack.c.0.s8 %v6310
    %v6312 = vlaneseq
    %v6313 = vshrl.u32 %v6312, 7
    %v6314 = vsub.s32 %v6311, %v6313
    %v6315 = vrot.slane %v6305, %v6314
    %v6317 = vunpack.c.l.s4 1966171168
    %v6318 = vunpack.c.0.s8 %v6317
    %v6319 = vlaneseq
    %v6320 = vshrl.u32 %v6319, 7
    %v6321 = vsub.s32 %v6318, %v6320
    %v6322 = vrot.slane %v6306, %v6321
    %v6324 = vunpack.c.l.s4 1966171168
    %v6325 = vunpack.c.0.s8 %v6324
    %v6326 = vlaneseq
    %v6327 = vshrl.u32 %v6326, 7
    %v6328 = vsub.s32 %v6325, %v6327
    %v6329 = vrot.slane %v6307, %v6328
    %v6331 = vunpack.c.l.s4 1966171168
    %v6332 = vunpack.c.0.s8 %v6331
    %v6333 = vlaneseq
    %v6334 = vshrl.u32 %v6333, 7
    %v6335 = vsub.s32 %v6332, %v6334
    %v6336 = vrot.slane %v6308, %v6335
    %v6337 = vcombine.low %v6315, %v6322
    %v6338 = vcombine.low %v6329, %v6336
    %v6340 = vunpack.c.l.s4 1966171168
    %v6341 = vunpack.c.0.s8 %v6340
    %v6342 = vlaneseq
    %v6343 = vshrl.u32 %v6342, 7
    %v6344 = vsub.s32 %v6341, %v6343
    %v6345 = vrot.slane %v6337, %v6344
    %v6347 = vunpack.c.l.s4 1966171168
    %v6348 = vunpack.c.0.s8 %v6347
    %v6349 = vlaneseq
    %v6350 = vshrl.u32 %v6349, 7
    %v6351 = vsub.s32 %v6348, %v6350
    %v6352 = vrot.slane %v6338, %v6351
    %v6353 = vcombine.low %v6345, %v6352
    %6354 = vrot.lane.b32.xlu0 %v6353, 96
    %v6355 = vpop.permute.xlu0 %6354
    %v6357 = vsel %vm3525, %v6355, %v5253
    %v6359 = vcombine.high %v6357, %v6357
    %v6361 = vunpack.c.l.s4 1966171168
    %v6362 = vunpack.c.0.s8 %v6361
    %v6363 = vlaneseq
    %v6364 = vshrl.u32 %v6363, 7
    %v6365 = vsub.s32 %v6362, %v6364
    %v6366 = vrot.slane %v6357, %v6365
    %v6368 = vunpack.c.l.s4 1966171168
    %v6369 = vunpack.c.0.s8 %v6368
    %v6370 = vlaneseq
    %v6371 = vshrl.u32 %v6370, 7
    %v6372 = vsub.s32 %v6369, %v6371
    %v6373 = vrot.slane %v6359, %v6372
    %v6374 = vcombine.high %v6366, %v6366
    %v6375 = vcombine.high %v6373, %v6373
    %v6377 = vunpack.c.l.s4 1966171168
    %v6378 = vunpack.c.0.s8 %v6377
    %v6379 = vlaneseq
    %v6380 = vshrl.u32 %v6379, 7
    %v6381 = vsub.s32 %v6378, %v6380
    %v6382 = vrot.slane %v6366, %v6381
    %v6384 = vunpack.c.l.s4 1966171168
    %v6385 = vunpack.c.0.s8 %v6384
    %v6386 = vlaneseq
    %v6387 = vshrl.u32 %v6386, 7
    %v6388 = vsub.s32 %v6385, %v6387
    %v6389 = vrot.slane %v6373, %v6388
    %v6391 = vunpack.c.l.s4 1966171168
    %v6392 = vunpack.c.0.s8 %v6391
    %v6393 = vlaneseq
    %v6394 = vshrl.u32 %v6393, 7
    %v6395 = vsub.s32 %v6392, %v6394
    %v6396 = vrot.slane %v6374, %v6395
    %v6398 = vunpack.c.l.s4 1966171168
    %v6399 = vunpack.c.0.s8 %v6398
    %v6400 = vlaneseq
    %v6401 = vshrl.u32 %v6400, 7
    %v6402 = vsub.s32 %v6399, %v6401
    %v6403 = vrot.slane %v6375, %v6402
    %v6404 = vcombine.high %v6382, %v6382
    %v6405 = vcombine.high %v6389, %v6389
    %v6406 = vcombine.high %v6396, %v6396
    %v6407 = vcombine.high %v6403, %v6403
    %6416 = vst.msk [vmem:[#allocation3 + $0x5] sm:$0x1] %vm800, %v6382
    %6417 = vst.msk [vmem:[#allocation3 + $0xd] sm:$0x1] %vm800, %v6396
    %6418 = vst.msk [vmem:[#allocation3 + $0x15] sm:$0x1] %vm800, %v6404
    %6419 = vst.msk [vmem:[#allocation3 + $0x1d] sm:$0x1] %vm800, %v6406
    %6420 = vst.msk [vmem:[#allocation3 + $0x25] sm:$0x1] %vm800, %v6389
    %6421 = vst.msk [vmem:[#allocation3 + $0x2d] sm:$0x1] %vm800, %v6403
    %6422 = vst.msk [vmem:[#allocation3 + $0x35] sm:$0x1] %vm800, %v6405
    %6423 = vst.msk [vmem:[#allocation3 + $0x3d] sm:$0x1] %vm800, %v6407
    %v6424 = vld [vmem:[%s2567] ss:$8 sm:$0x3]
    %v6425 = vld [vmem:[%s2569] ss:$8 sm:$0x3]
    %v6426 = vld [vmem:[%s2571] ss:$8 sm:$0x3]
    %v6427 = vld [vmem:[%s2573] ss:$8 sm:$0x3]
    %v6428 = vld [vmem:[%s2575] ss:$8 sm:$0x3]
    %v6429 = vld [vmem:[%s2577] ss:$8 sm:$0x3]
    %v6430 = vld [vmem:[%s2579] ss:$8 sm:$0x3]
    %v6431 = vld [vmem:[%s2581] ss:$8 sm:$0x3]
    %v6432 = vsel %vm343, %v5820, 0
    %6434 = vmatprep.subr.mxu0 0.0
    %6435 = vmatpush1.msra.mxu0 %v317
    %6436 = vmatprep.subr.mxu0 0.0
    %6437 = vmatpush1.msra.mxu0 %v318
    %6438 = vmatprep.subr.mxu0 0.0
    %6439 = vmatpush1.msra.mxu0 %v319
    %6440 = vmatprep.subr.mxu0 0.0
    %6441 = vmatpush1.msra.mxu0 %v320
    %6442 = vmatprep.subr.mxu0 0.0
    %6443 = vmatpush1.msra.mxu0 0.0
    %6444 = vmatprep.subr.mxu0 0.0
    %6445 = vmatpush1.msra.mxu0 0.0
    %6446 = vmatprep.subr.mxu0 0.0
    %6447 = vmatpush1.msra.mxu0 0.0
    %6448 = vmatprep.subr.mxu0 0.0
    %6449 = vmatpush1.msra.mxu0 0.0
    %6450 = vmatprep.subr.mxu0 0.0
    %6451 = vmatpush1.msra.mxu0 0.0
    %6452 = vmatprep.subr.mxu0 0.0
    %6453 = vmatpush1.msra.mxu0 0.0
    %6454 = vmatprep.subr.mxu0 0.0
    %6455 = vmatpush1.msra.mxu0 0.0
    %6456 = vmatprep.subr.mxu0 0.0
    %6457 = vmatpush1.msra.mxu0 0.0
    %6458 = vmatprep.subr.mxu0 0.0
    %6459 = vmatpush1.msra.mxu0 0.0
    %6460 = vmatprep.subr.mxu0 0.0
    %6461 = vmatpush1.msra.mxu0 0.0
    %6462 = vmatprep.subr.mxu0 0.0
    %6463 = vmatpush1.msra.mxu0 0.0
    %6464 = vmatprep.subr.mxu0 0.0
    %6465 = vmatpush1.msra.mxu0 0.0
    %6466 = vmatprep.subr.mxu0 0.0
    %6467 = vmatpush1.msra.mxu0 0.0
    %6468 = vmatprep.subr.mxu0 0.0
    %6469 = vmatpush1.msra.mxu0 0.0
    %6470 = vmatprep.subr.mxu0 0.0
    %6471 = vmatpush1.msra.mxu0 0.0
    %6472 = vmatprep.subr.mxu0 0.0
    %6473 = vmatpush1.msra.mxu0 0.0
    %6474 = vmatprep.subr.mxu0 0.0
    %6475 = vmatpush1.msra.mxu0 0.0
    %6476 = vmatprep.subr.mxu0 0.0
    %6477 = vmatpush1.msra.mxu0 0.0
    %6478 = vmatprep.subr.mxu0 0.0
    %6479 = vmatpush1.msra.mxu0 0.0
    %6480 = vmatprep.subr.mxu0 0.0
    %6481 = vmatpush1.msra.mxu0 0.0
    %6482 = vmatprep.subr.mxu0 0.0
    %6483 = vmatpush1.msra.mxu0 0.0
    %6484 = vmatprep.subr.mxu0 0.0
    %6485 = vmatpush1.msra.mxu0 0.0
    %6486 = vmatprep.subr.mxu0 0.0
    %6487 = vmatpush1.msra.mxu0 0.0
    %6488 = vmatprep.subr.mxu0 0.0
    %6489 = vmatpush1.msra.mxu0 0.0
    %6490 = vmatprep.subr.mxu0 0.0
    %6491 = vmatpush1.msra.mxu0 0.0
    %6492 = vmatprep.subr.mxu0 0.0
    %6493 = vmatpush1.msra.mxu0 0.0
    %6494 = vmatprep.subr.mxu0 0.0
    %6495 = vmatpush1.msra.mxu0 0.0
    %6496 = vmatprep.subr.mxu0 0.0
    %6497 = vmatpush1.msra.mxu0 0.0
    %6498 = vmatprep.mubr.f32.mxu0 0.0
    %6499 = vmatmul.mubr.f32.gmra.mrb[0].mxu0 %v6432
    %v6500 = vpop.f32.mrb[0].mxu0
    %v6501 = vadd.f32 %v829, %v6500
    %v6502 = vpop.f32.mrb[0].mxu0
    %6503 = vdwg.mxu0
    %v6505 = vcombine.high %v6501, %v6501
    %v6507 = vunpack.c.l.s4 1966171168
    %v6508 = vunpack.c.0.s8 %v6507
    %v6509 = vlaneseq
    %v6510 = vshrl.u32 %v6509, 7
    %v6511 = vsub.s32 %v6508, %v6510
    %v6512 = vrot.slane %v6501, %v6511
    %v6514 = vunpack.c.l.s4 1966171168
    %v6515 = vunpack.c.0.s8 %v6514
    %v6516 = vlaneseq
    %v6517 = vshrl.u32 %v6516, 7
    %v6518 = vsub.s32 %v6515, %v6517
    %v6519 = vrot.slane %v6505, %v6518
    %v6520 = vcombine.high %v6512, %v6512
    %v6521 = vcombine.high %v6519, %v6519
    %v6523 = vunpack.c.l.s4 1966171168
    %v6524 = vunpack.c.0.s8 %v6523
    %v6525 = vlaneseq
    %v6526 = vshrl.u32 %v6525, 7
    %v6527 = vsub.s32 %v6524, %v6526
    %v6528 = vrot.slane %v6512, %v6527
    %v6530 = vunpack.c.l.s4 1966171168
    %v6531 = vunpack.c.0.s8 %v6530
    %v6532 = vlaneseq
    %v6533 = vshrl.u32 %v6532, 7
    %v6534 = vsub.s32 %v6531, %v6533
    %v6535 = vrot.slane %v6519, %v6534
    %v6537 = vunpack.c.l.s4 1966171168
    %v6538 = vunpack.c.0.s8 %v6537
    %v6539 = vlaneseq
    %v6540 = vshrl.u32 %v6539, 7
    %v6541 = vsub.s32 %v6538, %v6540
    %v6542 = vrot.slane %v6520, %v6541
    %v6544 = vunpack.c.l.s4 1966171168
    %v6545 = vunpack.c.0.s8 %v6544
    %v6546 = vlaneseq
    %v6547 = vshrl.u32 %v6546, 7
    %v6548 = vsub.s32 %v6545, %v6547
    %v6549 = vrot.slane %v6521, %v6548
    %v6550 = vcombine.high %v6528, %v6528
    %v6551 = vcombine.high %v6535, %v6535
    %v6552 = vcombine.high %v6542, %v6542
    %v6553 = vcombine.high %v6549, %v6549
    %6554 = vrot.lane.b32.xlu0 %v6528, 96
    %v6555 = vpop.permute.xlu0 %6554
    %6556 = vrot.lane.b32.xlu0 %v6542, 96
    %v6557 = vpop.permute.xlu0 %6556
    %6558 = vrot.lane.b32.xlu0 %v6550, 96
    %v6559 = vpop.permute.xlu0 %6558
    %6560 = vrot.lane.b32.xlu0 %v6552, 96
    %v6561 = vpop.permute.xlu0 %6560
    %6562 = vrot.lane.b32.xlu0 %v6535, 96
    %v6563 = vpop.permute.xlu0 %6562
    %6564 = vrot.lane.b32.xlu0 %v6549, 96
    %v6565 = vpop.permute.xlu0 %6564
    %6566 = vrot.lane.b32.xlu0 %v6551, 96
    %v6567 = vpop.permute.xlu0 %6566
    %6568 = vrot.lane.b32.xlu0 %v6553, 96
    %v6569 = vpop.permute.xlu0 %6568
    %v6578 = vadd.f32 %v6424, %v6555
    %v6579 = vadd.f32 %v6425, %v6557
    %v6580 = vadd.f32 %v6426, %v6559
    %v6581 = vadd.f32 %v6427, %v6561
    %v6582 = vadd.f32 %v6428, %v6563
    %v6583 = vadd.f32 %v6429, %v6565
    %v6584 = vadd.f32 %v6430, %v6567
    %v6585 = vadd.f32 %v6431, %v6569
    %v6586 = vxor.u32 %v6578, 2147483648
    %v6587 = vxor.u32 %v6579, 2147483648
    %v6588 = vxor.u32 %v6580, 2147483648
    %v6589 = vxor.u32 %v6581, 2147483648
    %v6590 = vxor.u32 %v6582, 2147483648
    %v6591 = vxor.u32 %v6583, 2147483648
    %v6592 = vxor.u32 %v6584, 2147483648
    %v6593 = vxor.u32 %v6585, 2147483648
    %v6594 = vmul.f32 %v6586, 1.442695
    %v6595 = vpow.pop %v6594
    %v6596 = vmul.f32 %v6587, 1.442695
    %v6597 = vpow.pop %v6596
    %v6598 = vmul.f32 %v6588, 1.442695
    %v6599 = vpow.pop %v6598
    %v6600 = vmul.f32 %v6589, 1.442695
    %v6601 = vpow.pop %v6600
    %v6602 = vmul.f32 %v6590, 1.442695
    %v6603 = vpow.pop %v6602
    %v6604 = vmul.f32 %v6591, 1.442695
    %v6605 = vpow.pop %v6604
    %v6606 = vmul.f32 %v6592, 1.442695
    %v6607 = vpow.pop %v6606
    %v6608 = vmul.f32 %v6593, 1.442695
    %v6609 = vpow.pop %v6608
    %v6610 = vadd.f32 %v6595, 1.0
    %v6611 = vadd.f32 %v6597, 1.0
    %v6612 = vadd.f32 %v6599, 1.0
    %v6613 = vadd.f32 %v6601, 1.0
    %v6614 = vadd.f32 %v6603, 1.0
    %v6615 = vadd.f32 %v6605, 1.0
    %v6616 = vadd.f32 %v6607, 1.0
    %v6617 = vadd.f32 %v6609, 1.0
    %v6618 = vrcp.pop %v6610
    %v6619 = vmul.f32 1.0, %v6618
    %v6620 = vrcp.pop %v6611
    %v6621 = vmul.f32 1.0, %v6620
    %v6622 = vrcp.pop %v6612
    %v6623 = vmul.f32 1.0, %v6622
    %v6624 = vrcp.pop %v6613
    %v6625 = vmul.f32 1.0, %v6624
    %v6626 = vrcp.pop %v6614
    %v6627 = vmul.f32 1.0, %v6626
    %v6628 = vrcp.pop %v6615
    %v6629 = vmul.f32 1.0, %v6628
    %v6630 = vrcp.pop %v6616
    %v6631 = vmul.f32 1.0, %v6630
    %v6632 = vrcp.pop %v6617
    %v6633 = vmul.f32 1.0, %v6632
    %v6642 = vrot.slane %v6424, 1
    %v6643 = vrot.slane %v6425, 1
    %v6644 = vrot.slane %v6426, 1
    %v6645 = vrot.slane %v6427, 1
    %v6646 = vrot.slane %v6428, 1
    %v6647 = vrot.slane %v6429, 1
    %v6648 = vrot.slane %v6430, 1
    %v6649 = vrot.slane %v6431, 1
    %v6658 = vadd.f32 %v6642, %v6555
    %v6659 = vadd.f32 %v6643, %v6557
    %v6660 = vadd.f32 %v6644, %v6559
    %v6661 = vadd.f32 %v6645, %v6561
    %v6662 = vadd.f32 %v6646, %v6563
    %v6663 = vadd.f32 %v6647, %v6565
    %v6664 = vadd.f32 %v6648, %v6567
    %v6665 = vadd.f32 %v6649, %v6569
    %v6666 = vxor.u32 %v6658, 2147483648
    %v6667 = vxor.u32 %v6659, 2147483648
    %v6668 = vxor.u32 %v6660, 2147483648
    %v6669 = vxor.u32 %v6661, 2147483648
    %v6670 = vxor.u32 %v6662, 2147483648
    %v6671 = vxor.u32 %v6663, 2147483648
    %v6672 = vxor.u32 %v6664, 2147483648
    %v6673 = vxor.u32 %v6665, 2147483648
    %v6674 = vmul.f32 %v6666, 1.442695
    %v6675 = vpow.pop %v6674
    %v6676 = vmul.f32 %v6667, 1.442695
    %v6677 = vpow.pop %v6676
    %v6678 = vmul.f32 %v6668, 1.442695
    %v6679 = vpow.pop %v6678
    %v6680 = vmul.f32 %v6669, 1.442695
    %v6681 = vpow.pop %v6680
    %v6682 = vmul.f32 %v6670, 1.442695
    %v6683 = vpow.pop %v6682
    %v6684 = vmul.f32 %v6671, 1.442695
    %v6685 = vpow.pop %v6684
    %v6686 = vmul.f32 %v6672, 1.442695
    %v6687 = vpow.pop %v6686
    %v6688 = vmul.f32 %v6673, 1.442695
    %v6689 = vpow.pop %v6688
    %v6690 = vadd.f32 %v6675, 1.0
    %v6691 = vadd.f32 %v6677, 1.0
    %v6692 = vadd.f32 %v6679, 1.0
    %v6693 = vadd.f32 %v6681, 1.0
    %v6694 = vadd.f32 %v6683, 1.0
    %v6695 = vadd.f32 %v6685, 1.0
    %v6696 = vadd.f32 %v6687, 1.0
    %v6697 = vadd.f32 %v6689, 1.0
    %v6698 = vrcp.pop %v6690
    %v6699 = vmul.f32 1.0, %v6698
    %v6700 = vrcp.pop %v6691
    %v6701 = vmul.f32 1.0, %v6700
    %v6702 = vrcp.pop %v6692
    %v6703 = vmul.f32 1.0, %v6702
    %v6704 = vrcp.pop %v6693
    %v6705 = vmul.f32 1.0, %v6704
    %v6706 = vrcp.pop %v6694
    %v6707 = vmul.f32 1.0, %v6706
    %v6708 = vrcp.pop %v6695
    %v6709 = vmul.f32 1.0, %v6708
    %v6710 = vrcp.pop %v6696
    %v6711 = vmul.f32 1.0, %v6710
    %v6712 = vrcp.pop %v6697
    %v6713 = vmul.f32 1.0, %v6712
    %6714 = vrot.lane.b32.xlu0 %v6528, 32
    %v6715 = vpop.permute.xlu0 %6714
    %6716 = vrot.lane.b32.xlu0 %v6542, 32
    %v6717 = vpop.permute.xlu0 %6716
    %6718 = vrot.lane.b32.xlu0 %v6550, 32
    %v6719 = vpop.permute.xlu0 %6718
    %6720 = vrot.lane.b32.xlu0 %v6552, 32
    %v6721 = vpop.permute.xlu0 %6720
    %6722 = vrot.lane.b32.xlu0 %v6535, 32
    %v6723 = vpop.permute.xlu0 %6722
    %6724 = vrot.lane.b32.xlu0 %v6549, 32
    %v6725 = vpop.permute.xlu0 %6724
    %6726 = vrot.lane.b32.xlu0 %v6551, 32
    %v6727 = vpop.permute.xlu0 %6726
    %6728 = vrot.lane.b32.xlu0 %v6553, 32
    %v6729 = vpop.permute.xlu0 %6728
    %v6738 = vmul.f32 %v6619, %v6715
    %v6739 = vmul.f32 %v6621, %v6717
    %v6740 = vmul.f32 %v6623, %v6719
    %v6741 = vmul.f32 %v6625, %v6721
    %v6742 = vmul.f32 %v6627, %v6723
    %v6743 = vmul.f32 %v6629, %v6725
    %v6744 = vmul.f32 %v6631, %v6727
    %v6745 = vmul.f32 %v6633, %v6729
    %6746 = vrot.lane.b32.xlu0 %v6424, 96
    %v6747 = vpop.permute.xlu0 %6746
    %6748 = vrot.lane.b32.xlu0 %v6425, 96
    %v6749 = vpop.permute.xlu0 %6748
    %6750 = vrot.lane.b32.xlu0 %v6426, 96
    %v6751 = vpop.permute.xlu0 %6750
    %6752 = vrot.lane.b32.xlu0 %v6427, 96
    %v6753 = vpop.permute.xlu0 %6752
    %6754 = vrot.lane.b32.xlu0 %v6428, 96
    %v6755 = vpop.permute.xlu0 %6754
    %6756 = vrot.lane.b32.xlu0 %v6429, 96
    %v6757 = vpop.permute.xlu0 %6756
    %6758 = vrot.lane.b32.xlu0 %v6430, 96
    %v6759 = vpop.permute.xlu0 %6758
    %6760 = vrot.lane.b32.xlu0 %v6431, 96
    %v6761 = vpop.permute.xlu0 %6760
    %v6762 = vrot.slane %v6747, 1
    %v6763 = vrot.slane %v6749, 1
    %v6764 = vrot.slane %v6751, 1
    %v6765 = vrot.slane %v6753, 1
    %v6766 = vrot.slane %v6755, 1
    %v6767 = vrot.slane %v6757, 1
    %v6768 = vrot.slane %v6759, 1
    %v6769 = vrot.slane %v6761, 1
    %6786 = vrot.lane.b32.xlu0 %v6738, 32
    %v6787 = vpop.permute.xlu0 %6786
    %6788 = vrot.lane.b32.xlu0 %v6739, 32
    %v6789 = vpop.permute.xlu0 %6788
    %6790 = vrot.lane.b32.xlu0 %v6740, 32
    %v6791 = vpop.permute.xlu0 %6790
    %6792 = vrot.lane.b32.xlu0 %v6741, 32
    %v6793 = vpop.permute.xlu0 %6792
    %6794 = vrot.lane.b32.xlu0 %v6742, 32
    %v6795 = vpop.permute.xlu0 %6794
    %6796 = vrot.lane.b32.xlu0 %v6743, 32
    %v6797 = vpop.permute.xlu0 %6796
    %6798 = vrot.lane.b32.xlu0 %v6744, 32
    %v6799 = vpop.permute.xlu0 %6798
    %6800 = vrot.lane.b32.xlu0 %v6745, 32
    %v6801 = vpop.permute.xlu0 %6800
    %v6810 = vadd.f32 %v6762, %v6787
    %v6811 = vadd.f32 %v6763, %v6789
    %v6812 = vadd.f32 %v6764, %v6791
    %v6813 = vadd.f32 %v6765, %v6793
    %v6814 = vadd.f32 %v6766, %v6795
    %v6815 = vadd.f32 %v6767, %v6797
    %v6816 = vadd.f32 %v6768, %v6799
    %v6817 = vadd.f32 %v6769, %v6801
    %v6818 = vtanh.pop %v6810
    %v6819 = vtanh.pop %v6811
    %v6820 = vtanh.pop %v6812
    %v6821 = vtanh.pop %v6813
    %v6822 = vtanh.pop %v6814
    %v6823 = vtanh.pop %v6815
    %v6824 = vtanh.pop %v6816
    %v6825 = vtanh.pop %v6817
    %v6826 = vsub.f32 1.0, %v6699
    %v6827 = vsub.f32 1.0, %v6701
    %v6828 = vsub.f32 1.0, %v6703
    %v6829 = vsub.f32 1.0, %v6705
    %v6830 = vsub.f32 1.0, %v6707
    %v6831 = vsub.f32 1.0, %v6709
    %v6832 = vsub.f32 1.0, %v6711
    %v6833 = vsub.f32 1.0, %v6713
    %v6834 = vmul.f32 %v6826, %v6818
    %v6835 = vmul.f32 %v6827, %v6819
    %v6836 = vmul.f32 %v6828, %v6820
    %v6837 = vmul.f32 %v6829, %v6821
    %v6838 = vmul.f32 %v6830, %v6822
    %v6839 = vmul.f32 %v6831, %v6823
    %v6840 = vmul.f32 %v6832, %v6824
    %v6841 = vmul.f32 %v6833, %v6825
    %v6850 = vmul.f32 %v6699, %v5845
    %v6851 = vmul.f32 %v6701, %v5859
    %v6852 = vmul.f32 %v6703, %v5867
    %v6853 = vmul.f32 %v6705, %v5869
    %v6854 = vmul.f32 %v6707, %v5852
    %v6855 = vmul.f32 %v6709, %v5866
    %v6856 = vmul.f32 %v6711, %v5868
    %v6857 = vmul.f32 %v6713, %v5870
    %v6858 = vadd.f32 %v6834, %v6850
    %v6859 = vadd.f32 %v6835, %v6851
    %v6860 = vadd.f32 %v6836, %v6852
    %v6861 = vadd.f32 %v6837, %v6853
    %v6862 = vadd.f32 %v6838, %v6854
    %v6863 = vadd.f32 %v6839, %v6855
    %v6864 = vadd.f32 %v6840, %v6856
    %v6865 = vadd.f32 %v6841, %v6857
    %v6874 = vcombine.low %v6858, %v6859
    %v6875 = vcombine.low %v6860, %v6861
    %v6876 = vcombine.low %v6862, %v6863
    %v6877 = vcombine.low %v6864, %v6865
    %v6879 = vunpack.c.l.s4 1966171168
    %v6880 = vunpack.c.0.s8 %v6879
    %v6881 = vlaneseq
    %v6882 = vshrl.u32 %v6881, 7
    %v6883 = vsub.s32 %v6880, %v6882
    %v6884 = vrot.slane %v6874, %v6883
    %v6886 = vunpack.c.l.s4 1966171168
    %v6887 = vunpack.c.0.s8 %v6886
    %v6888 = vlaneseq
    %v6889 = vshrl.u32 %v6888, 7
    %v6890 = vsub.s32 %v6887, %v6889
    %v6891 = vrot.slane %v6875, %v6890
    %v6893 = vunpack.c.l.s4 1966171168
    %v6894 = vunpack.c.0.s8 %v6893
    %v6895 = vlaneseq
    %v6896 = vshrl.u32 %v6895, 7
    %v6897 = vsub.s32 %v6894, %v6896
    %v6898 = vrot.slane %v6876, %v6897
    %v6900 = vunpack.c.l.s4 1966171168
    %v6901 = vunpack.c.0.s8 %v6900
    %v6902 = vlaneseq
    %v6903 = vshrl.u32 %v6902, 7
    %v6904 = vsub.s32 %v6901, %v6903
    %v6905 = vrot.slane %v6877, %v6904
    %v6906 = vcombine.low %v6884, %v6891
    %v6907 = vcombine.low %v6898, %v6905
    %v6909 = vunpack.c.l.s4 1966171168
    %v6910 = vunpack.c.0.s8 %v6909
    %v6911 = vlaneseq
    %v6912 = vshrl.u32 %v6911, 7
    %v6913 = vsub.s32 %v6910, %v6912
    %v6914 = vrot.slane %v6906, %v6913
    %v6916 = vunpack.c.l.s4 1966171168
    %v6917 = vunpack.c.0.s8 %v6916
    %v6918 = vlaneseq
    %v6919 = vshrl.u32 %v6918, 7
    %v6920 = vsub.s32 %v6917, %v6919
    %v6921 = vrot.slane %v6907, %v6920
    %v6922 = vcombine.low %v6914, %v6921
    %v6924 = vsel %vm2942, %v6922, %v5820
    %v6926 = vcombine.high %v6924, %v6924
    %v6928 = vunpack.c.l.s4 1966171168
    %v6929 = vunpack.c.0.s8 %v6928
    %v6930 = vlaneseq
    %v6931 = vshrl.u32 %v6930, 7
    %v6932 = vsub.s32 %v6929, %v6931
    %v6933 = vrot.slane %v6924, %v6932
    %v6935 = vunpack.c.l.s4 1966171168
    %v6936 = vunpack.c.0.s8 %v6935
    %v6937 = vlaneseq
    %v6938 = vshrl.u32 %v6937, 7
    %v6939 = vsub.s32 %v6936, %v6938
    %v6940 = vrot.slane %v6926, %v6939
    %v6941 = vcombine.high %v6933, %v6933
    %v6942 = vcombine.high %v6940, %v6940
    %v6944 = vunpack.c.l.s4 1966171168
    %v6945 = vunpack.c.0.s8 %v6944
    %v6946 = vlaneseq
    %v6947 = vshrl.u32 %v6946, 7
    %v6948 = vsub.s32 %v6945, %v6947
    %v6949 = vrot.slane %v6933, %v6948
    %v6951 = vunpack.c.l.s4 1966171168
    %v6952 = vunpack.c.0.s8 %v6951
    %v6953 = vlaneseq
    %v6954 = vshrl.u32 %v6953, 7
    %v6955 = vsub.s32 %v6952, %v6954
    %v6956 = vrot.slane %v6940, %v6955
    %v6958 = vunpack.c.l.s4 1966171168
    %v6959 = vunpack.c.0.s8 %v6958
    %v6960 = vlaneseq
    %v6961 = vshrl.u32 %v6960, 7
    %v6962 = vsub.s32 %v6959, %v6961
    %v6963 = vrot.slane %v6941, %v6962
    %v6965 = vunpack.c.l.s4 1966171168
    %v6966 = vunpack.c.0.s8 %v6965
    %v6967 = vlaneseq
    %v6968 = vshrl.u32 %v6967, 7
    %v6969 = vsub.s32 %v6966, %v6968
    %v6970 = vrot.slane %v6942, %v6969
    %v6971 = vcombine.high %v6949, %v6949
    %v6972 = vcombine.high %v6956, %v6956
    %v6973 = vcombine.high %v6963, %v6963
    %v6974 = vcombine.high %v6970, %v6970
    %v6975 = vlaneseq
    %v6976 = vshrl.u32 %v6975, 7
    %v6977 = vsub.s32 0, %v6976
    %v6978 = vrot.slane %v6949, %v6977
    %v6979 = vlaneseq
    %v6980 = vshrl.u32 %v6979, 7
    %v6981 = vsub.s32 0, %v6980
    %v6982 = vrot.slane %v6963, %v6981
    %v6983 = vlaneseq
    %v6984 = vshrl.u32 %v6983, 7
    %v6985 = vsub.s32 0, %v6984
    %v6986 = vrot.slane %v6971, %v6985
    %v6987 = vlaneseq
    %v6988 = vshrl.u32 %v6987, 7
    %v6989 = vsub.s32 0, %v6988
    %v6990 = vrot.slane %v6973, %v6989
    %v6991 = vlaneseq
    %v6992 = vshrl.u32 %v6991, 7
    %v6993 = vsub.s32 0, %v6992
    %v6994 = vrot.slane %v6956, %v6993
    %v6995 = vlaneseq
    %v6996 = vshrl.u32 %v6995, 7
    %v6997 = vsub.s32 0, %v6996
    %v6998 = vrot.slane %v6970, %v6997
    %v6999 = vlaneseq
    %v7000 = vshrl.u32 %v6999, 7
    %v7001 = vsub.s32 0, %v7000
    %v7002 = vrot.slane %v6972, %v7001
    %v7003 = vlaneseq
    %v7004 = vshrl.u32 %v7003, 7
    %v7005 = vsub.s32 0, %v7004
    %v7006 = vrot.slane %v6974, %v7005
    %7007 = vrot.lane.b32.xlu0 %v6978, 32
    %v7008 = vpop.permute.xlu0 %7007
    %7009 = vrot.lane.b32.xlu0 %v6982, 32
    %v7010 = vpop.permute.xlu0 %7009
    %7011 = vrot.lane.b32.xlu0 %v6986, 32
    %v7012 = vpop.permute.xlu0 %7011
    %7013 = vrot.lane.b32.xlu0 %v6990, 32
    %v7014 = vpop.permute.xlu0 %7013
    %7015 = vrot.lane.b32.xlu0 %v6994, 32
    %v7016 = vpop.permute.xlu0 %7015
    %7017 = vrot.lane.b32.xlu0 %v6998, 32
    %v7018 = vpop.permute.xlu0 %7017
    %7019 = vrot.lane.b32.xlu0 %v7002, 32
    %v7020 = vpop.permute.xlu0 %7019
    %7021 = vrot.lane.b32.xlu0 %v7006, 32
    %v7022 = vpop.permute.xlu0 %7021
    %7031 = vst.msk [vmem:[#allocation3 + $0x2] sm:$0x1] %vm1426, %v7008
    %7032 = vst.msk [vmem:[#allocation3 + $0xa] sm:$0x1] %vm1426, %v7010
    %7033 = vst.msk [vmem:[#allocation3 + $0x12] sm:$0x1] %vm1426, %v7012
    %7034 = vst.msk [vmem:[#allocation3 + $0x1a] sm:$0x1] %vm1426, %v7014
    %7035 = vst.msk [vmem:[#allocation3 + $0x22] sm:$0x1] %vm1426, %v7016
    %7036 = vst.msk [vmem:[#allocation3 + $0x2a] sm:$0x1] %vm1426, %v7018
    %7037 = vst.msk [vmem:[#allocation3 + $0x32] sm:$0x1] %vm1426, %v7020
    %7038 = vst.msk [vmem:[#allocation3 + $0x3a] sm:$0x1] %vm1426, %v7022
    %v7039 = vld [vmem:[%s1938] ss:$8 sm:$0x3]
    %v7040 = vld [vmem:[%s1940] ss:$8 sm:$0x3]
    %v7041 = vld [vmem:[%s1942] ss:$8 sm:$0x3]
    %v7042 = vld [vmem:[%s1944] ss:$8 sm:$0x3]
    %v7043 = vld [vmem:[%s1946] ss:$8 sm:$0x3]
    %v7044 = vld [vmem:[%s1948] ss:$8 sm:$0x3]
    %v7045 = vld [vmem:[%s1950] ss:$8 sm:$0x3]
    %v7046 = vld [vmem:[%s1952] ss:$8 sm:$0x3]
    %v7047 = vsel %vm343, %v6357, 0
    %7049 = vmatprep.subr.mxu0 0.0
    %7050 = vmatpush1.msra.mxu0 %v312
    %7051 = vmatprep.subr.mxu0 0.0
    %7052 = vmatpush1.msra.mxu0 %v313
    %7053 = vmatprep.subr.mxu0 0.0
    %7054 = vmatpush1.msra.mxu0 %v314
    %7055 = vmatprep.subr.mxu0 0.0
    %7056 = vmatpush1.msra.mxu0 %v315
    %7057 = vmatprep.subr.mxu0 0.0
    %7058 = vmatpush1.msra.mxu0 0.0
    %7059 = vmatprep.subr.mxu0 0.0
    %7060 = vmatpush1.msra.mxu0 0.0
    %7061 = vmatprep.subr.mxu0 0.0
    %7062 = vmatpush1.msra.mxu0 0.0
    %7063 = vmatprep.subr.mxu0 0.0
    %7064 = vmatpush1.msra.mxu0 0.0
    %7065 = vmatprep.subr.mxu0 0.0
    %7066 = vmatpush1.msra.mxu0 0.0
    %7067 = vmatprep.subr.mxu0 0.0
    %7068 = vmatpush1.msra.mxu0 0.0
    %7069 = vmatprep.subr.mxu0 0.0
    %7070 = vmatpush1.msra.mxu0 0.0
    %7071 = vmatprep.subr.mxu0 0.0
    %7072 = vmatpush1.msra.mxu0 0.0
    %7073 = vmatprep.subr.mxu0 0.0
    %7074 = vmatpush1.msra.mxu0 0.0
    %7075 = vmatprep.subr.mxu0 0.0
    %7076 = vmatpush1.msra.mxu0 0.0
    %7077 = vmatprep.subr.mxu0 0.0
    %7078 = vmatpush1.msra.mxu0 0.0
    %7079 = vmatprep.subr.mxu0 0.0
    %7080 = vmatpush1.msra.mxu0 0.0
    %7081 = vmatprep.subr.mxu0 0.0
    %7082 = vmatpush1.msra.mxu0 0.0
    %7083 = vmatprep.subr.mxu0 0.0
    %7084 = vmatpush1.msra.mxu0 0.0
    %7085 = vmatprep.subr.mxu0 0.0
    %7086 = vmatpush1.msra.mxu0 0.0
    %7087 = vmatprep.subr.mxu0 0.0
    %7088 = vmatpush1.msra.mxu0 0.0
    %7089 = vmatprep.subr.mxu0 0.0
    %7090 = vmatpush1.msra.mxu0 0.0
    %7091 = vmatprep.subr.mxu0 0.0
    %7092 = vmatpush1.msra.mxu0 0.0
    %7093 = vmatprep.subr.mxu0 0.0
    %7094 = vmatpush1.msra.mxu0 0.0
    %7095 = vmatprep.subr.mxu0 0.0
    %7096 = vmatpush1.msra.mxu0 0.0
    %7097 = vmatprep.subr.mxu0 0.0
    %7098 = vmatpush1.msra.mxu0 0.0
    %7099 = vmatprep.subr.mxu0 0.0
    %7100 = vmatpush1.msra.mxu0 0.0
    %7101 = vmatprep.subr.mxu0 0.0
    %7102 = vmatpush1.msra.mxu0 0.0
    %7103 = vmatprep.subr.mxu0 0.0
    %7104 = vmatpush1.msra.mxu0 0.0
    %7105 = vmatprep.subr.mxu0 0.0
    %7106 = vmatpush1.msra.mxu0 0.0
    %7107 = vmatprep.subr.mxu0 0.0
    %7108 = vmatpush1.msra.mxu0 0.0
    %7109 = vmatprep.subr.mxu0 0.0
    %7110 = vmatpush1.msra.mxu0 0.0
    %7111 = vmatprep.subr.mxu0 0.0
    %7112 = vmatpush1.msra.mxu0 0.0
    %7113 = vmatprep.mubr.f32.mxu0 0.0
    %7114 = vmatmul.mubr.f32.gmra.mrb[0].mxu0 %v7047
    %v7115 = vpop.f32.mrb[0].mxu0
    %v7116 = vadd.f32 %v341, %v7115
    %v7117 = vpop.f32.mrb[0].mxu0
    %7118 = vdwg.mxu0
    %v7120 = vcombine.high %v7116, %v7116
    %v7122 = vunpack.c.l.s4 1966171168
    %v7123 = vunpack.c.0.s8 %v7122
    %v7124 = vlaneseq
    %v7125 = vshrl.u32 %v7124, 7
    %v7126 = vsub.s32 %v7123, %v7125
    %v7127 = vrot.slane %v7116, %v7126
    %v7129 = vunpack.c.l.s4 1966171168
    %v7130 = vunpack.c.0.s8 %v7129
    %v7131 = vlaneseq
    %v7132 = vshrl.u32 %v7131, 7
    %v7133 = vsub.s32 %v7130, %v7132
    %v7134 = vrot.slane %v7120, %v7133
    %v7135 = vcombine.high %v7127, %v7127
    %v7136 = vcombine.high %v7134, %v7134
    %v7138 = vunpack.c.l.s4 1966171168
    %v7139 = vunpack.c.0.s8 %v7138
    %v7140 = vlaneseq
    %v7141 = vshrl.u32 %v7140, 7
    %v7142 = vsub.s32 %v7139, %v7141
    %v7143 = vrot.slane %v7127, %v7142
    %v7145 = vunpack.c.l.s4 1966171168
    %v7146 = vunpack.c.0.s8 %v7145
    %v7147 = vlaneseq
    %v7148 = vshrl.u32 %v7147, 7
    %v7149 = vsub.s32 %v7146, %v7148
    %v7150 = vrot.slane %v7134, %v7149
    %v7152 = vunpack.c.l.s4 1966171168
    %v7153 = vunpack.c.0.s8 %v7152
    %v7154 = vlaneseq
    %v7155 = vshrl.u32 %v7154, 7
    %v7156 = vsub.s32 %v7153, %v7155
    %v7157 = vrot.slane %v7135, %v7156
    %v7159 = vunpack.c.l.s4 1966171168
    %v7160 = vunpack.c.0.s8 %v7159
    %v7161 = vlaneseq
    %v7162 = vshrl.u32 %v7161, 7
    %v7163 = vsub.s32 %v7160, %v7162
    %v7164 = vrot.slane %v7136, %v7163
    %v7165 = vcombine.high %v7143, %v7143
    %v7166 = vcombine.high %v7150, %v7150
    %v7167 = vcombine.high %v7157, %v7157
    %v7168 = vcombine.high %v7164, %v7164
    %v7177 = vadd.f32 %v7039, %v7143
    %v7178 = vadd.f32 %v7040, %v7157
    %v7179 = vadd.f32 %v7041, %v7165
    %v7180 = vadd.f32 %v7042, %v7167
    %v7181 = vadd.f32 %v7043, %v7150
    %v7182 = vadd.f32 %v7044, %v7164
    %v7183 = vadd.f32 %v7045, %v7166
    %v7184 = vadd.f32 %v7046, %v7168
    %v7185 = vxor.u32 %v7177, 2147483648
    %v7186 = vxor.u32 %v7178, 2147483648
    %v7187 = vxor.u32 %v7179, 2147483648
    %v7188 = vxor.u32 %v7180, 2147483648
    %v7189 = vxor.u32 %v7181, 2147483648
    %v7190 = vxor.u32 %v7182, 2147483648
    %v7191 = vxor.u32 %v7183, 2147483648
    %v7192 = vxor.u32 %v7184, 2147483648
    %v7193 = vmul.f32 %v7185, 1.442695
    %v7194 = vpow.pop %v7193
    %v7195 = vmul.f32 %v7186, 1.442695
    %v7196 = vpow.pop %v7195
    %v7197 = vmul.f32 %v7187, 1.442695
    %v7198 = vpow.pop %v7197
    %v7199 = vmul.f32 %v7188, 1.442695
    %v7200 = vpow.pop %v7199
    %v7201 = vmul.f32 %v7189, 1.442695
    %v7202 = vpow.pop %v7201
    %v7203 = vmul.f32 %v7190, 1.442695
    %v7204 = vpow.pop %v7203
    %v7205 = vmul.f32 %v7191, 1.442695
    %v7206 = vpow.pop %v7205
    %v7207 = vmul.f32 %v7192, 1.442695
    %v7208 = vpow.pop %v7207
    %v7209 = vadd.f32 %v7194, 1.0
    %v7210 = vadd.f32 %v7196, 1.0
    %v7211 = vadd.f32 %v7198, 1.0
    %v7212 = vadd.f32 %v7200, 1.0
    %v7213 = vadd.f32 %v7202, 1.0
    %v7214 = vadd.f32 %v7204, 1.0
    %v7215 = vadd.f32 %v7206, 1.0
    %v7216 = vadd.f32 %v7208, 1.0
    %v7217 = vrcp.pop %v7209
    %v7218 = vmul.f32 1.0, %v7217
    %v7219 = vrcp.pop %v7210
    %v7220 = vmul.f32 1.0, %v7219
    %v7221 = vrcp.pop %v7211
    %v7222 = vmul.f32 1.0, %v7221
    %v7223 = vrcp.pop %v7212
    %v7224 = vmul.f32 1.0, %v7223
    %v7225 = vrcp.pop %v7213
    %v7226 = vmul.f32 1.0, %v7225
    %v7227 = vrcp.pop %v7214
    %v7228 = vmul.f32 1.0, %v7227
    %v7229 = vrcp.pop %v7215
    %v7230 = vmul.f32 1.0, %v7229
    %v7231 = vrcp.pop %v7216
    %v7232 = vmul.f32 1.0, %v7231
    %7233 = vrot.lane.b32.xlu0 %v7143, 64
    %v7234 = vpop.permute.xlu0 %7233
    %7235 = vrot.lane.b32.xlu0 %v7157, 64
    %v7236 = vpop.permute.xlu0 %7235
    %7237 = vrot.lane.b32.xlu0 %v7165, 64
    %v7238 = vpop.permute.xlu0 %7237
    %7239 = vrot.lane.b32.xlu0 %v7167, 64
    %v7240 = vpop.permute.xlu0 %7239
    %7241 = vrot.lane.b32.xlu0 %v7150, 64
    %v7242 = vpop.permute.xlu0 %7241
    %7243 = vrot.lane.b32.xlu0 %v7164, 64
    %v7244 = vpop.permute.xlu0 %7243
    %7245 = vrot.lane.b32.xlu0 %v7166, 64
    %v7246 = vpop.permute.xlu0 %7245
    %7247 = vrot.lane.b32.xlu0 %v7168, 64
    %v7248 = vpop.permute.xlu0 %7247
    %v7257 = vmul.f32 %v7218, %v7234
    %v7258 = vmul.f32 %v7220, %v7236
    %v7259 = vmul.f32 %v7222, %v7238
    %v7260 = vmul.f32 %v7224, %v7240
    %v7261 = vmul.f32 %v7226, %v7242
    %v7262 = vmul.f32 %v7228, %v7244
    %v7263 = vmul.f32 %v7230, %v7246
    %v7264 = vmul.f32 %v7232, %v7248
    %7273 = vrot.lane.b32.xlu0 %v7257, 64
    %v7274 = vpop.permute.xlu0 %7273
    %7275 = vrot.lane.b32.xlu0 %v7258, 64
    %v7276 = vpop.permute.xlu0 %7275
    %7277 = vrot.lane.b32.xlu0 %v7259, 64
    %v7278 = vpop.permute.xlu0 %7277
    %7279 = vrot.lane.b32.xlu0 %v7260, 64
    %v7280 = vpop.permute.xlu0 %7279
    %7281 = vrot.lane.b32.xlu0 %v7261, 64
    %v7282 = vpop.permute.xlu0 %7281
    %7283 = vrot.lane.b32.xlu0 %v7262, 64
    %v7284 = vpop.permute.xlu0 %7283
    %7285 = vrot.lane.b32.xlu0 %v7263, 64
    %v7286 = vpop.permute.xlu0 %7285
    %7287 = vrot.lane.b32.xlu0 %v7264, 64
    %v7288 = vpop.permute.xlu0 %7287
    %v7297 = vadd.f32 %v7039, %v7274
    %v7298 = vadd.f32 %v7040, %v7276
    %v7299 = vadd.f32 %v7041, %v7278
    %v7300 = vadd.f32 %v7042, %v7280
    %v7301 = vadd.f32 %v7043, %v7282
    %v7302 = vadd.f32 %v7044, %v7284
    %v7303 = vadd.f32 %v7045, %v7286
    %v7304 = vadd.f32 %v7046, %v7288
    %v7305 = vtanh.pop %v7297
    %v7306 = vtanh.pop %v7298
    %v7307 = vtanh.pop %v7299
    %v7308 = vtanh.pop %v7300
    %v7309 = vtanh.pop %v7301
    %v7310 = vtanh.pop %v7302
    %v7311 = vtanh.pop %v7303
    %v7312 = vtanh.pop %v7304
    %v7313 = vsub.f32 1.0, %v7218
    %v7314 = vsub.f32 1.0, %v7220
    %v7315 = vsub.f32 1.0, %v7222
    %v7316 = vsub.f32 1.0, %v7224
    %v7317 = vsub.f32 1.0, %v7226
    %v7318 = vsub.f32 1.0, %v7228
    %v7319 = vsub.f32 1.0, %v7230
    %v7320 = vsub.f32 1.0, %v7232
    %7329 = vrot.lane.b32.xlu0 %v7305, 96
    %v7330 = vpop.permute.xlu0 %7329
    %7331 = vrot.lane.b32.xlu0 %v7306, 96
    %v7332 = vpop.permute.xlu0 %7331
    %7333 = vrot.lane.b32.xlu0 %v7307, 96
    %v7334 = vpop.permute.xlu0 %7333
    %7335 = vrot.lane.b32.xlu0 %v7308, 96
    %v7336 = vpop.permute.xlu0 %7335
    %7337 = vrot.lane.b32.xlu0 %v7309, 96
    %v7338 = vpop.permute.xlu0 %7337
    %7339 = vrot.lane.b32.xlu0 %v7310, 96
    %v7340 = vpop.permute.xlu0 %7339
    %7341 = vrot.lane.b32.xlu0 %v7311, 96
    %v7342 = vpop.permute.xlu0 %7341
    %7343 = vrot.lane.b32.xlu0 %v7312, 96
    %v7344 = vpop.permute.xlu0 %7343
    %v7353 = vmul.f32 %v7313, %v7330
    %v7354 = vmul.f32 %v7314, %v7332
    %v7355 = vmul.f32 %v7315, %v7334
    %v7356 = vmul.f32 %v7316, %v7336
    %v7357 = vmul.f32 %v7317, %v7338
    %v7358 = vmul.f32 %v7318, %v7340
    %v7359 = vmul.f32 %v7319, %v7342
    %v7360 = vmul.f32 %v7320, %v7344
    %7361 = vrot.lane.b32.xlu0 %v6382, 32
    %v7362 = vpop.permute.xlu0 %7361
    %7363 = vrot.lane.b32.xlu0 %v6396, 32
    %v7364 = vpop.permute.xlu0 %7363
    %7365 = vrot.lane.b32.xlu0 %v6404, 32
    %v7366 = vpop.permute.xlu0 %7365
    %7367 = vrot.lane.b32.xlu0 %v6406, 32
    %v7368 = vpop.permute.xlu0 %7367
    %7369 = vrot.lane.b32.xlu0 %v6389, 32
    %v7370 = vpop.permute.xlu0 %7369
    %7371 = vrot.lane.b32.xlu0 %v6403, 32
    %v7372 = vpop.permute.xlu0 %7371
    %7373 = vrot.lane.b32.xlu0 %v6405, 32
    %v7374 = vpop.permute.xlu0 %7373
    %7375 = vrot.lane.b32.xlu0 %v6407, 32
    %v7376 = vpop.permute.xlu0 %7375
    %v7385 = vmul.f32 %v7218, %v7362
    %v7386 = vmul.f32 %v7220, %v7364
    %v7387 = vmul.f32 %v7222, %v7366
    %v7388 = vmul.f32 %v7224, %v7368
    %v7389 = vmul.f32 %v7226, %v7370
    %v7390 = vmul.f32 %v7228, %v7372
    %v7391 = vmul.f32 %v7230, %v7374
    %v7392 = vmul.f32 %v7232, %v7376
    %v7393 = vadd.f32 %v7353, %v7385
    %v7394 = vadd.f32 %v7354, %v7386
    %v7395 = vadd.f32 %v7355, %v7387
    %v7396 = vadd.f32 %v7356, %v7388
    %v7397 = vadd.f32 %v7357, %v7389
    %v7398 = vadd.f32 %v7358, %v7390
    %v7399 = vadd.f32 %v7359, %v7391
    %v7400 = vadd.f32 %v7360, %v7392
    %v7409 = vcombine.low %v7393, %v7394
    %v7410 = vcombine.low %v7395, %v7396
    %v7411 = vcombine.low %v7397, %v7398
    %v7412 = vcombine.low %v7399, %v7400
    %v7414 = vunpack.c.l.s4 1966171168
    %v7415 = vunpack.c.0.s8 %v7414
    %v7416 = vlaneseq
    %v7417 = vshrl.u32 %v7416, 7
    %v7418 = vsub.s32 %v7415, %v7417
    %v7419 = vrot.slane %v7409, %v7418
    %v7421 = vunpack.c.l.s4 1966171168
    %v7422 = vunpack.c.0.s8 %v7421
    %v7423 = vlaneseq
    %v7424 = vshrl.u32 %v7423, 7
    %v7425 = vsub.s32 %v7422, %v7424
    %v7426 = vrot.slane %v7410, %v7425
    %v7428 = vunpack.c.l.s4 1966171168
    %v7429 = vunpack.c.0.s8 %v7428
    %v7430 = vlaneseq
    %v7431 = vshrl.u32 %v7430, 7
    %v7432 = vsub.s32 %v7429, %v7431
    %v7433 = vrot.slane %v7411, %v7432
    %v7435 = vunpack.c.l.s4 1966171168
    %v7436 = vunpack.c.0.s8 %v7435
    %v7437 = vlaneseq
    %v7438 = vshrl.u32 %v7437, 7
    %v7439 = vsub.s32 %v7436, %v7438
    %v7440 = vrot.slane %v7412, %v7439
    %v7441 = vcombine.low %v7419, %v7426
    %v7442 = vcombine.low %v7433, %v7440
    %v7444 = vunpack.c.l.s4 1966171168
    %v7445 = vunpack.c.0.s8 %v7444
    %v7446 = vlaneseq
    %v7447 = vshrl.u32 %v7446, 7
    %v7448 = vsub.s32 %v7445, %v7447
    %v7449 = vrot.slane %v7441, %v7448
    %v7451 = vunpack.c.l.s4 1966171168
    %v7452 = vunpack.c.0.s8 %v7451
    %v7453 = vlaneseq
    %v7454 = vshrl.u32 %v7453, 7
    %v7455 = vsub.s32 %v7452, %v7454
    %v7456 = vrot.slane %v7442, %v7455
    %v7457 = vcombine.low %v7449, %v7456
    %7458 = vrot.lane.b32.xlu0 %v7457, 96
    %v7459 = vpop.permute.xlu0 %7458
    %v7461 = vsel %vm2393, %v7459, %v6357
    %v7463 = vcombine.high %v7461, %v7461
    %v7465 = vunpack.c.l.s4 1966171168
    %v7466 = vunpack.c.0.s8 %v7465
    %v7467 = vlaneseq
    %v7468 = vshrl.u32 %v7467, 7
    %v7469 = vsub.s32 %v7466, %v7468
    %v7470 = vrot.slane %v7461, %v7469
    %v7472 = vunpack.c.l.s4 1966171168
    %v7473 = vunpack.c.0.s8 %v7472
    %v7474 = vlaneseq
    %v7475 = vshrl.u32 %v7474, 7
    %v7476 = vsub.s32 %v7473, %v7475
    %v7477 = vrot.slane %v7463, %v7476
    %v7478 = vcombine.high %v7470, %v7470
    %v7479 = vcombine.high %v7477, %v7477
    %v7481 = vunpack.c.l.s4 1966171168
    %v7482 = vunpack.c.0.s8 %v7481
    %v7483 = vlaneseq
    %v7484 = vshrl.u32 %v7483, 7
    %v7485 = vsub.s32 %v7482, %v7484
    %v7486 = vrot.slane %v7470, %v7485
    %v7488 = vunpack.c.l.s4 1966171168
    %v7489 = vunpack.c.0.s8 %v7488
    %v7490 = vlaneseq
    %v7491 = vshrl.u32 %v7490, 7
    %v7492 = vsub.s32 %v7489, %v7491
    %v7493 = vrot.slane %v7477, %v7492
    %v7495 = vunpack.c.l.s4 1966171168
    %v7496 = vunpack.c.0.s8 %v7495
    %v7497 = vlaneseq
    %v7498 = vshrl.u32 %v7497, 7
    %v7499 = vsub.s32 %v7496, %v7498
    %v7500 = vrot.slane %v7478, %v7499
    %v7502 = vunpack.c.l.s4 1966171168
    %v7503 = vunpack.c.0.s8 %v7502
    %v7504 = vlaneseq
    %v7505 = vshrl.u32 %v7504, 7
    %v7506 = vsub.s32 %v7503, %v7505
    %v7507 = vrot.slane %v7479, %v7506
    %v7508 = vcombine.high %v7486, %v7486
    %v7509 = vcombine.high %v7493, %v7493
    %v7510 = vcombine.high %v7500, %v7500
    %v7511 = vcombine.high %v7507, %v7507
    %7520 = vst.msk [vmem:[#allocation3 + $0x6] sm:$0x1] %vm800, %v7486
    %7521 = vst.msk [vmem:[#allocation3 + $0xe] sm:$0x1] %vm800, %v7500
    %7522 = vst.msk [vmem:[#allocation3 + $0x16] sm:$0x1] %vm800, %v7508
    %7523 = vst.msk [vmem:[#allocation3 + $0x1e] sm:$0x1] %vm800, %v7510
    %7524 = vst.msk [vmem:[#allocation3 + $0x26] sm:$0x1] %vm800, %v7493
    %7525 = vst.msk [vmem:[#allocation3 + $0x2e] sm:$0x1] %vm800, %v7507
    %7526 = vst.msk [vmem:[#allocation3 + $0x36] sm:$0x1] %vm800, %v7509
    %7527 = vst.msk [vmem:[#allocation3 + $0x3e] sm:$0x1] %vm800, %v7511
    %v7528 = vld [vmem:[%s1435] ss:$8 sm:$0x3]
    %v7529 = vld [vmem:[%s1437] ss:$8 sm:$0x3]
    %v7530 = vld [vmem:[%s1439] ss:$8 sm:$0x3]
    %v7531 = vld [vmem:[%s1441] ss:$8 sm:$0x3]
    %v7532 = vld [vmem:[%s1443] ss:$8 sm:$0x3]
    %v7533 = vld [vmem:[%s1445] ss:$8 sm:$0x3]
    %v7534 = vld [vmem:[%s1447] ss:$8 sm:$0x3]
    %v7535 = vld [vmem:[%s1449] ss:$8 sm:$0x3]
    %v7536 = vsel %vm343, %v6924, 0
    %7538 = vmatprep.subr.mxu0 0.0
    %7539 = vmatpush1.msra.mxu0 %v317
    %7540 = vmatprep.subr.mxu0 0.0
    %7541 = vmatpush1.msra.mxu0 %v318
    %7542 = vmatprep.subr.mxu0 0.0
    %7543 = vmatpush1.msra.mxu0 %v319
    %7544 = vmatprep.subr.mxu0 0.0
    %7545 = vmatpush1.msra.mxu0 %v320
    %7546 = vmatprep.subr.mxu0 0.0
    %7547 = vmatpush1.msra.mxu0 0.0
    %7548 = vmatprep.subr.mxu0 0.0
    %7549 = vmatpush1.msra.mxu0 0.0
    %7550 = vmatprep.subr.mxu0 0.0
    %7551 = vmatpush1.msra.mxu0 0.0
    %7552 = vmatprep.subr.mxu0 0.0
    %7553 = vmatpush1.msra.mxu0 0.0
    %7554 = vmatprep.subr.mxu0 0.0
    %7555 = vmatpush1.msra.mxu0 0.0
    %7556 = vmatprep.subr.mxu0 0.0
    %7557 = vmatpush1.msra.mxu0 0.0
    %7558 = vmatprep.subr.mxu0 0.0
    %7559 = vmatpush1.msra.mxu0 0.0
    %7560 = vmatprep.subr.mxu0 0.0
    %7561 = vmatpush1.msra.mxu0 0.0
    %7562 = vmatprep.subr.mxu0 0.0
    %7563 = vmatpush1.msra.mxu0 0.0
    %7564 = vmatprep.subr.mxu0 0.0
    %7565 = vmatpush1.msra.mxu0 0.0
    %7566 = vmatprep.subr.mxu0 0.0
    %7567 = vmatpush1.msra.mxu0 0.0
    %7568 = vmatprep.subr.mxu0 0.0
    %7569 = vmatpush1.msra.mxu0 0.0
    %7570 = vmatprep.subr.mxu0 0.0
    %7571 = vmatpush1.msra.mxu0 0.0
    %7572 = vmatprep.subr.mxu0 0.0
    %7573 = vmatpush1.msra.mxu0 0.0
    %7574 = vmatprep.subr.mxu0 0.0
    %7575 = vmatpush1.msra.mxu0 0.0
    %7576 = vmatprep.subr.mxu0 0.0
    %7577 = vmatpush1.msra.mxu0 0.0
    %7578 = vmatprep.subr.mxu0 0.0
    %7579 = vmatpush1.msra.mxu0 0.0
    %7580 = vmatprep.subr.mxu0 0.0
    %7581 = vmatpush1.msra.mxu0 0.0
    %7582 = vmatprep.subr.mxu0 0.0
    %7583 = vmatpush1.msra.mxu0 0.0
    %7584 = vmatprep.subr.mxu0 0.0
    %7585 = vmatpush1.msra.mxu0 0.0
    %7586 = vmatprep.subr.mxu0 0.0
    %7587 = vmatpush1.msra.mxu0 0.0
    %7588 = vmatprep.subr.mxu0 0.0
    %7589 = vmatpush1.msra.mxu0 0.0
    %7590 = vmatprep.subr.mxu0 0.0
    %7591 = vmatpush1.msra.mxu0 0.0
    %7592 = vmatprep.subr.mxu0 0.0
    %7593 = vmatpush1.msra.mxu0 0.0
    %7594 = vmatprep.subr.mxu0 0.0
    %7595 = vmatpush1.msra.mxu0 0.0
    %7596 = vmatprep.subr.mxu0 0.0
    %7597 = vmatpush1.msra.mxu0 0.0
    %7598 = vmatprep.subr.mxu0 0.0
    %7599 = vmatpush1.msra.mxu0 0.0
    %7600 = vmatprep.subr.mxu0 0.0
    %7601 = vmatpush1.msra.mxu0 0.0
    %7602 = vmatprep.mubr.f32.mxu0 0.0
    %7603 = vmatmul.mubr.f32.gmra.mrb[0].mxu0 %v7536
    %v7604 = vpop.f32.mrb[0].mxu0
    %v7605 = vadd.f32 %v829, %v7604
    %v7606 = vpop.f32.mrb[0].mxu0
    %7607 = vdwg.mxu0
    %v7609 = vcombine.high %v7605, %v7605
    %v7611 = vunpack.c.l.s4 1966171168
    %v7612 = vunpack.c.0.s8 %v7611
    %v7613 = vlaneseq
    %v7614 = vshrl.u32 %v7613, 7
    %v7615 = vsub.s32 %v7612, %v7614
    %v7616 = vrot.slane %v7605, %v7615
    %v7618 = vunpack.c.l.s4 1966171168
    %v7619 = vunpack.c.0.s8 %v7618
    %v7620 = vlaneseq
    %v7621 = vshrl.u32 %v7620, 7
    %v7622 = vsub.s32 %v7619, %v7621
    %v7623 = vrot.slane %v7609, %v7622
    %v7624 = vcombine.high %v7616, %v7616
    %v7625 = vcombine.high %v7623, %v7623
    %v7627 = vunpack.c.l.s4 1966171168
    %v7628 = vunpack.c.0.s8 %v7627
    %v7629 = vlaneseq
    %v7630 = vshrl.u32 %v7629, 7
    %v7631 = vsub.s32 %v7628, %v7630
    %v7632 = vrot.slane %v7616, %v7631
    %v7634 = vunpack.c.l.s4 1966171168
    %v7635 = vunpack.c.0.s8 %v7634
    %v7636 = vlaneseq
    %v7637 = vshrl.u32 %v7636, 7
    %v7638 = vsub.s32 %v7635, %v7637
    %v7639 = vrot.slane %v7623, %v7638
    %v7641 = vunpack.c.l.s4 1966171168
    %v7642 = vunpack.c.0.s8 %v7641
    %v7643 = vlaneseq
    %v7644 = vshrl.u32 %v7643, 7
    %v7645 = vsub.s32 %v7642, %v7644
    %v7646 = vrot.slane %v7624, %v7645
    %v7648 = vunpack.c.l.s4 1966171168
    %v7649 = vunpack.c.0.s8 %v7648
    %v7650 = vlaneseq
    %v7651 = vshrl.u32 %v7650, 7
    %v7652 = vsub.s32 %v7649, %v7651
    %v7653 = vrot.slane %v7625, %v7652
    %v7654 = vcombine.high %v7632, %v7632
    %v7655 = vcombine.high %v7639, %v7639
    %v7656 = vcombine.high %v7646, %v7646
    %v7657 = vcombine.high %v7653, %v7653
    %7658 = vrot.lane.b32.xlu0 %v7632, 96
    %v7659 = vpop.permute.xlu0 %7658
    %7660 = vrot.lane.b32.xlu0 %v7646, 96
    %v7661 = vpop.permute.xlu0 %7660
    %7662 = vrot.lane.b32.xlu0 %v7654, 96
    %v7663 = vpop.permute.xlu0 %7662
    %7664 = vrot.lane.b32.xlu0 %v7656, 96
    %v7665 = vpop.permute.xlu0 %7664
    %7666 = vrot.lane.b32.xlu0 %v7639, 96
    %v7667 = vpop.permute.xlu0 %7666
    %7668 = vrot.lane.b32.xlu0 %v7653, 96
    %v7669 = vpop.permute.xlu0 %7668
    %7670 = vrot.lane.b32.xlu0 %v7655, 96
    %v7671 = vpop.permute.xlu0 %7670
    %7672 = vrot.lane.b32.xlu0 %v7657, 96
    %v7673 = vpop.permute.xlu0 %7672
    %v7682 = vadd.f32 %v7528, %v7659
    %v7683 = vadd.f32 %v7529, %v7661
    %v7684 = vadd.f32 %v7530, %v7663
    %v7685 = vadd.f32 %v7531, %v7665
    %v7686 = vadd.f32 %v7532, %v7667
    %v7687 = vadd.f32 %v7533, %v7669
    %v7688 = vadd.f32 %v7534, %v7671
    %v7689 = vadd.f32 %v7535, %v7673
    %v7690 = vxor.u32 %v7682, 2147483648
    %v7691 = vxor.u32 %v7683, 2147483648
    %v7692 = vxor.u32 %v7684, 2147483648
    %v7693 = vxor.u32 %v7685, 2147483648
    %v7694 = vxor.u32 %v7686, 2147483648
    %v7695 = vxor.u32 %v7687, 2147483648
    %v7696 = vxor.u32 %v7688, 2147483648
    %v7697 = vxor.u32 %v7689, 2147483648
    %v7698 = vmul.f32 %v7690, 1.442695
    %v7699 = vpow.pop %v7698
    %v7700 = vmul.f32 %v7691, 1.442695
    %v7701 = vpow.pop %v7700
    %v7702 = vmul.f32 %v7692, 1.442695
    %v7703 = vpow.pop %v7702
    %v7704 = vmul.f32 %v7693, 1.442695
    %v7705 = vpow.pop %v7704
    %v7706 = vmul.f32 %v7694, 1.442695
    %v7707 = vpow.pop %v7706
    %v7708 = vmul.f32 %v7695, 1.442695
    %v7709 = vpow.pop %v7708
    %v7710 = vmul.f32 %v7696, 1.442695
    %v7711 = vpow.pop %v7710
    %v7712 = vmul.f32 %v7697, 1.442695
    %v7713 = vpow.pop %v7712
    %v7714 = vadd.f32 %v7699, 1.0
    %v7715 = vadd.f32 %v7701, 1.0
    %v7716 = vadd.f32 %v7703, 1.0
    %v7717 = vadd.f32 %v7705, 1.0
    %v7718 = vadd.f32 %v7707, 1.0
    %v7719 = vadd.f32 %v7709, 1.0
    %v7720 = vadd.f32 %v7711, 1.0
    %v7721 = vadd.f32 %v7713, 1.0
    %v7722 = vrcp.pop %v7714
    %v7723 = vmul.f32 1.0, %v7722
    %v7724 = vrcp.pop %v7715
    %v7725 = vmul.f32 1.0, %v7724
    %v7726 = vrcp.pop %v7716
    %v7727 = vmul.f32 1.0, %v7726
    %v7728 = vrcp.pop %v7717
    %v7729 = vmul.f32 1.0, %v7728
    %v7730 = vrcp.pop %v7718
    %v7731 = vmul.f32 1.0, %v7730
    %v7732 = vrcp.pop %v7719
    %v7733 = vmul.f32 1.0, %v7732
    %v7734 = vrcp.pop %v7720
    %v7735 = vmul.f32 1.0, %v7734
    %v7736 = vrcp.pop %v7721
    %v7737 = vmul.f32 1.0, %v7736
    %v7746 = vrot.slane %v7528, 1
    %v7747 = vrot.slane %v7529, 1
    %v7748 = vrot.slane %v7530, 1
    %v7749 = vrot.slane %v7531, 1
    %v7750 = vrot.slane %v7532, 1
    %v7751 = vrot.slane %v7533, 1
    %v7752 = vrot.slane %v7534, 1
    %v7753 = vrot.slane %v7535, 1
    %v7762 = vadd.f32 %v7746, %v7659
    %v7763 = vadd.f32 %v7747, %v7661
    %v7764 = vadd.f32 %v7748, %v7663
    %v7765 = vadd.f32 %v7749, %v7665
    %v7766 = vadd.f32 %v7750, %v7667
    %v7767 = vadd.f32 %v7751, %v7669
    %v7768 = vadd.f32 %v7752, %v7671
    %v7769 = vadd.f32 %v7753, %v7673
    %v7770 = vxor.u32 %v7762, 2147483648
    %v7771 = vxor.u32 %v7763, 2147483648
    %v7772 = vxor.u32 %v7764, 2147483648
    %v7773 = vxor.u32 %v7765, 2147483648
    %v7774 = vxor.u32 %v7766, 2147483648
    %v7775 = vxor.u32 %v7767, 2147483648
    %v7776 = vxor.u32 %v7768, 2147483648
    %v7777 = vxor.u32 %v7769, 2147483648
    %v7778 = vmul.f32 %v7770, 1.442695
    %v7779 = vpow.pop %v7778
    %v7780 = vmul.f32 %v7771, 1.442695
    %v7781 = vpow.pop %v7780
    %v7782 = vmul.f32 %v7772, 1.442695
    %v7783 = vpow.pop %v7782
    %v7784 = vmul.f32 %v7773, 1.442695
    %v7785 = vpow.pop %v7784
    %v7786 = vmul.f32 %v7774, 1.442695
    %v7787 = vpow.pop %v7786
    %v7788 = vmul.f32 %v7775, 1.442695
    %v7789 = vpow.pop %v7788
    %v7790 = vmul.f32 %v7776, 1.442695
    %v7791 = vpow.pop %v7790
    %v7792 = vmul.f32 %v7777, 1.442695
    %v7793 = vpow.pop %v7792
    %v7794 = vadd.f32 %v7779, 1.0
    %v7795 = vadd.f32 %v7781, 1.0
    %v7796 = vadd.f32 %v7783, 1.0
    %v7797 = vadd.f32 %v7785, 1.0
    %v7798 = vadd.f32 %v7787, 1.0
    %v7799 = vadd.f32 %v7789, 1.0
    %v7800 = vadd.f32 %v7791, 1.0
    %v7801 = vadd.f32 %v7793, 1.0
    %v7802 = vrcp.pop %v7794
    %v7803 = vmul.f32 1.0, %v7802
    %v7804 = vrcp.pop %v7795
    %v7805 = vmul.f32 1.0, %v7804
    %v7806 = vrcp.pop %v7796
    %v7807 = vmul.f32 1.0, %v7806
    %v7808 = vrcp.pop %v7797
    %v7809 = vmul.f32 1.0, %v7808
    %v7810 = vrcp.pop %v7798
    %v7811 = vmul.f32 1.0, %v7810
    %v7812 = vrcp.pop %v7799
    %v7813 = vmul.f32 1.0, %v7812
    %v7814 = vrcp.pop %v7800
    %v7815 = vmul.f32 1.0, %v7814
    %v7816 = vrcp.pop %v7801
    %v7817 = vmul.f32 1.0, %v7816
    %7818 = vrot.lane.b32.xlu0 %v7632, 32
    %v7819 = vpop.permute.xlu0 %7818
    %7820 = vrot.lane.b32.xlu0 %v7646, 32
    %v7821 = vpop.permute.xlu0 %7820
    %7822 = vrot.lane.b32.xlu0 %v7654, 32
    %v7823 = vpop.permute.xlu0 %7822
    %7824 = vrot.lane.b32.xlu0 %v7656, 32
    %v7825 = vpop.permute.xlu0 %7824
    %7826 = vrot.lane.b32.xlu0 %v7639, 32
    %v7827 = vpop.permute.xlu0 %7826
    %7828 = vrot.lane.b32.xlu0 %v7653, 32
    %v7829 = vpop.permute.xlu0 %7828
    %7830 = vrot.lane.b32.xlu0 %v7655, 32
    %v7831 = vpop.permute.xlu0 %7830
    %7832 = vrot.lane.b32.xlu0 %v7657, 32
    %v7833 = vpop.permute.xlu0 %7832
    %v7842 = vmul.f32 %v7723, %v7819
    %v7843 = vmul.f32 %v7725, %v7821
    %v7844 = vmul.f32 %v7727, %v7823
    %v7845 = vmul.f32 %v7729, %v7825
    %v7846 = vmul.f32 %v7731, %v7827
    %v7847 = vmul.f32 %v7733, %v7829
    %v7848 = vmul.f32 %v7735, %v7831
    %v7849 = vmul.f32 %v7737, %v7833
    %7850 = vrot.lane.b32.xlu0 %v7528, 96
    %v7851 = vpop.permute.xlu0 %7850
    %7852 = vrot.lane.b32.xlu0 %v7529, 96
    %v7853 = vpop.permute.xlu0 %7852
    %7854 = vrot.lane.b32.xlu0 %v7530, 96
    %v7855 = vpop.permute.xlu0 %7854
    %7856 = vrot.lane.b32.xlu0 %v7531, 96
    %v7857 = vpop.permute.xlu0 %7856
    %7858 = vrot.lane.b32.xlu0 %v7532, 96
    %v7859 = vpop.permute.xlu0 %7858
    %7860 = vrot.lane.b32.xlu0 %v7533, 96
    %v7861 = vpop.permute.xlu0 %7860
    %7862 = vrot.lane.b32.xlu0 %v7534, 96
    %v7863 = vpop.permute.xlu0 %7862
    %7864 = vrot.lane.b32.xlu0 %v7535, 96
    %v7865 = vpop.permute.xlu0 %7864
    %v7866 = vrot.slane %v7851, 1
    %v7867 = vrot.slane %v7853, 1
    %v7868 = vrot.slane %v7855, 1
    %v7869 = vrot.slane %v7857, 1
    %v7870 = vrot.slane %v7859, 1
    %v7871 = vrot.slane %v7861, 1
    %v7872 = vrot.slane %v7863, 1
    %v7873 = vrot.slane %v7865, 1
    %7890 = vrot.lane.b32.xlu0 %v7842, 32
    %v7891 = vpop.permute.xlu0 %7890
    %7892 = vrot.lane.b32.xlu0 %v7843, 32
    %v7893 = vpop.permute.xlu0 %7892
    %7894 = vrot.lane.b32.xlu0 %v7844, 32
    %v7895 = vpop.permute.xlu0 %7894
    %7896 = vrot.lane.b32.xlu0 %v7845, 32
    %v7897 = vpop.permute.xlu0 %7896
    %7898 = vrot.lane.b32.xlu0 %v7846, 32
    %v7899 = vpop.permute.xlu0 %7898
    %7900 = vrot.lane.b32.xlu0 %v7847, 32
    %v7901 = vpop.permute.xlu0 %7900
    %7902 = vrot.lane.b32.xlu0 %v7848, 32
    %v7903 = vpop.permute.xlu0 %7902
    %7904 = vrot.lane.b32.xlu0 %v7849, 32
    %v7905 = vpop.permute.xlu0 %7904
    %v7914 = vadd.f32 %v7866, %v7891
    %v7915 = vadd.f32 %v7867, %v7893
    %v7916 = vadd.f32 %v7868, %v7895
    %v7917 = vadd.f32 %v7869, %v7897
    %v7918 = vadd.f32 %v7870, %v7899
    %v7919 = vadd.f32 %v7871, %v7901
    %v7920 = vadd.f32 %v7872, %v7903
    %v7921 = vadd.f32 %v7873, %v7905
    %v7922 = vtanh.pop %v7914
    %v7923 = vtanh.pop %v7915
    %v7924 = vtanh.pop %v7916
    %v7925 = vtanh.pop %v7917
    %v7926 = vtanh.pop %v7918
    %v7927 = vtanh.pop %v7919
    %v7928 = vtanh.pop %v7920
    %v7929 = vtanh.pop %v7921
    %v7930 = vsub.f32 1.0, %v7803
    %v7931 = vsub.f32 1.0, %v7805
    %v7932 = vsub.f32 1.0, %v7807
    %v7933 = vsub.f32 1.0, %v7809
    %v7934 = vsub.f32 1.0, %v7811
    %v7935 = vsub.f32 1.0, %v7813
    %v7936 = vsub.f32 1.0, %v7815
    %v7937 = vsub.f32 1.0, %v7817
    %v7938 = vmul.f32 %v7930, %v7922
    %v7939 = vmul.f32 %v7931, %v7923
    %v7940 = vmul.f32 %v7932, %v7924
    %v7941 = vmul.f32 %v7933, %v7925
    %v7942 = vmul.f32 %v7934, %v7926
    %v7943 = vmul.f32 %v7935, %v7927
    %v7944 = vmul.f32 %v7936, %v7928
    %v7945 = vmul.f32 %v7937, %v7929
    %v7954 = vmul.f32 %v7803, %v6949
    %v7955 = vmul.f32 %v7805, %v6963
    %v7956 = vmul.f32 %v7807, %v6971
    %v7957 = vmul.f32 %v7809, %v6973
    %v7958 = vmul.f32 %v7811, %v6956
    %v7959 = vmul.f32 %v7813, %v6970
    %v7960 = vmul.f32 %v7815, %v6972
    %v7961 = vmul.f32 %v7817, %v6974
    %v7962 = vadd.f32 %v7938, %v7954
    %v7963 = vadd.f32 %v7939, %v7955
    %v7964 = vadd.f32 %v7940, %v7956
    %v7965 = vadd.f32 %v7941, %v7957
    %v7966 = vadd.f32 %v7942, %v7958
    %v7967 = vadd.f32 %v7943, %v7959
    %v7968 = vadd.f32 %v7944, %v7960
    %v7969 = vadd.f32 %v7945, %v7961
    %v7978 = vcombine.low %v7962, %v7963
    %v7979 = vcombine.low %v7964, %v7965
    %v7980 = vcombine.low %v7966, %v7967
    %v7981 = vcombine.low %v7968, %v7969
    %v7983 = vunpack.c.l.s4 1966171168
    %v7984 = vunpack.c.0.s8 %v7983
    %v7985 = vlaneseq
    %v7986 = vshrl.u32 %v7985, 7
    %v7987 = vsub.s32 %v7984, %v7986
    %v7988 = vrot.slane %v7978, %v7987
    %v7990 = vunpack.c.l.s4 1966171168
    %v7991 = vunpack.c.0.s8 %v7990
    %v7992 = vlaneseq
    %v7993 = vshrl.u32 %v7992, 7
    %v7994 = vsub.s32 %v7991, %v7993
    %v7995 = vrot.slane %v7979, %v7994
    %v7997 = vunpack.c.l.s4 1966171168
    %v7998 = vunpack.c.0.s8 %v7997
    %v7999 = vlaneseq
    %v8000 = vshrl.u32 %v7999, 7
    %v8001 = vsub.s32 %v7998, %v8000
    %v8002 = vrot.slane %v7980, %v8001
    %v8004 = vunpack.c.l.s4 1966171168
    %v8005 = vunpack.c.0.s8 %v8004
    %v8006 = vlaneseq
    %v8007 = vshrl.u32 %v8006, 7
    %v8008 = vsub.s32 %v8005, %v8007
    %v8009 = vrot.slane %v7981, %v8008
    %v8010 = vcombine.low %v7988, %v7995
    %v8011 = vcombine.low %v8002, %v8009
    %v8013 = vunpack.c.l.s4 1966171168
    %v8014 = vunpack.c.0.s8 %v8013
    %v8015 = vlaneseq
    %v8016 = vshrl.u32 %v8015, 7
    %v8017 = vsub.s32 %v8014, %v8016
    %v8018 = vrot.slane %v8010, %v8017
    %v8020 = vunpack.c.l.s4 1966171168
    %v8021 = vunpack.c.0.s8 %v8020
    %v8022 = vlaneseq
    %v8023 = vshrl.u32 %v8022, 7
    %v8024 = vsub.s32 %v8021, %v8023
    %v8025 = vrot.slane %v8011, %v8024
    %v8026 = vcombine.low %v8018, %v8025
    %v8028 = vsel %vm1810, %v8026, %v6924
    %v8030 = vcombine.high %v8028, %v8028
    %v8032 = vunpack.c.l.s4 1966171168
    %v8033 = vunpack.c.0.s8 %v8032
    %v8034 = vlaneseq
    %v8035 = vshrl.u32 %v8034, 7
    %v8036 = vsub.s32 %v8033, %v8035
    %v8037 = vrot.slane %v8028, %v8036
    %v8039 = vunpack.c.l.s4 1966171168
    %v8040 = vunpack.c.0.s8 %v8039
    %v8041 = vlaneseq
    %v8042 = vshrl.u32 %v8041, 7
    %v8043 = vsub.s32 %v8040, %v8042
    %v8044 = vrot.slane %v8030, %v8043
    %v8045 = vcombine.high %v8037, %v8037
    %v8046 = vcombine.high %v8044, %v8044
    %v8048 = vunpack.c.l.s4 1966171168
    %v8049 = vunpack.c.0.s8 %v8048
    %v8050 = vlaneseq
    %v8051 = vshrl.u32 %v8050, 7
    %v8052 = vsub.s32 %v8049, %v8051
    %v8053 = vrot.slane %v8037, %v8052
    %v8055 = vunpack.c.l.s4 1966171168
    %v8056 = vunpack.c.0.s8 %v8055
    %v8057 = vlaneseq
    %v8058 = vshrl.u32 %v8057, 7
    %v8059 = vsub.s32 %v8056, %v8058
    %v8060 = vrot.slane %v8044, %v8059
    %v8062 = vunpack.c.l.s4 1966171168
    %v8063 = vunpack.c.0.s8 %v8062
    %v8064 = vlaneseq
    %v8065 = vshrl.u32 %v8064, 7
    %v8066 = vsub.s32 %v8063, %v8065
    %v8067 = vrot.slane %v8045, %v8066
    %v8069 = vunpack.c.l.s4 1966171168
    %v8070 = vunpack.c.0.s8 %v8069
    %v8071 = vlaneseq
    %v8072 = vshrl.u32 %v8071, 7
    %v8073 = vsub.s32 %v8070, %v8072
    %v8074 = vrot.slane %v8046, %v8073
    %v8075 = vcombine.high %v8053, %v8053
    %v8076 = vcombine.high %v8060, %v8060
    %v8077 = vcombine.high %v8067, %v8067
    %v8078 = vcombine.high %v8074, %v8074
    %v8079 = vlaneseq
    %v8080 = vshrl.u32 %v8079, 7
    %v8081 = vsub.s32 0, %v8080
    %v8082 = vrot.slane %v8053, %v8081
    %v8083 = vlaneseq
    %v8084 = vshrl.u32 %v8083, 7
    %v8085 = vsub.s32 0, %v8084
    %v8086 = vrot.slane %v8067, %v8085
    %v8087 = vlaneseq
    %v8088 = vshrl.u32 %v8087, 7
    %v8089 = vsub.s32 0, %v8088
    %v8090 = vrot.slane %v8075, %v8089
    %v8091 = vlaneseq
    %v8092 = vshrl.u32 %v8091, 7
    %v8093 = vsub.s32 0, %v8092
    %v8094 = vrot.slane %v8077, %v8093
    %v8095 = vlaneseq
    %v8096 = vshrl.u32 %v8095, 7
    %v8097 = vsub.s32 0, %v8096
    %v8098 = vrot.slane %v8060, %v8097
    %v8099 = vlaneseq
    %v8100 = vshrl.u32 %v8099, 7
    %v8101 = vsub.s32 0, %v8100
    %v8102 = vrot.slane %v8074, %v8101
    %v8103 = vlaneseq
    %v8104 = vshrl.u32 %v8103, 7
    %v8105 = vsub.s32 0, %v8104
    %v8106 = vrot.slane %v8076, %v8105
    %v8107 = vlaneseq
    %v8108 = vshrl.u32 %v8107, 7
    %v8109 = vsub.s32 0, %v8108
    %v8110 = vrot.slane %v8078, %v8109
    %8111 = vrot.lane.b32.xlu0 %v8082, 32
    %v8112 = vpop.permute.xlu0 %8111
    %8113 = vrot.lane.b32.xlu0 %v8086, 32
    %v8114 = vpop.permute.xlu0 %8113
    %8115 = vrot.lane.b32.xlu0 %v8090, 32
    %v8116 = vpop.permute.xlu0 %8115
    %8117 = vrot.lane.b32.xlu0 %v8094, 32
    %v8118 = vpop.permute.xlu0 %8117
    %8119 = vrot.lane.b32.xlu0 %v8098, 32
    %v8120 = vpop.permute.xlu0 %8119
    %8121 = vrot.lane.b32.xlu0 %v8102, 32
    %v8122 = vpop.permute.xlu0 %8121
    %8123 = vrot.lane.b32.xlu0 %v8106, 32
    %v8124 = vpop.permute.xlu0 %8123
    %8125 = vrot.lane.b32.xlu0 %v8110, 32
    %v8126 = vpop.permute.xlu0 %8125
    %8135 = vst.msk [vmem:[#allocation3 + $0x1] sm:$0x1] %vm1426, %v8112
    %8136 = vst.msk [vmem:[#allocation3 + $0x9] sm:$0x1] %vm1426, %v8114
    %8137 = vst.msk [vmem:[#allocation3 + $0x11] sm:$0x1] %vm1426, %v8116
    %8138 = vst.msk [vmem:[#allocation3 + $0x19] sm:$0x1] %vm1426, %v8118
    %8139 = vst.msk [vmem:[#allocation3 + $0x21] sm:$0x1] %vm1426, %v8120
    %8140 = vst.msk [vmem:[#allocation3 + $0x29] sm:$0x1] %vm1426, %v8122
    %8141 = vst.msk [vmem:[#allocation3 + $0x31] sm:$0x1] %vm1426, %v8124
    %8142 = vst.msk [vmem:[#allocation3 + $0x39] sm:$0x1] %vm1426, %v8126
    %v8143 = vld [vmem:[%s809] ss:$8 sm:$0x3]
    %v8144 = vld [vmem:[%s811] ss:$8 sm:$0x3]
    %v8145 = vld [vmem:[%s813] ss:$8 sm:$0x3]
    %v8146 = vld [vmem:[%s815] ss:$8 sm:$0x3]
    %v8147 = vld [vmem:[%s817] ss:$8 sm:$0x3]
    %v8148 = vld [vmem:[%s819] ss:$8 sm:$0x3]
    %v8149 = vld [vmem:[%s821] ss:$8 sm:$0x3]
    %v8150 = vld [vmem:[%s823] ss:$8 sm:$0x3]
    %v8151 = vsel %vm343, %v7461, 0
    %8153 = vmatprep.subr.mxu0 0.0
    %8154 = vmatpush1.msra.mxu0 %v312
    %8155 = vmatprep.subr.mxu0 0.0
    %8156 = vmatpush1.msra.mxu0 %v313
    %8157 = vmatprep.subr.mxu0 0.0
    %8158 = vmatpush1.msra.mxu0 %v314
    %8159 = vmatprep.subr.mxu0 0.0
    %8160 = vmatpush1.msra.mxu0 %v315
    %8161 = vmatprep.subr.mxu0 0.0
    %8162 = vmatpush1.msra.mxu0 0.0
    %8163 = vmatprep.subr.mxu0 0.0
    %8164 = vmatpush1.msra.mxu0 0.0
    %8165 = vmatprep.subr.mxu0 0.0
    %8166 = vmatpush1.msra.mxu0 0.0
    %8167 = vmatprep.subr.mxu0 0.0
    %8168 = vmatpush1.msra.mxu0 0.0
    %8169 = vmatprep.subr.mxu0 0.0
    %8170 = vmatpush1.msra.mxu0 0.0
    %8171 = vmatprep.subr.mxu0 0.0
    %8172 = vmatpush1.msra.mxu0 0.0
    %8173 = vmatprep.subr.mxu0 0.0
    %8174 = vmatpush1.msra.mxu0 0.0
    %8175 = vmatprep.subr.mxu0 0.0
    %8176 = vmatpush1.msra.mxu0 0.0
    %8177 = vmatprep.subr.mxu0 0.0
    %8178 = vmatpush1.msra.mxu0 0.0
    %8179 = vmatprep.subr.mxu0 0.0
    %8180 = vmatpush1.msra.mxu0 0.0
    %8181 = vmatprep.subr.mxu0 0.0
    %8182 = vmatpush1.msra.mxu0 0.0
    %8183 = vmatprep.subr.mxu0 0.0
    %8184 = vmatpush1.msra.mxu0 0.0
    %8185 = vmatprep.subr.mxu0 0.0
    %8186 = vmatpush1.msra.mxu0 0.0
    %8187 = vmatprep.subr.mxu0 0.0
    %8188 = vmatpush1.msra.mxu0 0.0
    %8189 = vmatprep.subr.mxu0 0.0
    %8190 = vmatpush1.msra.mxu0 0.0
    %8191 = vmatprep.subr.mxu0 0.0
    %8192 = vmatpush1.msra.mxu0 0.0
    %8193 = vmatprep.subr.mxu0 0.0
    %8194 = vmatpush1.msra.mxu0 0.0
    %8195 = vmatprep.subr.mxu0 0.0
    %8196 = vmatpush1.msra.mxu0 0.0
    %8197 = vmatprep.subr.mxu0 0.0
    %8198 = vmatpush1.msra.mxu0 0.0
    %8199 = vmatprep.subr.mxu0 0.0
    %8200 = vmatpush1.msra.mxu0 0.0
    %8201 = vmatprep.subr.mxu0 0.0
    %8202 = vmatpush1.msra.mxu0 0.0
    %8203 = vmatprep.subr.mxu0 0.0
    %8204 = vmatpush1.msra.mxu0 0.0
    %8205 = vmatprep.subr.mxu0 0.0
    %8206 = vmatpush1.msra.mxu0 0.0
    %8207 = vmatprep.subr.mxu0 0.0
    %8208 = vmatpush1.msra.mxu0 0.0
    %8209 = vmatprep.subr.mxu0 0.0
    %8210 = vmatpush1.msra.mxu0 0.0
    %8211 = vmatprep.subr.mxu0 0.0
    %8212 = vmatpush1.msra.mxu0 0.0
    %8213 = vmatprep.subr.mxu0 0.0
    %8214 = vmatpush1.msra.mxu0 0.0
    %8215 = vmatprep.subr.mxu0 0.0
    %8216 = vmatpush1.msra.mxu0 0.0
    %8217 = vmatprep.mubr.f32.mxu0 0.0
    %8218 = vmatmul.mubr.f32.gmra.mrb[0].mxu0 %v8151
    %v8219 = vpop.f32.mrb[0].mxu0
    %v8220 = vadd.f32 %v341, %v8219
    %v8221 = vpop.f32.mrb[0].mxu0
    %8222 = vdwg.mxu0
    %v8224 = vcombine.high %v8220, %v8220
    %v8226 = vunpack.c.l.s4 1966171168
    %v8227 = vunpack.c.0.s8 %v8226
    %v8228 = vlaneseq
    %v8229 = vshrl.u32 %v8228, 7
    %v8230 = vsub.s32 %v8227, %v8229
    %v8231 = vrot.slane %v8220, %v8230
    %v8233 = vunpack.c.l.s4 1966171168
    %v8234 = vunpack.c.0.s8 %v8233
    %v8235 = vlaneseq
    %v8236 = vshrl.u32 %v8235, 7
    %v8237 = vsub.s32 %v8234, %v8236
    %v8238 = vrot.slane %v8224, %v8237
    %v8239 = vcombine.high %v8231, %v8231
    %v8240 = vcombine.high %v8238, %v8238
    %v8242 = vunpack.c.l.s4 1966171168
    %v8243 = vunpack.c.0.s8 %v8242
    %v8244 = vlaneseq
    %v8245 = vshrl.u32 %v8244, 7
    %v8246 = vsub.s32 %v8243, %v8245
    %v8247 = vrot.slane %v8231, %v8246
    %v8249 = vunpack.c.l.s4 1966171168
    %v8250 = vunpack.c.0.s8 %v8249
    %v8251 = vlaneseq
    %v8252 = vshrl.u32 %v8251, 7
    %v8253 = vsub.s32 %v8250, %v8252
    %v8254 = vrot.slane %v8238, %v8253
    %v8256 = vunpack.c.l.s4 1966171168
    %v8257 = vunpack.c.0.s8 %v8256
    %v8258 = vlaneseq
    %v8259 = vshrl.u32 %v8258, 7
    %v8260 = vsub.s32 %v8257, %v8259
    %v8261 = vrot.slane %v8239, %v8260
    %v8263 = vunpack.c.l.s4 1966171168
    %v8264 = vunpack.c.0.s8 %v8263
    %v8265 = vlaneseq
    %v8266 = vshrl.u32 %v8265, 7
    %v8267 = vsub.s32 %v8264, %v8266
    %v8268 = vrot.slane %v8240, %v8267
    %v8269 = vcombine.high %v8247, %v8247
    %v8270 = vcombine.high %v8254, %v8254
    %v8271 = vcombine.high %v8261, %v8261
    %v8272 = vcombine.high %v8268, %v8268
    %v8281 = vadd.f32 %v8143, %v8247
    %v8282 = vadd.f32 %v8144, %v8261
    %v8283 = vadd.f32 %v8145, %v8269
    %v8284 = vadd.f32 %v8146, %v8271
    %v8285 = vadd.f32 %v8147, %v8254
    %v8286 = vadd.f32 %v8148, %v8268
    %v8287 = vadd.f32 %v8149, %v8270
    %v8288 = vadd.f32 %v8150, %v8272
    %v8289 = vxor.u32 %v8281, 2147483648
    %v8290 = vxor.u32 %v8282, 2147483648
    %v8291 = vxor.u32 %v8283, 2147483648
    %v8292 = vxor.u32 %v8284, 2147483648
    %v8293 = vxor.u32 %v8285, 2147483648
    %v8294 = vxor.u32 %v8286, 2147483648
    %v8295 = vxor.u32 %v8287, 2147483648
    %v8296 = vxor.u32 %v8288, 2147483648
    %v8297 = vmul.f32 %v8289, 1.442695
    %v8298 = vpow.pop %v8297
    %v8299 = vmul.f32 %v8290, 1.442695
    %v8300 = vpow.pop %v8299
    %v8301 = vmul.f32 %v8291, 1.442695
    %v8302 = vpow.pop %v8301
    %v8303 = vmul.f32 %v8292, 1.442695
    %v8304 = vpow.pop %v8303
    %v8305 = vmul.f32 %v8293, 1.442695
    %v8306 = vpow.pop %v8305
    %v8307 = vmul.f32 %v8294, 1.442695
    %v8308 = vpow.pop %v8307
    %v8309 = vmul.f32 %v8295, 1.442695
    %v8310 = vpow.pop %v8309
    %v8311 = vmul.f32 %v8296, 1.442695
    %v8312 = vpow.pop %v8311
    %v8313 = vadd.f32 %v8298, 1.0
    %v8314 = vadd.f32 %v8300, 1.0
    %v8315 = vadd.f32 %v8302, 1.0
    %v8316 = vadd.f32 %v8304, 1.0
    %v8317 = vadd.f32 %v8306, 1.0
    %v8318 = vadd.f32 %v8308, 1.0
    %v8319 = vadd.f32 %v8310, 1.0
    %v8320 = vadd.f32 %v8312, 1.0
    %v8321 = vrcp.pop %v8313
    %v8322 = vmul.f32 1.0, %v8321
    %v8323 = vrcp.pop %v8314
    %v8324 = vmul.f32 1.0, %v8323
    %v8325 = vrcp.pop %v8315
    %v8326 = vmul.f32 1.0, %v8325
    %v8327 = vrcp.pop %v8316
    %v8328 = vmul.f32 1.0, %v8327
    %v8329 = vrcp.pop %v8317
    %v8330 = vmul.f32 1.0, %v8329
    %v8331 = vrcp.pop %v8318
    %v8332 = vmul.f32 1.0, %v8331
    %v8333 = vrcp.pop %v8319
    %v8334 = vmul.f32 1.0, %v8333
    %v8335 = vrcp.pop %v8320
    %v8336 = vmul.f32 1.0, %v8335
    %8337 = vrot.lane.b32.xlu0 %v8247, 64
    %v8338 = vpop.permute.xlu0 %8337
    %8339 = vrot.lane.b32.xlu0 %v8261, 64
    %v8340 = vpop.permute.xlu0 %8339
    %8341 = vrot.lane.b32.xlu0 %v8269, 64
    %v8342 = vpop.permute.xlu0 %8341
    %8343 = vrot.lane.b32.xlu0 %v8271, 64
    %v8344 = vpop.permute.xlu0 %8343
    %8345 = vrot.lane.b32.xlu0 %v8254, 64
    %v8346 = vpop.permute.xlu0 %8345
    %8347 = vrot.lane.b32.xlu0 %v8268, 64
    %v8348 = vpop.permute.xlu0 %8347
    %8349 = vrot.lane.b32.xlu0 %v8270, 64
    %v8350 = vpop.permute.xlu0 %8349
    %8351 = vrot.lane.b32.xlu0 %v8272, 64
    %v8352 = vpop.permute.xlu0 %8351
    %v8361 = vmul.f32 %v8322, %v8338
    %v8362 = vmul.f32 %v8324, %v8340
    %v8363 = vmul.f32 %v8326, %v8342
    %v8364 = vmul.f32 %v8328, %v8344
    %v8365 = vmul.f32 %v8330, %v8346
    %v8366 = vmul.f32 %v8332, %v8348
    %v8367 = vmul.f32 %v8334, %v8350
    %v8368 = vmul.f32 %v8336, %v8352
    %8377 = vrot.lane.b32.xlu0 %v8361, 64
    %v8378 = vpop.permute.xlu0 %8377
    %8379 = vrot.lane.b32.xlu0 %v8362, 64
    %v8380 = vpop.permute.xlu0 %8379
    %8381 = vrot.lane.b32.xlu0 %v8363, 64
    %v8382 = vpop.permute.xlu0 %8381
    %8383 = vrot.lane.b32.xlu0 %v8364, 64
    %v8384 = vpop.permute.xlu0 %8383
    %8385 = vrot.lane.b32.xlu0 %v8365, 64
    %v8386 = vpop.permute.xlu0 %8385
    %8387 = vrot.lane.b32.xlu0 %v8366, 64
    %v8388 = vpop.permute.xlu0 %8387
    %8389 = vrot.lane.b32.xlu0 %v8367, 64
    %v8390 = vpop.permute.xlu0 %8389
    %8391 = vrot.lane.b32.xlu0 %v8368, 64
    %v8392 = vpop.permute.xlu0 %8391
    %v8401 = vadd.f32 %v8143, %v8378
    %v8402 = vadd.f32 %v8144, %v8380
    %v8403 = vadd.f32 %v8145, %v8382
    %v8404 = vadd.f32 %v8146, %v8384
    %v8405 = vadd.f32 %v8147, %v8386
    %v8406 = vadd.f32 %v8148, %v8388
    %v8407 = vadd.f32 %v8149, %v8390
    %v8408 = vadd.f32 %v8150, %v8392
    %v8409 = vtanh.pop %v8401
    %v8410 = vtanh.pop %v8402
    %v8411 = vtanh.pop %v8403
    %v8412 = vtanh.pop %v8404
    %v8413 = vtanh.pop %v8405
    %v8414 = vtanh.pop %v8406
    %v8415 = vtanh.pop %v8407
    %v8416 = vtanh.pop %v8408
    %v8417 = vsub.f32 1.0, %v8322
    %v8418 = vsub.f32 1.0, %v8324
    %v8419 = vsub.f32 1.0, %v8326
    %v8420 = vsub.f32 1.0, %v8328
    %v8421 = vsub.f32 1.0, %v8330
    %v8422 = vsub.f32 1.0, %v8332
    %v8423 = vsub.f32 1.0, %v8334
    %v8424 = vsub.f32 1.0, %v8336
    %8433 = vrot.lane.b32.xlu0 %v8409, 96
    %v8434 = vpop.permute.xlu0 %8433
    %8435 = vrot.lane.b32.xlu0 %v8410, 96
    %v8436 = vpop.permute.xlu0 %8435
    %8437 = vrot.lane.b32.xlu0 %v8411, 96
    %v8438 = vpop.permute.xlu0 %8437
    %8439 = vrot.lane.b32.xlu0 %v8412, 96
    %v8440 = vpop.permute.xlu0 %8439
    %8441 = vrot.lane.b32.xlu0 %v8413, 96
    %v8442 = vpop.permute.xlu0 %8441
    %8443 = vrot.lane.b32.xlu0 %v8414, 96
    %v8444 = vpop.permute.xlu0 %8443
    %8445 = vrot.lane.b32.xlu0 %v8415, 96
    %v8446 = vpop.permute.xlu0 %8445
    %8447 = vrot.lane.b32.xlu0 %v8416, 96
    %v8448 = vpop.permute.xlu0 %8447
    %v8457 = vmul.f32 %v8417, %v8434
    %v8458 = vmul.f32 %v8418, %v8436
    %v8459 = vmul.f32 %v8419, %v8438
    %v8460 = vmul.f32 %v8420, %v8440
    %v8461 = vmul.f32 %v8421, %v8442
    %v8462 = vmul.f32 %v8422, %v8444
    %v8463 = vmul.f32 %v8423, %v8446
    %v8464 = vmul.f32 %v8424, %v8448
    %8465 = vrot.lane.b32.xlu0 %v7486, 32
    %v8466 = vpop.permute.xlu0 %8465
    %8467 = vrot.lane.b32.xlu0 %v7500, 32
    %v8468 = vpop.permute.xlu0 %8467
    %8469 = vrot.lane.b32.xlu0 %v7508, 32
    %v8470 = vpop.permute.xlu0 %8469
    %8471 = vrot.lane.b32.xlu0 %v7510, 32
    %v8472 = vpop.permute.xlu0 %8471
    %8473 = vrot.lane.b32.xlu0 %v7493, 32
    %v8474 = vpop.permute.xlu0 %8473
    %8475 = vrot.lane.b32.xlu0 %v7507, 32
    %v8476 = vpop.permute.xlu0 %8475
    %8477 = vrot.lane.b32.xlu0 %v7509, 32
    %v8478 = vpop.permute.xlu0 %8477
    %8479 = vrot.lane.b32.xlu0 %v7511, 32
    %v8480 = vpop.permute.xlu0 %8479
    %v8489 = vmul.f32 %v8322, %v8466
    %v8490 = vmul.f32 %v8324, %v8468
    %v8491 = vmul.f32 %v8326, %v8470
    %v8492 = vmul.f32 %v8328, %v8472
    %v8493 = vmul.f32 %v8330, %v8474
    %v8494 = vmul.f32 %v8332, %v8476
    %v8495 = vmul.f32 %v8334, %v8478
    %v8496 = vmul.f32 %v8336, %v8480
    %v8497 = vadd.f32 %v8457, %v8489
    %v8498 = vadd.f32 %v8458, %v8490
    %v8499 = vadd.f32 %v8459, %v8491
    %v8500 = vadd.f32 %v8460, %v8492
    %v8501 = vadd.f32 %v8461, %v8493
    %v8502 = vadd.f32 %v8462, %v8494
    %v8503 = vadd.f32 %v8463, %v8495
    %v8504 = vadd.f32 %v8464, %v8496
    %v8513 = vcombine.low %v8497, %v8498
    %v8514 = vcombine.low %v8499, %v8500
    %v8515 = vcombine.low %v8501, %v8502
    %v8516 = vcombine.low %v8503, %v8504
    %v8518 = vunpack.c.l.s4 1966171168
    %v8519 = vunpack.c.0.s8 %v8518
    %v8520 = vlaneseq
    %v8521 = vshrl.u32 %v8520, 7
    %v8522 = vsub.s32 %v8519, %v8521
    %v8523 = vrot.slane %v8513, %v8522
    %v8525 = vunpack.c.l.s4 1966171168
    %v8526 = vunpack.c.0.s8 %v8525
    %v8527 = vlaneseq
    %v8528 = vshrl.u32 %v8527, 7
    %v8529 = vsub.s32 %v8526, %v8528
    %v8530 = vrot.slane %v8514, %v8529
    %v8532 = vunpack.c.l.s4 1966171168
    %v8533 = vunpack.c.0.s8 %v8532
    %v8534 = vlaneseq
    %v8535 = vshrl.u32 %v8534, 7
    %v8536 = vsub.s32 %v8533, %v8535
    %v8537 = vrot.slane %v8515, %v8536
    %v8539 = vunpack.c.l.s4 1966171168
    %v8540 = vunpack.c.0.s8 %v8539
    %v8541 = vlaneseq
    %v8542 = vshrl.u32 %v8541, 7
    %v8543 = vsub.s32 %v8540, %v8542
    %v8544 = vrot.slane %v8516, %v8543
    %v8545 = vcombine.low %v8523, %v8530
    %v8546 = vcombine.low %v8537, %v8544
    %v8548 = vunpack.c.l.s4 1966171168
    %v8549 = vunpack.c.0.s8 %v8548
    %v8550 = vlaneseq
    %v8551 = vshrl.u32 %v8550, 7
    %v8552 = vsub.s32 %v8549, %v8551
    %v8553 = vrot.slane %v8545, %v8552
    %v8555 = vunpack.c.l.s4 1966171168
    %v8556 = vunpack.c.0.s8 %v8555
    %v8557 = vlaneseq
    %v8558 = vshrl.u32 %v8557, 7
    %v8559 = vsub.s32 %v8556, %v8558
    %v8560 = vrot.slane %v8546, %v8559
    %v8561 = vcombine.low %v8553, %v8560
    %8562 = vrot.lane.b32.xlu0 %v8561, 96
    %v8563 = vpop.permute.xlu0 %8562
    %v8565 = vsel %vm1260, %v8563, %v7461
    %v8567 = vcombine.high %v8565, %v8565
    %v8569 = vunpack.c.l.s4 1966171168
    %v8570 = vunpack.c.0.s8 %v8569
    %v8571 = vlaneseq
    %v8572 = vshrl.u32 %v8571, 7
    %v8573 = vsub.s32 %v8570, %v8572
    %v8574 = vrot.slane %v8565, %v8573
    %v8576 = vunpack.c.l.s4 1966171168
    %v8577 = vunpack.c.0.s8 %v8576
    %v8578 = vlaneseq
    %v8579 = vshrl.u32 %v8578, 7
    %v8580 = vsub.s32 %v8577, %v8579
    %v8581 = vrot.slane %v8567, %v8580
    %v8582 = vcombine.high %v8574, %v8574
    %v8583 = vcombine.high %v8581, %v8581
    %v8585 = vunpack.c.l.s4 1966171168
    %v8586 = vunpack.c.0.s8 %v8585
    %v8587 = vlaneseq
    %v8588 = vshrl.u32 %v8587, 7
    %v8589 = vsub.s32 %v8586, %v8588
    %v8590 = vrot.slane %v8574, %v8589
    %v8592 = vunpack.c.l.s4 1966171168
    %v8593 = vunpack.c.0.s8 %v8592
    %v8594 = vlaneseq
    %v8595 = vshrl.u32 %v8594, 7
    %v8596 = vsub.s32 %v8593, %v8595
    %v8597 = vrot.slane %v8581, %v8596
    %v8599 = vunpack.c.l.s4 1966171168
    %v8600 = vunpack.c.0.s8 %v8599
    %v8601 = vlaneseq
    %v8602 = vshrl.u32 %v8601, 7
    %v8603 = vsub.s32 %v8600, %v8602
    %v8604 = vrot.slane %v8582, %v8603
    %v8606 = vunpack.c.l.s4 1966171168
    %v8607 = vunpack.c.0.s8 %v8606
    %v8608 = vlaneseq
    %v8609 = vshrl.u32 %v8608, 7
    %v8610 = vsub.s32 %v8607, %v8609
    %v8611 = vrot.slane %v8583, %v8610
    %v8612 = vcombine.high %v8590, %v8590
    %v8613 = vcombine.high %v8597, %v8597
    %v8614 = vcombine.high %v8604, %v8604
    %v8615 = vcombine.high %v8611, %v8611
    %8624 = vst.msk [vmem:[#allocation3 + $0x7] sm:$0x1] %vm800, %v8590
    %8625 = vst.msk [vmem:[#allocation3 + $0xf] sm:$0x1] %vm800, %v8604
    %8626 = vst.msk [vmem:[#allocation3 + $0x17] sm:$0x1] %vm800, %v8612
    %8627 = vst.msk [vmem:[#allocation3 + $0x1f] sm:$0x1] %vm800, %v8614
    %8628 = vst.msk [vmem:[#allocation3 + $0x27] sm:$0x1] %vm800, %v8597
    %8629 = vst.msk [vmem:[#allocation3 + $0x2f] sm:$0x1] %vm800, %v8611
    %8630 = vst.msk [vmem:[#allocation3 + $0x37] sm:$0x1] %vm800, %v8613
    %8631 = vst.msk [vmem:[#allocation3 + $0x3f] sm:$0x1] %vm800, %v8615
    %v8632 = vld [vmem:[#allocation2] ss:$8 sm:$0x3]
    %v8633 = vld [vmem:[%s323] ss:$8 sm:$0x3]
    %v8634 = vld [vmem:[%s325] ss:$8 sm:$0x3]
    %v8635 = vld [vmem:[%s327] ss:$8 sm:$0x3]
    %v8636 = vld [vmem:[%s329] ss:$8 sm:$0x3]
    %v8637 = vld [vmem:[%s331] ss:$8 sm:$0x3]
    %v8638 = vld [vmem:[%s333] ss:$8 sm:$0x3]
    %v8639 = vld [vmem:[%s335] ss:$8 sm:$0x3]
    %v8640 = vsel %vm343, %v8028, 0
    %8642 = vmatprep.subr.mxu0 0.0
    %8643 = vmatpush1.msra.mxu0 %v317
    %8644 = vmatprep.subr.mxu0 0.0
    %8645 = vmatpush1.msra.mxu0 %v318
    %8646 = vmatprep.subr.mxu0 0.0
    %8647 = vmatpush1.msra.mxu0 %v319
    %8648 = vmatprep.subr.mxu0 0.0
    %8649 = vmatpush1.msra.mxu0 %v320
    %8650 = vmatprep.subr.mxu0 0.0
    %8651 = vmatpush1.msra.mxu0 0.0
    %8652 = vmatprep.subr.mxu0 0.0
    %8653 = vmatpush1.msra.mxu0 0.0
    %8654 = vmatprep.subr.mxu0 0.0
    %8655 = vmatpush1.msra.mxu0 0.0
    %8656 = vmatprep.subr.mxu0 0.0
    %8657 = vmatpush1.msra.mxu0 0.0
    %8658 = vmatprep.subr.mxu0 0.0
    %8659 = vmatpush1.msra.mxu0 0.0
    %8660 = vmatprep.subr.mxu0 0.0
    %8661 = vmatpush1.msra.mxu0 0.0
    %8662 = vmatprep.subr.mxu0 0.0
    %8663 = vmatpush1.msra.mxu0 0.0
    %8664 = vmatprep.subr.mxu0 0.0
    %8665 = vmatpush1.msra.mxu0 0.0
    %8666 = vmatprep.subr.mxu0 0.0
    %8667 = vmatpush1.msra.mxu0 0.0
    %8668 = vmatprep.subr.mxu0 0.0
    %8669 = vmatpush1.msra.mxu0 0.0
    %8670 = vmatprep.subr.mxu0 0.0
    %8671 = vmatpush1.msra.mxu0 0.0
    %8672 = vmatprep.subr.mxu0 0.0
    %8673 = vmatpush1.msra.mxu0 0.0
    %8674 = vmatprep.subr.mxu0 0.0
    %8675 = vmatpush1.msra.mxu0 0.0
    %8676 = vmatprep.subr.mxu0 0.0
    %8677 = vmatpush1.msra.mxu0 0.0
    %8678 = vmatprep.subr.mxu0 0.0
    %8679 = vmatpush1.msra.mxu0 0.0
    %8680 = vmatprep.subr.mxu0 0.0
    %8681 = vmatpush1.msra.mxu0 0.0
    %8682 = vmatprep.subr.mxu0 0.0
    %8683 = vmatpush1.msra.mxu0 0.0
    %8684 = vmatprep.subr.mxu0 0.0
    %8685 = vmatpush1.msra.mxu0 0.0
    %8686 = vmatprep.subr.mxu0 0.0
    %8687 = vmatpush1.msra.mxu0 0.0
    %8688 = vmatprep.subr.mxu0 0.0
    %8689 = vmatpush1.msra.mxu0 0.0
    %8690 = vmatprep.subr.mxu0 0.0
    %8691 = vmatpush1.msra.mxu0 0.0
    %8692 = vmatprep.subr.mxu0 0.0
    %8693 = vmatpush1.msra.mxu0 0.0
    %8694 = vmatprep.subr.mxu0 0.0
    %8695 = vmatpush1.msra.mxu0 0.0
    %8696 = vmatprep.subr.mxu0 0.0
    %8697 = vmatpush1.msra.mxu0 0.0
    %8698 = vmatprep.subr.mxu0 0.0
    %8699 = vmatpush1.msra.mxu0 0.0
    %8700 = vmatprep.subr.mxu0 0.0
    %8701 = vmatpush1.msra.mxu0 0.0
    %8702 = vmatprep.subr.mxu0 0.0
    %8703 = vmatpush1.msra.mxu0 0.0
    %8704 = vmatprep.subr.mxu0 0.0
    %8705 = vmatpush1.msra.mxu0 0.0
    %8706 = vmatprep.mubr.f32.mxu0 0.0
    %8707 = vmatmul.mubr.f32.gmra.mrb[0].mxu0 %v8640
    %v8708 = vpop.f32.mrb[0].mxu0
    %v8709 = vadd.f32 %v829, %v8708
    %v8710 = vpop.f32.mrb[0].mxu0
    %8711 = vdwg.mxu0
    %v8713 = vcombine.high %v8709, %v8709
    %v8715 = vunpack.c.l.s4 1966171168
    %v8716 = vunpack.c.0.s8 %v8715
    %v8717 = vlaneseq
    %v8718 = vshrl.u32 %v8717, 7
    %v8719 = vsub.s32 %v8716, %v8718
    %v8720 = vrot.slane %v8709, %v8719
    %v8722 = vunpack.c.l.s4 1966171168
    %v8723 = vunpack.c.0.s8 %v8722
    %v8724 = vlaneseq
    %v8725 = vshrl.u32 %v8724, 7
    %v8726 = vsub.s32 %v8723, %v8725
    %v8727 = vrot.slane %v8713, %v8726
    %v8728 = vcombine.high %v8720, %v8720
    %v8729 = vcombine.high %v8727, %v8727
    %v8731 = vunpack.c.l.s4 1966171168
    %v8732 = vunpack.c.0.s8 %v8731
    %v8733 = vlaneseq
    %v8734 = vshrl.u32 %v8733, 7
    %v8735 = vsub.s32 %v8732, %v8734
    %v8736 = vrot.slane %v8720, %v8735
    %v8738 = vunpack.c.l.s4 1966171168
    %v8739 = vunpack.c.0.s8 %v8738
    %v8740 = vlaneseq
    %v8741 = vshrl.u32 %v8740, 7
    %v8742 = vsub.s32 %v8739, %v8741
    %v8743 = vrot.slane %v8727, %v8742
    %v8745 = vunpack.c.l.s4 1966171168
    %v8746 = vunpack.c.0.s8 %v8745
    %v8747 = vlaneseq
    %v8748 = vshrl.u32 %v8747, 7
    %v8749 = vsub.s32 %v8746, %v8748
    %v8750 = vrot.slane %v8728, %v8749
    %v8752 = vunpack.c.l.s4 1966171168
    %v8753 = vunpack.c.0.s8 %v8752
    %v8754 = vlaneseq
    %v8755 = vshrl.u32 %v8754, 7
    %v8756 = vsub.s32 %v8753, %v8755
    %v8757 = vrot.slane %v8729, %v8756
    %v8758 = vcombine.high %v8736, %v8736
    %v8759 = vcombine.high %v8743, %v8743
    %v8760 = vcombine.high %v8750, %v8750
    %v8761 = vcombine.high %v8757, %v8757
    %8762 = vrot.lane.b32.xlu0 %v8736, 96
    %v8763 = vpop.permute.xlu0 %8762
    %8764 = vrot.lane.b32.xlu0 %v8750, 96
    %v8765 = vpop.permute.xlu0 %8764
    %8766 = vrot.lane.b32.xlu0 %v8758, 96
    %v8767 = vpop.permute.xlu0 %8766
    %8768 = vrot.lane.b32.xlu0 %v8760, 96
    %v8769 = vpop.permute.xlu0 %8768
    %8770 = vrot.lane.b32.xlu0 %v8743, 96
    %v8771 = vpop.permute.xlu0 %8770
    %8772 = vrot.lane.b32.xlu0 %v8757, 96
    %v8773 = vpop.permute.xlu0 %8772
    %8774 = vrot.lane.b32.xlu0 %v8759, 96
    %v8775 = vpop.permute.xlu0 %8774
    %8776 = vrot.lane.b32.xlu0 %v8761, 96
    %v8777 = vpop.permute.xlu0 %8776
    %v8786 = vadd.f32 %v8632, %v8763
    %v8787 = vadd.f32 %v8633, %v8765
    %v8788 = vadd.f32 %v8634, %v8767
    %v8789 = vadd.f32 %v8635, %v8769
    %v8790 = vadd.f32 %v8636, %v8771
    %v8791 = vadd.f32 %v8637, %v8773
    %v8792 = vadd.f32 %v8638, %v8775
    %v8793 = vadd.f32 %v8639, %v8777
    %v8794 = vxor.u32 %v8786, 2147483648
    %v8795 = vxor.u32 %v8787, 2147483648
    %v8796 = vxor.u32 %v8788, 2147483648
    %v8797 = vxor.u32 %v8789, 2147483648
    %v8798 = vxor.u32 %v8790, 2147483648
    %v8799 = vxor.u32 %v8791, 2147483648
    %v8800 = vxor.u32 %v8792, 2147483648
    %v8801 = vxor.u32 %v8793, 2147483648
    %v8802 = vmul.f32 %v8794, 1.442695
    %v8803 = vpow.pop %v8802
    %v8804 = vmul.f32 %v8795, 1.442695
    %v8805 = vpow.pop %v8804
    %v8806 = vmul.f32 %v8796, 1.442695
    %v8807 = vpow.pop %v8806
    %v8808 = vmul.f32 %v8797, 1.442695
    %v8809 = vpow.pop %v8808
    %v8810 = vmul.f32 %v8798, 1.442695
    %v8811 = vpow.pop %v8810
    %v8812 = vmul.f32 %v8799, 1.442695
    %v8813 = vpow.pop %v8812
    %v8814 = vmul.f32 %v8800, 1.442695
    %v8815 = vpow.pop %v8814
    %v8816 = vmul.f32 %v8801, 1.442695
    %v8817 = vpow.pop %v8816
    %v8818 = vadd.f32 %v8803, 1.0
    %v8819 = vadd.f32 %v8805, 1.0
    %v8820 = vadd.f32 %v8807, 1.0
    %v8821 = vadd.f32 %v8809, 1.0
    %v8822 = vadd.f32 %v8811, 1.0
    %v8823 = vadd.f32 %v8813, 1.0
    %v8824 = vadd.f32 %v8815, 1.0
    %v8825 = vadd.f32 %v8817, 1.0
    %v8826 = vrcp.pop %v8818
    %v8827 = vmul.f32 1.0, %v8826
    %v8828 = vrcp.pop %v8819
    %v8829 = vmul.f32 1.0, %v8828
    %v8830 = vrcp.pop %v8820
    %v8831 = vmul.f32 1.0, %v8830
    %v8832 = vrcp.pop %v8821
    %v8833 = vmul.f32 1.0, %v8832
    %v8834 = vrcp.pop %v8822
    %v8835 = vmul.f32 1.0, %v8834
    %v8836 = vrcp.pop %v8823
    %v8837 = vmul.f32 1.0, %v8836
    %v8838 = vrcp.pop %v8824
    %v8839 = vmul.f32 1.0, %v8838
    %v8840 = vrcp.pop %v8825
    %v8841 = vmul.f32 1.0, %v8840
    %v8850 = vrot.slane %v8632, 1
    %v8851 = vrot.slane %v8633, 1
    %v8852 = vrot.slane %v8634, 1
    %v8853 = vrot.slane %v8635, 1
    %v8854 = vrot.slane %v8636, 1
    %v8855 = vrot.slane %v8637, 1
    %v8856 = vrot.slane %v8638, 1
    %v8857 = vrot.slane %v8639, 1
    %v8866 = vadd.f32 %v8850, %v8763
    %v8867 = vadd.f32 %v8851, %v8765
    %v8868 = vadd.f32 %v8852, %v8767
    %v8869 = vadd.f32 %v8853, %v8769
    %v8870 = vadd.f32 %v8854, %v8771
    %v8871 = vadd.f32 %v8855, %v8773
    %v8872 = vadd.f32 %v8856, %v8775
    %v8873 = vadd.f32 %v8857, %v8777
    %v8874 = vxor.u32 %v8866, 2147483648
    %v8875 = vxor.u32 %v8867, 2147483648
    %v8876 = vxor.u32 %v8868, 2147483648
    %v8877 = vxor.u32 %v8869, 2147483648
    %v8878 = vxor.u32 %v8870, 2147483648
    %v8879 = vxor.u32 %v8871, 2147483648
    %v8880 = vxor.u32 %v8872, 2147483648
    %v8881 = vxor.u32 %v8873, 2147483648
    %v8882 = vmul.f32 %v8874, 1.442695
    %v8883 = vpow.pop %v8882
    %v8884 = vmul.f32 %v8875, 1.442695
    %v8885 = vpow.pop %v8884
    %v8886 = vmul.f32 %v8876, 1.442695
    %v8887 = vpow.pop %v8886
    %v8888 = vmul.f32 %v8877, 1.442695
    %v8889 = vpow.pop %v8888
    %v8890 = vmul.f32 %v8878, 1.442695
    %v8891 = vpow.pop %v8890
    %v8892 = vmul.f32 %v8879, 1.442695
    %v8893 = vpow.pop %v8892
    %v8894 = vmul.f32 %v8880, 1.442695
    %v8895 = vpow.pop %v8894
    %v8896 = vmul.f32 %v8881, 1.442695
    %v8897 = vpow.pop %v8896
    %v8898 = vadd.f32 %v8883, 1.0
    %v8899 = vadd.f32 %v8885, 1.0
    %v8900 = vadd.f32 %v8887, 1.0
    %v8901 = vadd.f32 %v8889, 1.0
    %v8902 = vadd.f32 %v8891, 1.0
    %v8903 = vadd.f32 %v8893, 1.0
    %v8904 = vadd.f32 %v8895, 1.0
    %v8905 = vadd.f32 %v8897, 1.0
    %v8906 = vrcp.pop %v8898
    %v8907 = vmul.f32 1.0, %v8906
    %v8908 = vrcp.pop %v8899
    %v8909 = vmul.f32 1.0, %v8908
    %v8910 = vrcp.pop %v8900
    %v8911 = vmul.f32 1.0, %v8910
    %v8912 = vrcp.pop %v8901
    %v8913 = vmul.f32 1.0, %v8912
    %v8914 = vrcp.pop %v8902
    %v8915 = vmul.f32 1.0, %v8914
    %v8916 = vrcp.pop %v8903
    %v8917 = vmul.f32 1.0, %v8916
    %v8918 = vrcp.pop %v8904
    %v8919 = vmul.f32 1.0, %v8918
    %v8920 = vrcp.pop %v8905
    %v8921 = vmul.f32 1.0, %v8920
    %8922 = vrot.lane.b32.xlu0 %v8736, 32
    %v8923 = vpop.permute.xlu0 %8922
    %8924 = vrot.lane.b32.xlu0 %v8750, 32
    %v8925 = vpop.permute.xlu0 %8924
    %8926 = vrot.lane.b32.xlu0 %v8758, 32
    %v8927 = vpop.permute.xlu0 %8926
    %8928 = vrot.lane.b32.xlu0 %v8760, 32
    %v8929 = vpop.permute.xlu0 %8928
    %8930 = vrot.lane.b32.xlu0 %v8743, 32
    %v8931 = vpop.permute.xlu0 %8930
    %8932 = vrot.lane.b32.xlu0 %v8757, 32
    %v8933 = vpop.permute.xlu0 %8932
    %8934 = vrot.lane.b32.xlu0 %v8759, 32
    %v8935 = vpop.permute.xlu0 %8934
    %8936 = vrot.lane.b32.xlu0 %v8761, 32
    %v8937 = vpop.permute.xlu0 %8936
    %v8946 = vmul.f32 %v8827, %v8923
    %v8947 = vmul.f32 %v8829, %v8925
    %v8948 = vmul.f32 %v8831, %v8927
    %v8949 = vmul.f32 %v8833, %v8929
    %v8950 = vmul.f32 %v8835, %v8931
    %v8951 = vmul.f32 %v8837, %v8933
    %v8952 = vmul.f32 %v8839, %v8935
    %v8953 = vmul.f32 %v8841, %v8937
    %8954 = vrot.lane.b32.xlu0 %v8632, 96
    %v8955 = vpop.permute.xlu0 %8954
    %8956 = vrot.lane.b32.xlu0 %v8633, 96
    %v8957 = vpop.permute.xlu0 %8956
    %8958 = vrot.lane.b32.xlu0 %v8634, 96
    %v8959 = vpop.permute.xlu0 %8958
    %8960 = vrot.lane.b32.xlu0 %v8635, 96
    %v8961 = vpop.permute.xlu0 %8960
    %8962 = vrot.lane.b32.xlu0 %v8636, 96
    %v8963 = vpop.permute.xlu0 %8962
    %8964 = vrot.lane.b32.xlu0 %v8637, 96
    %v8965 = vpop.permute.xlu0 %8964
    %8966 = vrot.lane.b32.xlu0 %v8638, 96
    %v8967 = vpop.permute.xlu0 %8966
    %8968 = vrot.lane.b32.xlu0 %v8639, 96
    %v8969 = vpop.permute.xlu0 %8968
    %v8970 = vrot.slane %v8955, 1
    %v8971 = vrot.slane %v8957, 1
    %v8972 = vrot.slane %v8959, 1
    %v8973 = vrot.slane %v8961, 1
    %v8974 = vrot.slane %v8963, 1
    %v8975 = vrot.slane %v8965, 1
    %v8976 = vrot.slane %v8967, 1
    %v8977 = vrot.slane %v8969, 1
    %8994 = vrot.lane.b32.xlu0 %v8946, 32
    %v8995 = vpop.permute.xlu0 %8994
    %8996 = vrot.lane.b32.xlu0 %v8947, 32
    %v8997 = vpop.permute.xlu0 %8996
    %8998 = vrot.lane.b32.xlu0 %v8948, 32
    %v8999 = vpop.permute.xlu0 %8998
    %9000 = vrot.lane.b32.xlu0 %v8949, 32
    %v9001 = vpop.permute.xlu0 %9000
    %9002 = vrot.lane.b32.xlu0 %v8950, 32
    %v9003 = vpop.permute.xlu0 %9002
    %9004 = vrot.lane.b32.xlu0 %v8951, 32
    %v9005 = vpop.permute.xlu0 %9004
    %9006 = vrot.lane.b32.xlu0 %v8952, 32
    %v9007 = vpop.permute.xlu0 %9006
    %9008 = vrot.lane.b32.xlu0 %v8953, 32
    %v9009 = vpop.permute.xlu0 %9008
    %v9018 = vadd.f32 %v8970, %v8995
    %v9019 = vadd.f32 %v8971, %v8997
    %v9020 = vadd.f32 %v8972, %v8999
    %v9021 = vadd.f32 %v8973, %v9001
    %v9022 = vadd.f32 %v8974, %v9003
    %v9023 = vadd.f32 %v8975, %v9005
    %v9024 = vadd.f32 %v8976, %v9007
    %v9025 = vadd.f32 %v8977, %v9009
    %v9026 = vtanh.pop %v9018
    %v9027 = vtanh.pop %v9019
    %v9028 = vtanh.pop %v9020
    %v9029 = vtanh.pop %v9021
    %v9030 = vtanh.pop %v9022
    %v9031 = vtanh.pop %v9023
    %v9032 = vtanh.pop %v9024
    %v9033 = vtanh.pop %v9025
    %v9034 = vsub.f32 1.0, %v8907
    %v9035 = vsub.f32 1.0, %v8909
    %v9036 = vsub.f32 1.0, %v8911
    %v9037 = vsub.f32 1.0, %v8913
    %v9038 = vsub.f32 1.0, %v8915
    %v9039 = vsub.f32 1.0, %v8917
    %v9040 = vsub.f32 1.0, %v8919
    %v9041 = vsub.f32 1.0, %v8921
    %v9042 = vmul.f32 %v9034, %v9026
    %v9043 = vmul.f32 %v9035, %v9027
    %v9044 = vmul.f32 %v9036, %v9028
    %v9045 = vmul.f32 %v9037, %v9029
    %v9046 = vmul.f32 %v9038, %v9030
    %v9047 = vmul.f32 %v9039, %v9031
    %v9048 = vmul.f32 %v9040, %v9032
    %v9049 = vmul.f32 %v9041, %v9033
    %v9058 = vmul.f32 %v8907, %v8053
    %v9059 = vmul.f32 %v8909, %v8067
    %v9060 = vmul.f32 %v8911, %v8075
    %v9061 = vmul.f32 %v8913, %v8077
    %v9062 = vmul.f32 %v8915, %v8060
    %v9063 = vmul.f32 %v8917, %v8074
    %v9064 = vmul.f32 %v8919, %v8076
    %v9065 = vmul.f32 %v8921, %v8078
    %v9066 = vadd.f32 %v9042, %v9058
    %v9067 = vadd.f32 %v9043, %v9059
    %v9068 = vadd.f32 %v9044, %v9060
    %v9069 = vadd.f32 %v9045, %v9061
    %v9070 = vadd.f32 %v9046, %v9062
    %v9071 = vadd.f32 %v9047, %v9063
    %v9072 = vadd.f32 %v9048, %v9064
    %v9073 = vadd.f32 %v9049, %v9065
    %v9082 = vcombine.low %v9066, %v9067
    %v9083 = vcombine.low %v9068, %v9069
    %v9084 = vcombine.low %v9070, %v9071
    %v9085 = vcombine.low %v9072, %v9073
    %v9087 = vunpack.c.l.s4 1966171168
    %v9088 = vunpack.c.0.s8 %v9087
    %v9089 = vlaneseq
    %v9090 = vshrl.u32 %v9089, 7
    %v9091 = vsub.s32 %v9088, %v9090
    %v9092 = vrot.slane %v9082, %v9091
    %v9094 = vunpack.c.l.s4 1966171168
    %v9095 = vunpack.c.0.s8 %v9094
    %v9096 = vlaneseq
    %v9097 = vshrl.u32 %v9096, 7
    %v9098 = vsub.s32 %v9095, %v9097
    %v9099 = vrot.slane %v9083, %v9098
    %v9101 = vunpack.c.l.s4 1966171168
    %v9102 = vunpack.c.0.s8 %v9101
    %v9103 = vlaneseq
    %v9104 = vshrl.u32 %v9103, 7
    %v9105 = vsub.s32 %v9102, %v9104
    %v9106 = vrot.slane %v9084, %v9105
    %v9108 = vunpack.c.l.s4 1966171168
    %v9109 = vunpack.c.0.s8 %v9108
    %v9110 = vlaneseq
    %v9111 = vshrl.u32 %v9110, 7
    %v9112 = vsub.s32 %v9109, %v9111
    %v9113 = vrot.slane %v9085, %v9112
    %v9114 = vcombine.low %v9092, %v9099
    %v9115 = vcombine.low %v9106, %v9113
    %v9117 = vunpack.c.l.s4 1966171168
    %v9118 = vunpack.c.0.s8 %v9117
    %v9119 = vlaneseq
    %v9120 = vshrl.u32 %v9119, 7
    %v9121 = vsub.s32 %v9118, %v9120
    %v9122 = vrot.slane %v9114, %v9121
    %v9124 = vunpack.c.l.s4 1966171168
    %v9125 = vunpack.c.0.s8 %v9124
    %v9126 = vlaneseq
    %v9127 = vshrl.u32 %v9126, 7
    %v9128 = vsub.s32 %v9125, %v9127
    %v9129 = vrot.slane %v9115, %v9128
    %v9130 = vcombine.low %v9122, %v9129
    %v9132 = vsel %vm680, %v9130, %v8028
    %v9134 = vcombine.high %v9132, %v9132
    %v9136 = vunpack.c.l.s4 1966171168
    %v9137 = vunpack.c.0.s8 %v9136
    %v9138 = vlaneseq
    %v9139 = vshrl.u32 %v9138, 7
    %v9140 = vsub.s32 %v9137, %v9139
    %v9141 = vrot.slane %v9132, %v9140
    %v9143 = vunpack.c.l.s4 1966171168
    %v9144 = vunpack.c.0.s8 %v9143
    %v9145 = vlaneseq
    %v9146 = vshrl.u32 %v9145, 7
    %v9147 = vsub.s32 %v9144, %v9146
    %v9148 = vrot.slane %v9134, %v9147
    %v9149 = vcombine.high %v9141, %v9141
    %v9150 = vcombine.high %v9148, %v9148
    %v9152 = vunpack.c.l.s4 1966171168
    %v9153 = vunpack.c.0.s8 %v9152
    %v9154 = vlaneseq
    %v9155 = vshrl.u32 %v9154, 7
    %v9156 = vsub.s32 %v9153, %v9155
    %v9157 = vrot.slane %v9141, %v9156
    %v9159 = vunpack.c.l.s4 1966171168
    %v9160 = vunpack.c.0.s8 %v9159
    %v9161 = vlaneseq
    %v9162 = vshrl.u32 %v9161, 7
    %v9163 = vsub.s32 %v9160, %v9162
    %v9164 = vrot.slane %v9148, %v9163
    %v9166 = vunpack.c.l.s4 1966171168
    %v9167 = vunpack.c.0.s8 %v9166
    %v9168 = vlaneseq
    %v9169 = vshrl.u32 %v9168, 7
    %v9170 = vsub.s32 %v9167, %v9169
    %v9171 = vrot.slane %v9149, %v9170
    %v9173 = vunpack.c.l.s4 1966171168
    %v9174 = vunpack.c.0.s8 %v9173
    %v9175 = vlaneseq
    %v9176 = vshrl.u32 %v9175, 7
    %v9177 = vsub.s32 %v9174, %v9176
    %v9178 = vrot.slane %v9150, %v9177
    %v9179 = vcombine.high %v9157, %v9157
    %v9180 = vcombine.high %v9164, %v9164
    %v9181 = vcombine.high %v9171, %v9171
    %v9182 = vcombine.high %v9178, %v9178
    %v9183 = vlaneseq
    %v9184 = vshrl.u32 %v9183, 7
    %v9185 = vsub.s32 0, %v9184
    %v9186 = vrot.slane %v9157, %v9185
    %v9187 = vlaneseq
    %v9188 = vshrl.u32 %v9187, 7
    %v9189 = vsub.s32 0, %v9188
    %v9190 = vrot.slane %v9171, %v9189
    %v9191 = vlaneseq
    %v9192 = vshrl.u32 %v9191, 7
    %v9193 = vsub.s32 0, %v9192
    %v9194 = vrot.slane %v9179, %v9193
    %v9195 = vlaneseq
    %v9196 = vshrl.u32 %v9195, 7
    %v9197 = vsub.s32 0, %v9196
    %v9198 = vrot.slane %v9181, %v9197
    %v9199 = vlaneseq
    %v9200 = vshrl.u32 %v9199, 7
    %v9201 = vsub.s32 0, %v9200
    %v9202 = vrot.slane %v9164, %v9201
    %v9203 = vlaneseq
    %v9204 = vshrl.u32 %v9203, 7
    %v9205 = vsub.s32 0, %v9204
    %v9206 = vrot.slane %v9178, %v9205
    %v9207 = vlaneseq
    %v9208 = vshrl.u32 %v9207, 7
    %v9209 = vsub.s32 0, %v9208
    %v9210 = vrot.slane %v9180, %v9209
    %v9211 = vlaneseq
    %v9212 = vshrl.u32 %v9211, 7
    %v9213 = vsub.s32 0, %v9212
    %v9214 = vrot.slane %v9182, %v9213
    %9215 = vrot.lane.b32.xlu0 %v9186, 32
    %v9216 = vpop.permute.xlu0 %9215
    %9217 = vrot.lane.b32.xlu0 %v9190, 32
    %v9218 = vpop.permute.xlu0 %9217
    %9219 = vrot.lane.b32.xlu0 %v9194, 32
    %v9220 = vpop.permute.xlu0 %9219
    %9221 = vrot.lane.b32.xlu0 %v9198, 32
    %v9222 = vpop.permute.xlu0 %9221
    %9223 = vrot.lane.b32.xlu0 %v9202, 32
    %v9224 = vpop.permute.xlu0 %9223
    %9225 = vrot.lane.b32.xlu0 %v9206, 32
    %v9226 = vpop.permute.xlu0 %9225
    %9227 = vrot.lane.b32.xlu0 %v9210, 32
    %v9228 = vpop.permute.xlu0 %9227
    %9229 = vrot.lane.b32.xlu0 %v9214, 32
    %v9230 = vpop.permute.xlu0 %9229
    %9239 = vst.msk [vmem:[#allocation3] sm:$0x1] %vm1426, %v9216
    %9240 = vst.msk [vmem:[#allocation3 + $0x8] sm:$0x1] %vm1426, %v9218
    %9241 = vst.msk [vmem:[#allocation3 + $0x10] sm:$0x1] %vm1426, %v9220
    %9242 = vst.msk [vmem:[#allocation3 + $0x18] sm:$0x1] %vm1426, %v9222
    %9243 = vst.msk [vmem:[#allocation3 + $0x20] sm:$0x1] %vm1426, %v9224
    %9244 = vst.msk [vmem:[#allocation3 + $0x28] sm:$0x1] %vm1426, %v9226
    %9245 = vst.msk [vmem:[#allocation3 + $0x30] sm:$0x1] %vm1426, %v9228
    %9246 = vst.msk [vmem:[#allocation3 + $0x38] sm:$0x1] %vm1426, %v9230
    %v9247 = vlaneseq
    %v9248 = vand.u32 %v9247, 127
    %9249 = vset.pattern.permute.xlu0 0
    %9250 = vperm.xlu0 %9249, %v132
    %v9251 = vpop.permute.xlu0 %9250
    %vm9252 = vcmp.lt.s32.totalorder %v9248, %v9251
    %v9253 = vsel %vm9252, 1, 0
    %v9254 = vcvt.s32.f32 %v9253
    %v9255 = vld [vmem:[#allocation3] sm:$0xff]
    %v9256 = vld [vmem:[#allocation3 + $0x8] sm:$0xff]
    %v9257 = vld [vmem:[#allocation3 + $0x10] sm:$0xff]
    %v9258 = vld [vmem:[#allocation3 + $0x18] sm:$0xff]
    %v9259 = vld [vmem:[#allocation3 + $0x20] sm:$0xff]
    %v9260 = vld [vmem:[#allocation3 + $0x28] sm:$0xff]
    %v9261 = vld [vmem:[#allocation3 + $0x30] sm:$0xff]
    %v9262 = vld [vmem:[#allocation3 + $0x38] sm:$0xff]
    %v9263 = vld [vmem:[%s8] sm:$0xff]
    %v9264 = vld [vmem:[%s8 + $0x8] sm:$0xff]
    %v9265 = vld [vmem:[%s8 + $0x10] sm:$0xff]
    %v9266 = vld [vmem:[%s8 + $0x18] sm:$0xff]
    %v9267 = vld [vmem:[%s8 + $0x20] sm:$0xff]
    %v9268 = vld [vmem:[%s8 + $0x28] sm:$0xff]
    %v9269 = vld [vmem:[%s8 + $0x30] sm:$0xff]
    %v9270 = vld [vmem:[%s8 + $0x38] sm:$0xff]
    %v9271 = vld [vmem:[#allocation13] sm:$0x1]
    %v9273 = vlaneseq
    %v9274 = vshrl.u32 %v9273, 7
    %v9275 = vsub.s32 0, %v9274
    %v9276 = vrot.slane %v9271, %v9275
    %v9279 = vsel %vm296, %v9255, 0
    %v9282 = vsel %vm296, %v9256, 0
    %v9285 = vsel %vm296, %v9257, 0
    %v9288 = vsel %vm296, %v9258, 0
    %v9291 = vsel %vm296, %v9259, 0
    %v9294 = vsel %vm296, %v9260, 0
    %v9297 = vsel %vm296, %v9261, 0
    %v9300 = vsel %vm296, %v9262, 0
    %9302 = vmatprep.subr.mxu0 0.0
    %9303 = vmatpush1.msra.mxu0 %v9263
    %9304 = vmatprep.subr.mxu0 0.0
    %9305 = vmatpush1.msra.mxu0 %v9264
    %9306 = vmatprep.subr.mxu0 0.0
    %9307 = vmatpush1.msra.mxu0 %v9265
    %9308 = vmatprep.subr.mxu0 0.0
    %9309 = vmatpush1.msra.mxu0 %v9266
    %9310 = vmatprep.subr.mxu0 0.0
    %9311 = vmatpush1.msra.mxu0 %v9267
    %9312 = vmatprep.subr.mxu0 0.0
    %9313 = vmatpush1.msra.mxu0 %v9268
    %9314 = vmatprep.subr.mxu0 0.0
    %9315 = vmatpush1.msra.mxu0 %v9269
    %9316 = vmatprep.subr.mxu0 0.0
    %9317 = vmatpush1.msra.mxu0 %v9270
    %9318 = vmatprep.subr.mxu0 0.0
    %9319 = vmatpush1.msra.mxu0 0.0
    %9320 = vmatprep.subr.mxu0 0.0
    %9321 = vmatpush1.msra.mxu0 0.0
    %9322 = vmatprep.subr.mxu0 0.0
    %9323 = vmatpush1.msra.mxu0 0.0
    %9324 = vmatprep.subr.mxu0 0.0
    %9325 = vmatpush1.msra.mxu0 0.0
    %9326 = vmatprep.subr.mxu0 0.0
    %9327 = vmatpush1.msra.mxu0 0.0
    %9328 = vmatprep.subr.mxu0 0.0
    %9329 = vmatpush1.msra.mxu0 0.0
    %9330 = vmatprep.subr.mxu0 0.0
    %9331 = vmatpush1.msra.mxu0 0.0
    %9332 = vmatprep.subr.mxu0 0.0
    %9333 = vmatpush1.msra.mxu0 0.0
    %9334 = vmatprep.subr.mxu0 0.0
    %9335 = vmatpush1.msra.mxu0 0.0
    %9336 = vmatprep.subr.mxu0 0.0
    %9337 = vmatpush1.msra.mxu0 0.0
    %9338 = vmatprep.subr.mxu0 0.0
    %9339 = vmatpush1.msra.mxu0 0.0
    %9340 = vmatprep.subr.mxu0 0.0
    %9341 = vmatpush1.msra.mxu0 0.0
    %9342 = vmatprep.subr.mxu0 0.0
    %9343 = vmatpush1.msra.mxu0 0.0
    %9344 = vmatprep.subr.mxu0 0.0
    %9345 = vmatpush1.msra.mxu0 0.0
    %9346 = vmatprep.subr.mxu0 0.0
    %9347 = vmatpush1.msra.mxu0 0.0
    %9348 = vmatprep.subr.mxu0 0.0
    %9349 = vmatpush1.msra.mxu0 0.0
    %9350 = vmatprep.subr.mxu0 0.0
    %9351 = vmatpush1.msra.mxu0 0.0
    %9352 = vmatprep.subr.mxu0 0.0
    %9353 = vmatpush1.msra.mxu0 0.0
    %9354 = vmatprep.subr.mxu0 0.0
    %9355 = vmatpush1.msra.mxu0 0.0
    %9356 = vmatprep.subr.mxu0 0.0
    %9357 = vmatpush1.msra.mxu0 0.0
    %9358 = vmatprep.subr.mxu0 0.0
    %9359 = vmatpush1.msra.mxu0 0.0
    %9360 = vmatprep.subr.mxu0 0.0
    %9361 = vmatpush1.msra.mxu0 0.0
    %9362 = vmatprep.subr.mxu0 0.0
    %9363 = vmatpush1.msra.mxu0 0.0
    %9364 = vmatprep.subr.mxu0 0.0
    %9365 = vmatpush1.msra.mxu0 0.0
    %9366 = vmatprep.mubr.f32.mxu0 0.0
    %9367 = vmatmul.mubr.f32.gmra.mrb[0].mxu0 %v9279
    %v9368 = vpop.f32.mrb[0].mxu0
    %v9369 = vadd.f32 %v9276, %v9368
    %v9370 = vpop.f32.mrb[0].mxu0
    %9371 = vmatprep.mubr.f32.mxu0 0.0
    %9372 = vmatmul.mubr.f32.gmra.mrb[0].mxu0 %v9282
    %v9373 = vpop.f32.mrb[0].mxu0
    %v9374 = vadd.f32 %v9276, %v9373
    %v9375 = vpop.f32.mrb[0].mxu0
    %9376 = vmatprep.mubr.f32.mxu0 0.0
    %9377 = vmatmul.mubr.f32.gmra.mrb[0].mxu0 %v9285
    %v9378 = vpop.f32.mrb[0].mxu0
    %v9379 = vadd.f32 %v9276, %v9378
    %v9380 = vpop.f32.mrb[0].mxu0
    %9381 = vmatprep.mubr.f32.mxu0 0.0
    %9382 = vmatmul.mubr.f32.gmra.mrb[0].mxu0 %v9288
    %v9383 = vpop.f32.mrb[0].mxu0
    %v9384 = vadd.f32 %v9276, %v9383
    %v9385 = vpop.f32.mrb[0].mxu0
    %9386 = vmatprep.mubr.f32.mxu0 0.0
    %9387 = vmatmul.mubr.f32.gmra.mrb[0].mxu0 %v9291
    %v9388 = vpop.f32.mrb[0].mxu0
    %v9389 = vadd.f32 %v9276, %v9388
    %v9390 = vpop.f32.mrb[0].mxu0
    %9391 = vmatprep.mubr.f32.mxu0 0.0
    %9392 = vmatmul.mubr.f32.gmra.mrb[0].mxu0 %v9294
    %v9393 = vpop.f32.mrb[0].mxu0
    %v9394 = vadd.f32 %v9276, %v9393
    %v9395 = vpop.f32.mrb[0].mxu0
    %9396 = vmatprep.mubr.f32.mxu0 0.0
    %9397 = vmatmul.mubr.f32.gmra.mrb[0].mxu0 %v9297
    %v9398 = vpop.f32.mrb[0].mxu0
    %v9399 = vadd.f32 %v9276, %v9398
    %v9400 = vpop.f32.mrb[0].mxu0
    %9401 = vmatprep.mubr.f32.mxu0 0.0
    %9402 = vmatmul.mubr.f32.gmra.mrb[0].mxu0 %v9300
    %v9403 = vpop.f32.mrb[0].mxu0
    %v9404 = vadd.f32 %v9276, %v9403
    %v9405 = vpop.f32.mrb[0].mxu0
    %9406 = vdwg.mxu0
    %v9407 = vtanh.pop %v9369
    %v9408 = vtanh.pop %v9374
    %v9409 = vtanh.pop %v9379
    %v9410 = vtanh.pop %v9384
    %v9411 = vtanh.pop %v9389
    %v9412 = vtanh.pop %v9394
    %v9413 = vtanh.pop %v9399
    %v9414 = vtanh.pop %v9404
    %v9415 = vld [vmem:[#allocation15] sm:$0x1]
    %v9417 = vlaneseq
    %v9418 = vshrl.u32 %v9417, 7
    %v9419 = vsub.s32 0, %v9418
    %v9420 = vrot.slane %v9415, %v9419
    %v9422 = vmul.f32 %v9407, %v9420
    %v9423 = vmul.f32 %v9408, %v9420
    %v9424 = vmul.f32 %v9409, %v9420
    %v9425 = vmul.f32 %v9410, %v9420
    %v9426 = vmul.f32 %v9411, %v9420
    %v9427 = vmul.f32 %v9412, %v9420
    %v9428 = vmul.f32 %v9413, %v9420
    %v9429 = vmul.f32 %v9414, %v9420
    %v9430 = vsel %vm157, %v9422, 0.0
    %9431 = vadd.xlane.f32.xlu0 %v9430
    %v9432 = vpop.xlane.xlu0 %9431
    %v9433 = vsel %vm157, %v9423, 0.0
    %9434 = vadd.xlane.f32.xlu0 %v9433
    %v9435 = vpop.xlane.xlu0 %9434
    %v9436 = vsel %vm157, %v9424, 0.0
    %9437 = vadd.xlane.f32.xlu0 %v9436
    %v9438 = vpop.xlane.xlu0 %9437
    %v9439 = vsel %vm157, %v9425, 0.0
    %9440 = vadd.xlane.f32.xlu0 %v9439
    %v9441 = vpop.xlane.xlu0 %9440
    %v9442 = vsel %vm157, %v9426, 0.0
    %9443 = vadd.xlane.f32.xlu0 %v9442
    %v9444 = vpop.xlane.xlu0 %9443
    %v9445 = vsel %vm157, %v9427, 0.0
    %9446 = vadd.xlane.f32.xlu0 %v9445
    %v9447 = vpop.xlane.xlu0 %9446
    %v9448 = vsel %vm157, %v9428, 0.0
    %9449 = vadd.xlane.f32.xlu0 %v9448
    %v9450 = vpop.xlane.xlu0 %9449
    %v9451 = vsel %vm157, %v9429, 0.0
    %9452 = vadd.xlane.f32.xlu0 %v9451
    %v9453 = vpop.xlane.xlu0 %9452
    %v9462 = vlaneseq
    %v9463 = vshrl.u32 %v9462, 7
    %v9464 = vsub.s32 %v9248, %v9463
    %v9465 = vrot.slane %v9432, %v9464
    %v9466 = vlaneseq
    %v9467 = vshrl.u32 %v9466, 7
    %v9468 = vsub.s32 %v9248, %v9467
    %v9469 = vrot.slane %v9435, %v9468
    %v9470 = vlaneseq
    %v9471 = vshrl.u32 %v9470, 7
    %v9472 = vsub.s32 %v9248, %v9471
    %v9473 = vrot.slane %v9438, %v9472
    %v9474 = vlaneseq
    %v9475 = vshrl.u32 %v9474, 7
    %v9476 = vsub.s32 %v9248, %v9475
    %v9477 = vrot.slane %v9441, %v9476
    %v9478 = vlaneseq
    %v9479 = vshrl.u32 %v9478, 7
    %v9480 = vsub.s32 %v9248, %v9479
    %v9481 = vrot.slane %v9444, %v9480
    %v9482 = vlaneseq
    %v9483 = vshrl.u32 %v9482, 7
    %v9484 = vsub.s32 %v9248, %v9483
    %v9485 = vrot.slane %v9447, %v9484
    %v9486 = vlaneseq
    %v9487 = vshrl.u32 %v9486, 7
    %v9488 = vsub.s32 %v9248, %v9487
    %v9489 = vrot.slane %v9450, %v9488
    %v9490 = vlaneseq
    %v9491 = vshrl.u32 %v9490, 7
    %v9492 = vsub.s32 %v9248, %v9491
    %v9493 = vrot.slane %v9453, %v9492
    %vm9494 = vcmask 1041409
    %v9495 = vsel %vm9494, %v9469, %v9465
    %vm9496 = vcmask 1042434
    %v9497 = vsel %vm9496, %v9473, %v9495
    %vm9498 = vcmask 1043459
    %v9499 = vsel %vm9498, %v9477, %v9497
    %vm9500 = vcmask 1044484
    %v9501 = vsel %vm9500, %v9481, %v9499
    %vm9502 = vcmask 1045509
    %v9503 = vsel %vm9502, %v9485, %v9501
    %vm9504 = vcmask 1046534
    %v9505 = vsel %vm9504, %v9489, %v9503
    %vm9506 = vcmask 1047559
    %v9507 = vsel %vm9506, %v9493, %v9505
    %v9509 = vsel %vm9252, %v9507, -1e+30
    %vm9510 = vcmask 64512
    %v9511 = vsel %vm9510, %v9509, -inf
    %9512 = vmax.xlane.f32.xlu0 %v9511
    %v9513 = vpop.xlane.xlu0 %9512
    %v9514 = vsub.f32 %v9509, %v9513
    %v9515 = vmul.f32 %v9514, 1.442695
    %v9516 = vpow.pop %v9515
    %v9517 = vmul.f32 %v9516, %v9254
    %v9518 = vsel %vm9510, %v9517, 0.0
    %9519 = vadd.xlane.f32.xlu0 %v9518
    %v9520 = vpop.xlane.xlu0 %9519
    %v9521 = vmax.f32 %v9520, 1e-30
    %v9522 = vrcp.pop %v9521
    %v9523 = vmul.f32 %v9517, %v9522
    %v9524 = vlaneseq
    %v9525 = vshrl.u32 %v9524, 7
    %v9526 = vsub.s32 0, %v9525
    %v9527 = vrot.slane %v9523, %v9526
    %9529 = vbcast.lane.b32.xlu0 %v9527, 256
    %v9530 = vpop.permute.xlu0 %9529
    %v9531 = vlaneseq
    %v9532 = vshrl.u32 %v9531, 7
    %v9533 = vsub.s32 1, %v9532
    %v9534 = vrot.slane %v9523, %v9533
    %9536 = vbcast.lane.b32.xlu0 %v9534, 256
    %v9537 = vpop.permute.xlu0 %9536
    %v9538 = vlaneseq
    %v9539 = vshrl.u32 %v9538, 7
    %v9540 = vsub.s32 2, %v9539
    %v9541 = vrot.slane %v9523, %v9540
    %9543 = vbcast.lane.b32.xlu0 %v9541, 256
    %v9544 = vpop.permute.xlu0 %9543
    %v9545 = vlaneseq
    %v9546 = vshrl.u32 %v9545, 7
    %v9547 = vsub.s32 3, %v9546
    %v9548 = vrot.slane %v9523, %v9547
    %9550 = vbcast.lane.b32.xlu0 %v9548, 256
    %v9551 = vpop.permute.xlu0 %9550
    %v9552 = vlaneseq
    %v9553 = vshrl.u32 %v9552, 7
    %v9554 = vsub.s32 4, %v9553
    %v9555 = vrot.slane %v9523, %v9554
    %9557 = vbcast.lane.b32.xlu0 %v9555, 256
    %v9558 = vpop.permute.xlu0 %9557
    %v9559 = vlaneseq
    %v9560 = vshrl.u32 %v9559, 7
    %v9561 = vsub.s32 5, %v9560
    %v9562 = vrot.slane %v9523, %v9561
    %9564 = vbcast.lane.b32.xlu0 %v9562, 256
    %v9565 = vpop.permute.xlu0 %9564
    %v9566 = vlaneseq
    %v9567 = vshrl.u32 %v9566, 7
    %v9568 = vsub.s32 6, %v9567
    %v9569 = vrot.slane %v9523, %v9568
    %9571 = vbcast.lane.b32.xlu0 %v9569, 256
    %v9572 = vpop.permute.xlu0 %9571
    %v9573 = vlaneseq
    %v9574 = vshrl.u32 %v9573, 7
    %v9575 = vsub.s32 7, %v9574
    %v9576 = vrot.slane %v9523, %v9575
    %9578 = vbcast.lane.b32.xlu0 %v9576, 256
    %v9579 = vpop.permute.xlu0 %9578
    %v9580 = vmul.f32 %v9255, %v9530
    %v9581 = vmul.f32 %v9256, %v9537
    %v9582 = vmul.f32 %v9257, %v9544
    %v9583 = vmul.f32 %v9258, %v9551
    %v9584 = vmul.f32 %v9259, %v9558
    %v9585 = vmul.f32 %v9260, %v9565
    %v9586 = vmul.f32 %v9261, %v9572
    %v9587 = vmul.f32 %v9262, %v9579
    %v9588 = vsel %vm296, %v9580, 0.0
    %v9589 = vrot.slane %v9588, 4
    %v9590 = vadd.f32 %v9588, %v9589
    %v9591 = vrot.slane %v9590, 2
    %v9592 = vadd.f32 %v9590, %v9591
    %v9593 = vrot.slane %v9592, 1
    %v9594 = vadd.f32 %v9592, %v9593
    %v9595 = vsel %vm296, %v9581, 0.0
    %v9596 = vrot.slane %v9595, 4
    %v9597 = vadd.f32 %v9595, %v9596
    %v9598 = vrot.slane %v9597, 2
    %v9599 = vadd.f32 %v9597, %v9598
    %v9600 = vrot.slane %v9599, 1
    %v9601 = vadd.f32 %v9599, %v9600
    %v9602 = vsel %vm296, %v9582, 0.0
    %v9603 = vrot.slane %v9602, 4
    %v9604 = vadd.f32 %v9602, %v9603
    %v9605 = vrot.slane %v9604, 2
    %v9606 = vadd.f32 %v9604, %v9605
    %v9607 = vrot.slane %v9606, 1
    %v9608 = vadd.f32 %v9606, %v9607
    %v9609 = vsel %vm296, %v9583, 0.0
    %v9610 = vrot.slane %v9609, 4
    %v9611 = vadd.f32 %v9609, %v9610
    %v9612 = vrot.slane %v9611, 2
    %v9613 = vadd.f32 %v9611, %v9612
    %v9614 = vrot.slane %v9613, 1
    %v9615 = vadd.f32 %v9613, %v9614
    %v9616 = vsel %vm296, %v9584, 0.0
    %v9617 = vrot.slane %v9616, 4
    %v9618 = vadd.f32 %v9616, %v9617
    %v9619 = vrot.slane %v9618, 2
    %v9620 = vadd.f32 %v9618, %v9619
    %v9621 = vrot.slane %v9620, 1
    %v9622 = vadd.f32 %v9620, %v9621
    %v9623 = vsel %vm296, %v9585, 0.0
    %v9624 = vrot.slane %v9623, 4
    %v9625 = vadd.f32 %v9623, %v9624
    %v9626 = vrot.slane %v9625, 2
    %v9627 = vadd.f32 %v9625, %v9626
    %v9628 = vrot.slane %v9627, 1
    %v9629 = vadd.f32 %v9627, %v9628
    %v9630 = vsel %vm296, %v9586, 0.0
    %v9631 = vrot.slane %v9630, 4
    %v9632 = vadd.f32 %v9630, %v9631
    %v9633 = vrot.slane %v9632, 2
    %v9634 = vadd.f32 %v9632, %v9633
    %v9635 = vrot.slane %v9634, 1
    %v9636 = vadd.f32 %v9634, %v9635
    %v9637 = vsel %vm296, %v9587, 0.0
    %v9638 = vrot.slane %v9637, 4
    %v9639 = vadd.f32 %v9637, %v9638
    %v9640 = vrot.slane %v9639, 2
    %v9641 = vadd.f32 %v9639, %v9640
    %v9642 = vrot.slane %v9641, 1
    %v9643 = vadd.f32 %v9641, %v9642
    %v9644 = vld [vmem:[%s11] sm:$0xff]
    %v9645 = vld [vmem:[%s11 + $0x8] sm:$0xff]
    %v9646 = vld [vmem:[%s11 + $0x10] sm:$0xff]
    %v9647 = vld [vmem:[%s11 + $0x18] sm:$0xff]
    %v9648 = vld [vmem:[%s11 + $0x20] sm:$0xff]
    %v9649 = vld [vmem:[%s11 + $0x28] sm:$0xff]
    %v9650 = vld [vmem:[%s11 + $0x30] sm:$0xff]
    %v9651 = vld [vmem:[%s11 + $0x38] sm:$0xff]
    %v9652 = vld [vmem:[%s12] sm:$0x1]
    %v9654 = vlaneseq
    %v9655 = vshrl.u32 %v9654, 7
    %v9656 = vsub.s32 0, %v9655
    %v9657 = vrot.slane %v9652, %v9656
    %v9667 = vsel %vm9494, %v9601, %v9594
    %v9668 = vsel %vm9496, %v9608, %v9667
    %v9669 = vsel %vm9498, %v9615, %v9668
    %v9670 = vsel %vm9500, %v9622, %v9669
    %v9671 = vsel %vm9502, %v9629, %v9670
    %v9672 = vsel %vm9504, %v9636, %v9671
    %v9673 = vsel %vm9506, %v9643, %v9672
    %v9674 = vsel %vm296, %v9673, 0
    %9676 = vmatprep.subr.mxu0 0.0
    %9677 = vmatpush1.msra.mxu0 %v9644
    %9678 = vmatprep.subr.mxu0 0.0
    %9679 = vmatpush1.msra.mxu0 %v9645
    %9680 = vmatprep.subr.mxu0 0.0
    %9681 = vmatpush1.msra.mxu0 %v9646
    %9682 = vmatprep.subr.mxu0 0.0
    %9683 = vmatpush1.msra.mxu0 %v9647
    %9684 = vmatprep.subr.mxu0 0.0
    %9685 = vmatpush1.msra.mxu0 %v9648
    %9686 = vmatprep.subr.mxu0 0.0
    %9687 = vmatpush1.msra.mxu0 %v9649
    %9688 = vmatprep.subr.mxu0 0.0
    %9689 = vmatpush1.msra.mxu0 %v9650
    %9690 = vmatprep.subr.mxu0 0.0
    %9691 = vmatpush1.msra.mxu0 %v9651
    %9692 = vmatprep.subr.mxu0 0.0
    %9693 = vmatpush1.msra.mxu0 0.0
    %9694 = vmatprep.subr.mxu0 0.0
    %9695 = vmatpush1.msra.mxu0 0.0
    %9696 = vmatprep.subr.mxu0 0.0
    %9697 = vmatpush1.msra.mxu0 0.0
    %9698 = vmatprep.subr.mxu0 0.0
    %9699 = vmatpush1.msra.mxu0 0.0
    %9700 = vmatprep.subr.mxu0 0.0
    %9701 = vmatpush1.msra.mxu0 0.0
    %9702 = vmatprep.subr.mxu0 0.0
    %9703 = vmatpush1.msra.mxu0 0.0
    %9704 = vmatprep.subr.mxu0 0.0
    %9705 = vmatpush1.msra.mxu0 0.0
    %9706 = vmatprep.subr.mxu0 0.0
    %9707 = vmatpush1.msra.mxu0 0.0
    %9708 = vmatprep.subr.mxu0 0.0
    %9709 = vmatpush1.msra.mxu0 0.0
    %9710 = vmatprep.subr.mxu0 0.0
    %9711 = vmatpush1.msra.mxu0 0.0
    %9712 = vmatprep.subr.mxu0 0.0
    %9713 = vmatpush1.msra.mxu0 0.0
    %9714 = vmatprep.subr.mxu0 0.0
    %9715 = vmatpush1.msra.mxu0 0.0
    %9716 = vmatprep.subr.mxu0 0.0
    %9717 = vmatpush1.msra.mxu0 0.0
    %9718 = vmatprep.subr.mxu0 0.0
    %9719 = vmatpush1.msra.mxu0 0.0
    %9720 = vmatprep.subr.mxu0 0.0
    %9721 = vmatpush1.msra.mxu0 0.0
    %9722 = vmatprep.subr.mxu0 0.0
    %9723 = vmatpush1.msra.mxu0 0.0
    %9724 = vmatprep.subr.mxu0 0.0
    %9725 = vmatpush1.msra.mxu0 0.0
    %9726 = vmatprep.subr.mxu0 0.0
    %9727 = vmatpush1.msra.mxu0 0.0
    %9728 = vmatprep.subr.mxu0 0.0
    %9729 = vmatpush1.msra.mxu0 0.0
    %9730 = vmatprep.subr.mxu0 0.0
    %9731 = vmatpush1.msra.mxu0 0.0
    %9732 = vmatprep.subr.mxu0 0.0
    %9733 = vmatpush1.msra.mxu0 0.0
    %9734 = vmatprep.subr.mxu0 0.0
    %9735 = vmatpush1.msra.mxu0 0.0
    %9736 = vmatprep.subr.mxu0 0.0
    %9737 = vmatpush1.msra.mxu0 0.0
    %9738 = vmatprep.subr.mxu0 0.0
    %9739 = vmatpush1.msra.mxu0 0.0
    %9740 = vmatprep.mubr.f32.mxu0 0.0
    %9741 = vmatmul.mubr.f32.gmra.mrb[0].mxu0 %v9674
    %v9742 = vpop.f32.mrb[0].mxu0
    %v9743 = vadd.f32 %v9657, %v9742
    %v9744 = vpop.f32.mrb[0].mxu0
    %9745 = vdwg.mxu0
    %v9746 = vxor.u32 %v9743, 2147483648
    %v9747 = vmul.f32 %v9746, 1.442695
    %v9748 = vpow.pop %v9747
    %v9749 = vadd.f32 %v9748, 1.0
    %v9750 = vrcp.pop %v9749
    %v9751 = vmul.f32 1.0, %v9750
    %9752 = vst [vmem:[#allocation16] sm:$0xff] %v9751
    // Predicated region
    $region82: #{tpu_custom_call.1} parent=1 // pred_check
      _
    $region83: #{tpu_custom_call.1} parent=1 // pred_check_branch
      %9754 = sbr.rel (0) target = $region85
    $region84: #{tpu_custom_call.1} parent=1 // pred_region
      %s9756 = ssub.s32 128, 128
      %9757 = vsyncadd [#allocation6], %s9756
      %s9759 = sshll.u32 [#allocation16], 4
      %s9760 = int_to_ptr.vmem [resolvable:$true] %s9759
      %9762 = dma.vmem_to_hbm [thread:$0]  %s9760, 128, %s13, [#allocation6]
    $region85: #{tpu_custom_call.1} parent=1 // pred_fallthru
      _
    // Predicated region
    $region86: #{tpu_custom_call.1} parent=1 // pred_check
      _
    $region87: #{tpu_custom_call.1} parent=1 // pred_check_branch
      %9764 = sbr.rel (0) target = $region89
    $region88: #{tpu_custom_call.1} parent=1 // pred_region
      %9765 = dma.done [#allocation6], 128
    $region89: #{tpu_custom_call.1} parent=1 // pred_fallthru
      _
    %9766 = vsyncpa [#allocation5], 1
    %9767 = vsyncpa [#allocation8], 1
    %9768 = vsyncpa [#allocation11], 1
    %9769 = vsyncpa [#allocation14], 1
    %9770 = vsyncpa [#allocation6], 1

</llo_original>
